<compile_context>
chip_gen: v7x
topology: tpu7x:2x2x1
jax: 0.10.0
libtpu: 0.0.40
codegen_flags: <defaults>
</compile_context>

<pallas_src>
import functools

import jax
import jax.numpy as jnp
from jax.experimental import pallas as pl
from jax.experimental.pallas import tpu as pltpu

_LANE = 128


def _round_up(x, m):
    return ((x + m - 1) // m) * m


# ----------------------------------------------------------------------------
# Pallas kernel 1: tiled matmul + bias with fused leaky_relu pre/post activation
# ----------------------------------------------------------------------------
def _matmul_kernel(a_ref, b_ref, bias_ref, o_ref, acc_ref,
                   *, pre_act, pre_slope, post_act, post_slope):
    @pl.when(pl.program_id(2) == 0)
    def _():
        acc_ref[...] = jnp.zeros_like(acc_ref)

    a = a_ref[...]
    if pre_act == "leaky_relu":                     # fused input activation (VPU, free vs MXU)
        a = jnp.where(a >= 0, a, pre_slope * a)
    acc_ref[...] += jnp.dot(a, b_ref[...], preferred_element_type=jnp.float32)

    @pl.when(pl.program_id(2) == pl.num_programs(2) - 1)
    def _():
        z = acc_ref[...] + bias_ref[...]
        if post_act == "leaky_relu":                # fused output activation
            z = jnp.where(z >= 0, z, post_slope * z)
        o_ref[...] = z


def pallas_matmul_bias(a, b, bias, pre_act=None, pre_slope=0.2,
                       post_act=None, post_slope=0.2):
    """(M,K) @ (K,N) + bias, tiled/pipelined, bf16 operands, f32 accumulation."""
    M, K = a.shape
    K2, N = b.shape
    assert K == K2
    tm = min(256, _round_up(M, 8))
    tk = 512 if K > 512 else _round_up(K, 8)
    Np = _round_up(N, _LANE)                         # lane-dense output
    tn = 256 if (Np >= 256 and Np % 256 == 0) else _LANE
    Mp = _round_up(M, tm)
    Kp = _round_up(K, tk)

    a_p = jnp.pad(a.astype(jnp.bfloat16), ((0, Mp - M), (0, Kp - K)))
    b_p = jnp.pad(b.astype(jnp.bfloat16), ((0, Kp - K), (0, Np - N)))
    bias_p = jnp.pad(bias.reshape(1, N).astype(jnp.float32), ((0, 0), (0, Np - N)))

    kernel = functools.partial(_matmul_kernel, pre_act=pre_act, pre_slope=pre_slope,
                               post_act=post_act, post_slope=post_slope)
    out = pl.pallas_call(
        kernel,
        out_shape=jax.ShapeDtypeStruct((Mp, Np), jnp.float32),
        grid=(Mp // tm, Np // tn, Kp // tk),
        in_specs=[
            pl.BlockSpec((tm, tk), lambda i, j, k: (i, k)),
            pl.BlockSpec((tk, tn), lambda i, j, k: (k, j)),
            pl.BlockSpec((1, tn), lambda i, j, k: (0, j)),
        ],
        out_specs=pl.BlockSpec((tm, tn), lambda i, j, k: (i, j)),
        scratch_shapes=[pltpu.VMEM((tm, tn), jnp.float32)],
        compiler_params=pltpu.CompilerParams(
            dimension_semantics=("parallel", "parallel", "arbitrary"),
            vmem_limit_bytes=32 * 1024 * 1024,
        ),
    )(a_p, b_p, bias_p)
    return out[:M, :N]


# ----------------------------------------------------------------------------
# Pallas kernel 2: location-variable convolution + fused sigmoid*tanh gate
# ----------------------------------------------------------------------------
def _lvc_gate_kernel(p_ref, w_ref, b_ref, o_ref, *, cp):
    # p: (Gb, hop, CK) bf16   w: (Gb, CK, 2*Cp) bf16   b: (Gb, 1, 2*Cp) f32
    z = jnp.einsum("ghk,gkc->ghc", p_ref[...], w_ref[...],
                   preferred_element_type=jnp.float32)
    z = z + b_ref[...]
    o_ref[...] = jax.nn.sigmoid(z[..., :cp]) * jnp.tanh(z[..., cp:])


def pallas_lvc_gated(patches, weights, biases, C):
    """LVC + gate.  patches (G,hop,CK), weights (G,CK,2C), biases (G,2C) -> (G,hop,C).

    Locations are batched Gb per grid step; the sigmoid/tanh halves are packed into
    a [Cp | Cp] slab with Cp=128 so the gated store is a full, unmasked lane register.
    """
    G, hop, CK = patches.shape
    Cp = _LANE

    w_p = jnp.zeros((G, CK, 2, Cp), jnp.bfloat16)
    w_p = w_p.at[:, :, 0, :C].set(weights[..., :C].astype(jnp.bfloat16))
    w_p = w_p.at[:, :, 1, :C].set(weights[..., C:].astype(jnp.bfloat16))
    w_p = w_p.reshape(G, CK, 2 * Cp)
    b_p = jnp.zeros((G, 2, Cp), jnp.float32)
    b_p = b_p.at[:, 0, :C].set(biases[..., :C].astype(jnp.float32))
    b_p = b_p.at[:, 1, :C].set(biases[..., C:].astype(jnp.float32))
    b_p = b_p.reshape(G, 1, 2 * Cp)
    p_bf = patches.astype(jnp.bfloat16)

    gb = min(8, G)
    Gp = _round_up(G, gb)
    if Gp != G:
        p_bf = jnp.pad(p_bf, ((0, Gp - G), (0, 0), (0, 0)))
        w_p = jnp.pad(w_p, ((0, Gp - G), (0, 0), (0, 0)))
        b_p = jnp.pad(b_p, ((0, Gp - G), (0, 0), (0, 0)))

    out = pl.pallas_call(
        functools.partial(_lvc_gate_kernel, cp=Cp),
        out_shape=jax.ShapeDtypeStruct((Gp, hop, Cp), jnp.float32),
        grid=(Gp // gb,),
        in_specs=[
            pl.BlockSpec((gb, hop, CK), lambda g: (g, 0, 0)),
            pl.BlockSpec((gb, CK, 2 * Cp), lambda g: (g, 0, 0)),
            pl.BlockSpec((gb, 1, 2 * Cp), lambda g: (g, 0, 0)),
        ],
        out_specs=pl.BlockSpec((gb, hop, Cp), lambda g: (g, 0, 0)),
        compiler_params=pltpu.CompilerParams(
            dimension_semantics=("parallel",),
            vmem_limit_bytes=32 * 1024 * 1024,
        ),
    )(p_bf, w_p, b_p)
    return out[:G, :, :C]


# ----------------------------------------------------------------------------
# Glue (channels-last layout everywhere: x is (B, L, C))
# ----------------------------------------------------------------------------
def swish(x):
    return x * jax.nn.sigmoid(x)


def linear_jnp(x, w, b):
    """Tiny PyTorch Linear — left to XLA (not worth a Pallas launch)."""
    return x @ w.T + b


def conv1d_cl(x, w, b, dilation=1, padding=0,
              pre_act=None, pre_slope=0.2, post_act=None, post_slope=0.2):
    """PyTorch-semantics Conv1d in channels-last layout.
    x: (B,L,Cin), w: (Cout,Cin,K) torch layout -> (B,Lout,Cout)."""
    B, L, Cin = x.shape
    Cout, _, K = w.shape
    xp = jnp.pad(x, ((0, 0), (padding, padding), (0, 0)))
    Lout = L + 2 * padding - dilation * (K - 1)
    cols = [xp[:, k * dilation:k * dilation + Lout, :] for k in range(K)]
    patches = jnp.concatenate(cols, axis=-1)            # (B, Lout, K*Cin) in (tap, cin) order
    patches = patches.reshape(B * Lout, K * Cin)
    wmat = jnp.transpose(w, (2, 1, 0)).reshape(K * Cin, Cout)   # (tap, cin) rows
    out = pallas_matmul_bias(patches, wmat, b, pre_act=pre_act, pre_slope=pre_slope,
                             post_act=post_act, post_slope=post_slope)
    return out.reshape(B, Lout, Cout)


def conv_transpose1d_cl(x, w, b, stride, padding, output_padding,
                        pre_act=None, pre_slope=0.2):
    """PyTorch ConvTranspose1d via zero-stuffed input + flipped-kernel conv.
    x: (B,L,Cin), w: (Cin,Cout,K) torch layout."""
    B, L, Cin = x.shape
    _, Cout, K = w.shape
    assert padding <= K - 1, "conv_transpose padding exceeds kernel support"
    z = jnp.zeros((B, (L - 1) * stride + 1, Cin), x.dtype)
    z = z.at[:, ::stride, :].set(x)
    pad_l = K - 1 - padding
    pad_r = K - 1 - padding + output_padding
    zp = jnp.pad(z, ((0, 0), (pad_l, pad_r), (0, 0)))
    w_conv = jnp.flip(w, axis=-1).transpose(1, 0, 2)     # (Cout, Cin, K)
    # leaky_relu(0)=0, so the fused pre-activation commutes with zero-stuffing/padding.
    return conv1d_cl(zp, w_conv, b, dilation=1, padding=0,
                     pre_act=pre_act, pre_slope=pre_slope)


def nearest_downsample_cl(x, out_size):
    """F.interpolate(mode='nearest') to a smaller size (floor indexing). x: (B,L,C)."""
    B, L, C = x.shape
    idx = (jnp.arange(out_size) * L) // out_size
    return x[:, idx, :]


def calc_diffusion_step_embedding(ts, dim_in):
    half = dim_in // 2
    emb = jnp.exp(jnp.arange(half, dtype=jnp.float32) * -(jnp.log(10000.0) / (half - 1)))
    emb = ts.astype(jnp.float32) * emb[None, :]
    return jnp.concatenate([jnp.sin(emb), jnp.cos(emb)], axis=1)


def _kernel_channel_perm(layers, cin, cout, ksz):
    """Output-channel permutation for the KernelPredictor k-conv so its output is emitted
    directly in the (layer, tap, cin, cout) order consumed by the LVC kernel."""
    idx = jnp.arange(layers * cin * cout * ksz).reshape(layers, cin, cout, ksz)
    return idx.transpose(0, 3, 1, 2).reshape(-1)


# ----------------------------------------------------------------------------
# Sub-modules
# ----------------------------------------------------------------------------
def kernel_predictor(params, cond, conv_layers, conv_in, conv_out, conv_ksz, kp_ksz):
    """Predict per-location LVC kernels/biases (cond is (B, Lc, cond_ch) channels-last).
    Returns kernels (B, Lc, layers, ksz*Cin, 2C) and biases (B, Lc, layers, 2C)."""
    pad5 = (5 - 1) // 2
    padk = (kp_ksz - 1) // 2
    c = conv1d_cl(cond, params["in_w"], params["in_b"], padding=pad5,
                  post_act="leaky_relu", post_slope=0.1)
    r = c
    for i in range(6):   # residual_conv: 6x (dropout=0, conv, LeakyReLU(0.1)) — LRelu fused
        r = conv1d_cl(r, params[f"res{i}_w"], params[f"res{i}_b"], padding=padk,
                      post_act="leaky_relu", post_slope=0.1)
    c = c + r
    # Weight-side permutation (tiny) instead of transposing the big predicted-kernel tensor.
    perm = _kernel_channel_perm(conv_layers, conv_in, conv_out, conv_ksz)
    k = conv1d_cl(c, params["k_w"][perm], params["k_b"][perm], padding=padk)
    b = conv1d_cl(c, params["b_w"], params["b_b"], padding=padk)
    B, Lc, _ = k.shape
    kernels = k.reshape(B, Lc, conv_layers, conv_ksz * conv_in, conv_out)
    biases = b.reshape(B, Lc, conv_layers, conv_out)
    return kernels, biases


def location_variable_conv_gated(y, kernel, bias, hop, C):
    """LVC (dilation=1) fused with sigmoid*tanh gate.
    y: (B,T,C); kernel: (B,Lk,ksz*C,2C); bias: (B,Lk,2C) -> (B,T,C)."""
    B, T, _ = y.shape
    _, Lk, CK, twoC = kernel.shape
    ksz = CK // C
    assert T == Lk * hop
    pad = (ksz - 1) // 2
    yp = jnp.pad(y, ((0, 0), (pad, pad), (0, 0)))
    cols = [yp[:, k:k + T, :] for k in range(ksz)]
    patches = jnp.concatenate(cols, axis=-1)             # (B, T, ksz*C) in (tap, cin) order
    patches = patches.reshape(B * Lk, hop, CK)
    W = kernel.reshape(B * Lk, CK, twoC)
    bmat = bias.reshape(B * Lk, twoC)
    gated = pallas_lvc_gated(patches, W, bmat, C)        # (B*Lk, hop, C)
    return gated.reshape(B, T, C)


def diffusion_dblock(params, x, factor):
    B, L, C = x.shape
    size = L // factor
    residual = conv1d_cl(x, params["res_w"], params["res_b"], padding=0)
    residual = nearest_downsample_cl(residual, size)
    x = nearest_downsample_cl(x, size)
    for i, d in enumerate((1, 2, 4)):
        # reference: x = leaky_relu(x, 0.2); x = conv(x)  -> pre-activation fused in kernel
        x = conv1d_cl(x, params[f"c{i}_w"], params[f"c{i}_b"], dilation=d, padding=d,
                      pre_act="leaky_relu", pre_slope=0.2)
    return x + residual


def timeaware_lvc_block(params, x, audio_down, c, noise_embed, cfg, block_idx):
    ratio = cfg["ratios"][block_idx]
    hop = cfg["hops"][block_idx]
    C = cfg["inner"]
    conv_layers = cfg["lvc_layers"]
    ksz = cfg["lvc_ksz"]

    noise = linear_jnp(noise_embed, params["fc_t_w"], params["fc_t_b"])     # (B, cond_ch)
    condition = c + noise[:, None, :]                                       # (B, Lc, cond_ch)
    kernels, biases = kernel_predictor(
        params["kp"], condition, conv_layers, C, 2 * C, ksz, cfg["kp_ksz"])

    x = conv_transpose1d_cl(
        x, params["up_w"], params["up_b"],
        stride=ratio, padding=ratio // 2 + ratio % 2, output_padding=ratio % 2,
        pre_act="leaky_relu", pre_slope=0.2)
    x = x + audio_down

    for i in range(conv_layers):
        d = 3 ** i
        y = conv1d_cl(x, params[f"conv{i}_w"], params[f"conv{i}_b"],
                      dilation=d, padding=d * ((ksz - 1) // 2),
                      pre_act="leaky_relu", pre_slope=0.2,
                      post_act="leaky_relu", post_slope=0.2)
        x = x + location_variable_conv_gated(y, kernels[:, :, i], biases[:, :, i], hop, C)
    return x


# ----------------------------------------------------------------------------
# FastDiff forward
# ----------------------------------------------------------------------------
def fastdiff_forward(params, x, c, ts, cfg):
    """x: (B,1,T) noisy audio, c: (B,cond,T') mel, ts: (B,1) diffusion steps."""
    embed = calc_diffusion_step_embedding(ts, cfg["dim_in"])
    embed = swish(linear_jnp(embed, params["fc_t1_w"], params["fc_t1_b"]))
    embed = swish(linear_jnp(embed, params["fc_t2_w"], params["fc_t2_b"]))

    x = jnp.transpose(x, (0, 2, 1))      # channels-last (B, T, 1)
    c = jnp.transpose(c, (0, 2, 1))      # channels-last (B, T', cond)

    x = conv1d_cl(x, params["first_w"], params["first_b"], padding=3)

    downsampled = []
    for d in range(cfg["num_blocks"]):
        downsampled.append(x)
        factor = cfg["ratios"][cfg["num_blocks"] - d - 1]
        x = diffusion_dblock(params["down"][d], x, factor)

    for n, audio_down in enumerate(reversed(downsampled)):
        x = timeaware_lvc_block(params["lvc"][n], x, audio_down, c, embed, cfg, n)

    x = conv1d_cl(x, params["final_w"], params["final_b"], padding=3)
    # TODO(synk): the ts=None branch (torch.randint + gaussian noising) is stochastic and
    # not reproduced; we exercise the deterministic explicit-ts path (mask=None, reverse=False).
    return jnp.transpose(x, (0, 2, 1))   # back to torch NCL layout (B, 1, T)


# ----------------------------------------------------------------------------
# Deterministic parameter construction (torch weight layouts)
# ----------------------------------------------------------------------------
def make_params(key, cfg):
    keys = list(jax.random.split(key, 256))
    it = iter(keys)

    def p(shape, scale=0.08):
        return scale * jax.random.normal(next(it), shape, dtype=jnp.float32)

    C = cfg["inner"]
    cond = cfg["cond"]
    kh = cfg["kp_hidden"]
    ksz = cfg["lvc_ksz"]
    layers = cfg["lvc_layers"]
    l_w = C * (2 * C) * ksz * layers
    l_b = (2 * C) * layers

    params = {
        "first_w": p((C, 1, 7)), "first_b": p((C,)),
        "fc_t1_w": p((cfg["dim_mid"], cfg["dim_in"])), "fc_t1_b": p((cfg["dim_mid"],)),
        "fc_t2_w": p((cfg["dim_out"], cfg["dim_mid"])), "fc_t2_b": p((cfg["dim_out"],)),
        "final_w": p((1, C, 7)), "final_b": p((1,)),
        "down": [], "lvc": [],
    }

    for _ in range(cfg["num_blocks"]):
        params["down"].append({
            "res_w": p((C, C, 1)), "res_b": p((C,)),
            "c0_w": p((C, C, 3)), "c0_b": p((C,)),
            "c1_w": p((C, C, 3)), "c1_b": p((C,)),
            "c2_w": p((C, C, 3)), "c2_b": p((C,)),
        })

    for n in range(cfg["num_blocks"]):
        ratio = cfg["ratios"][n]
        kp = {
            "in_w": p((kh, cond, 5)), "in_b": p((kh,)),
            "k_w": p((l_w, kh, cfg["kp_ksz"])), "k_b": p((l_w,)),
            "b_w": p((l_b, kh, cfg["kp_ksz"])), "b_b": p((l_b,)),
        }
        for i in range(6):
            kp[f"res{i}_w"] = p((kh, kh, cfg["kp_ksz"]))
            kp[f"res{i}_b"] = p((kh,))
        blk = {
            "up_w": p((C, C, 2 * ratio)), "up_b": p((C,)),   # ConvTranspose1d layout
            "fc_t_w": p((cond, cfg["dim_out"])), "fc_t_b": p((cond,)),
            "kp": kp,
        }
        for i in range(layers):
            blk[f"conv{i}_w"] = p((C, C, ksz))
            blk[f"conv{i}_b"] = p((C,))
        params["lvc"].append(blk)
    return params


# ----------------------------------------------------------------------------
# Main
# ----------------------------------------------------------------------------
if __name__ == "__main__":
    # Small FastDiff configuration (module hyper-parameters, scaled down).
    ratios = [2, 2, 2]
    cfg = {
        "inner": 8,            # inner_channels
        "cond": 16,            # cond_channels
        "ratios": ratios,      # upsample_ratios
        "hops": [2, 4, 8],     # cumulative cond_hop_length per LVC block
        "num_blocks": len(ratios),
        "lvc_layers": 2,       # lvc_layers_each_block
        "lvc_ksz": 3,          # lvc_kernel_size
        "kp_hidden": 16,       # kpnet_hidden_channels
        "kp_ksz": 3,           # kpnet_conv_size
        "dim_in": 16,          # diffusion_step_embed_dim_in
        "dim_mid": 32,
        "dim_out": 32,
    }

    key = jax.random.PRNGKey(0)
    k_params, k_x, k_c, k_ts = jax.random.split(key, 4)

    params = make_params(k_params, cfg)

    B = 2
    Tmel = 8
    hop_total = ratios[0] * ratios[1] * ratios[2]          # 8
    Taudio = Tmel * hop_total                              # 64

    x = jax.random.normal(k_x, (B, 1, Taudio), dtype=jnp.float32)           # noisy audio
    c = jax.random.normal(k_c, (B, cfg["cond"], Tmel), dtype=jnp.float32)   # mel condition
    ts = jax.random.randint(k_ts, (B, 1), 0, 1000)                          # diffusion steps

    fwd = jax.jit(lambda p, xx, cc, tt: fastdiff_forward(p, xx, cc, tt, cfg))
    out = fwd(params, x, c, ts)
    out = jax.block_until_ready(out)
    assert out.shape == (B, 1, Taudio), out.shape
    assert bool(jnp.all(jnp.isfinite(out)))
    print("KERNEL_OK")
</pallas_src>

<mosaic_0001>
module attributes {stable_mosaic.version = 11 : i64} {
  func.func @_matmul_kernel(%arg0: i32, %arg1: i32, %arg2: i32, %arg3: memref<128x8xbf16, #tpu.memory_space<vmem>>, %arg4: memref<8x128xbf16, #tpu.memory_space<vmem>>, %arg5: memref<1x128xf32, #tpu.memory_space<vmem>>, %arg6: memref<128x128xf32, #tpu.memory_space<vmem>>, %arg7: memref<128x128xf32, #tpu.memory_space<vmem>>) attributes {dimension_semantics = [#tpu.dimension_semantics<parallel>, #tpu.dimension_semantics<parallel>, #tpu.dimension_semantics<arbitrary>], iteration_bounds = array<i64: 1, 1, 1>, scalar_prefetch = 0 : i64, scratch_operands = 1 : i64, tpu.core_type = #tpu.core_type<tc>, window_params = [{transform_indices = @transform_0, window_bounds = array<i64: 128, 8>}, {transform_indices = @transform_1, window_bounds = array<i64: 8, 128>}, {transform_indices = @transform_2, window_bounds = array<i64: 1, 128>}, {transform_indices = @transform_3, window_bounds = array<i64: 128, 128>}]} {
    %c0_i32 = arith.constant 0 : i32
    %0 = arith.cmpi eq, %arg2, %c0_i32 : i32
    %1 = arith.extui %0 : i1 to i32
    %c0_i32_0 = arith.constant 0 : i32
    %2 = arith.cmpi ne, %1, %c0_i32_0 : i32
    scf.if %2 {
      %cst_10 = arith.constant 0.000000e+00 : f32
      %12 = vector.broadcast %cst_10 : f32 to vector<128x128xf32>
      %c0_11 = arith.constant 0 : index
      %c0_12 = arith.constant 0 : index
      %13 = vector.load %arg7[%c0_11, %c0_12] : memref<128x128xf32, #tpu.memory_space<vmem>>, vector<128x128xf32>
      tpu.vector_store %arg7[%c0_11, %c0_12], %12 {strides = array<i32>} : memref<128x128xf32, #tpu.memory_space<vmem>>, vector<128x128xf32>,
    } else {
    }
    %c0 = arith.constant 0 : index
    %c0_1 = arith.constant 0 : index
    %3 = vector.load %arg3[%c0, %c0_1] : memref<128x8xbf16, #tpu.memory_space<vmem>>, vector<128x8xbf16>
    %c0_2 = arith.constant 0 : index
    %c0_3 = arith.constant 0 : index
    %4 = vector.load %arg7[%c0_2, %c0_3] : memref<128x128xf32, #tpu.memory_space<vmem>>, vector<128x128xf32>
    %c0_4 = arith.constant 0 : index
    %c0_5 = arith.constant 0 : index
    %5 = vector.load %arg4[%c0_4, %c0_5] : memref<8x128xbf16, #tpu.memory_space<vmem>>, vector<8x128xbf16>
    %cst = arith.constant dense<0.000000e+00> : vector<128x128xf32>
    %6 = tpu.matmul %3, %5, %cst {dimension_numbers = #tpu.dot_dimension_numbers<[1], [0], [0], [1], [0, 0, 1, 1], [], []>} : vector<128x8xbf16>, vector<8x128xbf16>, vector<128x128xf32> -> vector<128x128xf32>
    %7 = arith.addf %4, %6 : vector<128x128xf32>
    %c0_6 = arith.constant 0 : index
    %c0_7 = arith.constant 0 : index
    %8 = vector.load %arg7[%c0_6, %c0_7] : memref<128x128xf32, #tpu.memory_space<vmem>>, vector<128x128xf32>
    tpu.vector_store %arg7[%c0_6, %c0_7], %7 {strides = array<i32>} : memref<128x128xf32, #tpu.memory_space<vmem>>, vector<128x128xf32>,
    %c0_i32_8 = arith.constant 0 : i32
    %9 = arith.cmpi eq, %arg2, %c0_i32_8 : i32
    %10 = arith.extui %9 : i1 to i32
    %c0_i32_9 = arith.constant 0 : i32
    %11 = arith.cmpi ne, %10, %c0_i32_9 : i32
    scf.if %11 {
      %c0_10 = arith.constant 0 : index
      %c0_11 = arith.constant 0 : index
      %12 = vector.load %arg7[%c0_10, %c0_11] : memref<128x128xf32, #tpu.memory_space<vmem>>, vector<128x128xf32>
      %c0_12 = arith.constant 0 : index
      %c0_13 = arith.constant 0 : index
      %13 = vector.load %arg5[%c0_12, %c0_13] : memref<1x128xf32, #tpu.memory_space<vmem>>, vector<1x128xf32>
      %14 = vector.broadcast %13 : vector<1x128xf32> to vector<128x128xf32>
      %15 = arith.addf %12, %14 : vector<128x128xf32>
      %c0_14 = arith.constant 0 : index
      %c0_15 = arith.constant 0 : index
      %16 = vector.load %arg6[%c0_14, %c0_15] : memref<128x128xf32, #tpu.memory_space<vmem>>, vector<128x128xf32>
      tpu.vector_store %arg6[%c0_14, %c0_15], %15 {strides = array<i32>} : memref<128x128xf32, #tpu.memory_space<vmem>>, vector<128x128xf32>,
    } else {
    }
    return
  }
  func.func @transform_0(%arg0: i32, %arg1: i32, %arg2: i32) -> (i32, i32) {
    %c0_i32 = arith.constant 0 : i32
    return %arg0, %arg2 : i32, i32
  }
  func.func @transform_1(%arg0: i32, %arg1: i32, %arg2: i32) -> (i32, i32) {
    %c0_i32 = arith.constant 0 : i32
    return %arg2, %arg1 : i32, i32
  }
  func.func @transform_2(%arg0: i32, %arg1: i32, %arg2: i32) -> (i32, i32) {
    %c0_i32 = arith.constant 0 : i32
    %c0_i32_0 = arith.constant 0 : i32
    return %c0_i32, %arg1 : i32, i32
  }
  func.func @transform_3(%arg0: i32, %arg1: i32, %arg2: i32) -> (i32, i32) {
    %c0_i32 = arith.constant 0 : i32
    return %arg0, %arg1 : i32, i32
  }
}

module attributes {stable_mosaic.version = 11 : i64} {
  func.func @_matmul_kernel(%arg0: i32, %arg1: i32, %arg2: i32, %arg3: memref<64x24xbf16, #tpu.memory_space<vmem>>, %arg4: memref<24x128xbf16, #tpu.memory_space<vmem>>, %arg5: memref<1x128xf32, #tpu.memory_space<vmem>>, %arg6: memref<64x128xf32, #tpu.memory_space<vmem>>, %arg7: memref<64x128xf32, #tpu.memory_space<vmem>>) attributes {dimension_semantics = [#tpu.dimension_semantics<parallel>, #tpu.dimension_semantics<parallel>, #tpu.dimension_semantics<arbitrary>], iteration_bounds = array<i64: 1, 1, 1>, scalar_prefetch = 0 : i64, scratch_operands = 1 : i64, tpu.core_type = #tpu.core_type<tc>, window_params = [{transform_indices = @transform_0, window_bounds = array<i64: 64, 24>}, {transform_indices = @transform_1, window_bounds = array<i64: 24, 128>}, {transform_indices = @transform_2, window_bounds = array<i64: 1, 128>}, {transform_indices = @transform_3, window_bounds = array<i64: 64, 128>}]} {
    %c0_i32 = arith.constant 0 : i32
    %0 = arith.cmpi eq, %arg2, %c0_i32 : i32
    %1 = arith.extui %0 : i1 to i32
    %c0_i32_0 = arith.constant 0 : i32
    %2 = arith.cmpi ne, %1, %c0_i32_0 : i32
    scf.if %2 {
      %cst_12 = arith.constant 0.000000e+00 : f32
      %17 = vector.broadcast %cst_12 : f32 to vector<64x128xf32>
      %c0_13 = arith.constant 0 : index
      %c0_14 = arith.constant 0 : index
      %18 = vector.load %arg7[%c0_13, %c0_14] : memref<64x128xf32, #tpu.memory_space<vmem>>, vector<64x128xf32>
      tpu.vector_store %arg7[%c0_13, %c0_14], %17 {strides = array<i32>} : memref<64x128xf32, #tpu.memory_space<vmem>>, vector<64x128xf32>,
    } else {
    }
    %c0 = arith.constant 0 : index
    %c0_1 = arith.constant 0 : index
    %3 = vector.load %arg3[%c0, %c0_1] : memref<64x24xbf16, #tpu.memory_space<vmem>>, vector<64x24xbf16>
    %cst = arith.constant 0.000000e+00 : bf16
    %4 = vector.broadcast %cst : bf16 to vector<64x24xbf16>
    %5 = arith.cmpf oge, %3, %4 : vector<64x24xbf16>
    %cst_2 = arith.constant 2.001950e-01 : bf16
    %6 = vector.broadcast %cst_2 : bf16 to vector<64x24xbf16>
    %7 = arith.mulf %6, %3 : vector<64x24xbf16>
    %8 = arith.select %5, %3, %7 : vector<64x24xi1>, vector<64x24xbf16>
    %c0_3 = arith.constant 0 : index
    %c0_4 = arith.constant 0 : index
    %9 = vector.load %arg7[%c0_3, %c0_4] : memref<64x128xf32, #tpu.memory_space<vmem>>, vector<64x128xf32>
    %c0_5 = arith.constant 0 : index
    %c0_6 = arith.constant 0 : index
    %10 = vector.load %arg4[%c0_5, %c0_6] : memref<24x128xbf16, #tpu.memory_space<vmem>>, vector<24x128xbf16>
    %cst_7 = arith.constant dense<0.000000e+00> : vector<64x128xf32>
    %11 = tpu.matmul %8, %10, %cst_7 {dimension_numbers = #tpu.dot_dimension_numbers<[1], [0], [0], [1], [0, 0, 1, 1], [], []>} : vector<64x24xbf16>, vector<24x128xbf16>, vector<64x128xf32> -> vector<64x128xf32>
    %12 = arith.addf %9, %11 : vector<64x128xf32>
    %c0_8 = arith.constant 0 : index
    %c0_9 = arith.constant 0 : index
    %13 = vector.load %arg7[%c0_8, %c0_9] : memref<64x128xf32, #tpu.memory_space<vmem>>, vector<64x128xf32>
    tpu.vector_store %arg7[%c0_8, %c0_9], %12 {strides = array<i32>} : memref<64x128xf32, #tpu.memory_space<vmem>>, vector<64x128xf32>,
    %c0_i32_10 = arith.constant 0 : i32
    %14 = arith.cmpi eq, %arg2, %c0_i32_10 : i32
    %15 = arith.extui %14 : i1 to i32
    %c0_i32_11 = arith.constant 0 : i32
    %16 = arith.cmpi ne, %15, %c0_i32_11 : i32
    scf.if %16 {
      %c0_12 = arith.constant 0 : index
      %c0_13 = arith.constant 0 : index
      %17 = vector.load %arg7[%c0_12, %c0_13] : memref<64x128xf32, #tpu.memory_space<vmem>>, vector<64x128xf32>
      %c0_14 = arith.constant 0 : index
      %c0_15 = arith.constant 0 : index
      %18 = vector.load %arg5[%c0_14, %c0_15] : memref<1x128xf32, #tpu.memory_space<vmem>>, vector<1x128xf32>
      %19 = vector.broadcast %18 : vector<1x128xf32> to vector<64x128xf32>
      %20 = arith.addf %17, %19 : vector<64x128xf32>
      %c0_16 = arith.constant 0 : index
      %c0_17 = arith.constant 0 : index
      %21 = vector.load %arg6[%c0_16, %c0_17] : memref<64x128xf32, #tpu.memory_space<vmem>>, vector<64x128xf32>
      tpu.vector_store %arg6[%c0_16, %c0_17], %20 {strides = array<i32>} : memref<64x128xf32, #tpu.memory_space<vmem>>, vector<64x128xf32>,
    } else {
    }
    return
  }
  func.func @transform_0(%arg0: i32, %arg1: i32, %arg2: i32) -> (i32, i32) {
    %c0_i32 = arith.constant 0 : i32
    return %arg0, %arg2 : i32, i32
  }
  func.func @transform_1(%arg0: i32, %arg1: i32, %arg2: i32) -> (i32, i32) {
    %c0_i32 = arith.constant 0 : i32
    return %arg2, %arg1 : i32, i32
  }
  func.func @transform_2(%arg0: i32, %arg1: i32, %arg2: i32) -> (i32, i32) {
    %c0_i32 = arith.constant 0 : i32
    %c0_i32_0 = arith.constant 0 : i32
    return %c0_i32, %arg1 : i32, i32
  }
  func.func @transform_3(%arg0: i32, %arg1: i32, %arg2: i32) -> (i32, i32) {
    %c0_i32 = arith.constant 0 : i32
    return %arg0, %arg1 : i32, i32
  }
}

module attributes {stable_mosaic.version = 11 : i64} {
  func.func @_matmul_kernel(%arg0: i32, %arg1: i32, %arg2: i32, %arg3: memref<32x24xbf16, #tpu.memory_space<vmem>>, %arg4: memref<24x128xbf16, #tpu.memory_space<vmem>>, %arg5: memref<1x128xf32, #tpu.memory_space<vmem>>, %arg6: memref<32x128xf32, #tpu.memory_space<vmem>>, %arg7: memref<32x128xf32, #tpu.memory_space<vmem>>) attributes {dimension_semantics = [#tpu.dimension_semantics<parallel>, #tpu.dimension_semantics<parallel>, #tpu.dimension_semantics<arbitrary>], iteration_bounds = array<i64: 1, 1, 1>, scalar_prefetch = 0 : i64, scratch_operands = 1 : i64, tpu.core_type = #tpu.core_type<tc>, window_params = [{transform_indices = @transform_0, window_bounds = array<i64: 32, 24>}, {transform_indices = @transform_1, window_bounds = array<i64: 24, 128>}, {transform_indices = @transform_2, window_bounds = array<i64: 1, 128>}, {transform_indices = @transform_3, window_bounds = array<i64: 32, 128>}]} {
    %c0_i32 = arith.constant 0 : i32
    %0 = arith.cmpi eq, %arg2, %c0_i32 : i32
    %1 = arith.extui %0 : i1 to i32
    %c0_i32_0 = arith.constant 0 : i32
    %2 = arith.cmpi ne, %1, %c0_i32_0 : i32
    scf.if %2 {
      %cst_12 = arith.constant 0.000000e+00 : f32
      %17 = vector.broadcast %cst_12 : f32 to vector<32x128xf32>
      %c0_13 = arith.constant 0 : index
      %c0_14 = arith.constant 0 : index
      %18 = vector.load %arg7[%c0_13, %c0_14] : memref<32x128xf32, #tpu.memory_space<vmem>>, vector<32x128xf32>
      tpu.vector_store %arg7[%c0_13, %c0_14], %17 {strides = array<i32>} : memref<32x128xf32, #tpu.memory_space<vmem>>, vector<32x128xf32>,
    } else {
    }
    %c0 = arith.constant 0 : index
    %c0_1 = arith.constant 0 : index
    %3 = vector.load %arg3[%c0, %c0_1] : memref<32x24xbf16, #tpu.memory_space<vmem>>, vector<32x24xbf16>
    %cst = arith.constant 0.000000e+00 : bf16
    %4 = vector.broadcast %cst : bf16 to vector<32x24xbf16>
    %5 = arith.cmpf oge, %3, %4 : vector<32x24xbf16>
    %cst_2 = arith.constant 2.001950e-01 : bf16
    %6 = vector.broadcast %cst_2 : bf16 to vector<32x24xbf16>
    %7 = arith.mulf %6, %3 : vector<32x24xbf16>
    %8 = arith.select %5, %3, %7 : vector<32x24xi1>, vector<32x24xbf16>
    %c0_3 = arith.constant 0 : index
    %c0_4 = arith.constant 0 : index
    %9 = vector.load %arg7[%c0_3, %c0_4] : memref<32x128xf32, #tpu.memory_space<vmem>>, vector<32x128xf32>
    %c0_5 = arith.constant 0 : index
    %c0_6 = arith.constant 0 : index
    %10 = vector.load %arg4[%c0_5, %c0_6] : memref<24x128xbf16, #tpu.memory_space<vmem>>, vector<24x128xbf16>
    %cst_7 = arith.constant dense<0.000000e+00> : vector<32x128xf32>
    %11 = tpu.matmul %8, %10, %cst_7 {dimension_numbers = #tpu.dot_dimension_numbers<[1], [0], [0], [1], [0, 0, 1, 1], [], []>} : vector<32x24xbf16>, vector<24x128xbf16>, vector<32x128xf32> -> vector<32x128xf32>
    %12 = arith.addf %9, %11 : vector<32x128xf32>
    %c0_8 = arith.constant 0 : index
    %c0_9 = arith.constant 0 : index
    %13 = vector.load %arg7[%c0_8, %c0_9] : memref<32x128xf32, #tpu.memory_space<vmem>>, vector<32x128xf32>
    tpu.vector_store %arg7[%c0_8, %c0_9], %12 {strides = array<i32>} : memref<32x128xf32, #tpu.memory_space<vmem>>, vector<32x128xf32>,
    %c0_i32_10 = arith.constant 0 : i32
    %14 = arith.cmpi eq, %arg2, %c0_i32_10 : i32
    %15 = arith.extui %14 : i1 to i32
    %c0_i32_11 = arith.constant 0 : i32
    %16 = arith.cmpi ne, %15, %c0_i32_11 : i32
    scf.if %16 {
      %c0_12 = arith.constant 0 : index
      %c0_13 = arith.constant 0 : index
      %17 = vector.load %arg7[%c0_12, %c0_13] : memref<32x128xf32, #tpu.memory_space<vmem>>, vector<32x128xf32>
      %c0_14 = arith.constant 0 : index
      %c0_15 = arith.constant 0 : index
      %18 = vector.load %arg5[%c0_14, %c0_15] : memref<1x128xf32, #tpu.memory_space<vmem>>, vector<1x128xf32>
      %19 = vector.broadcast %18 : vector<1x128xf32> to vector<32x128xf32>
      %20 = arith.addf %17, %19 : vector<32x128xf32>
      %c0_16 = arith.constant 0 : index
      %c0_17 = arith.constant 0 : index
      %21 = vector.load %arg6[%c0_16, %c0_17] : memref<32x128xf32, #tpu.memory_space<vmem>>, vector<32x128xf32>
      tpu.vector_store %arg6[%c0_16, %c0_17], %20 {strides = array<i32>} : memref<32x128xf32, #tpu.memory_space<vmem>>, vector<32x128xf32>,
    } else {
    }
    return
  }
  func.func @transform_0(%arg0: i32, %arg1: i32, %arg2: i32) -> (i32, i32) {
    %c0_i32 = arith.constant 0 : i32
    return %arg0, %arg2 : i32, i32
  }
  func.func @transform_1(%arg0: i32, %arg1: i32, %arg2: i32) -> (i32, i32) {
    %c0_i32 = arith.constant 0 : i32
    return %arg2, %arg1 : i32, i32
  }
  func.func @transform_2(%arg0: i32, %arg1: i32, %arg2: i32) -> (i32, i32) {
    %c0_i32 = arith.constant 0 : i32
    %c0_i32_0 = arith.constant 0 : i32
    return %c0_i32, %arg1 : i32, i32
  }
  func.func @transform_3(%arg0: i32, %arg1: i32, %arg2: i32) -> (i32, i32) {
    %c0_i32 = arith.constant 0 : i32
    return %arg0, %arg1 : i32, i32
  }
}

module attributes {stable_mosaic.version = 11 : i64} {
  func.func @_matmul_kernel(%arg0: i32, %arg1: i32, %arg2: i32, %arg3: memref<64x8xbf16, #tpu.memory_space<vmem>>, %arg4: memref<8x128xbf16, #tpu.memory_space<vmem>>, %arg5: memref<1x128xf32, #tpu.memory_space<vmem>>, %arg6: memref<64x128xf32, #tpu.memory_space<vmem>>, %arg7: memref<64x128xf32, #tpu.memory_space<vmem>>) attributes {dimension_semantics = [#tpu.dimension_semantics<parallel>, #tpu.dimension_semantics<parallel>, #tpu.dimension_semantics<arbitrary>], iteration_bounds = array<i64: 1, 1, 1>, scalar_prefetch = 0 : i64, scratch_operands = 1 : i64, tpu.core_type = #tpu.core_type<tc>, window_params = [{transform_indices = @transform_0, window_bounds = array<i64: 64, 8>}, {transform_indices = @transform_1, window_bounds = array<i64: 8, 128>}, {transform_indices = @transform_2, window_bounds = array<i64: 1, 128>}, {transform_indices = @transform_3, window_bounds = array<i64: 64, 128>}]} {
    %c0_i32 = arith.constant 0 : i32
    %0 = arith.cmpi eq, %arg2, %c0_i32 : i32
    %1 = arith.extui %0 : i1 to i32
    %c0_i32_0 = arith.constant 0 : i32
    %2 = arith.cmpi ne, %1, %c0_i32_0 : i32
    scf.if %2 {
      %cst_10 = arith.constant 0.000000e+00 : f32
      %12 = vector.broadcast %cst_10 : f32 to vector<64x128xf32>
      %c0_11 = arith.constant 0 : index
      %c0_12 = arith.constant 0 : index
      %13 = vector.load %arg7[%c0_11, %c0_12] : memref<64x128xf32, #tpu.memory_space<vmem>>, vector<64x128xf32>
      tpu.vector_store %arg7[%c0_11, %c0_12], %12 {strides = array<i32>} : memref<64x128xf32, #tpu.memory_space<vmem>>, vector<64x128xf32>,
    } else {
    }
    %c0 = arith.constant 0 : index
    %c0_1 = arith.constant 0 : index
    %3 = vector.load %arg3[%c0, %c0_1] : memref<64x8xbf16, #tpu.memory_space<vmem>>, vector<64x8xbf16>
    %c0_2 = arith.constant 0 : index
    %c0_3 = arith.constant 0 : index
    %4 = vector.load %arg7[%c0_2, %c0_3] : memref<64x128xf32, #tpu.memory_space<vmem>>, vector<64x128xf32>
    %c0_4 = arith.constant 0 : index
    %c0_5 = arith.constant 0 : index
    %5 = vector.load %arg4[%c0_4, %c0_5] : memref<8x128xbf16, #tpu.memory_space<vmem>>, vector<8x128xbf16>
    %cst = arith.constant dense<0.000000e+00> : vector<64x128xf32>
    %6 = tpu.matmul %3, %5, %cst {dimension_numbers = #tpu.dot_dimension_numbers<[1], [0], [0], [1], [0, 0, 1, 1], [], []>} : vector<64x8xbf16>, vector<8x128xbf16>, vector<64x128xf32> -> vector<64x128xf32>
    %7 = arith.addf %4, %6 : vector<64x128xf32>
    %c0_6 = arith.constant 0 : index
    %c0_7 = arith.constant 0 : index
    %8 = vector.load %arg7[%c0_6, %c0_7] : memref<64x128xf32, #tpu.memory_space<vmem>>, vector<64x128xf32>
    tpu.vector_store %arg7[%c0_6, %c0_7], %7 {strides = array<i32>} : memref<64x128xf32, #tpu.memory_space<vmem>>, vector<64x128xf32>,
    %c0_i32_8 = arith.constant 0 : i32
    %9 = arith.cmpi eq, %arg2, %c0_i32_8 : i32
    %10 = arith.extui %9 : i1 to i32
    %c0_i32_9 = arith.constant 0 : i32
    %11 = arith.cmpi ne, %10, %c0_i32_9 : i32
    scf.if %11 {
      %c0_10 = arith.constant 0 : index
      %c0_11 = arith.constant 0 : index
      %12 = vector.load %arg7[%c0_10, %c0_11] : memref<64x128xf32, #tpu.memory_space<vmem>>, vector<64x128xf32>
      %c0_12 = arith.constant 0 : index
      %c0_13 = arith.constant 0 : index
      %13 = vector.load %arg5[%c0_12, %c0_13] : memref<1x128xf32, #tpu.memory_space<vmem>>, vector<1x128xf32>
      %14 = vector.broadcast %13 : vector<1x128xf32> to vector<64x128xf32>
      %15 = arith.addf %12, %14 : vector<64x128xf32>
      %c0_14 = arith.constant 0 : index
      %c0_15 = arith.constant 0 : index
      %16 = vector.load %arg6[%c0_14, %c0_15] : memref<64x128xf32, #tpu.memory_space<vmem>>, vector<64x128xf32>
      tpu.vector_store %arg6[%c0_14, %c0_15], %15 {strides = array<i32>} : memref<64x128xf32, #tpu.memory_space<vmem>>, vector<64x128xf32>,
    } else {
    }
    return
  }
  func.func @transform_0(%arg0: i32, %arg1: i32, %arg2: i32) -> (i32, i32) {
    %c0_i32 = arith.constant 0 : i32
    return %arg0, %arg2 : i32, i32
  }
  func.func @transform_1(%arg0: i32, %arg1: i32, %arg2: i32) -> (i32, i32) {
    %c0_i32 = arith.constant 0 : i32
    return %arg2, %arg1 : i32, i32
  }
  func.func @transform_2(%arg0: i32, %arg1: i32, %arg2: i32) -> (i32, i32) {
    %c0_i32 = arith.constant 0 : i32
    %c0_i32_0 = arith.constant 0 : i32
    return %c0_i32, %arg1 : i32, i32
  }
  func.func @transform_3(%arg0: i32, %arg1: i32, %arg2: i32) -> (i32, i32) {
    %c0_i32 = arith.constant 0 : i32
    return %arg0, %arg1 : i32, i32
  }
}

module attributes {stable_mosaic.version = 11 : i64} {
  func.func @_matmul_kernel(%arg0: i32, %arg1: i32, %arg2: i32, %arg3: memref<32x8xbf16, #tpu.memory_space<vmem>>, %arg4: memref<8x128xbf16, #tpu.memory_space<vmem>>, %arg5: memref<1x128xf32, #tpu.memory_space<vmem>>, %arg6: memref<32x128xf32, #tpu.memory_space<vmem>>, %arg7: memref<32x128xf32, #tpu.memory_space<vmem>>) attributes {dimension_semantics = [#tpu.dimension_semantics<parallel>, #tpu.dimension_semantics<parallel>, #tpu.dimension_semantics<arbitrary>], iteration_bounds = array<i64: 1, 1, 1>, scalar_prefetch = 0 : i64, scratch_operands = 1 : i64, tpu.core_type = #tpu.core_type<tc>, window_params = [{transform_indices = @transform_0, window_bounds = array<i64: 32, 8>}, {transform_indices = @transform_1, window_bounds = array<i64: 8, 128>}, {transform_indices = @transform_2, window_bounds = array<i64: 1, 128>}, {transform_indices = @transform_3, window_bounds = array<i64: 32, 128>}]} {
    %c0_i32 = arith.constant 0 : i32
    %0 = arith.cmpi eq, %arg2, %c0_i32 : i32
    %1 = arith.extui %0 : i1 to i32
    %c0_i32_0 = arith.constant 0 : i32
    %2 = arith.cmpi ne, %1, %c0_i32_0 : i32
    scf.if %2 {
      %cst_10 = arith.constant 0.000000e+00 : f32
      %12 = vector.broadcast %cst_10 : f32 to vector<32x128xf32>
      %c0_11 = arith.constant 0 : index
      %c0_12 = arith.constant 0 : index
      %13 = vector.load %arg7[%c0_11, %c0_12] : memref<32x128xf32, #tpu.memory_space<vmem>>, vector<32x128xf32>
      tpu.vector_store %arg7[%c0_11, %c0_12], %12 {strides = array<i32>} : memref<32x128xf32, #tpu.memory_space<vmem>>, vector<32x128xf32>,
    } else {
    }
    %c0 = arith.constant 0 : index
    %c0_1 = arith.constant 0 : index
    %3 = vector.load %arg3[%c0, %c0_1] : memref<32x8xbf16, #tpu.memory_space<vmem>>, vector<32x8xbf16>
    %c0_2 = arith.constant 0 : index
    %c0_3 = arith.constant 0 : index
    %4 = vector.load %arg7[%c0_2, %c0_3] : memref<32x128xf32, #tpu.memory_space<vmem>>, vector<32x128xf32>
    %c0_4 = arith.constant 0 : index
    %c0_5 = arith.constant 0 : index
    %5 = vector.load %arg4[%c0_4, %c0_5] : memref<8x128xbf16, #tpu.memory_space<vmem>>, vector<8x128xbf16>
    %cst = arith.constant dense<0.000000e+00> : vector<32x128xf32>
    %6 = tpu.matmul %3, %5, %cst {dimension_numbers = #tpu.dot_dimension_numbers<[1], [0], [0], [1], [0, 0, 1, 1], [], []>} : vector<32x8xbf16>, vector<8x128xbf16>, vector<32x128xf32> -> vector<32x128xf32>
    %7 = arith.addf %4, %6 : vector<32x128xf32>
    %c0_6 = arith.constant 0 : index
    %c0_7 = arith.constant 0 : index
    %8 = vector.load %arg7[%c0_6, %c0_7] : memref<32x128xf32, #tpu.memory_space<vmem>>, vector<32x128xf32>
    tpu.vector_store %arg7[%c0_6, %c0_7], %7 {strides = array<i32>} : memref<32x128xf32, #tpu.memory_space<vmem>>, vector<32x128xf32>,
    %c0_i32_8 = arith.constant 0 : i32
    %9 = arith.cmpi eq, %arg2, %c0_i32_8 : i32
    %10 = arith.extui %9 : i1 to i32
    %c0_i32_9 = arith.constant 0 : i32
    %11 = arith.cmpi ne, %10, %c0_i32_9 : i32
    scf.if %11 {
      %c0_10 = arith.constant 0 : index
      %c0_11 = arith.constant 0 : index
      %12 = vector.load %arg7[%c0_10, %c0_11] : memref<32x128xf32, #tpu.memory_space<vmem>>, vector<32x128xf32>
      %c0_12 = arith.constant 0 : index
      %c0_13 = arith.constant 0 : index
      %13 = vector.load %arg5[%c0_12, %c0_13] : memref<1x128xf32, #tpu.memory_space<vmem>>, vector<1x128xf32>
      %14 = vector.broadcast %13 : vector<1x128xf32> to vector<32x128xf32>
      %15 = arith.addf %12, %14 : vector<32x128xf32>
      %c0_14 = arith.constant 0 : index
      %c0_15 = arith.constant 0 : index
      %16 = vector.load %arg6[%c0_14, %c0_15] : memref<32x128xf32, #tpu.memory_space<vmem>>, vector<32x128xf32>
      tpu.vector_store %arg6[%c0_14, %c0_15], %15 {strides = array<i32>} : memref<32x128xf32, #tpu.memory_space<vmem>>, vector<32x128xf32>,
    } else {
    }
    return
  }
  func.func @transform_0(%arg0: i32, %arg1: i32, %arg2: i32) -> (i32, i32) {
    %c0_i32 = arith.constant 0 : i32
    return %arg0, %arg2 : i32, i32
  }
  func.func @transform_1(%arg0: i32, %arg1: i32, %arg2: i32) -> (i32, i32) {
    %c0_i32 = arith.constant 0 : i32
    return %arg2, %arg1 : i32, i32
  }
  func.func @transform_2(%arg0: i32, %arg1: i32, %arg2: i32) -> (i32, i32) {
    %c0_i32 = arith.constant 0 : i32
    %c0_i32_0 = arith.constant 0 : i32
    return %c0_i32, %arg1 : i32, i32
  }
  func.func @transform_3(%arg0: i32, %arg1: i32, %arg2: i32) -> (i32, i32) {
    %c0_i32 = arith.constant 0 : i32
    return %arg0, %arg1 : i32, i32
  }
}

module attributes {stable_mosaic.version = 11 : i64} {
  func.func @_matmul_kernel(%arg0: i32, %arg1: i32, %arg2: i32, %arg3: memref<16x24xbf16, #tpu.memory_space<vmem>>, %arg4: memref<24x128xbf16, #tpu.memory_space<vmem>>, %arg5: memref<1x128xf32, #tpu.memory_space<vmem>>, %arg6: memref<16x128xf32, #tpu.memory_space<vmem>>, %arg7: memref<16x128xf32, #tpu.memory_space<vmem>>) attributes {dimension_semantics = [#tpu.dimension_semantics<parallel>, #tpu.dimension_semantics<parallel>, #tpu.dimension_semantics<arbitrary>], iteration_bounds = array<i64: 1, 1, 1>, scalar_prefetch = 0 : i64, scratch_operands = 1 : i64, tpu.core_type = #tpu.core_type<tc>, window_params = [{transform_indices = @transform_0, window_bounds = array<i64: 16, 24>}, {transform_indices = @transform_1, window_bounds = array<i64: 24, 128>}, {transform_indices = @transform_2, window_bounds = array<i64: 1, 128>}, {transform_indices = @transform_3, window_bounds = array<i64: 16, 128>}]} {
    %c0_i32 = arith.constant 0 : i32
    %0 = arith.cmpi eq, %arg2, %c0_i32 : i32
    %1 = arith.extui %0 : i1 to i32
    %c0_i32_0 = arith.constant 0 : i32
    %2 = arith.cmpi ne, %1, %c0_i32_0 : i32
    scf.if %2 {
      %cst_12 = arith.constant 0.000000e+00 : f32
      %17 = vector.broadcast %cst_12 : f32 to vector<16x128xf32>
      %c0_13 = arith.constant 0 : index
      %c0_14 = arith.constant 0 : index
      %18 = vector.load %arg7[%c0_13, %c0_14] : memref<16x128xf32, #tpu.memory_space<vmem>>, vector<16x128xf32>
      tpu.vector_store %arg7[%c0_13, %c0_14], %17 {strides = array<i32>} : memref<16x128xf32, #tpu.memory_space<vmem>>, vector<16x128xf32>,
    } else {
    }
    %c0 = arith.constant 0 : index
    %c0_1 = arith.constant 0 : index
    %3 = vector.load %arg3[%c0, %c0_1] : memref<16x24xbf16, #tpu.memory_space<vmem>>, vector<16x24xbf16>
    %cst = arith.constant 0.000000e+00 : bf16
    %4 = vector.broadcast %cst : bf16 to vector<16x24xbf16>
    %5 = arith.cmpf oge, %3, %4 : vector<16x24xbf16>
    %cst_2 = arith.constant 2.001950e-01 : bf16
    %6 = vector.broadcast %cst_2 : bf16 to vector<16x24xbf16>
    %7 = arith.mulf %6, %3 : vector<16x24xbf16>
    %8 = arith.select %5, %3, %7 : vector<16x24xi1>, vector<16x24xbf16>
    %c0_3 = arith.constant 0 : index
    %c0_4 = arith.constant 0 : index
    %9 = vector.load %arg7[%c0_3, %c0_4] : memref<16x128xf32, #tpu.memory_space<vmem>>, vector<16x128xf32>
    %c0_5 = arith.constant 0 : index
    %c0_6 = arith.constant 0 : index
    %10 = vector.load %arg4[%c0_5, %c0_6] : memref<24x128xbf16, #tpu.memory_space<vmem>>, vector<24x128xbf16>
    %cst_7 = arith.constant dense<0.000000e+00> : vector<16x128xf32>
    %11 = tpu.matmul %8, %10, %cst_7 {dimension_numbers = #tpu.dot_dimension_numbers<[1], [0], [0], [1], [0, 0, 1, 1], [], []>} : vector<16x24xbf16>, vector<24x128xbf16>, vector<16x128xf32> -> vector<16x128xf32>
    %12 = arith.addf %9, %11 : vector<16x128xf32>
    %c0_8 = arith.constant 0 : index
    %c0_9 = arith.constant 0 : index
    %13 = vector.load %arg7[%c0_8, %c0_9] : memref<16x128xf32, #tpu.memory_space<vmem>>, vector<16x128xf32>
    tpu.vector_store %arg7[%c0_8, %c0_9], %12 {strides = array<i32>} : memref<16x128xf32, #tpu.memory_space<vmem>>, vector<16x128xf32>,
    %c0_i32_10 = arith.constant 0 : i32
    %14 = arith.cmpi eq, %arg2, %c0_i32_10 : i32
    %15 = arith.extui %14 : i1 to i32
    %c0_i32_11 = arith.constant 0 : i32
    %16 = arith.cmpi ne, %15, %c0_i32_11 : i32
    scf.if %16 {
      %c0_12 = arith.constant 0 : index
      %c0_13 = arith.constant 0 : index
      %17 = vector.load %arg7[%c0_12, %c0_13] : memref<16x128xf32, #tpu.memory_space<vmem>>, vector<16x128xf32>
      %c0_14 = arith.constant 0 : index
      %c0_15 = arith.constant 0 : index
      %18 = vector.load %arg5[%c0_14, %c0_15] : memref<1x128xf32, #tpu.memory_space<vmem>>, vector<1x128xf32>
      %19 = vector.broadcast %18 : vector<1x128xf32> to vector<16x128xf32>
      %20 = arith.addf %17, %19 : vector<16x128xf32>
      %c0_16 = arith.constant 0 : index
      %c0_17 = arith.constant 0 : index
      %21 = vector.load %arg6[%c0_16, %c0_17] : memref<16x128xf32, #tpu.memory_space<vmem>>, vector<16x128xf32>
      tpu.vector_store %arg6[%c0_16, %c0_17], %20 {strides = array<i32>} : memref<16x128xf32, #tpu.memory_space<vmem>>, vector<16x128xf32>,
    } else {
    }
    return
  }
  func.func @transform_0(%arg0: i32, %arg1: i32, %arg2: i32) -> (i32, i32) {
    %c0_i32 = arith.constant 0 : i32
    return %arg0, %arg2 : i32, i32
  }
  func.func @transform_1(%arg0: i32, %arg1: i32, %arg2: i32) -> (i32, i32) {
    %c0_i32 = arith.constant 0 : i32
    return %arg2, %arg1 : i32, i32
  }
  func.func @transform_2(%arg0: i32, %arg1: i32, %arg2: i32) -> (i32, i32) {
    %c0_i32 = arith.constant 0 : i32
    %c0_i32_0 = arith.constant 0 : i32
    return %c0_i32, %arg1 : i32, i32
  }
  func.func @transform_3(%arg0: i32, %arg1: i32, %arg2: i32) -> (i32, i32) {
    %c0_i32 = arith.constant 0 : i32
    return %arg0, %arg1 : i32, i32
  }
}

module attributes {stable_mosaic.version = 11 : i64} {
  func.func @_matmul_kernel(%arg0: i32, %arg1: i32, %arg2: i32, %arg3: memref<32x32xbf16, #tpu.memory_space<vmem>>, %arg4: memref<32x128xbf16, #tpu.memory_space<vmem>>, %arg5: memref<1x128xf32, #tpu.memory_space<vmem>>, %arg6: memref<32x128xf32, #tpu.memory_space<vmem>>, %arg7: memref<32x128xf32, #tpu.memory_space<vmem>>) attributes {dimension_semantics = [#tpu.dimension_semantics<parallel>, #tpu.dimension_semantics<parallel>, #tpu.dimension_semantics<arbitrary>], iteration_bounds = array<i64: 1, 1, 1>, scalar_prefetch = 0 : i64, scratch_operands = 1 : i64, tpu.core_type = #tpu.core_type<tc>, window_params = [{transform_indices = @transform_0, window_bounds = array<i64: 32, 32>}, {transform_indices = @transform_1, window_bounds = array<i64: 32, 128>}, {transform_indices = @transform_2, window_bounds = array<i64: 1, 128>}, {transform_indices = @transform_3, window_bounds = array<i64: 32, 128>}]} {
    %c0_i32 = arith.constant 0 : i32
    %0 = arith.cmpi eq, %arg2, %c0_i32 : i32
    %1 = arith.extui %0 : i1 to i32
    %c0_i32_0 = arith.constant 0 : i32
    %2 = arith.cmpi ne, %1, %c0_i32_0 : i32
    scf.if %2 {
      %cst_12 = arith.constant 0.000000e+00 : f32
      %17 = vector.broadcast %cst_12 : f32 to vector<32x128xf32>
      %c0_13 = arith.constant 0 : index
      %c0_14 = arith.constant 0 : index
      %18 = vector.load %arg7[%c0_13, %c0_14] : memref<32x128xf32, #tpu.memory_space<vmem>>, vector<32x128xf32>
      tpu.vector_store %arg7[%c0_13, %c0_14], %17 {strides = array<i32>} : memref<32x128xf32, #tpu.memory_space<vmem>>, vector<32x128xf32>,
    } else {
    }
    %c0 = arith.constant 0 : index
    %c0_1 = arith.constant 0 : index
    %3 = vector.load %arg3[%c0, %c0_1] : memref<32x32xbf16, #tpu.memory_space<vmem>>, vector<32x32xbf16>
    %cst = arith.constant 0.000000e+00 : bf16
    %4 = vector.broadcast %cst : bf16 to vector<32x32xbf16>
    %5 = arith.cmpf oge, %3, %4 : vector<32x32xbf16>
    %cst_2 = arith.constant 2.001950e-01 : bf16
    %6 = vector.broadcast %cst_2 : bf16 to vector<32x32xbf16>
    %7 = arith.mulf %6, %3 : vector<32x32xbf16>
    %8 = arith.select %5, %3, %7 : vector<32x32xi1>, vector<32x32xbf16>
    %c0_3 = arith.constant 0 : index
    %c0_4 = arith.constant 0 : index
    %9 = vector.load %arg7[%c0_3, %c0_4] : memref<32x128xf32, #tpu.memory_space<vmem>>, vector<32x128xf32>
    %c0_5 = arith.constant 0 : index
    %c0_6 = arith.constant 0 : index
    %10 = vector.load %arg4[%c0_5, %c0_6] : memref<32x128xbf16, #tpu.memory_space<vmem>>, vector<32x128xbf16>
    %cst_7 = arith.constant dense<0.000000e+00> : vector<32x128xf32>
    %11 = tpu.matmul %8, %10, %cst_7 {dimension_numbers = #tpu.dot_dimension_numbers<[1], [0], [0], [1], [0, 0, 1, 1], [], []>} : vector<32x32xbf16>, vector<32x128xbf16>, vector<32x128xf32> -> vector<32x128xf32>
    %12 = arith.addf %9, %11 : vector<32x128xf32>
    %c0_8 = arith.constant 0 : index
    %c0_9 = arith.constant 0 : index
    %13 = vector.load %arg7[%c0_8, %c0_9] : memref<32x128xf32, #tpu.memory_space<vmem>>, vector<32x128xf32>
    tpu.vector_store %arg7[%c0_8, %c0_9], %12 {strides = array<i32>} : memref<32x128xf32, #tpu.memory_space<vmem>>, vector<32x128xf32>,
    %c0_i32_10 = arith.constant 0 : i32
    %14 = arith.cmpi eq, %arg2, %c0_i32_10 : i32
    %15 = arith.extui %14 : i1 to i32
    %c0_i32_11 = arith.constant 0 : i32
    %16 = arith.cmpi ne, %15, %c0_i32_11 : i32
    scf.if %16 {
      %c0_12 = arith.constant 0 : index
      %c0_13 = arith.constant 0 : index
      %17 = vector.load %arg7[%c0_12, %c0_13] : memref<32x128xf32, #tpu.memory_space<vmem>>, vector<32x128xf32>
      %c0_14 = arith.constant 0 : index
      %c0_15 = arith.constant 0 : index
      %18 = vector.load %arg5[%c0_14, %c0_15] : memref<1x128xf32, #tpu.memory_space<vmem>>, vector<1x128xf32>
      %19 = vector.broadcast %18 : vector<1x128xf32> to vector<32x128xf32>
      %20 = arith.addf %17, %19 : vector<32x128xf32>
      %c0_16 = arith.constant 0 : index
      %c0_17 = arith.constant 0 : index
      %21 = vector.load %arg6[%c0_16, %c0_17] : memref<32x128xf32, #tpu.memory_space<vmem>>, vector<32x128xf32>
      tpu.vector_store %arg6[%c0_16, %c0_17], %20 {strides = array<i32>} : memref<32x128xf32, #tpu.memory_space<vmem>>, vector<32x128xf32>,
    } else {
    }
    return
  }
  func.func @transform_0(%arg0: i32, %arg1: i32, %arg2: i32) -> (i32, i32) {
    %c0_i32 = arith.constant 0 : i32
    return %arg0, %arg2 : i32, i32
  }
  func.func @transform_1(%arg0: i32, %arg1: i32, %arg2: i32) -> (i32, i32) {
    %c0_i32 = arith.constant 0 : i32
    return %arg2, %arg1 : i32, i32
  }
  func.func @transform_2(%arg0: i32, %arg1: i32, %arg2: i32) -> (i32, i32) {
    %c0_i32 = arith.constant 0 : i32
    %c0_i32_0 = arith.constant 0 : i32
    return %c0_i32, %arg1 : i32, i32
  }
  func.func @transform_3(%arg0: i32, %arg1: i32, %arg2: i32) -> (i32, i32) {
    %c0_i32 = arith.constant 0 : i32
    return %arg0, %arg1 : i32, i32
  }
}

module attributes {stable_mosaic.version = 11 : i64} {
  func.func @_matmul_kernel(%arg0: i32, %arg1: i32, %arg2: i32, %arg3: memref<32x24xbf16, #tpu.memory_space<vmem>>, %arg4: memref<24x128xbf16, #tpu.memory_space<vmem>>, %arg5: memref<1x128xf32, #tpu.memory_space<vmem>>, %arg6: memref<32x128xf32, #tpu.memory_space<vmem>>, %arg7: memref<32x128xf32, #tpu.memory_space<vmem>>) attributes {dimension_semantics = [#tpu.dimension_semantics<parallel>, #tpu.dimension_semantics<parallel>, #tpu.dimension_semantics<arbitrary>], iteration_bounds = array<i64: 1, 1, 1>, scalar_prefetch = 0 : i64, scratch_operands = 1 : i64, tpu.core_type = #tpu.core_type<tc>, window_params = [{transform_indices = @transform_0, window_bounds = array<i64: 32, 24>}, {transform_indices = @transform_1, window_bounds = array<i64: 24, 128>}, {transform_indices = @transform_2, window_bounds = array<i64: 1, 128>}, {transform_indices = @transform_3, window_bounds = array<i64: 32, 128>}]} {
    %c0_i32 = arith.constant 0 : i32
    %0 = arith.cmpi eq, %arg2, %c0_i32 : i32
    %1 = arith.extui %0 : i1 to i32
    %c0_i32_0 = arith.constant 0 : i32
    %2 = arith.cmpi ne, %1, %c0_i32_0 : i32
    scf.if %2 {
      %cst_12 = arith.constant 0.000000e+00 : f32
      %17 = vector.broadcast %cst_12 : f32 to vector<32x128xf32>
      %c0_13 = arith.constant 0 : index
      %c0_14 = arith.constant 0 : index
      %18 = vector.load %arg7[%c0_13, %c0_14] : memref<32x128xf32, #tpu.memory_space<vmem>>, vector<32x128xf32>
      tpu.vector_store %arg7[%c0_13, %c0_14], %17 {strides = array<i32>} : memref<32x128xf32, #tpu.memory_space<vmem>>, vector<32x128xf32>,
    } else {
    }
    %c0 = arith.constant 0 : index
    %c0_1 = arith.constant 0 : index
    %3 = vector.load %arg3[%c0, %c0_1] : memref<32x24xbf16, #tpu.memory_space<vmem>>, vector<32x24xbf16>
    %cst = arith.constant 0.000000e+00 : bf16
    %4 = vector.broadcast %cst : bf16 to vector<32x24xbf16>
    %5 = arith.cmpf oge, %3, %4 : vector<32x24xbf16>
    %cst_2 = arith.constant 2.001950e-01 : bf16
    %6 = vector.broadcast %cst_2 : bf16 to vector<32x24xbf16>
    %7 = arith.mulf %6, %3 : vector<32x24xbf16>
    %8 = arith.select %5, %3, %7 : vector<32x24xi1>, vector<32x24xbf16>
    %c0_3 = arith.constant 0 : index
    %c0_4 = arith.constant 0 : index
    %9 = vector.load %arg7[%c0_3, %c0_4] : memref<32x128xf32, #tpu.memory_space<vmem>>, vector<32x128xf32>
    %c0_5 = arith.constant 0 : index
    %c0_6 = arith.constant 0 : index
    %10 = vector.load %arg4[%c0_5, %c0_6] : memref<24x128xbf16, #tpu.memory_space<vmem>>, vector<24x128xbf16>
    %cst_7 = arith.constant dense<0.000000e+00> : vector<32x128xf32>
    %11 = tpu.matmul %8, %10, %cst_7 {dimension_numbers = #tpu.dot_dimension_numbers<[1], [0], [0], [1], [0, 0, 1, 1], [], []>} : vector<32x24xbf16>, vector<24x128xbf16>, vector<32x128xf32> -> vector<32x128xf32>
    %12 = arith.addf %9, %11 : vector<32x128xf32>
    %c0_8 = arith.constant 0 : index
    %c0_9 = arith.constant 0 : index
    %13 = vector.load %arg7[%c0_8, %c0_9] : memref<32x128xf32, #tpu.memory_space<vmem>>, vector<32x128xf32>
    tpu.vector_store %arg7[%c0_8, %c0_9], %12 {strides = array<i32>} : memref<32x128xf32, #tpu.memory_space<vmem>>, vector<32x128xf32>,
    %c0_i32_10 = arith.constant 0 : i32
    %14 = arith.cmpi eq, %arg2, %c0_i32_10 : i32
    %15 = arith.extui %14 : i1 to i32
    %c0_i32_11 = arith.constant 0 : i32
    %16 = arith.cmpi ne, %15, %c0_i32_11 : i32
    scf.if %16 {
      %c0_12 = arith.constant 0 : index
      %c0_13 = arith.constant 0 : index
      %17 = vector.load %arg7[%c0_12, %c0_13] : memref<32x128xf32, #tpu.memory_space<vmem>>, vector<32x128xf32>
      %c0_14 = arith.constant 0 : index
      %c0_15 = arith.constant 0 : index
      %18 = vector.load %arg5[%c0_14, %c0_15] : memref<1x128xf32, #tpu.memory_space<vmem>>, vector<1x128xf32>
      %19 = vector.broadcast %18 : vector<1x128xf32> to vector<32x128xf32>
      %20 = arith.addf %17, %19 : vector<32x128xf32>
      %cst_16 = arith.constant 0.000000e+00 : f32
      %21 = vector.broadcast %cst_16 : f32 to vector<32x128xf32>
      %22 = arith.cmpf oge, %20, %21 : vector<32x128xf32>
      %cst_17 = arith.constant 2.000000e-01 : f32
      %23 = vector.broadcast %cst_17 : f32 to vector<32x128xf32>
      %24 = arith.mulf %23, %20 : vector<32x128xf32>
      %25 = arith.select %22, %20, %24 : vector<32x128xi1>, vector<32x128xf32>
      %c0_18 = arith.constant 0 : index
      %c0_19 = arith.constant 0 : index
      %26 = vector.load %arg6[%c0_18, %c0_19] : memref<32x128xf32, #tpu.memory_space<vmem>>, vector<32x128xf32>
      tpu.vector_store %arg6[%c0_18, %c0_19], %25 {strides = array<i32>} : memref<32x128xf32, #tpu.memory_space<vmem>>, vector<32x128xf32>,
    } else {
    }
    return
  }
  func.func @transform_0(%arg0: i32, %arg1: i32, %arg2: i32) -> (i32, i32) {
    %c0_i32 = arith.constant 0 : i32
    return %arg0, %arg2 : i32, i32
  }
  func.func @transform_1(%arg0: i32, %arg1: i32, %arg2: i32) -> (i32, i32) {
    %c0_i32 = arith.constant 0 : i32
    return %arg2, %arg1 : i32, i32
  }
  func.func @transform_2(%arg0: i32, %arg1: i32, %arg2: i32) -> (i32, i32) {
    %c0_i32 = arith.constant 0 : i32
    %c0_i32_0 = arith.constant 0 : i32
    return %c0_i32, %arg1 : i32, i32
  }
  func.func @transform_3(%arg0: i32, %arg1: i32, %arg2: i32) -> (i32, i32) {
    %c0_i32 = arith.constant 0 : i32
    return %arg0, %arg1 : i32, i32
  }
}

module attributes {stable_mosaic.version = 11 : i64} {
  func.func @_matmul_kernel(%arg0: i32, %arg1: i32, %arg2: i32, %arg3: memref<16x80xbf16, #tpu.memory_space<vmem>>, %arg4: memref<80x128xbf16, #tpu.memory_space<vmem>>, %arg5: memref<1x128xf32, #tpu.memory_space<vmem>>, %arg6: memref<16x128xf32, #tpu.memory_space<vmem>>, %arg7: memref<16x128xf32, #tpu.memory_space<vmem>>) attributes {dimension_semantics = [#tpu.dimension_semantics<parallel>, #tpu.dimension_semantics<parallel>, #tpu.dimension_semantics<arbitrary>], iteration_bounds = array<i64: 1, 1, 1>, scalar_prefetch = 0 : i64, scratch_operands = 1 : i64, tpu.core_type = #tpu.core_type<tc>, window_params = [{transform_indices = @transform_0, window_bounds = array<i64: 16, 80>}, {transform_indices = @transform_1, window_bounds = array<i64: 80, 128>}, {transform_indices = @transform_2, window_bounds = array<i64: 1, 128>}, {transform_indices = @transform_3, window_bounds = array<i64: 16, 128>}]} {
    %c0_i32 = arith.constant 0 : i32
    %0 = arith.cmpi eq, %arg2, %c0_i32 : i32
    %1 = arith.extui %0 : i1 to i32
    %c0_i32_0 = arith.constant 0 : i32
    %2 = arith.cmpi ne, %1, %c0_i32_0 : i32
    scf.if %2 {
      %cst_10 = arith.constant 0.000000e+00 : f32
      %12 = vector.broadcast %cst_10 : f32 to vector<16x128xf32>
      %c0_11 = arith.constant 0 : index
      %c0_12 = arith.constant 0 : index
      %13 = vector.load %arg7[%c0_11, %c0_12] : memref<16x128xf32, #tpu.memory_space<vmem>>, vector<16x128xf32>
      tpu.vector_store %arg7[%c0_11, %c0_12], %12 {strides = array<i32>} : memref<16x128xf32, #tpu.memory_space<vmem>>, vector<16x128xf32>,
    } else {
    }
    %c0 = arith.constant 0 : index
    %c0_1 = arith.constant 0 : index
    %3 = vector.load %arg3[%c0, %c0_1] : memref<16x80xbf16, #tpu.memory_space<vmem>>, vector<16x80xbf16>
    %c0_2 = arith.constant 0 : index
    %c0_3 = arith.constant 0 : index
    %4 = vector.load %arg7[%c0_2, %c0_3] : memref<16x128xf32, #tpu.memory_space<vmem>>, vector<16x128xf32>
    %c0_4 = arith.constant 0 : index
    %c0_5 = arith.constant 0 : index
    %5 = vector.load %arg4[%c0_4, %c0_5] : memref<80x128xbf16, #tpu.memory_space<vmem>>, vector<80x128xbf16>
    %cst = arith.constant dense<0.000000e+00> : vector<16x128xf32>
    %6 = tpu.matmul %3, %5, %cst {dimension_numbers = #tpu.dot_dimension_numbers<[1], [0], [0], [1], [0, 0, 1, 1], [], []>} : vector<16x80xbf16>, vector<80x128xbf16>, vector<16x128xf32> -> vector<16x128xf32>
    %7 = arith.addf %4, %6 : vector<16x128xf32>
    %c0_6 = arith.constant 0 : index
    %c0_7 = arith.constant 0 : index
    %8 = vector.load %arg7[%c0_6, %c0_7] : memref<16x128xf32, #tpu.memory_space<vmem>>, vector<16x128xf32>
    tpu.vector_store %arg7[%c0_6, %c0_7], %7 {strides = array<i32>} : memref<16x128xf32, #tpu.memory_space<vmem>>, vector<16x128xf32>,
    %c0_i32_8 = arith.constant 0 : i32
    %9 = arith.cmpi eq, %arg2, %c0_i32_8 : i32
    %10 = arith.extui %9 : i1 to i32
    %c0_i32_9 = arith.constant 0 : i32
    %11 = arith.cmpi ne, %10, %c0_i32_9 : i32
    scf.if %11 {
      %c0_10 = arith.constant 0 : index
      %c0_11 = arith.constant 0 : index
      %12 = vector.load %arg7[%c0_10, %c0_11] : memref<16x128xf32, #tpu.memory_space<vmem>>, vector<16x128xf32>
      %c0_12 = arith.constant 0 : index
      %c0_13 = arith.constant 0 : index
      %13 = vector.load %arg5[%c0_12, %c0_13] : memref<1x128xf32, #tpu.memory_space<vmem>>, vector<1x128xf32>
      %14 = vector.broadcast %13 : vector<1x128xf32> to vector<16x128xf32>
      %15 = arith.addf %12, %14 : vector<16x128xf32>
      %cst_14 = arith.constant 0.000000e+00 : f32
      %16 = vector.broadcast %cst_14 : f32 to vector<16x128xf32>
      %17 = arith.cmpf oge, %15, %16 : vector<16x128xf32>
      %cst_15 = arith.constant 1.000000e-01 : f32
      %18 = vector.broadcast %cst_15 : f32 to vector<16x128xf32>
      %19 = arith.mulf %18, %15 : vector<16x128xf32>
      %20 = arith.select %17, %15, %19 : vector<16x128xi1>, vector<16x128xf32>
      %c0_16 = arith.constant 0 : index
      %c0_17 = arith.constant 0 : index
      %21 = vector.load %arg6[%c0_16, %c0_17] : memref<16x128xf32, #tpu.memory_space<vmem>>, vector<16x128xf32>
      tpu.vector_store %arg6[%c0_16, %c0_17], %20 {strides = array<i32>} : memref<16x128xf32, #tpu.memory_space<vmem>>, vector<16x128xf32>,
    } else {
    }
    return
  }
  func.func @transform_0(%arg0: i32, %arg1: i32, %arg2: i32) -> (i32, i32) {
    %c0_i32 = arith.constant 0 : i32
    return %arg0, %arg2 : i32, i32
  }
  func.func @transform_1(%arg0: i32, %arg1: i32, %arg2: i32) -> (i32, i32) {
    %c0_i32 = arith.constant 0 : i32
    return %arg2, %arg1 : i32, i32
  }
  func.func @transform_2(%arg0: i32, %arg1: i32, %arg2: i32) -> (i32, i32) {
    %c0_i32 = arith.constant 0 : i32
    %c0_i32_0 = arith.constant 0 : i32
    return %c0_i32, %arg1 : i32, i32
  }
  func.func @transform_3(%arg0: i32, %arg1: i32, %arg2: i32) -> (i32, i32) {
    %c0_i32 = arith.constant 0 : i32
    return %arg0, %arg1 : i32, i32
  }
}

module attributes {stable_mosaic.version = 11 : i64} {
  func.func @_matmul_kernel(%arg0: i32, %arg1: i32, %arg2: i32, %arg3: memref<16x48xbf16, #tpu.memory_space<vmem>>, %arg4: memref<48x128xbf16, #tpu.memory_space<vmem>>, %arg5: memref<1x128xf32, #tpu.memory_space<vmem>>, %arg6: memref<16x128xf32, #tpu.memory_space<vmem>>, %arg7: memref<16x128xf32, #tpu.memory_space<vmem>>) attributes {dimension_semantics = [#tpu.dimension_semantics<parallel>, #tpu.dimension_semantics<parallel>, #tpu.dimension_semantics<arbitrary>], iteration_bounds = array<i64: 1, 1, 1>, scalar_prefetch = 0 : i64, scratch_operands = 1 : i64, tpu.core_type = #tpu.core_type<tc>, window_params = [{transform_indices = @transform_0, window_bounds = array<i64: 16, 48>}, {transform_indices = @transform_1, window_bounds = array<i64: 48, 128>}, {transform_indices = @transform_2, window_bounds = array<i64: 1, 128>}, {transform_indices = @transform_3, window_bounds = array<i64: 16, 128>}]} {
    %c0_i32 = arith.constant 0 : i32
    %0 = arith.cmpi eq, %arg2, %c0_i32 : i32
    %1 = arith.extui %0 : i1 to i32
    %c0_i32_0 = arith.constant 0 : i32
    %2 = arith.cmpi ne, %1, %c0_i32_0 : i32
    scf.if %2 {
      %cst_10 = arith.constant 0.000000e+00 : f32
      %12 = vector.broadcast %cst_10 : f32 to vector<16x128xf32>
      %c0_11 = arith.constant 0 : index
      %c0_12 = arith.constant 0 : index
      %13 = vector.load %arg7[%c0_11, %c0_12] : memref<16x128xf32, #tpu.memory_space<vmem>>, vector<16x128xf32>
      tpu.vector_store %arg7[%c0_11, %c0_12], %12 {strides = array<i32>} : memref<16x128xf32, #tpu.memory_space<vmem>>, vector<16x128xf32>,
    } else {
    }
    %c0 = arith.constant 0 : index
    %c0_1 = arith.constant 0 : index
    %3 = vector.load %arg3[%c0, %c0_1] : memref<16x48xbf16, #tpu.memory_space<vmem>>, vector<16x48xbf16>
    %c0_2 = arith.constant 0 : index
    %c0_3 = arith.constant 0 : index
    %4 = vector.load %arg7[%c0_2, %c0_3] : memref<16x128xf32, #tpu.memory_space<vmem>>, vector<16x128xf32>
    %c0_4 = arith.constant 0 : index
    %c0_5 = arith.constant 0 : index
    %5 = vector.load %arg4[%c0_4, %c0_5] : memref<48x128xbf16, #tpu.memory_space<vmem>>, vector<48x128xbf16>
    %cst = arith.constant dense<0.000000e+00> : vector<16x128xf32>
    %6 = tpu.matmul %3, %5, %cst {dimension_numbers = #tpu.dot_dimension_numbers<[1], [0], [0], [1], [0, 0, 1, 1], [], []>} : vector<16x48xbf16>, vector<48x128xbf16>, vector<16x128xf32> -> vector<16x128xf32>
    %7 = arith.addf %4, %6 : vector<16x128xf32>
    %c0_6 = arith.constant 0 : index
    %c0_7 = arith.constant 0 : index
    %8 = vector.load %arg7[%c0_6, %c0_7] : memref<16x128xf32, #tpu.memory_space<vmem>>, vector<16x128xf32>
    tpu.vector_store %arg7[%c0_6, %c0_7], %7 {strides = array<i32>} : memref<16x128xf32, #tpu.memory_space<vmem>>, vector<16x128xf32>,
    %c0_i32_8 = arith.constant 0 : i32
    %9 = arith.cmpi eq, %arg2, %c0_i32_8 : i32
    %10 = arith.extui %9 : i1 to i32
    %c0_i32_9 = arith.constant 0 : i32
    %11 = arith.cmpi ne, %10, %c0_i32_9 : i32
    scf.if %11 {
      %c0_10 = arith.constant 0 : index
      %c0_11 = arith.constant 0 : index
      %12 = vector.load %arg7[%c0_10, %c0_11] : memref<16x128xf32, #tpu.memory_space<vmem>>, vector<16x128xf32>
      %c0_12 = arith.constant 0 : index
      %c0_13 = arith.constant 0 : index
      %13 = vector.load %arg5[%c0_12, %c0_13] : memref<1x128xf32, #tpu.memory_space<vmem>>, vector<1x128xf32>
      %14 = vector.broadcast %13 : vector<1x128xf32> to vector<16x128xf32>
      %15 = arith.addf %12, %14 : vector<16x128xf32>
      %cst_14 = arith.constant 0.000000e+00 : f32
      %16 = vector.broadcast %cst_14 : f32 to vector<16x128xf32>
      %17 = arith.cmpf oge, %15, %16 : vector<16x128xf32>
      %cst_15 = arith.constant 1.000000e-01 : f32
      %18 = vector.broadcast %cst_15 : f32 to vector<16x128xf32>
      %19 = arith.mulf %18, %15 : vector<16x128xf32>
      %20 = arith.select %17, %15, %19 : vector<16x128xi1>, vector<16x128xf32>
      %c0_16 = arith.constant 0 : index
      %c0_17 = arith.constant 0 : index
      %21 = vector.load %arg6[%c0_16, %c0_17] : memref<16x128xf32, #tpu.memory_space<vmem>>, vector<16x128xf32>
      tpu.vector_store %arg6[%c0_16, %c0_17], %20 {strides = array<i32>} : memref<16x128xf32, #tpu.memory_space<vmem>>, vector<16x128xf32>,
    } else {
    }
    return
  }
  func.func @transform_0(%arg0: i32, %arg1: i32, %arg2: i32) -> (i32, i32) {
    %c0_i32 = arith.constant 0 : i32
    return %arg0, %arg2 : i32, i32
  }
  func.func @transform_1(%arg0: i32, %arg1: i32, %arg2: i32) -> (i32, i32) {
    %c0_i32 = arith.constant 0 : i32
    return %arg2, %arg1 : i32, i32
  }
  func.func @transform_2(%arg0: i32, %arg1: i32, %arg2: i32) -> (i32, i32) {
    %c0_i32 = arith.constant 0 : i32
    %c0_i32_0 = arith.constant 0 : i32
    return %c0_i32, %arg1 : i32, i32
  }
  func.func @transform_3(%arg0: i32, %arg1: i32, %arg2: i32) -> (i32, i32) {
    %c0_i32 = arith.constant 0 : i32
    return %arg0, %arg1 : i32, i32
  }
}

module attributes {stable_mosaic.version = 11 : i64} {
  func.func @_matmul_kernel(%arg0: i32, %arg1: i32, %arg2: i32, %arg3: memref<16x48xbf16, #tpu.memory_space<vmem>>, %arg4: memref<48x256xbf16, #tpu.memory_space<vmem>>, %arg5: memref<1x256xf32, #tpu.memory_space<vmem>>, %arg6: memref<16x256xf32, #tpu.memory_space<vmem>>, %arg7: memref<16x256xf32, #tpu.memory_space<vmem>>) attributes {dimension_semantics = [#tpu.dimension_semantics<parallel>, #tpu.dimension_semantics<parallel>, #tpu.dimension_semantics<arbitrary>], iteration_bounds = array<i64: 1, 3, 1>, scalar_prefetch = 0 : i64, scratch_operands = 1 : i64, tpu.core_type = #tpu.core_type<tc>, window_params = [{transform_indices = @transform_0, window_bounds = array<i64: 16, 48>}, {transform_indices = @transform_1, window_bounds = array<i64: 48, 256>}, {transform_indices = @transform_2, window_bounds = array<i64: 1, 256>}, {transform_indices = @transform_3, window_bounds = array<i64: 16, 256>}]} {
    %c0_i32 = arith.constant 0 : i32
    %0 = arith.cmpi eq, %arg2, %c0_i32 : i32
    %1 = arith.extui %0 : i1 to i32
    %c0_i32_0 = arith.constant 0 : i32
    %2 = arith.cmpi ne, %1, %c0_i32_0 : i32
    scf.if %2 {
      %cst_10 = arith.constant 0.000000e+00 : f32
      %12 = vector.broadcast %cst_10 : f32 to vector<16x256xf32>
      %c0_11 = arith.constant 0 : index
      %c0_12 = arith.constant 0 : index
      %13 = vector.load %arg7[%c0_11, %c0_12] : memref<16x256xf32, #tpu.memory_space<vmem>>, vector<16x256xf32>
      tpu.vector_store %arg7[%c0_11, %c0_12], %12 {strides = array<i32>} : memref<16x256xf32, #tpu.memory_space<vmem>>, vector<16x256xf32>,
    } else {
    }
    %c0 = arith.constant 0 : index
    %c0_1 = arith.constant 0 : index
    %3 = vector.load %arg3[%c0, %c0_1] : memref<16x48xbf16, #tpu.memory_space<vmem>>, vector<16x48xbf16>
    %c0_2 = arith.constant 0 : index
    %c0_3 = arith.constant 0 : index
    %4 = vector.load %arg7[%c0_2, %c0_3] : memref<16x256xf32, #tpu.memory_space<vmem>>, vector<16x256xf32>
    %c0_4 = arith.constant 0 : index
    %c0_5 = arith.constant 0 : index
    %5 = vector.load %arg4[%c0_4, %c0_5] : memref<48x256xbf16, #tpu.memory_space<vmem>>, vector<48x256xbf16>
    %cst = arith.constant dense<0.000000e+00> : vector<16x256xf32>
    %6 = tpu.matmul %3, %5, %cst {dimension_numbers = #tpu.dot_dimension_numbers<[1], [0], [0], [1], [0, 0, 1, 1], [], []>} : vector<16x48xbf16>, vector<48x256xbf16>, vector<16x256xf32> -> vector<16x256xf32>
    %7 = arith.addf %4, %6 : vector<16x256xf32>
    %c0_6 = arith.constant 0 : index
    %c0_7 = arith.constant 0 : index
    %8 = vector.load %arg7[%c0_6, %c0_7] : memref<16x256xf32, #tpu.memory_space<vmem>>, vector<16x256xf32>
    tpu.vector_store %arg7[%c0_6, %c0_7], %7 {strides = array<i32>} : memref<16x256xf32, #tpu.memory_space<vmem>>, vector<16x256xf32>,
    %c0_i32_8 = arith.constant 0 : i32
    %9 = arith.cmpi eq, %arg2, %c0_i32_8 : i32
    %10 = arith.extui %9 : i1 to i32
    %c0_i32_9 = arith.constant 0 : i32
    %11 = arith.cmpi ne, %10, %c0_i32_9 : i32
    scf.if %11 {
      %c0_10 = arith.constant 0 : index
      %c0_11 = arith.constant 0 : index
      %12 = vector.load %arg7[%c0_10, %c0_11] : memref<16x256xf32, #tpu.memory_space<vmem>>, vector<16x256xf32>
      %c0_12 = arith.constant 0 : index
      %c0_13 = arith.constant 0 : index
      %13 = vector.load %arg5[%c0_12, %c0_13] : memref<1x256xf32, #tpu.memory_space<vmem>>, vector<1x256xf32>
      %14 = vector.broadcast %13 : vector<1x256xf32> to vector<16x256xf32>
      %15 = arith.addf %12, %14 : vector<16x256xf32>
      %c0_14 = arith.constant 0 : index
      %c0_15 = arith.constant 0 : index
      %16 = vector.load %arg6[%c0_14, %c0_15] : memref<16x256xf32, #tpu.memory_space<vmem>>, vector<16x256xf32>
      tpu.vector_store %arg6[%c0_14, %c0_15], %15 {strides = array<i32>} : memref<16x256xf32, #tpu.memory_space<vmem>>, vector<16x256xf32>,
    } else {
    }
    return
  }
  func.func @transform_0(%arg0: i32, %arg1: i32, %arg2: i32) -> (i32, i32) {
    %c0_i32 = arith.constant 0 : i32
    return %arg0, %arg2 : i32, i32
  }
  func.func @transform_1(%arg0: i32, %arg1: i32, %arg2: i32) -> (i32, i32) {
    %c0_i32 = arith.constant 0 : i32
    return %arg2, %arg1 : i32, i32
  }
  func.func @transform_2(%arg0: i32, %arg1: i32, %arg2: i32) -> (i32, i32) {
    %c0_i32 = arith.constant 0 : i32
    %c0_i32_0 = arith.constant 0 : i32
    return %c0_i32, %arg1 : i32, i32
  }
  func.func @transform_3(%arg0: i32, %arg1: i32, %arg2: i32) -> (i32, i32) {
    %c0_i32 = arith.constant 0 : i32
    return %arg0, %arg1 : i32, i32
  }
}

module attributes {stable_mosaic.version = 11 : i64} {
  func.func @_matmul_kernel(%arg0: i32, %arg1: i32, %arg2: i32, %arg3: memref<16x48xbf16, #tpu.memory_space<vmem>>, %arg4: memref<48x128xbf16, #tpu.memory_space<vmem>>, %arg5: memref<1x128xf32, #tpu.memory_space<vmem>>, %arg6: memref<16x128xf32, #tpu.memory_space<vmem>>, %arg7: memref<16x128xf32, #tpu.memory_space<vmem>>) attributes {dimension_semantics = [#tpu.dimension_semantics<parallel>, #tpu.dimension_semantics<parallel>, #tpu.dimension_semantics<arbitrary>], iteration_bounds = array<i64: 1, 1, 1>, scalar_prefetch = 0 : i64, scratch_operands = 1 : i64, tpu.core_type = #tpu.core_type<tc>, window_params = [{transform_indices = @transform_0, window_bounds = array<i64: 16, 48>}, {transform_indices = @transform_1, window_bounds = array<i64: 48, 128>}, {transform_indices = @transform_2, window_bounds = array<i64: 1, 128>}, {transform_indices = @transform_3, window_bounds = array<i64: 16, 128>}]} {
    %c0_i32 = arith.constant 0 : i32
    %0 = arith.cmpi eq, %arg2, %c0_i32 : i32
    %1 = arith.extui %0 : i1 to i32
    %c0_i32_0 = arith.constant 0 : i32
    %2 = arith.cmpi ne, %1, %c0_i32_0 : i32
    scf.if %2 {
      %cst_10 = arith.constant 0.000000e+00 : f32
      %12 = vector.broadcast %cst_10 : f32 to vector<16x128xf32>
      %c0_11 = arith.constant 0 : index
      %c0_12 = arith.constant 0 : index
      %13 = vector.load %arg7[%c0_11, %c0_12] : memref<16x128xf32, #tpu.memory_space<vmem>>, vector<16x128xf32>
      tpu.vector_store %arg7[%c0_11, %c0_12], %12 {strides = array<i32>} : memref<16x128xf32, #tpu.memory_space<vmem>>, vector<16x128xf32>,
    } else {
    }
    %c0 = arith.constant 0 : index
    %c0_1 = arith.constant 0 : index
    %3 = vector.load %arg3[%c0, %c0_1] : memref<16x48xbf16, #tpu.memory_space<vmem>>, vector<16x48xbf16>
    %c0_2 = arith.constant 0 : index
    %c0_3 = arith.constant 0 : index
    %4 = vector.load %arg7[%c0_2, %c0_3] : memref<16x128xf32, #tpu.memory_space<vmem>>, vector<16x128xf32>
    %c0_4 = arith.constant 0 : index
    %c0_5 = arith.constant 0 : index
    %5 = vector.load %arg4[%c0_4, %c0_5] : memref<48x128xbf16, #tpu.memory_space<vmem>>, vector<48x128xbf16>
    %cst = arith.constant dense<0.000000e+00> : vector<16x128xf32>
    %6 = tpu.matmul %3, %5, %cst {dimension_numbers = #tpu.dot_dimension_numbers<[1], [0], [0], [1], [0, 0, 1, 1], [], []>} : vector<16x48xbf16>, vector<48x128xbf16>, vector<16x128xf32> -> vector<16x128xf32>
    %7 = arith.addf %4, %6 : vector<16x128xf32>
    %c0_6 = arith.constant 0 : index
    %c0_7 = arith.constant 0 : index
    %8 = vector.load %arg7[%c0_6, %c0_7] : memref<16x128xf32, #tpu.memory_space<vmem>>, vector<16x128xf32>
    tpu.vector_store %arg7[%c0_6, %c0_7], %7 {strides = array<i32>} : memref<16x128xf32, #tpu.memory_space<vmem>>, vector<16x128xf32>,
    %c0_i32_8 = arith.constant 0 : i32
    %9 = arith.cmpi eq, %arg2, %c0_i32_8 : i32
    %10 = arith.extui %9 : i1 to i32
    %c0_i32_9 = arith.constant 0 : i32
    %11 = arith.cmpi ne, %10, %c0_i32_9 : i32
    scf.if %11 {
      %c0_10 = arith.constant 0 : index
      %c0_11 = arith.constant 0 : index
      %12 = vector.load %arg7[%c0_10, %c0_11] : memref<16x128xf32, #tpu.memory_space<vmem>>, vector<16x128xf32>
      %c0_12 = arith.constant 0 : index
      %c0_13 = arith.constant 0 : index
      %13 = vector.load %arg5[%c0_12, %c0_13] : memref<1x128xf32, #tpu.memory_space<vmem>>, vector<1x128xf32>
      %14 = vector.broadcast %13 : vector<1x128xf32> to vector<16x128xf32>
      %15 = arith.addf %12, %14 : vector<16x128xf32>
      %c0_14 = arith.constant 0 : index
      %c0_15 = arith.constant 0 : index
      %16 = vector.load %arg6[%c0_14, %c0_15] : memref<16x128xf32, #tpu.memory_space<vmem>>, vector<16x128xf32>
      tpu.vector_store %arg6[%c0_14, %c0_15], %15 {strides = array<i32>} : memref<16x128xf32, #tpu.memory_space<vmem>>, vector<16x128xf32>,
    } else {
    }
    return
  }
  func.func @transform_0(%arg0: i32, %arg1: i32, %arg2: i32) -> (i32, i32) {
    %c0_i32 = arith.constant 0 : i32
    return %arg0, %arg2 : i32, i32
  }
  func.func @transform_1(%arg0: i32, %arg1: i32, %arg2: i32) -> (i32, i32) {
    %c0_i32 = arith.constant 0 : i32
    return %arg2, %arg1 : i32, i32
  }
  func.func @transform_2(%arg0: i32, %arg1: i32, %arg2: i32) -> (i32, i32) {
    %c0_i32 = arith.constant 0 : i32
    %c0_i32_0 = arith.constant 0 : i32
    return %c0_i32, %arg1 : i32, i32
  }
  func.func @transform_3(%arg0: i32, %arg1: i32, %arg2: i32) -> (i32, i32) {
    %c0_i32 = arith.constant 0 : i32
    return %arg0, %arg1 : i32, i32
  }
}

module attributes {stable_mosaic.version = 11 : i64} {
  func.func @_lvc_gate_kernel(%arg0: i32, %arg1: memref<8x2x24xbf16, #tpu.memory_space<vmem>>, %arg2: memref<8x24x256xbf16, #tpu.memory_space<vmem>>, %arg3: memref<8x1x256xf32, #tpu.memory_space<vmem>>, %arg4: memref<8x2x128xf32, #tpu.memory_space<vmem>>) attributes {dimension_semantics = [#tpu.dimension_semantics<parallel>], iteration_bounds = array<i64: 2>, scalar_prefetch = 0 : i64, scratch_operands = 0 : i64, tpu.core_type = #tpu.core_type<tc>, window_params = [{transform_indices = @transform_0, window_bounds = array<i64: 8, 2, 24>}, {transform_indices = @transform_1, window_bounds = array<i64: 8, 24, 256>}, {transform_indices = @transform_2, window_bounds = array<i64: 8, 1, 256>}, {transform_indices = @transform_3, window_bounds = array<i64: 8, 2, 128>}]} {
    %c0 = arith.constant 0 : index
    %c0_0 = arith.constant 0 : index
    %c0_1 = arith.constant 0 : index
    %0 = vector.load %arg1[%c0, %c0_0, %c0_1] : memref<8x2x24xbf16, #tpu.memory_space<vmem>>, vector<8x2x24xbf16>
    %c0_2 = arith.constant 0 : index
    %c0_3 = arith.constant 0 : index
    %c0_4 = arith.constant 0 : index
    %1 = vector.load %arg2[%c0_2, %c0_3, %c0_4] : memref<8x24x256xbf16, #tpu.memory_space<vmem>>, vector<8x24x256xbf16>
    "tpu.trace_start"() <{level = 10 : i32, message = "ghk,gkc->ghc"}> : () -> ()
    %cst = arith.constant dense<0.000000e+00> : vector<8x2x256xf32>
    %2 = tpu.matmul %0, %1, %cst {dimension_numbers = #tpu.dot_dimension_numbers<[2], [1], [1], [2], [0, 0, 0, 1, 1, 2], [0], [0]>} : vector<8x2x24xbf16>, vector<8x24x256xbf16>, vector<8x2x256xf32> -> vector<8x2x256xf32>
    "tpu.trace_stop"() : () -> ()
    %c0_5 = arith.constant 0 : index
    %c0_6 = arith.constant 0 : index
    %c0_7 = arith.constant 0 : index
    %3 = vector.load %arg3[%c0_5, %c0_6, %c0_7] : memref<8x1x256xf32, #tpu.memory_space<vmem>>, vector<8x1x256xf32>
    %4 = vector.broadcast %3 : vector<8x1x256xf32> to vector<8x2x256xf32>
    %5 = arith.addf %2, %4 : vector<8x2x256xf32>
    %6 = vector.extract_strided_slice %5 {offsets = [0, 0, 0], sizes = [8, 2, 128], strides = [1, 1, 1]} : vector<8x2x256xf32> to vector<8x2x128xf32>
    %7 = arith.negf %6 : vector<8x2x128xf32>
    %8 = math.exp %7 : vector<8x2x128xf32>
    %cst_8 = arith.constant 1.000000e+00 : f32
    %9 = vector.broadcast %cst_8 : f32 to vector<8x2x128xf32>
    %10 = arith.addf %9, %8 : vector<8x2x128xf32>
    %11 = arith.divf %9, %10 : vector<8x2x128xf32>
    %12 = vector.extract_strided_slice %5 {offsets = [0, 0, 128], sizes = [8, 2, 128], strides = [1, 1, 1]} : vector<8x2x256xf32> to vector<8x2x128xf32>
    %13 = math.tanh %12 : vector<8x2x128xf32>
    %14 = arith.mulf %11, %13 : vector<8x2x128xf32>
    %c0_9 = arith.constant 0 : index
    %c0_10 = arith.constant 0 : index
    %c0_11 = arith.constant 0 : index
    %15 = vector.load %arg4[%c0_9, %c0_10, %c0_11] : memref<8x2x128xf32, #tpu.memory_space<vmem>>, vector<8x2x128xf32>
    tpu.vector_store %arg4[%c0_9, %c0_10, %c0_11], %14 {strides = array<i32>} : memref<8x2x128xf32, #tpu.memory_space<vmem>>, vector<8x2x128xf32>,
    return
  }
  func.func @transform_0(%arg0: i32) -> (i32, i32, i32) {
    %c0_i32 = arith.constant 0 : i32
    %c0_i32_0 = arith.constant 0 : i32
    %c0_i32_1 = arith.constant 0 : i32
    return %arg0, %c0_i32, %c0_i32_0 : i32, i32, i32
  }
  func.func @transform_1(%arg0: i32) -> (i32, i32, i32) {
    %c0_i32 = arith.constant 0 : i32
    %c0_i32_0 = arith.constant 0 : i32
    %c0_i32_1 = arith.constant 0 : i32
    return %arg0, %c0_i32, %c0_i32_0 : i32, i32, i32
  }
  func.func @transform_2(%arg0: i32) -> (i32, i32, i32) {
    %c0_i32 = arith.constant 0 : i32
    %c0_i32_0 = arith.constant 0 : i32
    %c0_i32_1 = arith.constant 0 : i32
    return %arg0, %c0_i32, %c0_i32_0 : i32, i32, i32
  }
  func.func @transform_3(%arg0: i32) -> (i32, i32, i32) {
    %c0_i32 = arith.constant 0 : i32
    %c0_i32_0 = arith.constant 0 : i32
    %c0_i32_1 = arith.constant 0 : i32
    return %arg0, %c0_i32, %c0_i32_0 : i32, i32, i32
  }
}

module attributes {stable_mosaic.version = 11 : i64} {
  func.func @_matmul_kernel(%arg0: i32, %arg1: i32, %arg2: i32, %arg3: memref<64x32xbf16, #tpu.memory_space<vmem>>, %arg4: memref<32x128xbf16, #tpu.memory_space<vmem>>, %arg5: memref<1x128xf32, #tpu.memory_space<vmem>>, %arg6: memref<64x128xf32, #tpu.memory_space<vmem>>, %arg7: memref<64x128xf32, #tpu.memory_space<vmem>>) attributes {dimension_semantics = [#tpu.dimension_semantics<parallel>, #tpu.dimension_semantics<parallel>, #tpu.dimension_semantics<arbitrary>], iteration_bounds = array<i64: 1, 1, 1>, scalar_prefetch = 0 : i64, scratch_operands = 1 : i64, tpu.core_type = #tpu.core_type<tc>, window_params = [{transform_indices = @transform_0, window_bounds = array<i64: 64, 32>}, {transform_indices = @transform_1, window_bounds = array<i64: 32, 128>}, {transform_indices = @transform_2, window_bounds = array<i64: 1, 128>}, {transform_indices = @transform_3, window_bounds = array<i64: 64, 128>}]} {
    %c0_i32 = arith.constant 0 : i32
    %0 = arith.cmpi eq, %arg2, %c0_i32 : i32
    %1 = arith.extui %0 : i1 to i32
    %c0_i32_0 = arith.constant 0 : i32
    %2 = arith.cmpi ne, %1, %c0_i32_0 : i32
    scf.if %2 {
      %cst_12 = arith.constant 0.000000e+00 : f32
      %17 = vector.broadcast %cst_12 : f32 to vector<64x128xf32>
      %c0_13 = arith.constant 0 : index
      %c0_14 = arith.constant 0 : index
      %18 = vector.load %arg7[%c0_13, %c0_14] : memref<64x128xf32, #tpu.memory_space<vmem>>, vector<64x128xf32>
      tpu.vector_store %arg7[%c0_13, %c0_14], %17 {strides = array<i32>} : memref<64x128xf32, #tpu.memory_space<vmem>>, vector<64x128xf32>,
    } else {
    }
    %c0 = arith.constant 0 : index
    %c0_1 = arith.constant 0 : index
    %3 = vector.load %arg3[%c0, %c0_1] : memref<64x32xbf16, #tpu.memory_space<vmem>>, vector<64x32xbf16>
    %cst = arith.constant 0.000000e+00 : bf16
    %4 = vector.broadcast %cst : bf16 to vector<64x32xbf16>
    %5 = arith.cmpf oge, %3, %4 : vector<64x32xbf16>
    %cst_2 = arith.constant 2.001950e-01 : bf16
    %6 = vector.broadcast %cst_2 : bf16 to vector<64x32xbf16>
    %7 = arith.mulf %6, %3 : vector<64x32xbf16>
    %8 = arith.select %5, %3, %7 : vector<64x32xi1>, vector<64x32xbf16>
    %c0_3 = arith.constant 0 : index
    %c0_4 = arith.constant 0 : index
    %9 = vector.load %arg7[%c0_3, %c0_4] : memref<64x128xf32, #tpu.memory_space<vmem>>, vector<64x128xf32>
    %c0_5 = arith.constant 0 : index
    %c0_6 = arith.constant 0 : index
    %10 = vector.load %arg4[%c0_5, %c0_6] : memref<32x128xbf16, #tpu.memory_space<vmem>>, vector<32x128xbf16>
    %cst_7 = arith.constant dense<0.000000e+00> : vector<64x128xf32>
    %11 = tpu.matmul %8, %10, %cst_7 {dimension_numbers = #tpu.dot_dimension_numbers<[1], [0], [0], [1], [0, 0, 1, 1], [], []>} : vector<64x32xbf16>, vector<32x128xbf16>, vector<64x128xf32> -> vector<64x128xf32>
    %12 = arith.addf %9, %11 : vector<64x128xf32>
    %c0_8 = arith.constant 0 : index
    %c0_9 = arith.constant 0 : index
    %13 = vector.load %arg7[%c0_8, %c0_9] : memref<64x128xf32, #tpu.memory_space<vmem>>, vector<64x128xf32>
    tpu.vector_store %arg7[%c0_8, %c0_9], %12 {strides = array<i32>} : memref<64x128xf32, #tpu.memory_space<vmem>>, vector<64x128xf32>,
    %c0_i32_10 = arith.constant 0 : i32
    %14 = arith.cmpi eq, %arg2, %c0_i32_10 : i32
    %15 = arith.extui %14 : i1 to i32
    %c0_i32_11 = arith.constant 0 : i32
    %16 = arith.cmpi ne, %15, %c0_i32_11 : i32
    scf.if %16 {
      %c0_12 = arith.constant 0 : index
      %c0_13 = arith.constant 0 : index
      %17 = vector.load %arg7[%c0_12, %c0_13] : memref<64x128xf32, #tpu.memory_space<vmem>>, vector<64x128xf32>
      %c0_14 = arith.constant 0 : index
      %c0_15 = arith.constant 0 : index
      %18 = vector.load %arg5[%c0_14, %c0_15] : memref<1x128xf32, #tpu.memory_space<vmem>>, vector<1x128xf32>
      %19 = vector.broadcast %18 : vector<1x128xf32> to vector<64x128xf32>
      %20 = arith.addf %17, %19 : vector<64x128xf32>
      %c0_16 = arith.constant 0 : index
      %c0_17 = arith.constant 0 : index
      %21 = vector.load %arg6[%c0_16, %c0_17] : memref<64x128xf32, #tpu.memory_space<vmem>>, vector<64x128xf32>
      tpu.vector_store %arg6[%c0_16, %c0_17], %20 {strides = array<i32>} : memref<64x128xf32, #tpu.memory_space<vmem>>, vector<64x128xf32>,
    } else {
    }
    return
  }
  func.func @transform_0(%arg0: i32, %arg1: i32, %arg2: i32) -> (i32, i32) {
    %c0_i32 = arith.constant 0 : i32
    return %arg0, %arg2 : i32, i32
  }
  func.func @transform_1(%arg0: i32, %arg1: i32, %arg2: i32) -> (i32, i32) {
    %c0_i32 = arith.constant 0 : i32
    return %arg2, %arg1 : i32, i32
  }
  func.func @transform_2(%arg0: i32, %arg1: i32, %arg2: i32) -> (i32, i32) {
    %c0_i32 = arith.constant 0 : i32
    %c0_i32_0 = arith.constant 0 : i32
    return %c0_i32, %arg1 : i32, i32
  }
  func.func @transform_3(%arg0: i32, %arg1: i32, %arg2: i32) -> (i32, i32) {
    %c0_i32 = arith.constant 0 : i32
    return %arg0, %arg1 : i32, i32
  }
}

module attributes {stable_mosaic.version = 11 : i64} {
  func.func @_matmul_kernel(%arg0: i32, %arg1: i32, %arg2: i32, %arg3: memref<64x24xbf16, #tpu.memory_space<vmem>>, %arg4: memref<24x128xbf16, #tpu.memory_space<vmem>>, %arg5: memref<1x128xf32, #tpu.memory_space<vmem>>, %arg6: memref<64x128xf32, #tpu.memory_space<vmem>>, %arg7: memref<64x128xf32, #tpu.memory_space<vmem>>) attributes {dimension_semantics = [#tpu.dimension_semantics<parallel>, #tpu.dimension_semantics<parallel>, #tpu.dimension_semantics<arbitrary>], iteration_bounds = array<i64: 1, 1, 1>, scalar_prefetch = 0 : i64, scratch_operands = 1 : i64, tpu.core_type = #tpu.core_type<tc>, window_params = [{transform_indices = @transform_0, window_bounds = array<i64: 64, 24>}, {transform_indices = @transform_1, window_bounds = array<i64: 24, 128>}, {transform_indices = @transform_2, window_bounds = array<i64: 1, 128>}, {transform_indices = @transform_3, window_bounds = array<i64: 64, 128>}]} {
    %c0_i32 = arith.constant 0 : i32
    %0 = arith.cmpi eq, %arg2, %c0_i32 : i32
    %1 = arith.extui %0 : i1 to i32
    %c0_i32_0 = arith.constant 0 : i32
    %2 = arith.cmpi ne, %1, %c0_i32_0 : i32
    scf.if %2 {
      %cst_12 = arith.constant 0.000000e+00 : f32
      %17 = vector.broadcast %cst_12 : f32 to vector<64x128xf32>
      %c0_13 = arith.constant 0 : index
      %c0_14 = arith.constant 0 : index
      %18 = vector.load %arg7[%c0_13, %c0_14] : memref<64x128xf32, #tpu.memory_space<vmem>>, vector<64x128xf32>
      tpu.vector_store %arg7[%c0_13, %c0_14], %17 {strides = array<i32>} : memref<64x128xf32, #tpu.memory_space<vmem>>, vector<64x128xf32>,
    } else {
    }
    %c0 = arith.constant 0 : index
    %c0_1 = arith.constant 0 : index
    %3 = vector.load %arg3[%c0, %c0_1] : memref<64x24xbf16, #tpu.memory_space<vmem>>, vector<64x24xbf16>
    %cst = arith.constant 0.000000e+00 : bf16
    %4 = vector.broadcast %cst : bf16 to vector<64x24xbf16>
    %5 = arith.cmpf oge, %3, %4 : vector<64x24xbf16>
    %cst_2 = arith.constant 2.001950e-01 : bf16
    %6 = vector.broadcast %cst_2 : bf16 to vector<64x24xbf16>
    %7 = arith.mulf %6, %3 : vector<64x24xbf16>
    %8 = arith.select %5, %3, %7 : vector<64x24xi1>, vector<64x24xbf16>
    %c0_3 = arith.constant 0 : index
    %c0_4 = arith.constant 0 : index
    %9 = vector.load %arg7[%c0_3, %c0_4] : memref<64x128xf32, #tpu.memory_space<vmem>>, vector<64x128xf32>
    %c0_5 = arith.constant 0 : index
    %c0_6 = arith.constant 0 : index
    %10 = vector.load %arg4[%c0_5, %c0_6] : memref<24x128xbf16, #tpu.memory_space<vmem>>, vector<24x128xbf16>
    %cst_7 = arith.constant dense<0.000000e+00> : vector<64x128xf32>
    %11 = tpu.matmul %8, %10, %cst_7 {dimension_numbers = #tpu.dot_dimension_numbers<[1], [0], [0], [1], [0, 0, 1, 1], [], []>} : vector<64x24xbf16>, vector<24x128xbf16>, vector<64x128xf32> -> vector<64x128xf32>
    %12 = arith.addf %9, %11 : vector<64x128xf32>
    %c0_8 = arith.constant 0 : index
    %c0_9 = arith.constant 0 : index
    %13 = vector.load %arg7[%c0_8, %c0_9] : memref<64x128xf32, #tpu.memory_space<vmem>>, vector<64x128xf32>
    tpu.vector_store %arg7[%c0_8, %c0_9], %12 {strides = array<i32>} : memref<64x128xf32, #tpu.memory_space<vmem>>, vector<64x128xf32>,
    %c0_i32_10 = arith.constant 0 : i32
    %14 = arith.cmpi eq, %arg2, %c0_i32_10 : i32
    %15 = arith.extui %14 : i1 to i32
    %c0_i32_11 = arith.constant 0 : i32
    %16 = arith.cmpi ne, %15, %c0_i32_11 : i32
    scf.if %16 {
      %c0_12 = arith.constant 0 : index
      %c0_13 = arith.constant 0 : index
      %17 = vector.load %arg7[%c0_12, %c0_13] : memref<64x128xf32, #tpu.memory_space<vmem>>, vector<64x128xf32>
      %c0_14 = arith.constant 0 : index
      %c0_15 = arith.constant 0 : index
      %18 = vector.load %arg5[%c0_14, %c0_15] : memref<1x128xf32, #tpu.memory_space<vmem>>, vector<1x128xf32>
      %19 = vector.broadcast %18 : vector<1x128xf32> to vector<64x128xf32>
      %20 = arith.addf %17, %19 : vector<64x128xf32>
      %cst_16 = arith.constant 0.000000e+00 : f32
      %21 = vector.broadcast %cst_16 : f32 to vector<64x128xf32>
      %22 = arith.cmpf oge, %20, %21 : vector<64x128xf32>
      %cst_17 = arith.constant 2.000000e-01 : f32
      %23 = vector.broadcast %cst_17 : f32 to vector<64x128xf32>
      %24 = arith.mulf %23, %20 : vector<64x128xf32>
      %25 = arith.select %22, %20, %24 : vector<64x128xi1>, vector<64x128xf32>
      %c0_18 = arith.constant 0 : index
      %c0_19 = arith.constant 0 : index
      %26 = vector.load %arg6[%c0_18, %c0_19] : memref<64x128xf32, #tpu.memory_space<vmem>>, vector<64x128xf32>
      tpu.vector_store %arg6[%c0_18, %c0_19], %25 {strides = array<i32>} : memref<64x128xf32, #tpu.memory_space<vmem>>, vector<64x128xf32>,
    } else {
    }
    return
  }
  func.func @transform_0(%arg0: i32, %arg1: i32, %arg2: i32) -> (i32, i32) {
    %c0_i32 = arith.constant 0 : i32
    return %arg0, %arg2 : i32, i32
  }
  func.func @transform_1(%arg0: i32, %arg1: i32, %arg2: i32) -> (i32, i32) {
    %c0_i32 = arith.constant 0 : i32
    return %arg2, %arg1 : i32, i32
  }
  func.func @transform_2(%arg0: i32, %arg1: i32, %arg2: i32) -> (i32, i32) {
    %c0_i32 = arith.constant 0 : i32
    %c0_i32_0 = arith.constant 0 : i32
    return %c0_i32, %arg1 : i32, i32
  }
  func.func @transform_3(%arg0: i32, %arg1: i32, %arg2: i32) -> (i32, i32) {
    %c0_i32 = arith.constant 0 : i32
    return %arg0, %arg1 : i32, i32
  }
}

module attributes {stable_mosaic.version = 11 : i64} {
  func.func @_lvc_gate_kernel(%arg0: i32, %arg1: memref<8x4x24xbf16, #tpu.memory_space<vmem>>, %arg2: memref<8x24x256xbf16, #tpu.memory_space<vmem>>, %arg3: memref<8x1x256xf32, #tpu.memory_space<vmem>>, %arg4: memref<8x4x128xf32, #tpu.memory_space<vmem>>) attributes {dimension_semantics = [#tpu.dimension_semantics<parallel>], iteration_bounds = array<i64: 2>, scalar_prefetch = 0 : i64, scratch_operands = 0 : i64, tpu.core_type = #tpu.core_type<tc>, window_params = [{transform_indices = @transform_0, window_bounds = array<i64: 8, 4, 24>}, {transform_indices = @transform_1, window_bounds = array<i64: 8, 24, 256>}, {transform_indices = @transform_2, window_bounds = array<i64: 8, 1, 256>}, {transform_indices = @transform_3, window_bounds = array<i64: 8, 4, 128>}]} {
    %c0 = arith.constant 0 : index
    %c0_0 = arith.constant 0 : index
    %c0_1 = arith.constant 0 : index
    %0 = vector.load %arg1[%c0, %c0_0, %c0_1] : memref<8x4x24xbf16, #tpu.memory_space<vmem>>, vector<8x4x24xbf16>
    %c0_2 = arith.constant 0 : index
    %c0_3 = arith.constant 0 : index
    %c0_4 = arith.constant 0 : index
    %1 = vector.load %arg2[%c0_2, %c0_3, %c0_4] : memref<8x24x256xbf16, #tpu.memory_space<vmem>>, vector<8x24x256xbf16>
    "tpu.trace_start"() <{level = 10 : i32, message = "ghk,gkc->ghc"}> : () -> ()
    %cst = arith.constant dense<0.000000e+00> : vector<8x4x256xf32>
    %2 = tpu.matmul %0, %1, %cst {dimension_numbers = #tpu.dot_dimension_numbers<[2], [1], [1], [2], [0, 0, 0, 1, 1, 2], [0], [0]>} : vector<8x4x24xbf16>, vector<8x24x256xbf16>, vector<8x4x256xf32> -> vector<8x4x256xf32>
    "tpu.trace_stop"() : () -> ()
    %c0_5 = arith.constant 0 : index
    %c0_6 = arith.constant 0 : index
    %c0_7 = arith.constant 0 : index
    %3 = vector.load %arg3[%c0_5, %c0_6, %c0_7] : memref<8x1x256xf32, #tpu.memory_space<vmem>>, vector<8x1x256xf32>
    %4 = vector.broadcast %3 : vector<8x1x256xf32> to vector<8x4x256xf32>
    %5 = arith.addf %2, %4 : vector<8x4x256xf32>
    %6 = vector.extract_strided_slice %5 {offsets = [0, 0, 0], sizes = [8, 4, 128], strides = [1, 1, 1]} : vector<8x4x256xf32> to vector<8x4x128xf32>
    %7 = arith.negf %6 : vector<8x4x128xf32>
    %8 = math.exp %7 : vector<8x4x128xf32>
    %cst_8 = arith.constant 1.000000e+00 : f32
    %9 = vector.broadcast %cst_8 : f32 to vector<8x4x128xf32>
    %10 = arith.addf %9, %8 : vector<8x4x128xf32>
    %11 = arith.divf %9, %10 : vector<8x4x128xf32>
    %12 = vector.extract_strided_slice %5 {offsets = [0, 0, 128], sizes = [8, 4, 128], strides = [1, 1, 1]} : vector<8x4x256xf32> to vector<8x4x128xf32>
    %13 = math.tanh %12 : vector<8x4x128xf32>
    %14 = arith.mulf %11, %13 : vector<8x4x128xf32>
    %c0_9 = arith.constant 0 : index
    %c0_10 = arith.constant 0 : index
    %c0_11 = arith.constant 0 : index
    %15 = vector.load %arg4[%c0_9, %c0_10, %c0_11] : memref<8x4x128xf32, #tpu.memory_space<vmem>>, vector<8x4x128xf32>
    tpu.vector_store %arg4[%c0_9, %c0_10, %c0_11], %14 {strides = array<i32>} : memref<8x4x128xf32, #tpu.memory_space<vmem>>, vector<8x4x128xf32>,
    return
  }
  func.func @transform_0(%arg0: i32) -> (i32, i32, i32) {
    %c0_i32 = arith.constant 0 : i32
    %c0_i32_0 = arith.constant 0 : i32
    %c0_i32_1 = arith.constant 0 : i32
    return %arg0, %c0_i32, %c0_i32_0 : i32, i32, i32
  }
  func.func @transform_1(%arg0: i32) -> (i32, i32, i32) {
    %c0_i32 = arith.constant 0 : i32
    %c0_i32_0 = arith.constant 0 : i32
    %c0_i32_1 = arith.constant 0 : i32
    return %arg0, %c0_i32, %c0_i32_0 : i32, i32, i32
  }
  func.func @transform_2(%arg0: i32) -> (i32, i32, i32) {
    %c0_i32 = arith.constant 0 : i32
    %c0_i32_0 = arith.constant 0 : i32
    %c0_i32_1 = arith.constant 0 : i32
    return %arg0, %c0_i32, %c0_i32_0 : i32, i32, i32
  }
  func.func @transform_3(%arg0: i32) -> (i32, i32, i32) {
    %c0_i32 = arith.constant 0 : i32
    %c0_i32_0 = arith.constant 0 : i32
    %c0_i32_1 = arith.constant 0 : i32
    return %arg0, %c0_i32, %c0_i32_0 : i32, i32, i32
  }
}

module attributes {stable_mosaic.version = 11 : i64} {
  func.func @_matmul_kernel(%arg0: i32, %arg1: i32, %arg2: i32, %arg3: memref<128x32xbf16, #tpu.memory_space<vmem>>, %arg4: memref<32x128xbf16, #tpu.memory_space<vmem>>, %arg5: memref<1x128xf32, #tpu.memory_space<vmem>>, %arg6: memref<128x128xf32, #tpu.memory_space<vmem>>, %arg7: memref<128x128xf32, #tpu.memory_space<vmem>>) attributes {dimension_semantics = [#tpu.dimension_semantics<parallel>, #tpu.dimension_semantics<parallel>, #tpu.dimension_semantics<arbitrary>], iteration_bounds = array<i64: 1, 1, 1>, scalar_prefetch = 0 : i64, scratch_operands = 1 : i64, tpu.core_type = #tpu.core_type<tc>, window_params = [{transform_indices = @transform_0, window_bounds = array<i64: 128, 32>}, {transform_indices = @transform_1, window_bounds = array<i64: 32, 128>}, {transform_indices = @transform_2, window_bounds = array<i64: 1, 128>}, {transform_indices = @transform_3, window_bounds = array<i64: 128, 128>}]} {
    %c0_i32 = arith.constant 0 : i32
    %0 = arith.cmpi eq, %arg2, %c0_i32 : i32
    %1 = arith.extui %0 : i1 to i32
    %c0_i32_0 = arith.constant 0 : i32
    %2 = arith.cmpi ne, %1, %c0_i32_0 : i32
    scf.if %2 {
      %cst_12 = arith.constant 0.000000e+00 : f32
      %17 = vector.broadcast %cst_12 : f32 to vector<128x128xf32>
      %c0_13 = arith.constant 0 : index
      %c0_14 = arith.constant 0 : index
      %18 = vector.load %arg7[%c0_13, %c0_14] : memref<128x128xf32, #tpu.memory_space<vmem>>, vector<128x128xf32>
      tpu.vector_store %arg7[%c0_13, %c0_14], %17 {strides = array<i32>} : memref<128x128xf32, #tpu.memory_space<vmem>>, vector<128x128xf32>,
    } else {
    }
    %c0 = arith.constant 0 : index
    %c0_1 = arith.constant 0 : index
    %3 = vector.load %arg3[%c0, %c0_1] : memref<128x32xbf16, #tpu.memory_space<vmem>>, vector<128x32xbf16>
    %cst = arith.constant 0.000000e+00 : bf16
    %4 = vector.broadcast %cst : bf16 to vector<128x32xbf16>
    %5 = arith.cmpf oge, %3, %4 : vector<128x32xbf16>
    %cst_2 = arith.constant 2.001950e-01 : bf16
    %6 = vector.broadcast %cst_2 : bf16 to vector<128x32xbf16>
    %7 = arith.mulf %6, %3 : vector<128x32xbf16>
    %8 = arith.select %5, %3, %7 : vector<128x32xi1>, vector<128x32xbf16>
    %c0_3 = arith.constant 0 : index
    %c0_4 = arith.constant 0 : index
    %9 = vector.load %arg7[%c0_3, %c0_4] : memref<128x128xf32, #tpu.memory_space<vmem>>, vector<128x128xf32>
    %c0_5 = arith.constant 0 : index
    %c0_6 = arith.constant 0 : index
    %10 = vector.load %arg4[%c0_5, %c0_6] : memref<32x128xbf16, #tpu.memory_space<vmem>>, vector<32x128xbf16>
    %cst_7 = arith.constant dense<0.000000e+00> : vector<128x128xf32>
    %11 = tpu.matmul %8, %10, %cst_7 {dimension_numbers = #tpu.dot_dimension_numbers<[1], [0], [0], [1], [0, 0, 1, 1], [], []>} : vector<128x32xbf16>, vector<32x128xbf16>, vector<128x128xf32> -> vector<128x128xf32>
    %12 = arith.addf %9, %11 : vector<128x128xf32>
    %c0_8 = arith.constant 0 : index
    %c0_9 = arith.constant 0 : index
    %13 = vector.load %arg7[%c0_8, %c0_9] : memref<128x128xf32, #tpu.memory_space<vmem>>, vector<128x128xf32>
    tpu.vector_store %arg7[%c0_8, %c0_9], %12 {strides = array<i32>} : memref<128x128xf32, #tpu.memory_space<vmem>>, vector<128x128xf32>,
    %c0_i32_10 = arith.constant 0 : i32
    %14 = arith.cmpi eq, %arg2, %c0_i32_10 : i32
    %15 = arith.extui %14 : i1 to i32
    %c0_i32_11 = arith.constant 0 : i32
    %16 = arith.cmpi ne, %15, %c0_i32_11 : i32
    scf.if %16 {
      %c0_12 = arith.constant 0 : index
      %c0_13 = arith.constant 0 : index
      %17 = vector.load %arg7[%c0_12, %c0_13] : memref<128x128xf32, #tpu.memory_space<vmem>>, vector<128x128xf32>
      %c0_14 = arith.constant 0 : index
      %c0_15 = arith.constant 0 : index
      %18 = vector.load %arg5[%c0_14, %c0_15] : memref<1x128xf32, #tpu.memory_space<vmem>>, vector<1x128xf32>
      %19 = vector.broadcast %18 : vector<1x128xf32> to vector<128x128xf32>
      %20 = arith.addf %17, %19 : vector<128x128xf32>
      %c0_16 = arith.constant 0 : index
      %c0_17 = arith.constant 0 : index
      %21 = vector.load %arg6[%c0_16, %c0_17] : memref<128x128xf32, #tpu.memory_space<vmem>>, vector<128x128xf32>
      tpu.vector_store %arg6[%c0_16, %c0_17], %20 {strides = array<i32>} : memref<128x128xf32, #tpu.memory_space<vmem>>, vector<128x128xf32>,
    } else {
    }
    return
  }
  func.func @transform_0(%arg0: i32, %arg1: i32, %arg2: i32) -> (i32, i32) {
    %c0_i32 = arith.constant 0 : i32
    return %arg0, %arg2 : i32, i32
  }
  func.func @transform_1(%arg0: i32, %arg1: i32, %arg2: i32) -> (i32, i32) {
    %c0_i32 = arith.constant 0 : i32
    return %arg2, %arg1 : i32, i32
  }
  func.func @transform_2(%arg0: i32, %arg1: i32, %arg2: i32) -> (i32, i32) {
    %c0_i32 = arith.constant 0 : i32
    %c0_i32_0 = arith.constant 0 : i32
    return %c0_i32, %arg1 : i32, i32
  }
  func.func @transform_3(%arg0: i32, %arg1: i32, %arg2: i32) -> (i32, i32) {
    %c0_i32 = arith.constant 0 : i32
    return %arg0, %arg1 : i32, i32
  }
}

module attributes {stable_mosaic.version = 11 : i64} {
  func.func @_matmul_kernel(%arg0: i32, %arg1: i32, %arg2: i32, %arg3: memref<128x24xbf16, #tpu.memory_space<vmem>>, %arg4: memref<24x128xbf16, #tpu.memory_space<vmem>>, %arg5: memref<1x128xf32, #tpu.memory_space<vmem>>, %arg6: memref<128x128xf32, #tpu.memory_space<vmem>>, %arg7: memref<128x128xf32, #tpu.memory_space<vmem>>) attributes {dimension_semantics = [#tpu.dimension_semantics<parallel>, #tpu.dimension_semantics<parallel>, #tpu.dimension_semantics<arbitrary>], iteration_bounds = array<i64: 1, 1, 1>, scalar_prefetch = 0 : i64, scratch_operands = 1 : i64, tpu.core_type = #tpu.core_type<tc>, window_params = [{transform_indices = @transform_0, window_bounds = array<i64: 128, 24>}, {transform_indices = @transform_1, window_bounds = array<i64: 24, 128>}, {transform_indices = @transform_2, window_bounds = array<i64: 1, 128>}, {transform_indices = @transform_3, window_bounds = array<i64: 128, 128>}]} {
    %c0_i32 = arith.constant 0 : i32
    %0 = arith.cmpi eq, %arg2, %c0_i32 : i32
    %1 = arith.extui %0 : i1 to i32
    %c0_i32_0 = arith.constant 0 : i32
    %2 = arith.cmpi ne, %1, %c0_i32_0 : i32
    scf.if %2 {
      %cst_12 = arith.constant 0.000000e+00 : f32
      %17 = vector.broadcast %cst_12 : f32 to vector<128x128xf32>
      %c0_13 = arith.constant 0 : index
      %c0_14 = arith.constant 0 : index
      %18 = vector.load %arg7[%c0_13, %c0_14] : memref<128x128xf32, #tpu.memory_space<vmem>>, vector<128x128xf32>
      tpu.vector_store %arg7[%c0_13, %c0_14], %17 {strides = array<i32>} : memref<128x128xf32, #tpu.memory_space<vmem>>, vector<128x128xf32>,
    } else {
    }
    %c0 = arith.constant 0 : index
    %c0_1 = arith.constant 0 : index
    %3 = vector.load %arg3[%c0, %c0_1] : memref<128x24xbf16, #tpu.memory_space<vmem>>, vector<128x24xbf16>
    %cst = arith.constant 0.000000e+00 : bf16
    %4 = vector.broadcast %cst : bf16 to vector<128x24xbf16>
    %5 = arith.cmpf oge, %3, %4 : vector<128x24xbf16>
    %cst_2 = arith.constant 2.001950e-01 : bf16
    %6 = vector.broadcast %cst_2 : bf16 to vector<128x24xbf16>
    %7 = arith.mulf %6, %3 : vector<128x24xbf16>
    %8 = arith.select %5, %3, %7 : vector<128x24xi1>, vector<128x24xbf16>
    %c0_3 = arith.constant 0 : index
    %c0_4 = arith.constant 0 : index
    %9 = vector.load %arg7[%c0_3, %c0_4] : memref<128x128xf32, #tpu.memory_space<vmem>>, vector<128x128xf32>
    %c0_5 = arith.constant 0 : index
    %c0_6 = arith.constant 0 : index
    %10 = vector.load %arg4[%c0_5, %c0_6] : memref<24x128xbf16, #tpu.memory_space<vmem>>, vector<24x128xbf16>
    %cst_7 = arith.constant dense<0.000000e+00> : vector<128x128xf32>
    %11 = tpu.matmul %8, %10, %cst_7 {dimension_numbers = #tpu.dot_dimension_numbers<[1], [0], [0], [1], [0, 0, 1, 1], [], []>} : vector<128x24xbf16>, vector<24x128xbf16>, vector<128x128xf32> -> vector<128x128xf32>
    %12 = arith.addf %9, %11 : vector<128x128xf32>
    %c0_8 = arith.constant 0 : index
    %c0_9 = arith.constant 0 : index
    %13 = vector.load %arg7[%c0_8, %c0_9] : memref<128x128xf32, #tpu.memory_space<vmem>>, vector<128x128xf32>
    tpu.vector_store %arg7[%c0_8, %c0_9], %12 {strides = array<i32>} : memref<128x128xf32, #tpu.memory_space<vmem>>, vector<128x128xf32>,
    %c0_i32_10 = arith.constant 0 : i32
    %14 = arith.cmpi eq, %arg2, %c0_i32_10 : i32
    %15 = arith.extui %14 : i1 to i32
    %c0_i32_11 = arith.constant 0 : i32
    %16 = arith.cmpi ne, %15, %c0_i32_11 : i32
    scf.if %16 {
      %c0_12 = arith.constant 0 : index
      %c0_13 = arith.constant 0 : index
      %17 = vector.load %arg7[%c0_12, %c0_13] : memref<128x128xf32, #tpu.memory_space<vmem>>, vector<128x128xf32>
      %c0_14 = arith.constant 0 : index
      %c0_15 = arith.constant 0 : index
      %18 = vector.load %arg5[%c0_14, %c0_15] : memref<1x128xf32, #tpu.memory_space<vmem>>, vector<1x128xf32>
      %19 = vector.broadcast %18 : vector<1x128xf32> to vector<128x128xf32>
      %20 = arith.addf %17, %19 : vector<128x128xf32>
      %cst_16 = arith.constant 0.000000e+00 : f32
      %21 = vector.broadcast %cst_16 : f32 to vector<128x128xf32>
      %22 = arith.cmpf oge, %20, %21 : vector<128x128xf32>
      %cst_17 = arith.constant 2.000000e-01 : f32
      %23 = vector.broadcast %cst_17 : f32 to vector<128x128xf32>
      %24 = arith.mulf %23, %20 : vector<128x128xf32>
      %25 = arith.select %22, %20, %24 : vector<128x128xi1>, vector<128x128xf32>
      %c0_18 = arith.constant 0 : index
      %c0_19 = arith.constant 0 : index
      %26 = vector.load %arg6[%c0_18, %c0_19] : memref<128x128xf32, #tpu.memory_space<vmem>>, vector<128x128xf32>
      tpu.vector_store %arg6[%c0_18, %c0_19], %25 {strides = array<i32>} : memref<128x128xf32, #tpu.memory_space<vmem>>, vector<128x128xf32>,
    } else {
    }
    return
  }
  func.func @transform_0(%arg0: i32, %arg1: i32, %arg2: i32) -> (i32, i32) {
    %c0_i32 = arith.constant 0 : i32
    return %arg0, %arg2 : i32, i32
  }
  func.func @transform_1(%arg0: i32, %arg1: i32, %arg2: i32) -> (i32, i32) {
    %c0_i32 = arith.constant 0 : i32
    return %arg2, %arg1 : i32, i32
  }
  func.func @transform_2(%arg0: i32, %arg1: i32, %arg2: i32) -> (i32, i32) {
    %c0_i32 = arith.constant 0 : i32
    %c0_i32_0 = arith.constant 0 : i32
    return %c0_i32, %arg1 : i32, i32
  }
  func.func @transform_3(%arg0: i32, %arg1: i32, %arg2: i32) -> (i32, i32) {
    %c0_i32 = arith.constant 0 : i32
    return %arg0, %arg1 : i32, i32
  }
}

module attributes {stable_mosaic.version = 11 : i64} {
  func.func @_lvc_gate_kernel(%arg0: i32, %arg1: memref<8x8x24xbf16, #tpu.memory_space<vmem>>, %arg2: memref<8x24x256xbf16, #tpu.memory_space<vmem>>, %arg3: memref<8x1x256xf32, #tpu.memory_space<vmem>>, %arg4: memref<8x8x128xf32, #tpu.memory_space<vmem>>) attributes {dimension_semantics = [#tpu.dimension_semantics<parallel>], iteration_bounds = array<i64: 2>, scalar_prefetch = 0 : i64, scratch_operands = 0 : i64, tpu.core_type = #tpu.core_type<tc>, window_params = [{transform_indices = @transform_0, window_bounds = array<i64: 8, 8, 24>}, {transform_indices = @transform_1, window_bounds = array<i64: 8, 24, 256>}, {transform_indices = @transform_2, window_bounds = array<i64: 8, 1, 256>}, {transform_indices = @transform_3, window_bounds = array<i64: 8, 8, 128>}]} {
    %c0 = arith.constant 0 : index
    %c0_0 = arith.constant 0 : index
    %c0_1 = arith.constant 0 : index
    %0 = vector.load %arg1[%c0, %c0_0, %c0_1] : memref<8x8x24xbf16, #tpu.memory_space<vmem>>, vector<8x8x24xbf16>
    %c0_2 = arith.constant 0 : index
    %c0_3 = arith.constant 0 : index
    %c0_4 = arith.constant 0 : index
    %1 = vector.load %arg2[%c0_2, %c0_3, %c0_4] : memref<8x24x256xbf16, #tpu.memory_space<vmem>>, vector<8x24x256xbf16>
    "tpu.trace_start"() <{level = 10 : i32, message = "ghk,gkc->ghc"}> : () -> ()
    %cst = arith.constant dense<0.000000e+00> : vector<8x8x256xf32>
    %2 = tpu.matmul %0, %1, %cst {dimension_numbers = #tpu.dot_dimension_numbers<[2], [1], [1], [2], [0, 0, 0, 1, 1, 2], [0], [0]>} : vector<8x8x24xbf16>, vector<8x24x256xbf16>, vector<8x8x256xf32> -> vector<8x8x256xf32>
    "tpu.trace_stop"() : () -> ()
    %c0_5 = arith.constant 0 : index
    %c0_6 = arith.constant 0 : index
    %c0_7 = arith.constant 0 : index
    %3 = vector.load %arg3[%c0_5, %c0_6, %c0_7] : memref<8x1x256xf32, #tpu.memory_space<vmem>>, vector<8x1x256xf32>
    %4 = vector.broadcast %3 : vector<8x1x256xf32> to vector<8x8x256xf32>
    %5 = arith.addf %2, %4 : vector<8x8x256xf32>
    %6 = vector.extract_strided_slice %5 {offsets = [0, 0, 0], sizes = [8, 8, 128], strides = [1, 1, 1]} : vector<8x8x256xf32> to vector<8x8x128xf32>
    %7 = arith.negf %6 : vector<8x8x128xf32>
    %8 = math.exp %7 : vector<8x8x128xf32>
    %cst_8 = arith.constant 1.000000e+00 : f32
    %9 = vector.broadcast %cst_8 : f32 to vector<8x8x128xf32>
    %10 = arith.addf %9, %8 : vector<8x8x128xf32>
    %11 = arith.divf %9, %10 : vector<8x8x128xf32>
    %12 = vector.extract_strided_slice %5 {offsets = [0, 0, 128], sizes = [8, 8, 128], strides = [1, 1, 1]} : vector<8x8x256xf32> to vector<8x8x128xf32>
    %13 = math.tanh %12 : vector<8x8x128xf32>
    %14 = arith.mulf %11, %13 : vector<8x8x128xf32>
    %c0_9 = arith.constant 0 : index
    %c0_10 = arith.constant 0 : index
    %c0_11 = arith.constant 0 : index
    %15 = vector.load %arg4[%c0_9, %c0_10, %c0_11] : memref<8x8x128xf32, #tpu.memory_space<vmem>>, vector<8x8x128xf32>
    tpu.vector_store %arg4[%c0_9, %c0_10, %c0_11], %14 {strides = array<i32>} : memref<8x8x128xf32, #tpu.memory_space<vmem>>, vector<8x8x128xf32>,
    return
  }
  func.func @transform_0(%arg0: i32) -> (i32, i32, i32) {
    %c0_i32 = arith.constant 0 : i32
    %c0_i32_0 = arith.constant 0 : i32
    %c0_i32_1 = arith.constant 0 : i32
    return %arg0, %c0_i32, %c0_i32_0 : i32, i32, i32
  }
  func.func @transform_1(%arg0: i32) -> (i32, i32, i32) {
    %c0_i32 = arith.constant 0 : i32
    %c0_i32_0 = arith.constant 0 : i32
    %c0_i32_1 = arith.constant 0 : i32
    return %arg0, %c0_i32, %c0_i32_0 : i32, i32, i32
  }
  func.func @transform_2(%arg0: i32) -> (i32, i32, i32) {
    %c0_i32 = arith.constant 0 : i32
    %c0_i32_0 = arith.constant 0 : i32
    %c0_i32_1 = arith.constant 0 : i32
    return %arg0, %c0_i32, %c0_i32_0 : i32, i32, i32
  }
  func.func @transform_3(%arg0: i32) -> (i32, i32, i32) {
    %c0_i32 = arith.constant 0 : i32
    %c0_i32_0 = arith.constant 0 : i32
    %c0_i32_1 = arith.constant 0 : i32
    return %arg0, %c0_i32, %c0_i32_0 : i32, i32, i32
  }
}

module attributes {stable_mosaic.version = 11 : i64} {
  func.func @_matmul_kernel(%arg0: i32, %arg1: i32, %arg2: i32, %arg3: memref<128x56xbf16, #tpu.memory_space<vmem>>, %arg4: memref<56x128xbf16, #tpu.memory_space<vmem>>, %arg5: memref<1x128xf32, #tpu.memory_space<vmem>>, %arg6: memref<128x128xf32, #tpu.memory_space<vmem>>, %arg7: memref<128x128xf32, #tpu.memory_space<vmem>>) attributes {dimension_semantics = [#tpu.dimension_semantics<parallel>, #tpu.dimension_semantics<parallel>, #tpu.dimension_semantics<arbitrary>], iteration_bounds = array<i64: 1, 1, 1>, scalar_prefetch = 0 : i64, scratch_operands = 1 : i64, tpu.core_type = #tpu.core_type<tc>, window_params = [{transform_indices = @transform_0, window_bounds = array<i64: 128, 56>}, {transform_indices = @transform_1, window_bounds = array<i64: 56, 128>}, {transform_indices = @transform_2, window_bounds = array<i64: 1, 128>}, {transform_indices = @transform_3, window_bounds = array<i64: 128, 128>}]} {
    %c0_i32 = arith.constant 0 : i32
    %0 = arith.cmpi eq, %arg2, %c0_i32 : i32
    %1 = arith.extui %0 : i1 to i32
    %c0_i32_0 = arith.constant 0 : i32
    %2 = arith.cmpi ne, %1, %c0_i32_0 : i32
    scf.if %2 {
      %cst_10 = arith.constant 0.000000e+00 : f32
      %12 = vector.broadcast %cst_10 : f32 to vector<128x128xf32>
      %c0_11 = arith.constant 0 : index
      %c0_12 = arith.constant 0 : index
      %13 = vector.load %arg7[%c0_11, %c0_12] : memref<128x128xf32, #tpu.memory_space<vmem>>, vector<128x128xf32>
      tpu.vector_store %arg7[%c0_11, %c0_12], %12 {strides = array<i32>} : memref<128x128xf32, #tpu.memory_space<vmem>>, vector<128x128xf32>,
    } else {
    }
    %c0 = arith.constant 0 : index
    %c0_1 = arith.constant 0 : index
    %3 = vector.load %arg3[%c0, %c0_1] : memref<128x56xbf16, #tpu.memory_space<vmem>>, vector<128x56xbf16>
    %c0_2 = arith.constant 0 : index
    %c0_3 = arith.constant 0 : index
    %4 = vector.load %arg7[%c0_2, %c0_3] : memref<128x128xf32, #tpu.memory_space<vmem>>, vector<128x128xf32>
    %c0_4 = arith.constant 0 : index
    %c0_5 = arith.constant 0 : index
    %5 = vector.load %arg4[%c0_4, %c0_5] : memref<56x128xbf16, #tpu.memory_space<vmem>>, vector<56x128xbf16>
    %cst = arith.constant dense<0.000000e+00> : vector<128x128xf32>
    %6 = tpu.matmul %3, %5, %cst {dimension_numbers = #tpu.dot_dimension_numbers<[1], [0], [0], [1], [0, 0, 1, 1], [], []>} : vector<128x56xbf16>, vector<56x128xbf16>, vector<128x128xf32> -> vector<128x128xf32>
    %7 = arith.addf %4, %6 : vector<128x128xf32>
    %c0_6 = arith.constant 0 : index
    %c0_7 = arith.constant 0 : index
    %8 = vector.load %arg7[%c0_6, %c0_7] : memref<128x128xf32, #tpu.memory_space<vmem>>, vector<128x128xf32>
    tpu.vector_store %arg7[%c0_6, %c0_7], %7 {strides = array<i32>} : memref<128x128xf32, #tpu.memory_space<vmem>>, vector<128x128xf32>,
    %c0_i32_8 = arith.constant 0 : i32
    %9 = arith.cmpi eq, %arg2, %c0_i32_8 : i32
    %10 = arith.extui %9 : i1 to i32
    %c0_i32_9 = arith.constant 0 : i32
    %11 = arith.cmpi ne, %10, %c0_i32_9 : i32
    scf.if %11 {
      %c0_10 = arith.constant 0 : index
      %c0_11 = arith.constant 0 : index
      %12 = vector.load %arg7[%c0_10, %c0_11] : memref<128x128xf32, #tpu.memory_space<vmem>>, vector<128x128xf32>
      %c0_12 = arith.constant 0 : index
      %c0_13 = arith.constant 0 : index
      %13 = vector.load %arg5[%c0_12, %c0_13] : memref<1x128xf32, #tpu.memory_space<vmem>>, vector<1x128xf32>
      %14 = vector.broadcast %13 : vector<1x128xf32> to vector<128x128xf32>
      %15 = arith.addf %12, %14 : vector<128x128xf32>
      %c0_14 = arith.constant 0 : index
      %c0_15 = arith.constant 0 : index
      %16 = vector.load %arg6[%c0_14, %c0_15] : memref<128x128xf32, #tpu.memory_space<vmem>>, vector<128x128xf32>
      tpu.vector_store %arg6[%c0_14, %c0_15], %15 {strides = array<i32>} : memref<128x128xf32, #tpu.memory_space<vmem>>, vector<128x128xf32>,
    } else {
    }
    return
  }
  func.func @transform_0(%arg0: i32, %arg1: i32, %arg2: i32) -> (i32, i32) {
    %c0_i32 = arith.constant 0 : i32
    return %arg0, %arg2 : i32, i32
  }
  func.func @transform_1(%arg0: i32, %arg1: i32, %arg2: i32) -> (i32, i32) {
    %c0_i32 = arith.constant 0 : i32
    return %arg2, %arg1 : i32, i32
  }
  func.func @transform_2(%arg0: i32, %arg1: i32, %arg2: i32) -> (i32, i32) {
    %c0_i32 = arith.constant 0 : i32
    %c0_i32_0 = arith.constant 0 : i32
    return %c0_i32, %arg1 : i32, i32
  }
  func.func @transform_3(%arg0: i32, %arg1: i32, %arg2: i32) -> (i32, i32) {
    %c0_i32 = arith.constant 0 : i32
    return %arg0, %arg1 : i32, i32
  }
}

</mosaic_0001>

<llo_original>
// kernel: _lambda_.56
$region0: #{_lambda_.56}
  #allocation0 [shape = 'u32[]', space=smem, size = 0x4, offset = 0x4, fixed_abs, tag = 'smem constant byte address 0x4 - core index']
  #allocation1 [shape = 'u32[144,128]{1,0:T(1,128)}', space=vmem, size = 0x12000, scoped, tag = 'internal scratch']
  #allocation2 [shape = 'f32[128,128]{1,0:T(8,128)}', space=vmem, size = 0x10000, scoped, tag = 'scratch operand']
  %s0 = inlined_call_operand.vmem [shape: bf16[128,8], index: 0, kind: input, shape index: {}]
  %s1 = inlined_call_operand.vmem [shape: bf16[8,128], index: 1, kind: input, shape index: {}]
  %s2 = inlined_call_operand.vmem [shape: f32[1,128], index: 2, kind: input, shape index: {}]
  %s3 = inlined_call_operand.vmem [shape: f32[128,128], index: 3, kind: output, shape index: {}]
  %s4 = sld [smem:[#allocation0]]
  $region30: #{_lambda_.56} parent=0
    _
  %s6 = ssub.s32 1, %s4
  %s7 = scalar_select 0, %s6, %s4
  // Predicated region
  $region2: #{_lambda_.56} parent=0 // pred_check
    _
  $region3: #{_lambda_.56} parent=0 // pred_check_branch
    %9 = sbr.rel (0) target = $region5
  $region4: #{_lambda_.56} parent=0 // pred_region
    _
  $region5: #{_lambda_.56} parent=0 // pred_fallthru
    _
  // Predicated region
  $region6: #{_lambda_.56} parent=0 // pred_check
    _
  $region7: #{_lambda_.56} parent=0 // pred_check_branch
    %11 = sbr.rel (0) target = $region9
  $region8: #{_lambda_.56} parent=0 // pred_region
    _
  $region9: #{_lambda_.56} parent=0 // pred_fallthru
    _
  // Predicated region
  $region10: #{_lambda_.56} parent=0 // pred_check
    _
  $region11: #{_lambda_.56} parent=0 // pred_check_branch
    %13 = sbr.rel (0) target = $region13
  $region12: #{_lambda_.56} parent=0 // pred_region
    _
  $region13: #{_lambda_.56} parent=0 // pred_fallthru
    _
  %p15 = scmp.eq.s32.totalorder 0, 0
  // Predicated region
  $region14: #{_lambda_.56} parent=0 // pred_check
    %p16 = pneg %p15
  $region15: #{_lambda_.56} parent=0 // pred_check_branch
    %18 = sbr.rel (%p16) target = $region17
  $region16: #{_lambda_.56} parent=0 // pred_region
    %19 = vst [vmem:[#allocation2] sm:$0xff] 0.0
    %20 = vst [vmem:[#allocation2 + $0x8] sm:$0xff] 0.0
    %21 = vst [vmem:[#allocation2 + $0x10] sm:$0xff] 0.0
    %22 = vst [vmem:[#allocation2 + $0x18] sm:$0xff] 0.0
    %23 = vst [vmem:[#allocation2 + $0x20] sm:$0xff] 0.0
    %24 = vst [vmem:[#allocation2 + $0x28] sm:$0xff] 0.0
    %25 = vst [vmem:[#allocation2 + $0x30] sm:$0xff] 0.0
    %26 = vst [vmem:[#allocation2 + $0x38] sm:$0xff] 0.0
    %27 = vst [vmem:[#allocation2 + $0x40] sm:$0xff] 0.0
    %28 = vst [vmem:[#allocation2 + $0x48] sm:$0xff] 0.0
    %29 = vst [vmem:[#allocation2 + $0x50] sm:$0xff] 0.0
    %30 = vst [vmem:[#allocation2 + $0x58] sm:$0xff] 0.0
    %31 = vst [vmem:[#allocation2 + $0x60] sm:$0xff] 0.0
    %32 = vst [vmem:[#allocation2 + $0x68] sm:$0xff] 0.0
    %33 = vst [vmem:[#allocation2 + $0x70] sm:$0xff] 0.0
    %34 = vst [vmem:[#allocation2 + $0x78] sm:$0xff] 0.0
  $region17: #{_lambda_.56} parent=0 // pred_fallthru
    _
  %v35 = vld [vmem:[%s0] sm:$0xf]
  %v36 = vld [vmem:[%s0 + $0x4] sm:$0xf]
  %v37 = vld [vmem:[%s0 + $0x8] sm:$0xf]
  %v38 = vld [vmem:[%s0 + $0xc] sm:$0xf]
  %v39 = vld [vmem:[%s0 + $0x10] sm:$0xf]
  %v40 = vld [vmem:[%s0 + $0x14] sm:$0xf]
  %v41 = vld [vmem:[%s0 + $0x18] sm:$0xf]
  %v42 = vld [vmem:[%s0 + $0x1c] sm:$0xf]
  %v43 = vld [vmem:[%s0 + $0x20] sm:$0xf]
  %v44 = vld [vmem:[%s0 + $0x24] sm:$0xf]
  %v45 = vld [vmem:[%s0 + $0x28] sm:$0xf]
  %v46 = vld [vmem:[%s0 + $0x2c] sm:$0xf]
  %v47 = vld [vmem:[%s0 + $0x30] sm:$0xf]
  %v48 = vld [vmem:[%s0 + $0x34] sm:$0xf]
  %v49 = vld [vmem:[%s0 + $0x38] sm:$0xf]
  %v50 = vld [vmem:[%s0 + $0x3c] sm:$0xf]
  %v51 = vld [vmem:[#allocation2] sm:$0xff]
  %v52 = vld [vmem:[#allocation2 + $0x8] sm:$0xff]
  %v53 = vld [vmem:[#allocation2 + $0x10] sm:$0xff]
  %v54 = vld [vmem:[#allocation2 + $0x18] sm:$0xff]
  %v55 = vld [vmem:[#allocation2 + $0x20] sm:$0xff]
  %v56 = vld [vmem:[#allocation2 + $0x28] sm:$0xff]
  %v57 = vld [vmem:[#allocation2 + $0x30] sm:$0xff]
  %v58 = vld [vmem:[#allocation2 + $0x38] sm:$0xff]
  %v59 = vld [vmem:[#allocation2 + $0x40] sm:$0xff]
  %v60 = vld [vmem:[#allocation2 + $0x48] sm:$0xff]
  %v61 = vld [vmem:[#allocation2 + $0x50] sm:$0xff]
  %v62 = vld [vmem:[#allocation2 + $0x58] sm:$0xff]
  %v63 = vld [vmem:[#allocation2 + $0x60] sm:$0xff]
  %v64 = vld [vmem:[#allocation2 + $0x68] sm:$0xff]
  %v65 = vld [vmem:[#allocation2 + $0x70] sm:$0xff]
  %v66 = vld [vmem:[#allocation2 + $0x78] sm:$0xff]
  %v67 = vld [vmem:[%s1] sm:$0xf]
  %v84 = vunpack.c.l.b16 %v35
  %v85 = vunpack.c.l.b16 %v36
  %v86 = vunpack.c.l.b16 %v37
  %v87 = vunpack.c.l.b16 %v38
  %v88 = vunpack.c.l.b16 %v39
  %v89 = vunpack.c.l.b16 %v40
  %v90 = vunpack.c.l.b16 %v41
  %v91 = vunpack.c.l.b16 %v42
  %v92 = vunpack.c.l.b16 %v43
  %v93 = vunpack.c.l.b16 %v44
  %v94 = vunpack.c.l.b16 %v45
  %v95 = vunpack.c.l.b16 %v46
  %v96 = vunpack.c.l.b16 %v47
  %v97 = vunpack.c.l.b16 %v48
  %v98 = vunpack.c.l.b16 %v49
  %v99 = vunpack.c.l.b16 %v50
  %v100 = vpack.c.b16 %v85, %v84
  %v101 = vpack.c.b16 %v87, %v86
  %v102 = vpack.c.b16 %v89, %v88
  %v103 = vpack.c.b16 %v91, %v90
  %v104 = vpack.c.b16 %v93, %v92
  %v105 = vpack.c.b16 %v95, %v94
  %v106 = vpack.c.b16 %v97, %v96
  %v107 = vpack.c.b16 %v99, %v98
  %vm108 = vcmask 64512
  %v110 = vsel %vm108, %v100, 0
  %v113 = vsel %vm108, %v101, 0
  %v116 = vsel %vm108, %v102, 0
  %v119 = vsel %vm108, %v103, 0
  %v122 = vsel %vm108, %v104, 0
  %v125 = vsel %vm108, %v105, 0
  %v128 = vsel %vm108, %v106, 0
  %v131 = vsel %vm108, %v107, 0
  %vm133 = vcmask 1043456
  %v135 = vsel %vm133, %v67, 0
  %137 = vmatprep.subr.bf16.mxu0 0
  %138 = vmatpush1.bf16.msra.mxu0 %v135
  %139 = vmatprep.subr.bf16.mxu0 0
  %140 = vmatpush1.bf16.msra.mxu0 0
  %141 = vmatprep.subr.bf16.mxu0 0
  %142 = vmatpush1.bf16.msra.mxu0 0
  %143 = vmatprep.subr.bf16.mxu0 0
  %144 = vmatpush1.bf16.msra.mxu0 0
  %145 = vmatprep.subr.bf16.mxu0 0
  %146 = vmatpush1.bf16.msra.mxu0 0
  %147 = vmatprep.subr.bf16.mxu0 0
  %148 = vmatpush1.bf16.msra.mxu0 0
  %149 = vmatprep.subr.bf16.mxu0 0
  %150 = vmatpush1.bf16.msra.mxu0 0
  %151 = vmatprep.subr.bf16.mxu0 0
  %152 = vmatpush1.bf16.msra.mxu0 0
  %153 = vmatprep.subr.bf16.mxu0 0
  %154 = vmatpush1.bf16.msra.mxu0 0
  %155 = vmatprep.subr.bf16.mxu0 0
  %156 = vmatpush1.bf16.msra.mxu0 0
  %157 = vmatprep.subr.bf16.mxu0 0
  %158 = vmatpush1.bf16.msra.mxu0 0
  %159 = vmatprep.subr.bf16.mxu0 0
  %160 = vmatpush1.bf16.msra.mxu0 0
  %161 = vmatprep.subr.bf16.mxu0 0
  %162 = vmatpush1.bf16.msra.mxu0 0
  %163 = vmatprep.subr.bf16.mxu0 0
  %164 = vmatpush1.bf16.msra.mxu0 0
  %165 = vmatprep.subr.bf16.mxu0 0
  %166 = vmatpush1.bf16.msra.mxu0 0
  %167 = vmatprep.subr.bf16.mxu0 0
  %168 = vmatpush1.bf16.msra.mxu0 0
  %169 = vmatprep.mubr.bf16.mxu0 0
  %170 = vmatmul.mubr.bf16.gmra.mrb[0].mxu0 %v110
  %v171 = vpop.f32.mrb[0].mxu0
  %v172 = vadd.f32 0.0, %v171
  %v173 = vpop.f32.mrb[0].mxu0
  %v174 = vpop.f32.mrb[0].mxu0
  %v175 = vadd.f32 0.0, %v174
  %v176 = vpop.f32.mrb[0].mxu0
  %177 = vmatprep.mubr.bf16.mxu0 0
  %178 = vmatmul.mubr.bf16.gmra.mrb[0].mxu0 %v113
  %v179 = vpop.f32.mrb[0].mxu0
  %v180 = vadd.f32 0.0, %v179
  %v181 = vpop.f32.mrb[0].mxu0
  %v182 = vpop.f32.mrb[0].mxu0
  %v183 = vadd.f32 0.0, %v182
  %v184 = vpop.f32.mrb[0].mxu0
  %185 = vmatprep.mubr.bf16.mxu0 0
  %186 = vmatmul.mubr.bf16.gmra.mrb[0].mxu0 %v116
  %v187 = vpop.f32.mrb[0].mxu0
  %v188 = vadd.f32 0.0, %v187
  %v189 = vpop.f32.mrb[0].mxu0
  %v190 = vpop.f32.mrb[0].mxu0
  %v191 = vadd.f32 0.0, %v190
  %v192 = vpop.f32.mrb[0].mxu0
  %193 = vmatprep.mubr.bf16.mxu0 0
  %194 = vmatmul.mubr.bf16.gmra.mrb[0].mxu0 %v119
  %v195 = vpop.f32.mrb[0].mxu0
  %v196 = vadd.f32 0.0, %v195
  %v197 = vpop.f32.mrb[0].mxu0
  %v198 = vpop.f32.mrb[0].mxu0
  %v199 = vadd.f32 0.0, %v198
  %v200 = vpop.f32.mrb[0].mxu0
  %201 = vmatprep.mubr.bf16.mxu0 0
  %202 = vmatmul.mubr.bf16.gmra.mrb[0].mxu0 %v122
  %v203 = vpop.f32.mrb[0].mxu0
  %v204 = vadd.f32 0.0, %v203
  %v205 = vpop.f32.mrb[0].mxu0
  %v206 = vpop.f32.mrb[0].mxu0
  %v207 = vadd.f32 0.0, %v206
  %v208 = vpop.f32.mrb[0].mxu0
  %209 = vmatprep.mubr.bf16.mxu0 0
  %210 = vmatmul.mubr.bf16.gmra.mrb[0].mxu0 %v125
  %v211 = vpop.f32.mrb[0].mxu0
  %v212 = vadd.f32 0.0, %v211
  %v213 = vpop.f32.mrb[0].mxu0
  %v214 = vpop.f32.mrb[0].mxu0
  %v215 = vadd.f32 0.0, %v214
  %v216 = vpop.f32.mrb[0].mxu0
  %217 = vmatprep.mubr.bf16.mxu0 0
  %218 = vmatmul.mubr.bf16.gmra.mrb[0].mxu0 %v128
  %v219 = vpop.f32.mrb[0].mxu0
  %v220 = vadd.f32 0.0, %v219
  %v221 = vpop.f32.mrb[0].mxu0
  %v222 = vpop.f32.mrb[0].mxu0
  %v223 = vadd.f32 0.0, %v222
  %v224 = vpop.f32.mrb[0].mxu0
  %225 = vmatprep.mubr.bf16.mxu0 0
  %226 = vmatmul.mubr.bf16.gmra.mrb[0].mxu0 %v131
  %v227 = vpop.f32.mrb[0].mxu0
  %v228 = vadd.f32 0.0, %v227
  %v229 = vpop.f32.mrb[0].mxu0
  %v230 = vpop.f32.mrb[0].mxu0
  %v231 = vadd.f32 0.0, %v230
  %v232 = vpop.f32.mrb[0].mxu0
  %233 = vdwg.mxu0
  %v234 = vadd.f32 %v51, %v172
  %v235 = vadd.f32 %v52, %v175
  %v236 = vadd.f32 %v53, %v180
  %v237 = vadd.f32 %v54, %v183
  %v238 = vadd.f32 %v55, %v188
  %v239 = vadd.f32 %v56, %v191
  %v240 = vadd.f32 %v57, %v196
  %v241 = vadd.f32 %v58, %v199
  %v242 = vadd.f32 %v59, %v204
  %v243 = vadd.f32 %v60, %v207
  %v244 = vadd.f32 %v61, %v212
  %v245 = vadd.f32 %v62, %v215
  %v246 = vadd.f32 %v63, %v220
  %v247 = vadd.f32 %v64, %v223
  %v248 = vadd.f32 %v65, %v228
  %v249 = vadd.f32 %v66, %v231
  %250 = vst [vmem:[#allocation2] sm:$0xff] %v234
  %251 = vst [vmem:[#allocation2 + $0x8] sm:$0xff] %v235
  %252 = vst [vmem:[#allocation2 + $0x10] sm:$0xff] %v236
  %253 = vst [vmem:[#allocation2 + $0x18] sm:$0xff] %v237
  %254 = vst [vmem:[#allocation2 + $0x20] sm:$0xff] %v238
  %255 = vst [vmem:[#allocation2 + $0x28] sm:$0xff] %v239
  %256 = vst [vmem:[#allocation2 + $0x30] sm:$0xff] %v240
  %257 = vst [vmem:[#allocation2 + $0x38] sm:$0xff] %v241
  %258 = vst [vmem:[#allocation2 + $0x40] sm:$0xff] %v242
  %259 = vst [vmem:[#allocation2 + $0x48] sm:$0xff] %v243
  %260 = vst [vmem:[#allocation2 + $0x50] sm:$0xff] %v244
  %261 = vst [vmem:[#allocation2 + $0x58] sm:$0xff] %v245
  %262 = vst [vmem:[#allocation2 + $0x60] sm:$0xff] %v246
  %263 = vst [vmem:[#allocation2 + $0x68] sm:$0xff] %v247
  %264 = vst [vmem:[#allocation2 + $0x70] sm:$0xff] %v248
  %265 = vst [vmem:[#allocation2 + $0x78] sm:$0xff] %v249
  // Predicated region
  $region18: #{_lambda_.56} parent=0 // pred_check
    %p266 = pneg %p15
  $region19: #{_lambda_.56} parent=0 // pred_check_branch
    %268 = sbr.rel (%p266) target = $region21
  $region20: #{_lambda_.56} parent=0 // pred_region
    %v269 = vld [vmem:[#allocation2] sm:$0xff]
    %v270 = vld [vmem:[#allocation2 + $0x8] sm:$0xff]
    %v271 = vld [vmem:[#allocation2 + $0x10] sm:$0xff]
    %v272 = vld [vmem:[#allocation2 + $0x18] sm:$0xff]
    %v273 = vld [vmem:[#allocation2 + $0x20] sm:$0xff]
    %v274 = vld [vmem:[#allocation2 + $0x28] sm:$0xff]
    %v275 = vld [vmem:[#allocation2 + $0x30] sm:$0xff]
    %v276 = vld [vmem:[#allocation2 + $0x38] sm:$0xff]
    %v277 = vld [vmem:[#allocation2 + $0x40] sm:$0xff]
    %v278 = vld [vmem:[#allocation2 + $0x48] sm:$0xff]
    %v279 = vld [vmem:[#allocation2 + $0x50] sm:$0xff]
    %v280 = vld [vmem:[#allocation2 + $0x58] sm:$0xff]
    %v281 = vld [vmem:[#allocation2 + $0x60] sm:$0xff]
    %v282 = vld [vmem:[#allocation2 + $0x68] sm:$0xff]
    %v283 = vld [vmem:[#allocation2 + $0x70] sm:$0xff]
    %v284 = vld [vmem:[#allocation2 + $0x78] sm:$0xff]
    %v285 = vld [vmem:[%s2] sm:$0x1]
    %v287 = vlaneseq
    %v288 = vshrl.u32 %v287, 7
    %v289 = vsub.s32 0, %v288
    %v290 = vrot.slane %v285, %v289
    %v292 = vadd.f32 %v269, %v290
    %v293 = vadd.f32 %v270, %v290
    %v294 = vadd.f32 %v271, %v290
    %v295 = vadd.f32 %v272, %v290
    %v296 = vadd.f32 %v273, %v290
    %v297 = vadd.f32 %v274, %v290
    %v298 = vadd.f32 %v275, %v290
    %v299 = vadd.f32 %v276, %v290
    %v300 = vadd.f32 %v277, %v290
    %v301 = vadd.f32 %v278, %v290
    %v302 = vadd.f32 %v279, %v290
    %v303 = vadd.f32 %v280, %v290
    %v304 = vadd.f32 %v281, %v290
    %v305 = vadd.f32 %v282, %v290
    %v306 = vadd.f32 %v283, %v290
    %v307 = vadd.f32 %v284, %v290
    %308 = vst [vmem:[%s3] sm:$0xff] %v292
    %309 = vst [vmem:[%s3 + $0x8] sm:$0xff] %v293
    %310 = vst [vmem:[%s3 + $0x10] sm:$0xff] %v294
    %311 = vst [vmem:[%s3 + $0x18] sm:$0xff] %v295
    %312 = vst [vmem:[%s3 + $0x20] sm:$0xff] %v296
    %313 = vst [vmem:[%s3 + $0x28] sm:$0xff] %v297
    %314 = vst [vmem:[%s3 + $0x30] sm:$0xff] %v298
    %315 = vst [vmem:[%s3 + $0x38] sm:$0xff] %v299
    %316 = vst [vmem:[%s3 + $0x40] sm:$0xff] %v300
    %317 = vst [vmem:[%s3 + $0x48] sm:$0xff] %v301
    %318 = vst [vmem:[%s3 + $0x50] sm:$0xff] %v302
    %319 = vst [vmem:[%s3 + $0x58] sm:$0xff] %v303
    %320 = vst [vmem:[%s3 + $0x60] sm:$0xff] %v304
    %321 = vst [vmem:[%s3 + $0x68] sm:$0xff] %v305
    %322 = vst [vmem:[%s3 + $0x70] sm:$0xff] %v306
    %323 = vst [vmem:[%s3 + $0x78] sm:$0xff] %v307
  $region21: #{_lambda_.56} parent=0 // pred_fallthru
    _
  // Predicated region
  $region22: #{_lambda_.56} parent=0 // pred_check
    _
  $region23: #{_lambda_.56} parent=0 // pred_check_branch
    %325 = sbr.rel (0) target = $region25
  $region24: #{_lambda_.56} parent=0 // pred_region
    _
  $region25: #{_lambda_.56} parent=0 // pred_fallthru
    _
  // Predicated region
  $region26: #{_lambda_.56} parent=0 // pred_check
    _
  $region27: #{_lambda_.56} parent=0 // pred_check_branch
    %327 = sbr.rel (0) target = $region29
  $region28: #{_lambda_.56} parent=0 // pred_region
    _
  $region29: #{_lambda_.56} parent=0 // pred_fallthru
    _

// kernel: _lambda_.58
$region0: #{_lambda_.58}
  #allocation0 [shape = 'u32[]', space=smem, size = 0x4, offset = 0x4, fixed_abs, tag = 'smem constant byte address 0x4 - core index']
  #allocation1 [shape = 'u32[144,128]{1,0:T(1,128)}', space=vmem, size = 0x12000, scoped, tag = 'internal scratch']
  #allocation2 [shape = 'f32[64,128]{1,0:T(8,128)}', space=vmem, size = 0x8000, scoped, tag = 'scratch operand']
  %s0 = inlined_call_operand.vmem [shape: bf16[64,24], index: 0, kind: input, shape index: {}]
  %s1 = inlined_call_operand.vmem [shape: bf16[24,128], index: 1, kind: input, shape index: {}]
  %s2 = inlined_call_operand.vmem [shape: f32[1,128], index: 2, kind: input, shape index: {}]
  %s3 = inlined_call_operand.vmem [shape: f32[64,128], index: 3, kind: output, shape index: {}]
  %s4 = sld [smem:[#allocation0]]
  $region30: #{_lambda_.58} parent=0
    _
  %s6 = ssub.s32 1, %s4
  %s7 = scalar_select 0, %s6, %s4
  // Predicated region
  $region2: #{_lambda_.58} parent=0 // pred_check
    _
  $region3: #{_lambda_.58} parent=0 // pred_check_branch
    %9 = sbr.rel (0) target = $region5
  $region4: #{_lambda_.58} parent=0 // pred_region
    _
  $region5: #{_lambda_.58} parent=0 // pred_fallthru
    _
  // Predicated region
  $region6: #{_lambda_.58} parent=0 // pred_check
    _
  $region7: #{_lambda_.58} parent=0 // pred_check_branch
    %11 = sbr.rel (0) target = $region9
  $region8: #{_lambda_.58} parent=0 // pred_region
    _
  $region9: #{_lambda_.58} parent=0 // pred_fallthru
    _
  // Predicated region
  $region10: #{_lambda_.58} parent=0 // pred_check
    _
  $region11: #{_lambda_.58} parent=0 // pred_check_branch
    %13 = sbr.rel (0) target = $region13
  $region12: #{_lambda_.58} parent=0 // pred_region
    _
  $region13: #{_lambda_.58} parent=0 // pred_fallthru
    _
  %p16 = scmp.eq.s32.totalorder 0, 0
  // Predicated region
  $region14: #{_lambda_.58} parent=0 // pred_check
    %p17 = pneg %p16
  $region15: #{_lambda_.58} parent=0 // pred_check_branch
    %19 = sbr.rel (%p17) target = $region17
  $region16: #{_lambda_.58} parent=0 // pred_region
    %20 = vst [vmem:[#allocation2] sm:$0xff] 0.0
    %21 = vst [vmem:[#allocation2 + $0x8] sm:$0xff] 0.0
    %22 = vst [vmem:[#allocation2 + $0x10] sm:$0xff] 0.0
    %23 = vst [vmem:[#allocation2 + $0x18] sm:$0xff] 0.0
    %24 = vst [vmem:[#allocation2 + $0x20] sm:$0xff] 0.0
    %25 = vst [vmem:[#allocation2 + $0x28] sm:$0xff] 0.0
    %26 = vst [vmem:[#allocation2 + $0x30] sm:$0xff] 0.0
    %27 = vst [vmem:[#allocation2 + $0x38] sm:$0xff] 0.0
  $region17: #{_lambda_.58} parent=0 // pred_fallthru
    _
  %v28 = vld [vmem:[%s0] sm:$0xf]
  %v29 = vld [vmem:[%s0 + $0x4] sm:$0xf]
  %v30 = vld [vmem:[%s0 + $0x8] sm:$0xf]
  %v31 = vld [vmem:[%s0 + $0xc] sm:$0xf]
  %v32 = vld [vmem:[%s0 + $0x10] sm:$0xf]
  %v33 = vld [vmem:[%s0 + $0x14] sm:$0xf]
  %v34 = vld [vmem:[%s0 + $0x18] sm:$0xf]
  %v35 = vld [vmem:[%s0 + $0x1c] sm:$0xf]
  %vm36 = vcmp.ge.bf16.partialorder %v28, 0
  %vm37 = vcmp.ge.bf16.partialorder %v29, 0
  %vm38 = vcmp.ge.bf16.partialorder %v30, 0
  %vm39 = vcmp.ge.bf16.partialorder %v31, 0
  %vm40 = vcmp.ge.bf16.partialorder %v32, 0
  %vm41 = vcmp.ge.bf16.partialorder %v33, 0
  %vm42 = vcmp.ge.bf16.partialorder %v34, 0
  %vm43 = vcmp.ge.bf16.partialorder %v35, 0
  %v44 = vmul.bf16 %v28, 1045249613
  %v45 = vmul.bf16 %v29, 1045249613
  %v46 = vmul.bf16 %v30, 1045249613
  %v47 = vmul.bf16 %v31, 1045249613
  %v48 = vmul.bf16 %v32, 1045249613
  %v49 = vmul.bf16 %v33, 1045249613
  %v50 = vmul.bf16 %v34, 1045249613
  %v51 = vmul.bf16 %v35, 1045249613
  %v52 = vsel %vm36, %v28, %v44
  %v53 = vsel %vm37, %v29, %v45
  %v54 = vsel %vm38, %v30, %v46
  %v55 = vsel %vm39, %v31, %v47
  %v56 = vsel %vm40, %v32, %v48
  %v57 = vsel %vm41, %v33, %v49
  %v58 = vsel %vm42, %v34, %v50
  %v59 = vsel %vm43, %v35, %v51
  %v60 = vld [vmem:[#allocation2] sm:$0xff]
  %v61 = vld [vmem:[#allocation2 + $0x8] sm:$0xff]
  %v62 = vld [vmem:[#allocation2 + $0x10] sm:$0xff]
  %v63 = vld [vmem:[#allocation2 + $0x18] sm:$0xff]
  %v64 = vld [vmem:[#allocation2 + $0x20] sm:$0xff]
  %v65 = vld [vmem:[#allocation2 + $0x28] sm:$0xff]
  %v66 = vld [vmem:[#allocation2 + $0x30] sm:$0xff]
  %v67 = vld [vmem:[#allocation2 + $0x38] sm:$0xff]
  %v68 = vld [vmem:[%s1] sm:$0xf]
  %v69 = vld [vmem:[%s1 + $0x4] sm:$0xf]
  %v70 = vld [vmem:[%s1 + $0x8] sm:$0xf]
  %v79 = vunpack.c.l.b16 %v52
  %v80 = vunpack.c.l.b16 %v53
  %v81 = vunpack.c.l.b16 %v54
  %v82 = vunpack.c.l.b16 %v55
  %v83 = vunpack.c.l.b16 %v56
  %v84 = vunpack.c.l.b16 %v57
  %v85 = vunpack.c.l.b16 %v58
  %v86 = vunpack.c.l.b16 %v59
  %v87 = vpack.c.b16 %v80, %v79
  %v88 = vpack.c.b16 %v82, %v81
  %v89 = vpack.c.b16 %v84, %v83
  %v90 = vpack.c.b16 %v86, %v85
  %v94 = vunpack.c.l.b16 %v68
  %v95 = vunpack.c.l.b16 %v69
  %v96 = vunpack.c.l.b16 %v70
  %v97 = vpack.c.b16 %v95, %v94
  %v98 = vpack.c.b16 %v96, %v96
  %vm100 = vcmask 195584
  %v102 = vsel %vm100, %v87, 0
  %v105 = vsel %vm100, %v88, 0
  %v108 = vsel %vm100, %v89, 0
  %v111 = vsel %vm100, %v90, 0
  %vm113 = vcmask 1043456
  %v115 = vsel %vm113, %v98, 0
  %117 = vmatprep.subr.bf16.mxu0 0
  %118 = vmatpush1.bf16.msra.mxu0 %v97
  %119 = vmatprep.subr.bf16.mxu0 0
  %120 = vmatpush1.bf16.msra.mxu0 %v115
  %121 = vmatprep.subr.bf16.mxu0 0
  %122 = vmatpush1.bf16.msra.mxu0 0
  %123 = vmatprep.subr.bf16.mxu0 0
  %124 = vmatpush1.bf16.msra.mxu0 0
  %125 = vmatprep.subr.bf16.mxu0 0
  %126 = vmatpush1.bf16.msra.mxu0 0
  %127 = vmatprep.subr.bf16.mxu0 0
  %128 = vmatpush1.bf16.msra.mxu0 0
  %129 = vmatprep.subr.bf16.mxu0 0
  %130 = vmatpush1.bf16.msra.mxu0 0
  %131 = vmatprep.subr.bf16.mxu0 0
  %132 = vmatpush1.bf16.msra.mxu0 0
  %133 = vmatprep.subr.bf16.mxu0 0
  %134 = vmatpush1.bf16.msra.mxu0 0
  %135 = vmatprep.subr.bf16.mxu0 0
  %136 = vmatpush1.bf16.msra.mxu0 0
  %137 = vmatprep.subr.bf16.mxu0 0
  %138 = vmatpush1.bf16.msra.mxu0 0
  %139 = vmatprep.subr.bf16.mxu0 0
  %140 = vmatpush1.bf16.msra.mxu0 0
  %141 = vmatprep.subr.bf16.mxu0 0
  %142 = vmatpush1.bf16.msra.mxu0 0
  %143 = vmatprep.subr.bf16.mxu0 0
  %144 = vmatpush1.bf16.msra.mxu0 0
  %145 = vmatprep.subr.bf16.mxu0 0
  %146 = vmatpush1.bf16.msra.mxu0 0
  %147 = vmatprep.subr.bf16.mxu0 0
  %148 = vmatpush1.bf16.msra.mxu0 0
  %149 = vmatprep.mubr.bf16.mxu0 0
  %150 = vmatmul.mubr.bf16.gmra.mrb[0].mxu0 %v102
  %v151 = vpop.f32.mrb[0].mxu0
  %v152 = vadd.f32 0.0, %v151
  %v153 = vpop.f32.mrb[0].mxu0
  %v154 = vpop.f32.mrb[0].mxu0
  %v155 = vadd.f32 0.0, %v154
  %v156 = vpop.f32.mrb[0].mxu0
  %157 = vmatprep.mubr.bf16.mxu0 0
  %158 = vmatmul.mubr.bf16.gmra.mrb[0].mxu0 %v105
  %v159 = vpop.f32.mrb[0].mxu0
  %v160 = vadd.f32 0.0, %v159
  %v161 = vpop.f32.mrb[0].mxu0
  %v162 = vpop.f32.mrb[0].mxu0
  %v163 = vadd.f32 0.0, %v162
  %v164 = vpop.f32.mrb[0].mxu0
  %165 = vmatprep.mubr.bf16.mxu0 0
  %166 = vmatmul.mubr.bf16.gmra.mrb[0].mxu0 %v108
  %v167 = vpop.f32.mrb[0].mxu0
  %v168 = vadd.f32 0.0, %v167
  %v169 = vpop.f32.mrb[0].mxu0
  %v170 = vpop.f32.mrb[0].mxu0
  %v171 = vadd.f32 0.0, %v170
  %v172 = vpop.f32.mrb[0].mxu0
  %173 = vmatprep.mubr.bf16.mxu0 0
  %174 = vmatmul.mubr.bf16.gmra.mrb[0].mxu0 %v111
  %v175 = vpop.f32.mrb[0].mxu0
  %v176 = vadd.f32 0.0, %v175
  %v177 = vpop.f32.mrb[0].mxu0
  %v178 = vpop.f32.mrb[0].mxu0
  %v179 = vadd.f32 0.0, %v178
  %v180 = vpop.f32.mrb[0].mxu0
  %181 = vdwg.mxu0
  %v182 = vadd.f32 %v60, %v152
  %v183 = vadd.f32 %v61, %v155
  %v184 = vadd.f32 %v62, %v160
  %v185 = vadd.f32 %v63, %v163
  %v186 = vadd.f32 %v64, %v168
  %v187 = vadd.f32 %v65, %v171
  %v188 = vadd.f32 %v66, %v176
  %v189 = vadd.f32 %v67, %v179
  %190 = vst [vmem:[#allocation2] sm:$0xff] %v182
  %191 = vst [vmem:[#allocation2 + $0x8] sm:$0xff] %v183
  %192 = vst [vmem:[#allocation2 + $0x10] sm:$0xff] %v184
  %193 = vst [vmem:[#allocation2 + $0x18] sm:$0xff] %v185
  %194 = vst [vmem:[#allocation2 + $0x20] sm:$0xff] %v186
  %195 = vst [vmem:[#allocation2 + $0x28] sm:$0xff] %v187
  %196 = vst [vmem:[#allocation2 + $0x30] sm:$0xff] %v188
  %197 = vst [vmem:[#allocation2 + $0x38] sm:$0xff] %v189
  // Predicated region
  $region18: #{_lambda_.58} parent=0 // pred_check
    %p198 = pneg %p16
  $region19: #{_lambda_.58} parent=0 // pred_check_branch
    %200 = sbr.rel (%p198) target = $region21
  $region20: #{_lambda_.58} parent=0 // pred_region
    %v201 = vld [vmem:[#allocation2] sm:$0xff]
    %v202 = vld [vmem:[#allocation2 + $0x8] sm:$0xff]
    %v203 = vld [vmem:[#allocation2 + $0x10] sm:$0xff]
    %v204 = vld [vmem:[#allocation2 + $0x18] sm:$0xff]
    %v205 = vld [vmem:[#allocation2 + $0x20] sm:$0xff]
    %v206 = vld [vmem:[#allocation2 + $0x28] sm:$0xff]
    %v207 = vld [vmem:[#allocation2 + $0x30] sm:$0xff]
    %v208 = vld [vmem:[#allocation2 + $0x38] sm:$0xff]
    %v209 = vld [vmem:[%s2] sm:$0x1]
    %v211 = vlaneseq
    %v212 = vshrl.u32 %v211, 7
    %v213 = vsub.s32 0, %v212
    %v214 = vrot.slane %v209, %v213
    %v216 = vadd.f32 %v201, %v214
    %v217 = vadd.f32 %v202, %v214
    %v218 = vadd.f32 %v203, %v214
    %v219 = vadd.f32 %v204, %v214
    %v220 = vadd.f32 %v205, %v214
    %v221 = vadd.f32 %v206, %v214
    %v222 = vadd.f32 %v207, %v214
    %v223 = vadd.f32 %v208, %v214
    %224 = vst [vmem:[%s3] sm:$0xff] %v216
    %225 = vst [vmem:[%s3 + $0x8] sm:$0xff] %v217
    %226 = vst [vmem:[%s3 + $0x10] sm:$0xff] %v218
    %227 = vst [vmem:[%s3 + $0x18] sm:$0xff] %v219
    %228 = vst [vmem:[%s3 + $0x20] sm:$0xff] %v220
    %229 = vst [vmem:[%s3 + $0x28] sm:$0xff] %v221
    %230 = vst [vmem:[%s3 + $0x30] sm:$0xff] %v222
    %231 = vst [vmem:[%s3 + $0x38] sm:$0xff] %v223
  $region21: #{_lambda_.58} parent=0 // pred_fallthru
    _
  // Predicated region
  $region22: #{_lambda_.58} parent=0 // pred_check
    _
  $region23: #{_lambda_.58} parent=0 // pred_check_branch
    %233 = sbr.rel (0) target = $region25
  $region24: #{_lambda_.58} parent=0 // pred_region
    _
  $region25: #{_lambda_.58} parent=0 // pred_fallthru
    _
  // Predicated region
  $region26: #{_lambda_.58} parent=0 // pred_check
    _
  $region27: #{_lambda_.58} parent=0 // pred_check_branch
    %235 = sbr.rel (0) target = $region29
  $region28: #{_lambda_.58} parent=0 // pred_region
    _
  $region29: #{_lambda_.58} parent=0 // pred_fallthru
    _

// kernel: _lambda_.62
$region0: #{_lambda_.62}
  #allocation0 [shape = 'u32[]', space=smem, size = 0x4, offset = 0x4, fixed_abs, tag = 'smem constant byte address 0x4 - core index']
  #allocation1 [shape = 'u32[144,128]{1,0:T(1,128)}', space=vmem, size = 0x12000, scoped, tag = 'internal scratch']
  #allocation2 [shape = 'f32[32,128]{1,0:T(8,128)}', space=vmem, size = 0x4000, scoped, tag = 'scratch operand']
  %s0 = inlined_call_operand.vmem [shape: bf16[32,24], index: 0, kind: input, shape index: {}]
  %s1 = inlined_call_operand.vmem [shape: bf16[24,128], index: 1, kind: input, shape index: {}]
  %s2 = inlined_call_operand.vmem [shape: f32[1,128], index: 2, kind: input, shape index: {}]
  %s3 = inlined_call_operand.vmem [shape: f32[32,128], index: 3, kind: output, shape index: {}]
  %s4 = sld [smem:[#allocation0]]
  $region30: #{_lambda_.62} parent=0
    _
  %s6 = ssub.s32 1, %s4
  %s7 = scalar_select 0, %s6, %s4
  // Predicated region
  $region2: #{_lambda_.62} parent=0 // pred_check
    _
  $region3: #{_lambda_.62} parent=0 // pred_check_branch
    %9 = sbr.rel (0) target = $region5
  $region4: #{_lambda_.62} parent=0 // pred_region
    _
  $region5: #{_lambda_.62} parent=0 // pred_fallthru
    _
  // Predicated region
  $region6: #{_lambda_.62} parent=0 // pred_check
    _
  $region7: #{_lambda_.62} parent=0 // pred_check_branch
    %11 = sbr.rel (0) target = $region9
  $region8: #{_lambda_.62} parent=0 // pred_region
    _
  $region9: #{_lambda_.62} parent=0 // pred_fallthru
    _
  // Predicated region
  $region10: #{_lambda_.62} parent=0 // pred_check
    _
  $region11: #{_lambda_.62} parent=0 // pred_check_branch
    %13 = sbr.rel (0) target = $region13
  $region12: #{_lambda_.62} parent=0 // pred_region
    _
  $region13: #{_lambda_.62} parent=0 // pred_fallthru
    _
  %p16 = scmp.eq.s32.totalorder 0, 0
  // Predicated region
  $region14: #{_lambda_.62} parent=0 // pred_check
    %p17 = pneg %p16
  $region15: #{_lambda_.62} parent=0 // pred_check_branch
    %19 = sbr.rel (%p17) target = $region17
  $region16: #{_lambda_.62} parent=0 // pred_region
    %20 = vst [vmem:[#allocation2] sm:$0xff] 0.0
    %21 = vst [vmem:[#allocation2 + $0x8] sm:$0xff] 0.0
    %22 = vst [vmem:[#allocation2 + $0x10] sm:$0xff] 0.0
    %23 = vst [vmem:[#allocation2 + $0x18] sm:$0xff] 0.0
  $region17: #{_lambda_.62} parent=0 // pred_fallthru
    _
  %v24 = vld [vmem:[%s0] sm:$0xf]
  %v25 = vld [vmem:[%s0 + $0x4] sm:$0xf]
  %v26 = vld [vmem:[%s0 + $0x8] sm:$0xf]
  %v27 = vld [vmem:[%s0 + $0xc] sm:$0xf]
  %vm28 = vcmp.ge.bf16.partialorder %v24, 0
  %vm29 = vcmp.ge.bf16.partialorder %v25, 0
  %vm30 = vcmp.ge.bf16.partialorder %v26, 0
  %vm31 = vcmp.ge.bf16.partialorder %v27, 0
  %v32 = vmul.bf16 %v24, 1045249613
  %v33 = vmul.bf16 %v25, 1045249613
  %v34 = vmul.bf16 %v26, 1045249613
  %v35 = vmul.bf16 %v27, 1045249613
  %v36 = vsel %vm28, %v24, %v32
  %v37 = vsel %vm29, %v25, %v33
  %v38 = vsel %vm30, %v26, %v34
  %v39 = vsel %vm31, %v27, %v35
  %v40 = vld [vmem:[#allocation2] sm:$0xff]
  %v41 = vld [vmem:[#allocation2 + $0x8] sm:$0xff]
  %v42 = vld [vmem:[#allocation2 + $0x10] sm:$0xff]
  %v43 = vld [vmem:[#allocation2 + $0x18] sm:$0xff]
  %v44 = vld [vmem:[%s1] sm:$0xf]
  %v45 = vld [vmem:[%s1 + $0x4] sm:$0xf]
  %v46 = vld [vmem:[%s1 + $0x8] sm:$0xf]
  %v51 = vunpack.c.l.b16 %v36
  %v52 = vunpack.c.l.b16 %v37
  %v53 = vunpack.c.l.b16 %v38
  %v54 = vunpack.c.l.b16 %v39
  %v55 = vpack.c.b16 %v52, %v51
  %v56 = vpack.c.b16 %v54, %v53
  %v60 = vunpack.c.l.b16 %v44
  %v61 = vunpack.c.l.b16 %v45
  %v62 = vunpack.c.l.b16 %v46
  %v63 = vpack.c.b16 %v61, %v60
  %v64 = vpack.c.b16 %v62, %v62
  %vm66 = vcmask 195584
  %v68 = vsel %vm66, %v55, 0
  %v71 = vsel %vm66, %v56, 0
  %vm73 = vcmask 1043456
  %v75 = vsel %vm73, %v64, 0
  %77 = vmatprep.subr.bf16.mxu0 0
  %78 = vmatpush1.bf16.msra.mxu0 %v63
  %79 = vmatprep.subr.bf16.mxu0 0
  %80 = vmatpush1.bf16.msra.mxu0 %v75
  %81 = vmatprep.subr.bf16.mxu0 0
  %82 = vmatpush1.bf16.msra.mxu0 0
  %83 = vmatprep.subr.bf16.mxu0 0
  %84 = vmatpush1.bf16.msra.mxu0 0
  %85 = vmatprep.subr.bf16.mxu0 0
  %86 = vmatpush1.bf16.msra.mxu0 0
  %87 = vmatprep.subr.bf16.mxu0 0
  %88 = vmatpush1.bf16.msra.mxu0 0
  %89 = vmatprep.subr.bf16.mxu0 0
  %90 = vmatpush1.bf16.msra.mxu0 0
  %91 = vmatprep.subr.bf16.mxu0 0
  %92 = vmatpush1.bf16.msra.mxu0 0
  %93 = vmatprep.subr.bf16.mxu0 0
  %94 = vmatpush1.bf16.msra.mxu0 0
  %95 = vmatprep.subr.bf16.mxu0 0
  %96 = vmatpush1.bf16.msra.mxu0 0
  %97 = vmatprep.subr.bf16.mxu0 0
  %98 = vmatpush1.bf16.msra.mxu0 0
  %99 = vmatprep.subr.bf16.mxu0 0
  %100 = vmatpush1.bf16.msra.mxu0 0
  %101 = vmatprep.subr.bf16.mxu0 0
  %102 = vmatpush1.bf16.msra.mxu0 0
  %103 = vmatprep.subr.bf16.mxu0 0
  %104 = vmatpush1.bf16.msra.mxu0 0
  %105 = vmatprep.subr.bf16.mxu0 0
  %106 = vmatpush1.bf16.msra.mxu0 0
  %107 = vmatprep.subr.bf16.mxu0 0
  %108 = vmatpush1.bf16.msra.mxu0 0
  %109 = vmatprep.mubr.bf16.mxu0 0
  %110 = vmatmul.mubr.bf16.gmra.mrb[0].mxu0 %v68
  %v111 = vpop.f32.mrb[0].mxu0
  %v112 = vadd.f32 0.0, %v111
  %v113 = vpop.f32.mrb[0].mxu0
  %v114 = vpop.f32.mrb[0].mxu0
  %v115 = vadd.f32 0.0, %v114
  %v116 = vpop.f32.mrb[0].mxu0
  %117 = vmatprep.mubr.bf16.mxu0 0
  %118 = vmatmul.mubr.bf16.gmra.mrb[0].mxu0 %v71
  %v119 = vpop.f32.mrb[0].mxu0
  %v120 = vadd.f32 0.0, %v119
  %v121 = vpop.f32.mrb[0].mxu0
  %v122 = vpop.f32.mrb[0].mxu0
  %v123 = vadd.f32 0.0, %v122
  %v124 = vpop.f32.mrb[0].mxu0
  %125 = vdwg.mxu0
  %v126 = vadd.f32 %v40, %v112
  %v127 = vadd.f32 %v41, %v115
  %v128 = vadd.f32 %v42, %v120
  %v129 = vadd.f32 %v43, %v123
  %130 = vst [vmem:[#allocation2] sm:$0xff] %v126
  %131 = vst [vmem:[#allocation2 + $0x8] sm:$0xff] %v127
  %132 = vst [vmem:[#allocation2 + $0x10] sm:$0xff] %v128
  %133 = vst [vmem:[#allocation2 + $0x18] sm:$0xff] %v129
  // Predicated region
  $region18: #{_lambda_.62} parent=0 // pred_check
    %p134 = pneg %p16
  $region19: #{_lambda_.62} parent=0 // pred_check_branch
    %136 = sbr.rel (%p134) target = $region21
  $region20: #{_lambda_.62} parent=0 // pred_region
    %v137 = vld [vmem:[#allocation2] sm:$0xff]
    %v138 = vld [vmem:[#allocation2 + $0x8] sm:$0xff]
    %v139 = vld [vmem:[#allocation2 + $0x10] sm:$0xff]
    %v140 = vld [vmem:[#allocation2 + $0x18] sm:$0xff]
    %v141 = vld [vmem:[%s2] sm:$0x1]
    %v143 = vlaneseq
    %v144 = vshrl.u32 %v143, 7
    %v145 = vsub.s32 0, %v144
    %v146 = vrot.slane %v141, %v145
    %v148 = vadd.f32 %v137, %v146
    %v149 = vadd.f32 %v138, %v146
    %v150 = vadd.f32 %v139, %v146
    %v151 = vadd.f32 %v140, %v146
    %152 = vst [vmem:[%s3] sm:$0xff] %v148
    %153 = vst [vmem:[%s3 + $0x8] sm:$0xff] %v149
    %154 = vst [vmem:[%s3 + $0x10] sm:$0xff] %v150
    %155 = vst [vmem:[%s3 + $0x18] sm:$0xff] %v151
  $region21: #{_lambda_.62} parent=0 // pred_fallthru
    _
  // Predicated region
  $region22: #{_lambda_.62} parent=0 // pred_check
    _
  $region23: #{_lambda_.62} parent=0 // pred_check_branch
    %157 = sbr.rel (0) target = $region25
  $region24: #{_lambda_.62} parent=0 // pred_region
    _
  $region25: #{_lambda_.62} parent=0 // pred_fallthru
    _
  // Predicated region
  $region26: #{_lambda_.62} parent=0 // pred_check
    _
  $region27: #{_lambda_.62} parent=0 // pred_check_branch
    %159 = sbr.rel (0) target = $region29
  $region28: #{_lambda_.62} parent=0 // pred_region
    _
  $region29: #{_lambda_.62} parent=0 // pred_fallthru
    _

// kernel: _lambda_.61
$region0: #{_lambda_.61}
  #allocation0 [shape = 'u32[]', space=smem, size = 0x4, offset = 0x4, fixed_abs, tag = 'smem constant byte address 0x4 - core index']
  #allocation1 [shape = 'u32[144,128]{1,0:T(1,128)}', space=vmem, size = 0x12000, scoped, tag = 'internal scratch']
  #allocation2 [shape = 'f32[64,128]{1,0:T(8,128)}', space=vmem, size = 0x8000, scoped, tag = 'scratch operand']
  %s0 = inlined_call_operand.vmem [shape: bf16[64,8], index: 0, kind: input, shape index: {}]
  %s1 = inlined_call_operand.vmem [shape: bf16[8,128], index: 1, kind: input, shape index: {}]
  %s2 = inlined_call_operand.vmem [shape: f32[1,128], index: 2, kind: input, shape index: {}]
  %s3 = inlined_call_operand.vmem [shape: f32[64,128], index: 3, kind: output, shape index: {}]
  %s4 = sld [smem:[#allocation0]]
  $region30: #{_lambda_.61} parent=0
    _
  %s6 = ssub.s32 1, %s4
  %s7 = scalar_select 0, %s6, %s4
  // Predicated region
  $region2: #{_lambda_.61} parent=0 // pred_check
    _
  $region3: #{_lambda_.61} parent=0 // pred_check_branch
    %9 = sbr.rel (0) target = $region5
  $region4: #{_lambda_.61} parent=0 // pred_region
    _
  $region5: #{_lambda_.61} parent=0 // pred_fallthru
    _
  // Predicated region
  $region6: #{_lambda_.61} parent=0 // pred_check
    _
  $region7: #{_lambda_.61} parent=0 // pred_check_branch
    %11 = sbr.rel (0) target = $region9
  $region8: #{_lambda_.61} parent=0 // pred_region
    _
  $region9: #{_lambda_.61} parent=0 // pred_fallthru
    _
  // Predicated region
  $region10: #{_lambda_.61} parent=0 // pred_check
    _
  $region11: #{_lambda_.61} parent=0 // pred_check_branch
    %13 = sbr.rel (0) target = $region13
  $region12: #{_lambda_.61} parent=0 // pred_region
    _
  $region13: #{_lambda_.61} parent=0 // pred_fallthru
    _
  %p15 = scmp.eq.s32.totalorder 0, 0
  // Predicated region
  $region14: #{_lambda_.61} parent=0 // pred_check
    %p16 = pneg %p15
  $region15: #{_lambda_.61} parent=0 // pred_check_branch
    %18 = sbr.rel (%p16) target = $region17
  $region16: #{_lambda_.61} parent=0 // pred_region
    %19 = vst [vmem:[#allocation2] sm:$0xff] 0.0
    %20 = vst [vmem:[#allocation2 + $0x8] sm:$0xff] 0.0
    %21 = vst [vmem:[#allocation2 + $0x10] sm:$0xff] 0.0
    %22 = vst [vmem:[#allocation2 + $0x18] sm:$0xff] 0.0
    %23 = vst [vmem:[#allocation2 + $0x20] sm:$0xff] 0.0
    %24 = vst [vmem:[#allocation2 + $0x28] sm:$0xff] 0.0
    %25 = vst [vmem:[#allocation2 + $0x30] sm:$0xff] 0.0
    %26 = vst [vmem:[#allocation2 + $0x38] sm:$0xff] 0.0
  $region17: #{_lambda_.61} parent=0 // pred_fallthru
    _
  %v27 = vld [vmem:[%s0] sm:$0xf]
  %v28 = vld [vmem:[%s0 + $0x4] sm:$0xf]
  %v29 = vld [vmem:[%s0 + $0x8] sm:$0xf]
  %v30 = vld [vmem:[%s0 + $0xc] sm:$0xf]
  %v31 = vld [vmem:[%s0 + $0x10] sm:$0xf]
  %v32 = vld [vmem:[%s0 + $0x14] sm:$0xf]
  %v33 = vld [vmem:[%s0 + $0x18] sm:$0xf]
  %v34 = vld [vmem:[%s0 + $0x1c] sm:$0xf]
  %v35 = vld [vmem:[#allocation2] sm:$0xff]
  %v36 = vld [vmem:[#allocation2 + $0x8] sm:$0xff]
  %v37 = vld [vmem:[#allocation2 + $0x10] sm:$0xff]
  %v38 = vld [vmem:[#allocation2 + $0x18] sm:$0xff]
  %v39 = vld [vmem:[#allocation2 + $0x20] sm:$0xff]
  %v40 = vld [vmem:[#allocation2 + $0x28] sm:$0xff]
  %v41 = vld [vmem:[#allocation2 + $0x30] sm:$0xff]
  %v42 = vld [vmem:[#allocation2 + $0x38] sm:$0xff]
  %v43 = vld [vmem:[%s1] sm:$0xf]
  %v52 = vunpack.c.l.b16 %v27
  %v53 = vunpack.c.l.b16 %v28
  %v54 = vunpack.c.l.b16 %v29
  %v55 = vunpack.c.l.b16 %v30
  %v56 = vunpack.c.l.b16 %v31
  %v57 = vunpack.c.l.b16 %v32
  %v58 = vunpack.c.l.b16 %v33
  %v59 = vunpack.c.l.b16 %v34
  %v60 = vpack.c.b16 %v53, %v52
  %v61 = vpack.c.b16 %v55, %v54
  %v62 = vpack.c.b16 %v57, %v56
  %v63 = vpack.c.b16 %v59, %v58
  %vm64 = vcmask 64512
  %v66 = vsel %vm64, %v60, 0
  %v69 = vsel %vm64, %v61, 0
  %v72 = vsel %vm64, %v62, 0
  %v75 = vsel %vm64, %v63, 0
  %vm77 = vcmask 1043456
  %v79 = vsel %vm77, %v43, 0
  %81 = vmatprep.subr.bf16.mxu0 0
  %82 = vmatpush1.bf16.msra.mxu0 %v79
  %83 = vmatprep.subr.bf16.mxu0 0
  %84 = vmatpush1.bf16.msra.mxu0 0
  %85 = vmatprep.subr.bf16.mxu0 0
  %86 = vmatpush1.bf16.msra.mxu0 0
  %87 = vmatprep.subr.bf16.mxu0 0
  %88 = vmatpush1.bf16.msra.mxu0 0
  %89 = vmatprep.subr.bf16.mxu0 0
  %90 = vmatpush1.bf16.msra.mxu0 0
  %91 = vmatprep.subr.bf16.mxu0 0
  %92 = vmatpush1.bf16.msra.mxu0 0
  %93 = vmatprep.subr.bf16.mxu0 0
  %94 = vmatpush1.bf16.msra.mxu0 0
  %95 = vmatprep.subr.bf16.mxu0 0
  %96 = vmatpush1.bf16.msra.mxu0 0
  %97 = vmatprep.subr.bf16.mxu0 0
  %98 = vmatpush1.bf16.msra.mxu0 0
  %99 = vmatprep.subr.bf16.mxu0 0
  %100 = vmatpush1.bf16.msra.mxu0 0
  %101 = vmatprep.subr.bf16.mxu0 0
  %102 = vmatpush1.bf16.msra.mxu0 0
  %103 = vmatprep.subr.bf16.mxu0 0
  %104 = vmatpush1.bf16.msra.mxu0 0
  %105 = vmatprep.subr.bf16.mxu0 0
  %106 = vmatpush1.bf16.msra.mxu0 0
  %107 = vmatprep.subr.bf16.mxu0 0
  %108 = vmatpush1.bf16.msra.mxu0 0
  %109 = vmatprep.subr.bf16.mxu0 0
  %110 = vmatpush1.bf16.msra.mxu0 0
  %111 = vmatprep.subr.bf16.mxu0 0
  %112 = vmatpush1.bf16.msra.mxu0 0
  %113 = vmatprep.mubr.bf16.mxu0 0
  %114 = vmatmul.mubr.bf16.gmra.mrb[0].mxu0 %v66
  %v115 = vpop.f32.mrb[0].mxu0
  %v116 = vadd.f32 0.0, %v115
  %v117 = vpop.f32.mrb[0].mxu0
  %v118 = vpop.f32.mrb[0].mxu0
  %v119 = vadd.f32 0.0, %v118
  %v120 = vpop.f32.mrb[0].mxu0
  %121 = vmatprep.mubr.bf16.mxu0 0
  %122 = vmatmul.mubr.bf16.gmra.mrb[0].mxu0 %v69
  %v123 = vpop.f32.mrb[0].mxu0
  %v124 = vadd.f32 0.0, %v123
  %v125 = vpop.f32.mrb[0].mxu0
  %v126 = vpop.f32.mrb[0].mxu0
  %v127 = vadd.f32 0.0, %v126
  %v128 = vpop.f32.mrb[0].mxu0
  %129 = vmatprep.mubr.bf16.mxu0 0
  %130 = vmatmul.mubr.bf16.gmra.mrb[0].mxu0 %v72
  %v131 = vpop.f32.mrb[0].mxu0
  %v132 = vadd.f32 0.0, %v131
  %v133 = vpop.f32.mrb[0].mxu0
  %v134 = vpop.f32.mrb[0].mxu0
  %v135 = vadd.f32 0.0, %v134
  %v136 = vpop.f32.mrb[0].mxu0
  %137 = vmatprep.mubr.bf16.mxu0 0
  %138 = vmatmul.mubr.bf16.gmra.mrb[0].mxu0 %v75
  %v139 = vpop.f32.mrb[0].mxu0
  %v140 = vadd.f32 0.0, %v139
  %v141 = vpop.f32.mrb[0].mxu0
  %v142 = vpop.f32.mrb[0].mxu0
  %v143 = vadd.f32 0.0, %v142
  %v144 = vpop.f32.mrb[0].mxu0
  %145 = vdwg.mxu0
  %v146 = vadd.f32 %v35, %v116
  %v147 = vadd.f32 %v36, %v119
  %v148 = vadd.f32 %v37, %v124
  %v149 = vadd.f32 %v38, %v127
  %v150 = vadd.f32 %v39, %v132
  %v151 = vadd.f32 %v40, %v135
  %v152 = vadd.f32 %v41, %v140
  %v153 = vadd.f32 %v42, %v143
  %154 = vst [vmem:[#allocation2] sm:$0xff] %v146
  %155 = vst [vmem:[#allocation2 + $0x8] sm:$0xff] %v147
  %156 = vst [vmem:[#allocation2 + $0x10] sm:$0xff] %v148
  %157 = vst [vmem:[#allocation2 + $0x18] sm:$0xff] %v149
  %158 = vst [vmem:[#allocation2 + $0x20] sm:$0xff] %v150
  %159 = vst [vmem:[#allocation2 + $0x28] sm:$0xff] %v151
  %160 = vst [vmem:[#allocation2 + $0x30] sm:$0xff] %v152
  %161 = vst [vmem:[#allocation2 + $0x38] sm:$0xff] %v153
  // Predicated region
  $region18: #{_lambda_.61} parent=0 // pred_check
    %p162 = pneg %p15
  $region19: #{_lambda_.61} parent=0 // pred_check_branch
    %164 = sbr.rel (%p162) target = $region21
  $region20: #{_lambda_.61} parent=0 // pred_region
    %v165 = vld [vmem:[#allocation2] sm:$0xff]
    %v166 = vld [vmem:[#allocation2 + $0x8] sm:$0xff]
    %v167 = vld [vmem:[#allocation2 + $0x10] sm:$0xff]
    %v168 = vld [vmem:[#allocation2 + $0x18] sm:$0xff]
    %v169 = vld [vmem:[#allocation2 + $0x20] sm:$0xff]
    %v170 = vld [vmem:[#allocation2 + $0x28] sm:$0xff]
    %v171 = vld [vmem:[#allocation2 + $0x30] sm:$0xff]
    %v172 = vld [vmem:[#allocation2 + $0x38] sm:$0xff]
    %v173 = vld [vmem:[%s2] sm:$0x1]
    %v175 = vlaneseq
    %v176 = vshrl.u32 %v175, 7
    %v177 = vsub.s32 0, %v176
    %v178 = vrot.slane %v173, %v177
    %v180 = vadd.f32 %v165, %v178
    %v181 = vadd.f32 %v166, %v178
    %v182 = vadd.f32 %v167, %v178
    %v183 = vadd.f32 %v168, %v178
    %v184 = vadd.f32 %v169, %v178
    %v185 = vadd.f32 %v170, %v178
    %v186 = vadd.f32 %v171, %v178
    %v187 = vadd.f32 %v172, %v178
    %188 = vst [vmem:[%s3] sm:$0xff] %v180
    %189 = vst [vmem:[%s3 + $0x8] sm:$0xff] %v181
    %190 = vst [vmem:[%s3 + $0x10] sm:$0xff] %v182
    %191 = vst [vmem:[%s3 + $0x18] sm:$0xff] %v183
    %192 = vst [vmem:[%s3 + $0x20] sm:$0xff] %v184
    %193 = vst [vmem:[%s3 + $0x28] sm:$0xff] %v185
    %194 = vst [vmem:[%s3 + $0x30] sm:$0xff] %v186
    %195 = vst [vmem:[%s3 + $0x38] sm:$0xff] %v187
  $region21: #{_lambda_.61} parent=0 // pred_fallthru
    _
  // Predicated region
  $region22: #{_lambda_.61} parent=0 // pred_check
    _
  $region23: #{_lambda_.61} parent=0 // pred_check_branch
    %197 = sbr.rel (0) target = $region25
  $region24: #{_lambda_.61} parent=0 // pred_region
    _
  $region25: #{_lambda_.61} parent=0 // pred_fallthru
    _
  // Predicated region
  $region26: #{_lambda_.61} parent=0 // pred_check
    _
  $region27: #{_lambda_.61} parent=0 // pred_check_branch
    %199 = sbr.rel (0) target = $region29
  $region28: #{_lambda_.61} parent=0 // pred_region
    _
  $region29: #{_lambda_.61} parent=0 // pred_fallthru
    _

// kernel: _lambda_.65
$region0: #{_lambda_.65}
  #allocation0 [shape = 'u32[]', space=smem, size = 0x4, offset = 0x4, fixed_abs, tag = 'smem constant byte address 0x4 - core index']
  #allocation1 [shape = 'u32[144,128]{1,0:T(1,128)}', space=vmem, size = 0x12000, scoped, tag = 'internal scratch']
  #allocation2 [shape = 'f32[32,128]{1,0:T(8,128)}', space=vmem, size = 0x4000, scoped, tag = 'scratch operand']
  %s0 = inlined_call_operand.vmem [shape: bf16[32,8], index: 0, kind: input, shape index: {}]
  %s1 = inlined_call_operand.vmem [shape: bf16[8,128], index: 1, kind: input, shape index: {}]
  %s2 = inlined_call_operand.vmem [shape: f32[1,128], index: 2, kind: input, shape index: {}]
  %s3 = inlined_call_operand.vmem [shape: f32[32,128], index: 3, kind: output, shape index: {}]
  %s4 = sld [smem:[#allocation0]]
  $region30: #{_lambda_.65} parent=0
    _
  %s6 = ssub.s32 1, %s4
  %s7 = scalar_select 0, %s6, %s4
  // Predicated region
  $region2: #{_lambda_.65} parent=0 // pred_check
    _
  $region3: #{_lambda_.65} parent=0 // pred_check_branch
    %9 = sbr.rel (0) target = $region5
  $region4: #{_lambda_.65} parent=0 // pred_region
    _
  $region5: #{_lambda_.65} parent=0 // pred_fallthru
    _
  // Predicated region
  $region6: #{_lambda_.65} parent=0 // pred_check
    _
  $region7: #{_lambda_.65} parent=0 // pred_check_branch
    %11 = sbr.rel (0) target = $region9
  $region8: #{_lambda_.65} parent=0 // pred_region
    _
  $region9: #{_lambda_.65} parent=0 // pred_fallthru
    _
  // Predicated region
  $region10: #{_lambda_.65} parent=0 // pred_check
    _
  $region11: #{_lambda_.65} parent=0 // pred_check_branch
    %13 = sbr.rel (0) target = $region13
  $region12: #{_lambda_.65} parent=0 // pred_region
    _
  $region13: #{_lambda_.65} parent=0 // pred_fallthru
    _
  %p15 = scmp.eq.s32.totalorder 0, 0
  // Predicated region
  $region14: #{_lambda_.65} parent=0 // pred_check
    %p16 = pneg %p15
  $region15: #{_lambda_.65} parent=0 // pred_check_branch
    %18 = sbr.rel (%p16) target = $region17
  $region16: #{_lambda_.65} parent=0 // pred_region
    %19 = vst [vmem:[#allocation2] sm:$0xff] 0.0
    %20 = vst [vmem:[#allocation2 + $0x8] sm:$0xff] 0.0
    %21 = vst [vmem:[#allocation2 + $0x10] sm:$0xff] 0.0
    %22 = vst [vmem:[#allocation2 + $0x18] sm:$0xff] 0.0
  $region17: #{_lambda_.65} parent=0 // pred_fallthru
    _
  %v23 = vld [vmem:[%s0] sm:$0xf]
  %v24 = vld [vmem:[%s0 + $0x4] sm:$0xf]
  %v25 = vld [vmem:[%s0 + $0x8] sm:$0xf]
  %v26 = vld [vmem:[%s0 + $0xc] sm:$0xf]
  %v27 = vld [vmem:[#allocation2] sm:$0xff]
  %v28 = vld [vmem:[#allocation2 + $0x8] sm:$0xff]
  %v29 = vld [vmem:[#allocation2 + $0x10] sm:$0xff]
  %v30 = vld [vmem:[#allocation2 + $0x18] sm:$0xff]
  %v31 = vld [vmem:[%s1] sm:$0xf]
  %v36 = vunpack.c.l.b16 %v23
  %v37 = vunpack.c.l.b16 %v24
  %v38 = vunpack.c.l.b16 %v25
  %v39 = vunpack.c.l.b16 %v26
  %v40 = vpack.c.b16 %v37, %v36
  %v41 = vpack.c.b16 %v39, %v38
  %vm42 = vcmask 64512
  %v44 = vsel %vm42, %v40, 0
  %v47 = vsel %vm42, %v41, 0
  %vm49 = vcmask 1043456
  %v51 = vsel %vm49, %v31, 0
  %53 = vmatprep.subr.bf16.mxu0 0
  %54 = vmatpush1.bf16.msra.mxu0 %v51
  %55 = vmatprep.subr.bf16.mxu0 0
  %56 = vmatpush1.bf16.msra.mxu0 0
  %57 = vmatprep.subr.bf16.mxu0 0
  %58 = vmatpush1.bf16.msra.mxu0 0
  %59 = vmatprep.subr.bf16.mxu0 0
  %60 = vmatpush1.bf16.msra.mxu0 0
  %61 = vmatprep.subr.bf16.mxu0 0
  %62 = vmatpush1.bf16.msra.mxu0 0
  %63 = vmatprep.subr.bf16.mxu0 0
  %64 = vmatpush1.bf16.msra.mxu0 0
  %65 = vmatprep.subr.bf16.mxu0 0
  %66 = vmatpush1.bf16.msra.mxu0 0
  %67 = vmatprep.subr.bf16.mxu0 0
  %68 = vmatpush1.bf16.msra.mxu0 0
  %69 = vmatprep.subr.bf16.mxu0 0
  %70 = vmatpush1.bf16.msra.mxu0 0
  %71 = vmatprep.subr.bf16.mxu0 0
  %72 = vmatpush1.bf16.msra.mxu0 0
  %73 = vmatprep.subr.bf16.mxu0 0
  %74 = vmatpush1.bf16.msra.mxu0 0
  %75 = vmatprep.subr.bf16.mxu0 0
  %76 = vmatpush1.bf16.msra.mxu0 0
  %77 = vmatprep.subr.bf16.mxu0 0
  %78 = vmatpush1.bf16.msra.mxu0 0
  %79 = vmatprep.subr.bf16.mxu0 0
  %80 = vmatpush1.bf16.msra.mxu0 0
  %81 = vmatprep.subr.bf16.mxu0 0
  %82 = vmatpush1.bf16.msra.mxu0 0
  %83 = vmatprep.subr.bf16.mxu0 0
  %84 = vmatpush1.bf16.msra.mxu0 0
  %85 = vmatprep.mubr.bf16.mxu0 0
  %86 = vmatmul.mubr.bf16.gmra.mrb[0].mxu0 %v44
  %v87 = vpop.f32.mrb[0].mxu0
  %v88 = vadd.f32 0.0, %v87
  %v89 = vpop.f32.mrb[0].mxu0
  %v90 = vpop.f32.mrb[0].mxu0
  %v91 = vadd.f32 0.0, %v90
  %v92 = vpop.f32.mrb[0].mxu0
  %93 = vmatprep.mubr.bf16.mxu0 0
  %94 = vmatmul.mubr.bf16.gmra.mrb[0].mxu0 %v47
  %v95 = vpop.f32.mrb[0].mxu0
  %v96 = vadd.f32 0.0, %v95
  %v97 = vpop.f32.mrb[0].mxu0
  %v98 = vpop.f32.mrb[0].mxu0
  %v99 = vadd.f32 0.0, %v98
  %v100 = vpop.f32.mrb[0].mxu0
  %101 = vdwg.mxu0
  %v102 = vadd.f32 %v27, %v88
  %v103 = vadd.f32 %v28, %v91
  %v104 = vadd.f32 %v29, %v96
  %v105 = vadd.f32 %v30, %v99
  %106 = vst [vmem:[#allocation2] sm:$0xff] %v102
  %107 = vst [vmem:[#allocation2 + $0x8] sm:$0xff] %v103
  %108 = vst [vmem:[#allocation2 + $0x10] sm:$0xff] %v104
  %109 = vst [vmem:[#allocation2 + $0x18] sm:$0xff] %v105
  // Predicated region
  $region18: #{_lambda_.65} parent=0 // pred_check
    %p110 = pneg %p15
  $region19: #{_lambda_.65} parent=0 // pred_check_branch
    %112 = sbr.rel (%p110) target = $region21
  $region20: #{_lambda_.65} parent=0 // pred_region
    %v113 = vld [vmem:[#allocation2] sm:$0xff]
    %v114 = vld [vmem:[#allocation2 + $0x8] sm:$0xff]
    %v115 = vld [vmem:[#allocation2 + $0x10] sm:$0xff]
    %v116 = vld [vmem:[#allocation2 + $0x18] sm:$0xff]
    %v117 = vld [vmem:[%s2] sm:$0x1]
    %v119 = vlaneseq
    %v120 = vshrl.u32 %v119, 7
    %v121 = vsub.s32 0, %v120
    %v122 = vrot.slane %v117, %v121
    %v124 = vadd.f32 %v113, %v122
    %v125 = vadd.f32 %v114, %v122
    %v126 = vadd.f32 %v115, %v122
    %v127 = vadd.f32 %v116, %v122
    %128 = vst [vmem:[%s3] sm:$0xff] %v124
    %129 = vst [vmem:[%s3 + $0x8] sm:$0xff] %v125
    %130 = vst [vmem:[%s3 + $0x10] sm:$0xff] %v126
    %131 = vst [vmem:[%s3 + $0x18] sm:$0xff] %v127
  $region21: #{_lambda_.65} parent=0 // pred_fallthru
    _
  // Predicated region
  $region22: #{_lambda_.65} parent=0 // pred_check
    _
  $region23: #{_lambda_.65} parent=0 // pred_check_branch
    %133 = sbr.rel (0) target = $region25
  $region24: #{_lambda_.65} parent=0 // pred_region
    _
  $region25: #{_lambda_.65} parent=0 // pred_fallthru
    _
  // Predicated region
  $region26: #{_lambda_.65} parent=0 // pred_check
    _
  $region27: #{_lambda_.65} parent=0 // pred_check_branch
    %135 = sbr.rel (0) target = $region29
  $region28: #{_lambda_.65} parent=0 // pred_region
    _
  $region29: #{_lambda_.65} parent=0 // pred_fallthru
    _

// kernel: _lambda_.66
$region0: #{_lambda_.66}
  #allocation0 [shape = 'u32[]', space=smem, size = 0x4, offset = 0x4, fixed_abs, tag = 'smem constant byte address 0x4 - core index']
  #allocation1 [shape = 'u32[144,128]{1,0:T(1,128)}', space=vmem, size = 0x12000, scoped, tag = 'internal scratch']
  #allocation2 [shape = 'f32[16,128]{1,0:T(8,128)}', space=vmem, size = 0x2000, scoped, tag = 'scratch operand']
  %s0 = inlined_call_operand.vmem [shape: bf16[16,24], index: 0, kind: input, shape index: {}]
  %s1 = inlined_call_operand.vmem [shape: bf16[24,128], index: 1, kind: input, shape index: {}]
  %s2 = inlined_call_operand.vmem [shape: f32[1,128], index: 2, kind: input, shape index: {}]
  %s3 = inlined_call_operand.vmem [shape: f32[16,128], index: 3, kind: output, shape index: {}]
  %s4 = sld [smem:[#allocation0]]
  $region30: #{_lambda_.66} parent=0
    _
  %s6 = ssub.s32 1, %s4
  %s7 = scalar_select 0, %s6, %s4
  // Predicated region
  $region2: #{_lambda_.66} parent=0 // pred_check
    _
  $region3: #{_lambda_.66} parent=0 // pred_check_branch
    %9 = sbr.rel (0) target = $region5
  $region4: #{_lambda_.66} parent=0 // pred_region
    _
  $region5: #{_lambda_.66} parent=0 // pred_fallthru
    _
  // Predicated region
  $region6: #{_lambda_.66} parent=0 // pred_check
    _
  $region7: #{_lambda_.66} parent=0 // pred_check_branch
    %11 = sbr.rel (0) target = $region9
  $region8: #{_lambda_.66} parent=0 // pred_region
    _
  $region9: #{_lambda_.66} parent=0 // pred_fallthru
    _
  // Predicated region
  $region10: #{_lambda_.66} parent=0 // pred_check
    _
  $region11: #{_lambda_.66} parent=0 // pred_check_branch
    %13 = sbr.rel (0) target = $region13
  $region12: #{_lambda_.66} parent=0 // pred_region
    _
  $region13: #{_lambda_.66} parent=0 // pred_fallthru
    _
  %p16 = scmp.eq.s32.totalorder 0, 0
  // Predicated region
  $region14: #{_lambda_.66} parent=0 // pred_check
    %p17 = pneg %p16
  $region15: #{_lambda_.66} parent=0 // pred_check_branch
    %19 = sbr.rel (%p17) target = $region17
  $region16: #{_lambda_.66} parent=0 // pred_region
    %20 = vst [vmem:[#allocation2] sm:$0xff] 0.0
    %21 = vst [vmem:[#allocation2 + $0x8] sm:$0xff] 0.0
  $region17: #{_lambda_.66} parent=0 // pred_fallthru
    _
  %v22 = vld [vmem:[%s0] sm:$0xf]
  %v23 = vld [vmem:[%s0 + $0x4] sm:$0xf]
  %vm24 = vcmp.ge.bf16.partialorder %v22, 0
  %vm25 = vcmp.ge.bf16.partialorder %v23, 0
  %v26 = vmul.bf16 %v22, 1045249613
  %v27 = vmul.bf16 %v23, 1045249613
  %v28 = vsel %vm24, %v22, %v26
  %v29 = vsel %vm25, %v23, %v27
  %v30 = vld [vmem:[#allocation2] sm:$0xff]
  %v31 = vld [vmem:[#allocation2 + $0x8] sm:$0xff]
  %v32 = vld [vmem:[%s1] sm:$0xf]
  %v33 = vld [vmem:[%s1 + $0x4] sm:$0xf]
  %v34 = vld [vmem:[%s1 + $0x8] sm:$0xf]
  %v37 = vunpack.c.l.b16 %v28
  %v38 = vunpack.c.l.b16 %v29
  %v39 = vpack.c.b16 %v38, %v37
  %v43 = vunpack.c.l.b16 %v32
  %v44 = vunpack.c.l.b16 %v33
  %v45 = vunpack.c.l.b16 %v34
  %v46 = vpack.c.b16 %v44, %v43
  %v47 = vpack.c.b16 %v45, %v45
  %vm49 = vcmask 195584
  %v51 = vsel %vm49, %v39, 0
  %vm53 = vcmask 1043456
  %v55 = vsel %vm53, %v47, 0
  %57 = vmatprep.subr.bf16.mxu0 0
  %58 = vmatpush1.bf16.msra.mxu0 %v46
  %59 = vmatprep.subr.bf16.mxu0 0
  %60 = vmatpush1.bf16.msra.mxu0 %v55
  %61 = vmatprep.subr.bf16.mxu0 0
  %62 = vmatpush1.bf16.msra.mxu0 0
  %63 = vmatprep.subr.bf16.mxu0 0
  %64 = vmatpush1.bf16.msra.mxu0 0
  %65 = vmatprep.subr.bf16.mxu0 0
  %66 = vmatpush1.bf16.msra.mxu0 0
  %67 = vmatprep.subr.bf16.mxu0 0
  %68 = vmatpush1.bf16.msra.mxu0 0
  %69 = vmatprep.subr.bf16.mxu0 0
  %70 = vmatpush1.bf16.msra.mxu0 0
  %71 = vmatprep.subr.bf16.mxu0 0
  %72 = vmatpush1.bf16.msra.mxu0 0
  %73 = vmatprep.subr.bf16.mxu0 0
  %74 = vmatpush1.bf16.msra.mxu0 0
  %75 = vmatprep.subr.bf16.mxu0 0
  %76 = vmatpush1.bf16.msra.mxu0 0
  %77 = vmatprep.subr.bf16.mxu0 0
  %78 = vmatpush1.bf16.msra.mxu0 0
  %79 = vmatprep.subr.bf16.mxu0 0
  %80 = vmatpush1.bf16.msra.mxu0 0
  %81 = vmatprep.subr.bf16.mxu0 0
  %82 = vmatpush1.bf16.msra.mxu0 0
  %83 = vmatprep.subr.bf16.mxu0 0
  %84 = vmatpush1.bf16.msra.mxu0 0
  %85 = vmatprep.subr.bf16.mxu0 0
  %86 = vmatpush1.bf16.msra.mxu0 0
  %87 = vmatprep.subr.bf16.mxu0 0
  %88 = vmatpush1.bf16.msra.mxu0 0
  %89 = vmatprep.mubr.bf16.mxu0 0
  %90 = vmatmul.mubr.bf16.gmra.mrb[0].mxu0 %v51
  %v91 = vpop.f32.mrb[0].mxu0
  %v92 = vadd.f32 0.0, %v91
  %v93 = vpop.f32.mrb[0].mxu0
  %v94 = vpop.f32.mrb[0].mxu0
  %v95 = vadd.f32 0.0, %v94
  %v96 = vpop.f32.mrb[0].mxu0
  %97 = vdwg.mxu0
  %v98 = vadd.f32 %v30, %v92
  %v99 = vadd.f32 %v31, %v95
  %100 = vst [vmem:[#allocation2] sm:$0xff] %v98
  %101 = vst [vmem:[#allocation2 + $0x8] sm:$0xff] %v99
  // Predicated region
  $region18: #{_lambda_.66} parent=0 // pred_check
    %p102 = pneg %p16
  $region19: #{_lambda_.66} parent=0 // pred_check_branch
    %104 = sbr.rel (%p102) target = $region21
  $region20: #{_lambda_.66} parent=0 // pred_region
    %v105 = vld [vmem:[#allocation2] sm:$0xff]
    %v106 = vld [vmem:[#allocation2 + $0x8] sm:$0xff]
    %v107 = vld [vmem:[%s2] sm:$0x1]
    %v109 = vlaneseq
    %v110 = vshrl.u32 %v109, 7
    %v111 = vsub.s32 0, %v110
    %v112 = vrot.slane %v107, %v111
    %v114 = vadd.f32 %v105, %v112
    %v115 = vadd.f32 %v106, %v112
    %116 = vst [vmem:[%s3] sm:$0xff] %v114
    %117 = vst [vmem:[%s3 + $0x8] sm:$0xff] %v115
  $region21: #{_lambda_.66} parent=0 // pred_fallthru
    _
  // Predicated region
  $region22: #{_lambda_.66} parent=0 // pred_check
    _
  $region23: #{_lambda_.66} parent=0 // pred_check_branch
    %119 = sbr.rel (0) target = $region25
  $region24: #{_lambda_.66} parent=0 // pred_region
    _
  $region25: #{_lambda_.66} parent=0 // pred_fallthru
    _
  // Predicated region
  $region26: #{_lambda_.66} parent=0 // pred_check
    _
  $region27: #{_lambda_.66} parent=0 // pred_check_branch
    %121 = sbr.rel (0) target = $region29
  $region28: #{_lambda_.66} parent=0 // pred_region
    _
  $region29: #{_lambda_.66} parent=0 // pred_fallthru
    _

// kernel: _lambda_.78
$region0: #{_lambda_.78}
  #allocation0 [shape = 'u32[]', space=smem, size = 0x4, offset = 0x4, fixed_abs, tag = 'smem constant byte address 0x4 - core index']
  #allocation1 [shape = 'u32[144,128]{1,0:T(1,128)}', space=vmem, size = 0x12000, scoped, tag = 'internal scratch']
  #allocation2 [shape = 'f32[32,128]{1,0:T(8,128)}', space=vmem, size = 0x4000, scoped, tag = 'scratch operand']
  %s0 = inlined_call_operand.vmem [shape: bf16[32,32], index: 0, kind: input, shape index: {}]
  %s1 = inlined_call_operand.vmem [shape: bf16[32,128], index: 1, kind: input, shape index: {}]
  %s2 = inlined_call_operand.vmem [shape: f32[1,128], index: 2, kind: input, shape index: {}]
  %s3 = inlined_call_operand.vmem [shape: f32[32,128], index: 3, kind: output, shape index: {}]
  %s4 = sld [smem:[#allocation0]]
  $region30: #{_lambda_.78} parent=0
    _
  %s6 = ssub.s32 1, %s4
  %s7 = scalar_select 0, %s6, %s4
  // Predicated region
  $region2: #{_lambda_.78} parent=0 // pred_check
    _
  $region3: #{_lambda_.78} parent=0 // pred_check_branch
    %9 = sbr.rel (0) target = $region5
  $region4: #{_lambda_.78} parent=0 // pred_region
    _
  $region5: #{_lambda_.78} parent=0 // pred_fallthru
    _
  // Predicated region
  $region6: #{_lambda_.78} parent=0 // pred_check
    _
  $region7: #{_lambda_.78} parent=0 // pred_check_branch
    %11 = sbr.rel (0) target = $region9
  $region8: #{_lambda_.78} parent=0 // pred_region
    _
  $region9: #{_lambda_.78} parent=0 // pred_fallthru
    _
  // Predicated region
  $region10: #{_lambda_.78} parent=0 // pred_check
    _
  $region11: #{_lambda_.78} parent=0 // pred_check_branch
    %13 = sbr.rel (0) target = $region13
  $region12: #{_lambda_.78} parent=0 // pred_region
    _
  $region13: #{_lambda_.78} parent=0 // pred_fallthru
    _
  %p16 = scmp.eq.s32.totalorder 0, 0
  // Predicated region
  $region14: #{_lambda_.78} parent=0 // pred_check
    %p17 = pneg %p16
  $region15: #{_lambda_.78} parent=0 // pred_check_branch
    %19 = sbr.rel (%p17) target = $region17
  $region16: #{_lambda_.78} parent=0 // pred_region
    %20 = vst [vmem:[#allocation2] sm:$0xff] 0.0
    %21 = vst [vmem:[#allocation2 + $0x8] sm:$0xff] 0.0
    %22 = vst [vmem:[#allocation2 + $0x10] sm:$0xff] 0.0
    %23 = vst [vmem:[#allocation2 + $0x18] sm:$0xff] 0.0
  $region17: #{_lambda_.78} parent=0 // pred_fallthru
    _
  %v24 = vld [vmem:[%s0] sm:$0xf]
  %v25 = vld [vmem:[%s0 + $0x4] sm:$0xf]
  %v26 = vld [vmem:[%s0 + $0x8] sm:$0xf]
  %v27 = vld [vmem:[%s0 + $0xc] sm:$0xf]
  %vm28 = vcmp.ge.bf16.partialorder %v24, 0
  %vm29 = vcmp.ge.bf16.partialorder %v25, 0
  %vm30 = vcmp.ge.bf16.partialorder %v26, 0
  %vm31 = vcmp.ge.bf16.partialorder %v27, 0
  %v32 = vmul.bf16 %v24, 1045249613
  %v33 = vmul.bf16 %v25, 1045249613
  %v34 = vmul.bf16 %v26, 1045249613
  %v35 = vmul.bf16 %v27, 1045249613
  %v36 = vsel %vm28, %v24, %v32
  %v37 = vsel %vm29, %v25, %v33
  %v38 = vsel %vm30, %v26, %v34
  %v39 = vsel %vm31, %v27, %v35
  %v40 = vld [vmem:[#allocation2] sm:$0xff]
  %v41 = vld [vmem:[#allocation2 + $0x8] sm:$0xff]
  %v42 = vld [vmem:[#allocation2 + $0x10] sm:$0xff]
  %v43 = vld [vmem:[#allocation2 + $0x18] sm:$0xff]
  %v44 = vld [vmem:[%s1] sm:$0xf]
  %v45 = vld [vmem:[%s1 + $0x4] sm:$0xf]
  %v46 = vld [vmem:[%s1 + $0x8] sm:$0xf]
  %v47 = vld [vmem:[%s1 + $0xc] sm:$0xf]
  %v52 = vunpack.c.l.b16 %v36
  %v53 = vunpack.c.l.b16 %v37
  %v54 = vunpack.c.l.b16 %v38
  %v55 = vunpack.c.l.b16 %v39
  %v56 = vpack.c.b16 %v53, %v52
  %v57 = vpack.c.b16 %v55, %v54
  %v62 = vunpack.c.l.b16 %v44
  %v63 = vunpack.c.l.b16 %v45
  %v64 = vunpack.c.l.b16 %v46
  %v65 = vunpack.c.l.b16 %v47
  %v66 = vpack.c.b16 %v63, %v62
  %v67 = vpack.c.b16 %v65, %v64
  %vm70 = vcmask 261120
  %v72 = vsel %vm70, %v56, 0
  %v75 = vsel %vm70, %v57, 0
  %77 = vmatprep.subr.bf16.mxu0 0
  %78 = vmatpush1.bf16.msra.mxu0 %v66
  %79 = vmatprep.subr.bf16.mxu0 0
  %80 = vmatpush1.bf16.msra.mxu0 %v67
  %81 = vmatprep.subr.bf16.mxu0 0
  %82 = vmatpush1.bf16.msra.mxu0 0
  %83 = vmatprep.subr.bf16.mxu0 0
  %84 = vmatpush1.bf16.msra.mxu0 0
  %85 = vmatprep.subr.bf16.mxu0 0
  %86 = vmatpush1.bf16.msra.mxu0 0
  %87 = vmatprep.subr.bf16.mxu0 0
  %88 = vmatpush1.bf16.msra.mxu0 0
  %89 = vmatprep.subr.bf16.mxu0 0
  %90 = vmatpush1.bf16.msra.mxu0 0
  %91 = vmatprep.subr.bf16.mxu0 0
  %92 = vmatpush1.bf16.msra.mxu0 0
  %93 = vmatprep.subr.bf16.mxu0 0
  %94 = vmatpush1.bf16.msra.mxu0 0
  %95 = vmatprep.subr.bf16.mxu0 0
  %96 = vmatpush1.bf16.msra.mxu0 0
  %97 = vmatprep.subr.bf16.mxu0 0
  %98 = vmatpush1.bf16.msra.mxu0 0
  %99 = vmatprep.subr.bf16.mxu0 0
  %100 = vmatpush1.bf16.msra.mxu0 0
  %101 = vmatprep.subr.bf16.mxu0 0
  %102 = vmatpush1.bf16.msra.mxu0 0
  %103 = vmatprep.subr.bf16.mxu0 0
  %104 = vmatpush1.bf16.msra.mxu0 0
  %105 = vmatprep.subr.bf16.mxu0 0
  %106 = vmatpush1.bf16.msra.mxu0 0
  %107 = vmatprep.subr.bf16.mxu0 0
  %108 = vmatpush1.bf16.msra.mxu0 0
  %109 = vmatprep.mubr.bf16.mxu0 0
  %110 = vmatmul.mubr.bf16.gmra.mrb[0].mxu0 %v72
  %v111 = vpop.f32.mrb[0].mxu0
  %v112 = vadd.f32 0.0, %v111
  %v113 = vpop.f32.mrb[0].mxu0
  %v114 = vpop.f32.mrb[0].mxu0
  %v115 = vadd.f32 0.0, %v114
  %v116 = vpop.f32.mrb[0].mxu0
  %117 = vmatprep.mubr.bf16.mxu0 0
  %118 = vmatmul.mubr.bf16.gmra.mrb[0].mxu0 %v75
  %v119 = vpop.f32.mrb[0].mxu0
  %v120 = vadd.f32 0.0, %v119
  %v121 = vpop.f32.mrb[0].mxu0
  %v122 = vpop.f32.mrb[0].mxu0
  %v123 = vadd.f32 0.0, %v122
  %v124 = vpop.f32.mrb[0].mxu0
  %125 = vdwg.mxu0
  %v126 = vadd.f32 %v40, %v112
  %v127 = vadd.f32 %v41, %v115
  %v128 = vadd.f32 %v42, %v120
  %v129 = vadd.f32 %v43, %v123
  %130 = vst [vmem:[#allocation2] sm:$0xff] %v126
  %131 = vst [vmem:[#allocation2 + $0x8] sm:$0xff] %v127
  %132 = vst [vmem:[#allocation2 + $0x10] sm:$0xff] %v128
  %133 = vst [vmem:[#allocation2 + $0x18] sm:$0xff] %v129
  // Predicated region
  $region18: #{_lambda_.78} parent=0 // pred_check
    %p134 = pneg %p16
  $region19: #{_lambda_.78} parent=0 // pred_check_branch
    %136 = sbr.rel (%p134) target = $region21
  $region20: #{_lambda_.78} parent=0 // pred_region
    %v137 = vld [vmem:[#allocation2] sm:$0xff]
    %v138 = vld [vmem:[#allocation2 + $0x8] sm:$0xff]
    %v139 = vld [vmem:[#allocation2 + $0x10] sm:$0xff]
    %v140 = vld [vmem:[#allocation2 + $0x18] sm:$0xff]
    %v141 = vld [vmem:[%s2] sm:$0x1]
    %v143 = vlaneseq
    %v144 = vshrl.u32 %v143, 7
    %v145 = vsub.s32 0, %v144
    %v146 = vrot.slane %v141, %v145
    %v148 = vadd.f32 %v137, %v146
    %v149 = vadd.f32 %v138, %v146
    %v150 = vadd.f32 %v139, %v146
    %v151 = vadd.f32 %v140, %v146
    %152 = vst [vmem:[%s3] sm:$0xff] %v148
    %153 = vst [vmem:[%s3 + $0x8] sm:$0xff] %v149
    %154 = vst [vmem:[%s3 + $0x10] sm:$0xff] %v150
    %155 = vst [vmem:[%s3 + $0x18] sm:$0xff] %v151
  $region21: #{_lambda_.78} parent=0 // pred_fallthru
    _
  // Predicated region
  $region22: #{_lambda_.78} parent=0 // pred_check
    _
  $region23: #{_lambda_.78} parent=0 // pred_check_branch
    %157 = sbr.rel (0) target = $region25
  $region24: #{_lambda_.78} parent=0 // pred_region
    _
  $region25: #{_lambda_.78} parent=0 // pred_fallthru
    _
  // Predicated region
  $region26: #{_lambda_.78} parent=0 // pred_check
    _
  $region27: #{_lambda_.78} parent=0 // pred_check_branch
    %159 = sbr.rel (0) target = $region29
  $region28: #{_lambda_.78} parent=0 // pred_region
    _
  $region29: #{_lambda_.78} parent=0 // pred_fallthru
    _

// kernel: _lambda_.79
$region0: #{_lambda_.79}
  #allocation0 [shape = 'u32[]', space=smem, size = 0x4, offset = 0x4, fixed_abs, tag = 'smem constant byte address 0x4 - core index']
  #allocation1 [shape = 'u32[144,128]{1,0:T(1,128)}', space=vmem, size = 0x12000, scoped, tag = 'internal scratch']
  #allocation2 [shape = 'f32[32,128]{1,0:T(8,128)}', space=vmem, size = 0x4000, scoped, tag = 'scratch operand']
  %s0 = inlined_call_operand.vmem [shape: bf16[32,24], index: 0, kind: input, shape index: {}]
  %s1 = inlined_call_operand.vmem [shape: bf16[24,128], index: 1, kind: input, shape index: {}]
  %s2 = inlined_call_operand.vmem [shape: f32[1,128], index: 2, kind: input, shape index: {}]
  %s3 = inlined_call_operand.vmem [shape: f32[32,128], index: 3, kind: output, shape index: {}]
  %s4 = sld [smem:[#allocation0]]
  $region30: #{_lambda_.79} parent=0
    _
  %s6 = ssub.s32 1, %s4
  %s7 = scalar_select 0, %s6, %s4
  // Predicated region
  $region2: #{_lambda_.79} parent=0 // pred_check
    _
  $region3: #{_lambda_.79} parent=0 // pred_check_branch
    %9 = sbr.rel (0) target = $region5
  $region4: #{_lambda_.79} parent=0 // pred_region
    _
  $region5: #{_lambda_.79} parent=0 // pred_fallthru
    _
  // Predicated region
  $region6: #{_lambda_.79} parent=0 // pred_check
    _
  $region7: #{_lambda_.79} parent=0 // pred_check_branch
    %11 = sbr.rel (0) target = $region9
  $region8: #{_lambda_.79} parent=0 // pred_region
    _
  $region9: #{_lambda_.79} parent=0 // pred_fallthru
    _
  // Predicated region
  $region10: #{_lambda_.79} parent=0 // pred_check
    _
  $region11: #{_lambda_.79} parent=0 // pred_check_branch
    %13 = sbr.rel (0) target = $region13
  $region12: #{_lambda_.79} parent=0 // pred_region
    _
  $region13: #{_lambda_.79} parent=0 // pred_fallthru
    _
  %p16 = scmp.eq.s32.totalorder 0, 0
  // Predicated region
  $region14: #{_lambda_.79} parent=0 // pred_check
    %p17 = pneg %p16
  $region15: #{_lambda_.79} parent=0 // pred_check_branch
    %19 = sbr.rel (%p17) target = $region17
  $region16: #{_lambda_.79} parent=0 // pred_region
    %20 = vst [vmem:[#allocation2] sm:$0xff] 0.0
    %21 = vst [vmem:[#allocation2 + $0x8] sm:$0xff] 0.0
    %22 = vst [vmem:[#allocation2 + $0x10] sm:$0xff] 0.0
    %23 = vst [vmem:[#allocation2 + $0x18] sm:$0xff] 0.0
  $region17: #{_lambda_.79} parent=0 // pred_fallthru
    _
  %v24 = vld [vmem:[%s0] sm:$0xf]
  %v25 = vld [vmem:[%s0 + $0x4] sm:$0xf]
  %v26 = vld [vmem:[%s0 + $0x8] sm:$0xf]
  %v27 = vld [vmem:[%s0 + $0xc] sm:$0xf]
  %vm28 = vcmp.ge.bf16.partialorder %v24, 0
  %vm29 = vcmp.ge.bf16.partialorder %v25, 0
  %vm30 = vcmp.ge.bf16.partialorder %v26, 0
  %vm31 = vcmp.ge.bf16.partialorder %v27, 0
  %v32 = vmul.bf16 %v24, 1045249613
  %v33 = vmul.bf16 %v25, 1045249613
  %v34 = vmul.bf16 %v26, 1045249613
  %v35 = vmul.bf16 %v27, 1045249613
  %v36 = vsel %vm28, %v24, %v32
  %v37 = vsel %vm29, %v25, %v33
  %v38 = vsel %vm30, %v26, %v34
  %v39 = vsel %vm31, %v27, %v35
  %v40 = vld [vmem:[#allocation2] sm:$0xff]
  %v41 = vld [vmem:[#allocation2 + $0x8] sm:$0xff]
  %v42 = vld [vmem:[#allocation2 + $0x10] sm:$0xff]
  %v43 = vld [vmem:[#allocation2 + $0x18] sm:$0xff]
  %v44 = vld [vmem:[%s1] sm:$0xf]
  %v45 = vld [vmem:[%s1 + $0x4] sm:$0xf]
  %v46 = vld [vmem:[%s1 + $0x8] sm:$0xf]
  %v51 = vunpack.c.l.b16 %v36
  %v52 = vunpack.c.l.b16 %v37
  %v53 = vunpack.c.l.b16 %v38
  %v54 = vunpack.c.l.b16 %v39
  %v55 = vpack.c.b16 %v52, %v51
  %v56 = vpack.c.b16 %v54, %v53
  %v60 = vunpack.c.l.b16 %v44
  %v61 = vunpack.c.l.b16 %v45
  %v62 = vunpack.c.l.b16 %v46
  %v63 = vpack.c.b16 %v61, %v60
  %v64 = vpack.c.b16 %v62, %v62
  %vm66 = vcmask 195584
  %v68 = vsel %vm66, %v55, 0
  %v71 = vsel %vm66, %v56, 0
  %vm73 = vcmask 1043456
  %v75 = vsel %vm73, %v64, 0
  %77 = vmatprep.subr.bf16.mxu0 0
  %78 = vmatpush1.bf16.msra.mxu0 %v63
  %79 = vmatprep.subr.bf16.mxu0 0
  %80 = vmatpush1.bf16.msra.mxu0 %v75
  %81 = vmatprep.subr.bf16.mxu0 0
  %82 = vmatpush1.bf16.msra.mxu0 0
  %83 = vmatprep.subr.bf16.mxu0 0
  %84 = vmatpush1.bf16.msra.mxu0 0
  %85 = vmatprep.subr.bf16.mxu0 0
  %86 = vmatpush1.bf16.msra.mxu0 0
  %87 = vmatprep.subr.bf16.mxu0 0
  %88 = vmatpush1.bf16.msra.mxu0 0
  %89 = vmatprep.subr.bf16.mxu0 0
  %90 = vmatpush1.bf16.msra.mxu0 0
  %91 = vmatprep.subr.bf16.mxu0 0
  %92 = vmatpush1.bf16.msra.mxu0 0
  %93 = vmatprep.subr.bf16.mxu0 0
  %94 = vmatpush1.bf16.msra.mxu0 0
  %95 = vmatprep.subr.bf16.mxu0 0
  %96 = vmatpush1.bf16.msra.mxu0 0
  %97 = vmatprep.subr.bf16.mxu0 0
  %98 = vmatpush1.bf16.msra.mxu0 0
  %99 = vmatprep.subr.bf16.mxu0 0
  %100 = vmatpush1.bf16.msra.mxu0 0
  %101 = vmatprep.subr.bf16.mxu0 0
  %102 = vmatpush1.bf16.msra.mxu0 0
  %103 = vmatprep.subr.bf16.mxu0 0
  %104 = vmatpush1.bf16.msra.mxu0 0
  %105 = vmatprep.subr.bf16.mxu0 0
  %106 = vmatpush1.bf16.msra.mxu0 0
  %107 = vmatprep.subr.bf16.mxu0 0
  %108 = vmatpush1.bf16.msra.mxu0 0
  %109 = vmatprep.mubr.bf16.mxu0 0
  %110 = vmatmul.mubr.bf16.gmra.mrb[0].mxu0 %v68
  %v111 = vpop.f32.mrb[0].mxu0
  %v112 = vadd.f32 0.0, %v111
  %v113 = vpop.f32.mrb[0].mxu0
  %v114 = vpop.f32.mrb[0].mxu0
  %v115 = vadd.f32 0.0, %v114
  %v116 = vpop.f32.mrb[0].mxu0
  %117 = vmatprep.mubr.bf16.mxu0 0
  %118 = vmatmul.mubr.bf16.gmra.mrb[0].mxu0 %v71
  %v119 = vpop.f32.mrb[0].mxu0
  %v120 = vadd.f32 0.0, %v119
  %v121 = vpop.f32.mrb[0].mxu0
  %v122 = vpop.f32.mrb[0].mxu0
  %v123 = vadd.f32 0.0, %v122
  %v124 = vpop.f32.mrb[0].mxu0
  %125 = vdwg.mxu0
  %v126 = vadd.f32 %v40, %v112
  %v127 = vadd.f32 %v41, %v115
  %v128 = vadd.f32 %v42, %v120
  %v129 = vadd.f32 %v43, %v123
  %130 = vst [vmem:[#allocation2] sm:$0xff] %v126
  %131 = vst [vmem:[#allocation2 + $0x8] sm:$0xff] %v127
  %132 = vst [vmem:[#allocation2 + $0x10] sm:$0xff] %v128
  %133 = vst [vmem:[#allocation2 + $0x18] sm:$0xff] %v129
  // Predicated region
  $region18: #{_lambda_.79} parent=0 // pred_check
    %p134 = pneg %p16
  $region19: #{_lambda_.79} parent=0 // pred_check_branch
    %136 = sbr.rel (%p134) target = $region21
  $region20: #{_lambda_.79} parent=0 // pred_region
    %v137 = vld [vmem:[#allocation2] sm:$0xff]
    %v138 = vld [vmem:[#allocation2 + $0x8] sm:$0xff]
    %v139 = vld [vmem:[#allocation2 + $0x10] sm:$0xff]
    %v140 = vld [vmem:[#allocation2 + $0x18] sm:$0xff]
    %v141 = vld [vmem:[%s2] sm:$0x1]
    %v143 = vlaneseq
    %v144 = vshrl.u32 %v143, 7
    %v145 = vsub.s32 0, %v144
    %v146 = vrot.slane %v141, %v145
    %v148 = vadd.f32 %v137, %v146
    %v149 = vadd.f32 %v138, %v146
    %v150 = vadd.f32 %v139, %v146
    %v151 = vadd.f32 %v140, %v146
    %vm152 = vcmp.ge.f32.partialorder %v148, 0.0
    %vm153 = vcmp.ge.f32.partialorder %v149, 0.0
    %vm154 = vcmp.ge.f32.partialorder %v150, 0.0
    %vm155 = vcmp.ge.f32.partialorder %v151, 0.0
    %v156 = vmul.f32 %v148, 0.2
    %v157 = vmul.f32 %v149, 0.2
    %v158 = vmul.f32 %v150, 0.2
    %v159 = vmul.f32 %v151, 0.2
    %v160 = vsel %vm152, %v148, %v156
    %v161 = vsel %vm153, %v149, %v157
    %v162 = vsel %vm154, %v150, %v158
    %v163 = vsel %vm155, %v151, %v159
    %164 = vst [vmem:[%s3] sm:$0xff] %v160
    %165 = vst [vmem:[%s3 + $0x8] sm:$0xff] %v161
    %166 = vst [vmem:[%s3 + $0x10] sm:$0xff] %v162
    %167 = vst [vmem:[%s3 + $0x18] sm:$0xff] %v163
  $region21: #{_lambda_.79} parent=0 // pred_fallthru
    _
  // Predicated region
  $region22: #{_lambda_.79} parent=0 // pred_check
    _
  $region23: #{_lambda_.79} parent=0 // pred_check_branch
    %169 = sbr.rel (0) target = $region25
  $region24: #{_lambda_.79} parent=0 // pred_region
    _
  $region25: #{_lambda_.79} parent=0 // pred_fallthru
    _
  // Predicated region
  $region26: #{_lambda_.79} parent=0 // pred_check
    _
  $region27: #{_lambda_.79} parent=0 // pred_check_branch
    %171 = sbr.rel (0) target = $region29
  $region28: #{_lambda_.79} parent=0 // pred_region
    _
  $region29: #{_lambda_.79} parent=0 // pred_fallthru
    _

// kernel: _lambda_.69
$region0: #{_lambda_.69}
  #allocation0 [shape = 'u32[]', space=smem, size = 0x4, offset = 0x4, fixed_abs, tag = 'smem constant byte address 0x4 - core index']
  #allocation1 [shape = 'u32[144,128]{1,0:T(1,128)}', space=vmem, size = 0x12000, scoped, tag = 'internal scratch']
  #allocation2 [shape = 'f32[16,128]{1,0:T(8,128)}', space=vmem, size = 0x2000, scoped, tag = 'scratch operand']
  %s0 = inlined_call_operand.vmem [shape: bf16[16,80], index: 0, kind: input, shape index: {}]
  %s1 = inlined_call_operand.vmem [shape: bf16[80,128], index: 1, kind: input, shape index: {}]
  %s2 = inlined_call_operand.vmem [shape: f32[1,128], index: 2, kind: input, shape index: {}]
  %s3 = inlined_call_operand.vmem [shape: f32[16,128], index: 3, kind: output, shape index: {}]
  %s4 = sld [smem:[#allocation0]]
  $region30: #{_lambda_.69} parent=0
    _
  %s6 = ssub.s32 1, %s4
  %s7 = scalar_select 0, %s6, %s4
  // Predicated region
  $region2: #{_lambda_.69} parent=0 // pred_check
    _
  $region3: #{_lambda_.69} parent=0 // pred_check_branch
    %9 = sbr.rel (0) target = $region5
  $region4: #{_lambda_.69} parent=0 // pred_region
    _
  $region5: #{_lambda_.69} parent=0 // pred_fallthru
    _
  // Predicated region
  $region6: #{_lambda_.69} parent=0 // pred_check
    _
  $region7: #{_lambda_.69} parent=0 // pred_check_branch
    %11 = sbr.rel (0) target = $region9
  $region8: #{_lambda_.69} parent=0 // pred_region
    _
  $region9: #{_lambda_.69} parent=0 // pred_fallthru
    _
  // Predicated region
  $region10: #{_lambda_.69} parent=0 // pred_check
    _
  $region11: #{_lambda_.69} parent=0 // pred_check_branch
    %13 = sbr.rel (0) target = $region13
  $region12: #{_lambda_.69} parent=0 // pred_region
    _
  $region13: #{_lambda_.69} parent=0 // pred_fallthru
    _
  %p15 = scmp.eq.s32.totalorder 0, 0
  // Predicated region
  $region14: #{_lambda_.69} parent=0 // pred_check
    %p16 = pneg %p15
  $region15: #{_lambda_.69} parent=0 // pred_check_branch
    %18 = sbr.rel (%p16) target = $region17
  $region16: #{_lambda_.69} parent=0 // pred_region
    %19 = vst [vmem:[#allocation2] sm:$0xff] 0.0
    %20 = vst [vmem:[#allocation2 + $0x8] sm:$0xff] 0.0
  $region17: #{_lambda_.69} parent=0 // pred_fallthru
    _
  %v21 = vld [vmem:[%s0] sm:$0xf]
  %v22 = vld [vmem:[%s0 + $0x4] sm:$0xf]
  %v23 = vld [vmem:[#allocation2] sm:$0xff]
  %v24 = vld [vmem:[#allocation2 + $0x8] sm:$0xff]
  %v25 = vld [vmem:[%s1] sm:$0xf]
  %v26 = vld [vmem:[%s1 + $0x4] sm:$0xf]
  %v27 = vld [vmem:[%s1 + $0x8] sm:$0xf]
  %v28 = vld [vmem:[%s1 + $0xc] sm:$0xf]
  %v29 = vld [vmem:[%s1 + $0x10] sm:$0xf]
  %v30 = vld [vmem:[%s1 + $0x14] sm:$0xf]
  %v31 = vld [vmem:[%s1 + $0x18] sm:$0xf]
  %v32 = vld [vmem:[%s1 + $0x1c] sm:$0xf]
  %v33 = vld [vmem:[%s1 + $0x20] sm:$0xf]
  %v34 = vld [vmem:[%s1 + $0x24] sm:$0xf]
  %v37 = vunpack.c.l.b16 %v21
  %v38 = vunpack.c.l.b16 %v22
  %v39 = vpack.c.b16 %v38, %v37
  %v50 = vunpack.c.l.b16 %v25
  %v51 = vunpack.c.l.b16 %v26
  %v52 = vunpack.c.l.b16 %v27
  %v53 = vunpack.c.l.b16 %v28
  %v54 = vunpack.c.l.b16 %v29
  %v55 = vunpack.c.l.b16 %v30
  %v56 = vunpack.c.l.b16 %v31
  %v57 = vunpack.c.l.b16 %v32
  %v58 = vunpack.c.l.b16 %v33
  %v59 = vunpack.c.l.b16 %v34
  %v60 = vpack.c.b16 %v51, %v50
  %v61 = vpack.c.b16 %v53, %v52
  %v62 = vpack.c.b16 %v55, %v54
  %v63 = vpack.c.b16 %v57, %v56
  %v64 = vpack.c.b16 %v59, %v58
  %vm70 = vcmask 654336
  %v72 = vsel %vm70, %v39, 0
  %74 = vmatprep.subr.bf16.mxu0 0
  %75 = vmatpush1.bf16.msra.mxu0 %v60
  %76 = vmatprep.subr.bf16.mxu0 0
  %77 = vmatpush1.bf16.msra.mxu0 %v61
  %78 = vmatprep.subr.bf16.mxu0 0
  %79 = vmatpush1.bf16.msra.mxu0 %v62
  %80 = vmatprep.subr.bf16.mxu0 0
  %81 = vmatpush1.bf16.msra.mxu0 %v63
  %82 = vmatprep.subr.bf16.mxu0 0
  %83 = vmatpush1.bf16.msra.mxu0 %v64
  %84 = vmatprep.subr.bf16.mxu0 0
  %85 = vmatpush1.bf16.msra.mxu0 0
  %86 = vmatprep.subr.bf16.mxu0 0
  %87 = vmatpush1.bf16.msra.mxu0 0
  %88 = vmatprep.subr.bf16.mxu0 0
  %89 = vmatpush1.bf16.msra.mxu0 0
  %90 = vmatprep.subr.bf16.mxu0 0
  %91 = vmatpush1.bf16.msra.mxu0 0
  %92 = vmatprep.subr.bf16.mxu0 0
  %93 = vmatpush1.bf16.msra.mxu0 0
  %94 = vmatprep.subr.bf16.mxu0 0
  %95 = vmatpush1.bf16.msra.mxu0 0
  %96 = vmatprep.subr.bf16.mxu0 0
  %97 = vmatpush1.bf16.msra.mxu0 0
  %98 = vmatprep.subr.bf16.mxu0 0
  %99 = vmatpush1.bf16.msra.mxu0 0
  %100 = vmatprep.subr.bf16.mxu0 0
  %101 = vmatpush1.bf16.msra.mxu0 0
  %102 = vmatprep.subr.bf16.mxu0 0
  %103 = vmatpush1.bf16.msra.mxu0 0
  %104 = vmatprep.subr.bf16.mxu0 0
  %105 = vmatpush1.bf16.msra.mxu0 0
  %106 = vmatprep.mubr.bf16.mxu0 0
  %107 = vmatmul.mubr.bf16.gmra.mrb[0].mxu0 %v72
  %v108 = vpop.f32.mrb[0].mxu0
  %v109 = vadd.f32 0.0, %v108
  %v110 = vpop.f32.mrb[0].mxu0
  %v111 = vpop.f32.mrb[0].mxu0
  %v112 = vadd.f32 0.0, %v111
  %v113 = vpop.f32.mrb[0].mxu0
  %114 = vdwg.mxu0
  %v115 = vadd.f32 %v23, %v109
  %v116 = vadd.f32 %v24, %v112
  %117 = vst [vmem:[#allocation2] sm:$0xff] %v115
  %118 = vst [vmem:[#allocation2 + $0x8] sm:$0xff] %v116
  // Predicated region
  $region18: #{_lambda_.69} parent=0 // pred_check
    %p119 = pneg %p15
  $region19: #{_lambda_.69} parent=0 // pred_check_branch
    %121 = sbr.rel (%p119) target = $region21
  $region20: #{_lambda_.69} parent=0 // pred_region
    %v122 = vld [vmem:[#allocation2] sm:$0xff]
    %v123 = vld [vmem:[#allocation2 + $0x8] sm:$0xff]
    %v124 = vld [vmem:[%s2] sm:$0x1]
    %v126 = vlaneseq
    %v127 = vshrl.u32 %v126, 7
    %v128 = vsub.s32 0, %v127
    %v129 = vrot.slane %v124, %v128
    %v131 = vadd.f32 %v122, %v129
    %v132 = vadd.f32 %v123, %v129
    %vm133 = vcmp.ge.f32.partialorder %v131, 0.0
    %vm134 = vcmp.ge.f32.partialorder %v132, 0.0
    %v135 = vmul.f32 %v131, 0.1
    %v136 = vmul.f32 %v132, 0.1
    %v137 = vsel %vm133, %v131, %v135
    %v138 = vsel %vm134, %v132, %v136
    %139 = vst [vmem:[%s3] sm:$0xff] %v137
    %140 = vst [vmem:[%s3 + $0x8] sm:$0xff] %v138
  $region21: #{_lambda_.69} parent=0 // pred_fallthru
    _
  // Predicated region
  $region22: #{_lambda_.69} parent=0 // pred_check
    _
  $region23: #{_lambda_.69} parent=0 // pred_check_branch
    %142 = sbr.rel (0) target = $region25
  $region24: #{_lambda_.69} parent=0 // pred_region
    _
  $region25: #{_lambda_.69} parent=0 // pred_fallthru
    _
  // Predicated region
  $region26: #{_lambda_.69} parent=0 // pred_check
    _
  $region27: #{_lambda_.69} parent=0 // pred_check_branch
    %144 = sbr.rel (0) target = $region29
  $region28: #{_lambda_.69} parent=0 // pred_region
    _
  $region29: #{_lambda_.69} parent=0 // pred_fallthru
    _

// kernel: _lambda_.70
$region0: #{_lambda_.70}
  #allocation0 [shape = 'u32[]', space=smem, size = 0x4, offset = 0x4, fixed_abs, tag = 'smem constant byte address 0x4 - core index']
  #allocation1 [shape = 'u32[144,128]{1,0:T(1,128)}', space=vmem, size = 0x12000, scoped, tag = 'internal scratch']
  #allocation2 [shape = 'f32[16,128]{1,0:T(8,128)}', space=vmem, size = 0x2000, scoped, tag = 'scratch operand']
  %s0 = inlined_call_operand.vmem [shape: bf16[16,48], index: 0, kind: input, shape index: {}]
  %s1 = inlined_call_operand.vmem [shape: bf16[48,128], index: 1, kind: input, shape index: {}]
  %s2 = inlined_call_operand.vmem [shape: f32[1,128], index: 2, kind: input, shape index: {}]
  %s3 = inlined_call_operand.vmem [shape: f32[16,128], index: 3, kind: output, shape index: {}]
  %s4 = sld [smem:[#allocation0]]
  $region30: #{_lambda_.70} parent=0
    _
  %s6 = ssub.s32 1, %s4
  %s7 = scalar_select 0, %s6, %s4
  // Predicated region
  $region2: #{_lambda_.70} parent=0 // pred_check
    _
  $region3: #{_lambda_.70} parent=0 // pred_check_branch
    %9 = sbr.rel (0) target = $region5
  $region4: #{_lambda_.70} parent=0 // pred_region
    _
  $region5: #{_lambda_.70} parent=0 // pred_fallthru
    _
  // Predicated region
  $region6: #{_lambda_.70} parent=0 // pred_check
    _
  $region7: #{_lambda_.70} parent=0 // pred_check_branch
    %11 = sbr.rel (0) target = $region9
  $region8: #{_lambda_.70} parent=0 // pred_region
    _
  $region9: #{_lambda_.70} parent=0 // pred_fallthru
    _
  // Predicated region
  $region10: #{_lambda_.70} parent=0 // pred_check
    _
  $region11: #{_lambda_.70} parent=0 // pred_check_branch
    %13 = sbr.rel (0) target = $region13
  $region12: #{_lambda_.70} parent=0 // pred_region
    _
  $region13: #{_lambda_.70} parent=0 // pred_fallthru
    _
  %p15 = scmp.eq.s32.totalorder 0, 0
  // Predicated region
  $region14: #{_lambda_.70} parent=0 // pred_check
    %p16 = pneg %p15
  $region15: #{_lambda_.70} parent=0 // pred_check_branch
    %18 = sbr.rel (%p16) target = $region17
  $region16: #{_lambda_.70} parent=0 // pred_region
    %19 = vst [vmem:[#allocation2] sm:$0xff] 0.0
    %20 = vst [vmem:[#allocation2 + $0x8] sm:$0xff] 0.0
  $region17: #{_lambda_.70} parent=0 // pred_fallthru
    _
  %v21 = vld [vmem:[%s0] sm:$0xf]
  %v22 = vld [vmem:[%s0 + $0x4] sm:$0xf]
  %v23 = vld [vmem:[#allocation2] sm:$0xff]
  %v24 = vld [vmem:[#allocation2 + $0x8] sm:$0xff]
  %v25 = vld [vmem:[%s1] sm:$0xf]
  %v26 = vld [vmem:[%s1 + $0x4] sm:$0xf]
  %v27 = vld [vmem:[%s1 + $0x8] sm:$0xf]
  %v28 = vld [vmem:[%s1 + $0xc] sm:$0xf]
  %v29 = vld [vmem:[%s1 + $0x10] sm:$0xf]
  %v30 = vld [vmem:[%s1 + $0x14] sm:$0xf]
  %v33 = vunpack.c.l.b16 %v21
  %v34 = vunpack.c.l.b16 %v22
  %v35 = vpack.c.b16 %v34, %v33
  %v42 = vunpack.c.l.b16 %v25
  %v43 = vunpack.c.l.b16 %v26
  %v44 = vunpack.c.l.b16 %v27
  %v45 = vunpack.c.l.b16 %v28
  %v46 = vunpack.c.l.b16 %v29
  %v47 = vunpack.c.l.b16 %v30
  %v48 = vpack.c.b16 %v43, %v42
  %v49 = vpack.c.b16 %v45, %v44
  %v50 = vpack.c.b16 %v47, %v46
  %vm54 = vcmask 392192
  %v56 = vsel %vm54, %v35, 0
  %58 = vmatprep.subr.bf16.mxu0 0
  %59 = vmatpush1.bf16.msra.mxu0 %v48
  %60 = vmatprep.subr.bf16.mxu0 0
  %61 = vmatpush1.bf16.msra.mxu0 %v49
  %62 = vmatprep.subr.bf16.mxu0 0
  %63 = vmatpush1.bf16.msra.mxu0 %v50
  %64 = vmatprep.subr.bf16.mxu0 0
  %65 = vmatpush1.bf16.msra.mxu0 0
  %66 = vmatprep.subr.bf16.mxu0 0
  %67 = vmatpush1.bf16.msra.mxu0 0
  %68 = vmatprep.subr.bf16.mxu0 0
  %69 = vmatpush1.bf16.msra.mxu0 0
  %70 = vmatprep.subr.bf16.mxu0 0
  %71 = vmatpush1.bf16.msra.mxu0 0
  %72 = vmatprep.subr.bf16.mxu0 0
  %73 = vmatpush1.bf16.msra.mxu0 0
  %74 = vmatprep.subr.bf16.mxu0 0
  %75 = vmatpush1.bf16.msra.mxu0 0
  %76 = vmatprep.subr.bf16.mxu0 0
  %77 = vmatpush1.bf16.msra.mxu0 0
  %78 = vmatprep.subr.bf16.mxu0 0
  %79 = vmatpush1.bf16.msra.mxu0 0
  %80 = vmatprep.subr.bf16.mxu0 0
  %81 = vmatpush1.bf16.msra.mxu0 0
  %82 = vmatprep.subr.bf16.mxu0 0
  %83 = vmatpush1.bf16.msra.mxu0 0
  %84 = vmatprep.subr.bf16.mxu0 0
  %85 = vmatpush1.bf16.msra.mxu0 0
  %86 = vmatprep.subr.bf16.mxu0 0
  %87 = vmatpush1.bf16.msra.mxu0 0
  %88 = vmatprep.subr.bf16.mxu0 0
  %89 = vmatpush1.bf16.msra.mxu0 0
  %90 = vmatprep.mubr.bf16.mxu0 0
  %91 = vmatmul.mubr.bf16.gmra.mrb[0].mxu0 %v56
  %v92 = vpop.f32.mrb[0].mxu0
  %v93 = vadd.f32 0.0, %v92
  %v94 = vpop.f32.mrb[0].mxu0
  %v95 = vpop.f32.mrb[0].mxu0
  %v96 = vadd.f32 0.0, %v95
  %v97 = vpop.f32.mrb[0].mxu0
  %98 = vdwg.mxu0
  %v99 = vadd.f32 %v23, %v93
  %v100 = vadd.f32 %v24, %v96
  %101 = vst [vmem:[#allocation2] sm:$0xff] %v99
  %102 = vst [vmem:[#allocation2 + $0x8] sm:$0xff] %v100
  // Predicated region
  $region18: #{_lambda_.70} parent=0 // pred_check
    %p103 = pneg %p15
  $region19: #{_lambda_.70} parent=0 // pred_check_branch
    %105 = sbr.rel (%p103) target = $region21
  $region20: #{_lambda_.70} parent=0 // pred_region
    %v106 = vld [vmem:[#allocation2] sm:$0xff]
    %v107 = vld [vmem:[#allocation2 + $0x8] sm:$0xff]
    %v108 = vld [vmem:[%s2] sm:$0x1]
    %v110 = vlaneseq
    %v111 = vshrl.u32 %v110, 7
    %v112 = vsub.s32 0, %v111
    %v113 = vrot.slane %v108, %v112
    %v115 = vadd.f32 %v106, %v113
    %v116 = vadd.f32 %v107, %v113
    %vm117 = vcmp.ge.f32.partialorder %v115, 0.0
    %vm118 = vcmp.ge.f32.partialorder %v116, 0.0
    %v119 = vmul.f32 %v115, 0.1
    %v120 = vmul.f32 %v116, 0.1
    %v121 = vsel %vm117, %v115, %v119
    %v122 = vsel %vm118, %v116, %v120
    %123 = vst [vmem:[%s3] sm:$0xff] %v121
    %124 = vst [vmem:[%s3 + $0x8] sm:$0xff] %v122
  $region21: #{_lambda_.70} parent=0 // pred_fallthru
    _
  // Predicated region
  $region22: #{_lambda_.70} parent=0 // pred_check
    _
  $region23: #{_lambda_.70} parent=0 // pred_check_branch
    %126 = sbr.rel (0) target = $region25
  $region24: #{_lambda_.70} parent=0 // pred_region
    _
  $region25: #{_lambda_.70} parent=0 // pred_fallthru
    _
  // Predicated region
  $region26: #{_lambda_.70} parent=0 // pred_check
    _
  $region27: #{_lambda_.70} parent=0 // pred_check_branch
    %128 = sbr.rel (0) target = $region29
  $region28: #{_lambda_.70} parent=0 // pred_region
    _
  $region29: #{_lambda_.70} parent=0 // pred_fallthru
    _

// kernel: _lambda_.76
$region0: #{_lambda_.76}
  #allocation0 [shape = 'u32[]', space=smem, size = 0x4, offset = 0x4, fixed_abs, tag = 'smem constant byte address 0x4 - core index']
  #allocation1 [shape = 'u32[144,128]{1,0:T(1,128)}', space=vmem, size = 0x12000, scoped, tag = 'internal scratch']
  #allocation2 [shape = 'f32[16,256]{1,0:T(8,128)}', space=vmem, size = 0x4000, scoped, tag = 'scratch operand']
  %s0 = inlined_call_operand.vmem [shape: bf16[16,48], index: 0, kind: input, shape index: {}]
  %s1 = inlined_call_operand.vmem [shape: bf16[48,768], index: 1, kind: input, shape index: {}]
  %s2 = inlined_call_operand.vmem [shape: f32[1,768], index: 2, kind: input, shape index: {}]
  %s3 = inlined_call_operand.vmem [shape: f32[16,768], index: 3, kind: output, shape index: {}]
  %s4 = sld [smem:[#allocation0]]
  $region110: #{_lambda_.76} parent=0
    _
  %s6 = ssub.s32 1, %s4
  %s7 = scalar_select 0, %s6, %s4
  $region1: #{_lambda_.76} parent=0
    #allocation3 [shape = 'u8[49152]{0}', space=vmem, size = 0xc000, scoped, tag = 'input window, operand 1']
    #allocation4 [shape = 'u8[32768]{0}', space=vmem, size = 0x8000, scoped, tag = 'output window, operand 0']
    loop: start=0, step=1, limit=5
    $region2: #{_lambda_.76} parent=1 // loop_pre_header
      _
    $region3: #{_lambda_.76} parent=1 // loop_header
      %s9 = sphi 0, %s13
      %p10 = scmp.ge.s32.totalorder %s9, 5
      %s16 = sphi 0, %s35
      %s17 = sphi 0, %s31
      %s18 = sphi 0, %s27
      %s19 = sphi 0, %s16
      %s20 = sphi 0, %s17
      %s21 = sphi 0, %s18
      %s22 = sphi 0, %s19
      %s23 = sphi 0, %s20
      %s24 = sphi 0, %s21
      %s40 = sphi 0, %s42
      %s43 = sphi 0, %s40
      %s44 = sphi 0, %s43
      %s60 = sphi 0, %s44
      %s68 = sphi 0, %s70
      %s71 = sphi 0, %s68
      %s72 = sphi 0, %s71
      %s88 = sphi 0, %s72
      %s94 = sphi 0, %s96
      %s97 = sphi 0, %s94
      %s98 = sphi 0, %s97
      %s114 = sphi 0, %s98
      %s122 = sphi 0, %s124
      %s125 = sphi 0, %s122
      %s126 = sphi 0, %s125
      %s142 = sphi 0, %s126
    $region4: #{_lambda_.76} parent=1 // loop_header_branch
      %12 = sbr.rel (%p10) target = $region8
    $region5: #{_lambda_.76} parent=1 // loop_body
      %s14 = ssub.s32 %s9, 1
      %s15 = ssub.s32 %s9, 2
      %s25 = sadd.s32 1, %s18
      %p26 = scmp.ge.s32.totalorder %s25, 1
      %s27 = scalar_select %p26, 0, %s25
      %s28 = sadd.s32 1, %s17
      %s29 = scalar_select %p26, %s28, %s17
      %p30 = scmp.ge.s32.totalorder %s29, 3
      %s31 = scalar_select %p30, 0, %s29
      %s32 = sadd.s32 1, %s16
      %s33 = scalar_select %p30, %s32, %s16
      %p34 = scmp.ge.s32.totalorder %s33, 1
      %s35 = scalar_select %p34, 0, %s33
      %s36 = ssub.s32 %s16, %s35
      %s37 = ssub.s32 %s18, %s27
      %s38 = sor.u32 %s36, %s37
      %p39 = scmp.eq.s32.totalorder %s38, 0
      %s41 = sadd.s32 %s40, 1
      %s42 = scalar_select %p39, %s40, %s41
      %p45 = pneg %p39
      %p46 = scmp.eq.s32.totalorder %s9, 2
      %p47 = por %p45, %p46
      %p48 = scmp.ne.s32.totalorder %s40, %s43
      %p49 = scmp.eq.s32.totalorder %s9, 0
      %p50 = por %p48, %p49
      %p51 = scmp.ne.s32.totalorder %s40, %s43
      %p52 = scmp.eq.s32.totalorder %s14, 2
      %p53 = por %p51, %p52
      %p54 = scmp.ne.s32.totalorder %s43, %s44
      %p55 = scmp.eq.s32.totalorder %s14, 0
      %p56 = por %p54, %p55
      %p57 = scmp.ne.s32.totalorder %s43, %s44
      %p58 = scmp.eq.s32.totalorder %s15, 2
      %p59 = por %p57, %p58
      %p61 = scmp.ne.s32.totalorder %s44, %s60
      %p62 = scmp.eq.s32.totalorder %s15, 0
      %p63 = por %p61, %p62
      %s64 = ssub.s32 %s18, %s27
      %s65 = ssub.s32 %s17, %s31
      %s66 = sor.u32 %s64, %s65
      %p67 = scmp.eq.s32.totalorder %s66, 0
      %s69 = sadd.s32 %s68, 1
      %s70 = scalar_select %p67, %s68, %s69
      %p73 = pneg %p67
      %p74 = scmp.eq.s32.totalorder %s9, 2
      %p75 = por %p73, %p74
      %p76 = scmp.ne.s32.totalorder %s68, %s71
      %p77 = scmp.eq.s32.totalorder %s9, 0
      %p78 = por %p76, %p77
      %p79 = scmp.ne.s32.totalorder %s68, %s71
      %p80 = scmp.eq.s32.totalorder %s14, 2
      %p81 = por %p79, %p80
      %p82 = scmp.ne.s32.totalorder %s71, %s72
      %p83 = scmp.eq.s32.totalorder %s14, 0
      %p84 = por %p82, %p83
      %p85 = scmp.ne.s32.totalorder %s71, %s72
      %p86 = scmp.eq.s32.totalorder %s15, 2
      %p87 = por %p85, %p86
      %p89 = scmp.ne.s32.totalorder %s72, %s88
      %p90 = scmp.eq.s32.totalorder %s15, 0
      %p91 = por %p89, %p90
      %s92 = ssub.s32 %s17, %s31
      %p93 = scmp.eq.s32.totalorder %s92, 0
      %s95 = sadd.s32 %s94, 1
      %s96 = scalar_select %p93, %s94, %s95
      %p99 = pneg %p93
      %p100 = scmp.eq.s32.totalorder %s9, 2
      %p101 = por %p99, %p100
      %p102 = scmp.ne.s32.totalorder %s94, %s97
      %p103 = scmp.eq.s32.totalorder %s9, 0
      %p104 = por %p102, %p103
      %p105 = scmp.ne.s32.totalorder %s94, %s97
      %p106 = scmp.eq.s32.totalorder %s14, 2
      %p107 = por %p105, %p106
      %p108 = scmp.ne.s32.totalorder %s97, %s98
      %p109 = scmp.eq.s32.totalorder %s14, 0
      %p110 = por %p108, %p109
      %p111 = scmp.ne.s32.totalorder %s97, %s98
      %p112 = scmp.eq.s32.totalorder %s15, 2
      %p113 = por %p111, %p112
      %p115 = scmp.ne.s32.totalorder %s98, %s114
      %p116 = scmp.eq.s32.totalorder %s15, 0
      %p117 = por %p115, %p116
      %s118 = ssub.s32 %s16, %s35
      %s119 = ssub.s32 %s17, %s31
      %s120 = sor.u32 %s118, %s119
      %p121 = scmp.eq.s32.totalorder %s120, 0
      %s123 = sadd.s32 %s122, 1
      %s124 = scalar_select %p121, %s122, %s123
      %p127 = pneg %p121
      %p128 = scmp.eq.s32.totalorder %s9, 2
      %p129 = por %p127, %p128
      %p130 = scmp.ne.s32.totalorder %s122, %s125
      %p131 = scmp.eq.s32.totalorder %s9, 0
      %p132 = por %p130, %p131
      %p133 = scmp.ne.s32.totalorder %s122, %s125
      %p134 = scmp.eq.s32.totalorder %s14, 2
      %p135 = por %p133, %p134
      %p136 = scmp.ne.s32.totalorder %s125, %s126
      %p137 = scmp.eq.s32.totalorder %s14, 0
      %p138 = por %p136, %p137
      %p139 = scmp.ne.s32.totalorder %s125, %s126
      %p140 = scmp.eq.s32.totalorder %s15, 2
      %p141 = por %p139, %p140
      %p143 = scmp.ne.s32.totalorder %s126, %s142
      %p144 = scmp.eq.s32.totalorder %s15, 0
      %p145 = por %p143, %p144
      %p146 = scmp.le.s32.totalorder 1, %s9
      %p147 = scmp.lt.s32.totalorder %s9, 4
      %p148 = pnand %p146, %p147
      %p149 = pneg %p148
      // Predicated region
      $region9: #{_lambda_.76} parent=5 // pred_check
        _
      $region10: #{_lambda_.76} parent=5 // pred_check_branch
        %151 = sbr.rel (%p148) target = $region12
      $region11: #{_lambda_.76} parent=5 // pred_region
        %s152 = ssub.s32 %s9, 1
        // Predicated region
        $region13: #{_lambda_.76} parent=11 // pred_check
          %p153 = pneg %p56
        $region14: #{_lambda_.76} parent=11 // pred_check_branch
          %155 = sbr.rel (%p153) target = $region16
        $region15: #{_lambda_.76} parent=11 // pred_region
          %s156 = smul.u32 2, %s19
          %p157 = scmp.lt.s32.totalorder %s156, 1
          %s158 = scalar_select %p157, %s156, 1
          %p159 = scmp.lt.s32.totalorder %s21, 0
          %s160 = scalar_select %p159, %s21, 0
          %s161 = sadd.s32 %s160, %s158
          %s162 = smul.addr %s161, 4
          %s163 = scalar_lea.vmem %s0, %s162
          %s164 = smul.u32 2, %s19
        $region16: #{_lambda_.76} parent=11 // pred_fallthru
          _
      $region12: #{_lambda_.76} parent=5 // pred_fallthru
        _
      %p165 = scmp.lt.s32.totalorder %s9, 3
      // Predicated region
      $region17: #{_lambda_.76} parent=5 // pred_check
        %p166 = pneg %p165
      $region18: #{_lambda_.76} parent=5 // pred_check_branch
        %168 = sbr.rel (%p166) target = $region20
      $region19: #{_lambda_.76} parent=5 // pred_region
        // Predicated region
        $region21: #{_lambda_.76} parent=19 // pred_check
          %p169 = pneg %p78
        $region22: #{_lambda_.76} parent=19 // pred_check_branch
          %171 = sbr.rel (%p169) target = $region24
        $region23: #{_lambda_.76} parent=19 // pred_region
          %s172 = sand.u32 %s68, 1
          %s173 = sand.u32 %s68, 1
          %s174 = smul.addr %s173, 48
          %s175 = scalar_lea.vmem [#allocation3], %s174
          %s176 = smul.u32 6, %s18
          %s177 = smul.u32 2, %s17
          %s178 = smul.addr %s176, 6
          %s179 = sadd.s32 %s177, %s178
          %s180 = smul.addr %s179, 4
          %s181 = scalar_lea.vmem %s1, %s180
          // Predicated region
          $region25: #{_lambda_.76} parent=23 // pred_check
            _
          $region26: #{_lambda_.76} parent=23 // pred_check_branch
            %183 = sbr.rel (0) target = $region28
          $region27: #{_lambda_.76} parent=23 // pred_region
            // Predicated region
            $region29: #{_lambda_.76} parent=27 // pred_check
              _
            $region30: #{_lambda_.76} parent=27 // pred_check_branch
              %185 = sbr.rel (0) target = $region32
            $region31: #{_lambda_.76} parent=27 // pred_region
              // Predicated region
              $region44: #{_lambda_.76} parent=31 // pred_check
                _
              $region45: #{_lambda_.76} parent=31 // pred_check_branch
                %210 = sbr.rel (0) target = $region47
              $region46: #{_lambda_.76} parent=31 // pred_region
                loop: start=0, step=1, limit=1
                $region48: #{_lambda_.76} parent=46 // loop_pre_header
                  _
                $region49: #{_lambda_.76} parent=46 // loop_header
                  %s212 = sphi 0, %s216
                  %p213 = scmp.ge.s32.totalorder %s212, 1
                  %s217 = sphi %s181, %s181
                  %s218 = sphi %s175, %s175
                $region50: #{_lambda_.76} parent=46 // loop_header_branch
                  %215 = sbr.rel (%p213) target = $region54
                $region51: #{_lambda_.76} parent=46 // loop_body
                  %v219 = vld [vmem:[%s217] sm:$0xff]
                  %220 = vst [vmem:[%s218] sm:$0xff] %v219
                  %v221 = vld [vmem:[%s217 + $0x18] sm:$0xff]
                  %222 = vst [vmem:[%s218 + $0x8] sm:$0xff] %v221
                  %v223 = vld [vmem:[%s217 + $0x30] sm:$0xff]
                  %224 = vst [vmem:[%s218 + $0x10] sm:$0xff] %v223
                  %v225 = vld [vmem:[%s217 + $0x48] sm:$0xff]
                  %226 = vst [vmem:[%s218 + $0x18] sm:$0xff] %v225
                  %v227 = vld [vmem:[%s217 + $0x60] sm:$0xff]
                  %228 = vst [vmem:[%s218 + $0x20] sm:$0xff] %v227
                  %v229 = vld [vmem:[%s217 + $0x78] sm:$0xff]
                  %230 = vst [vmem:[%s218 + $0x28] sm:$0xff] %v229
                $region52: #{_lambda_.76} parent=46 // loop_footer
                  %s216 = sadd.s32 1, %s212
                $region53: #{_lambda_.76} parent=46 // loop_footer_branch
                  %211 = sbr.rel target = $region49
                $region54: #{_lambda_.76} parent=46 // loop_exit
                  _
              $region47: #{_lambda_.76} parent=31 // pred_fallthru
                _
              // Predicated region
              $region55: #{_lambda_.76} parent=31 // pred_check
                _
              $region56: #{_lambda_.76} parent=31 // pred_check_branch
                %232 = sbr.rel target = $region58
              $region57: #{_lambda_.76} parent=31 // pred_region
                _
              $region58: #{_lambda_.76} parent=31 // pred_fallthru
                _
            $region32: #{_lambda_.76} parent=27 // pred_fallthru
              _
            // Predicated region
            $region33: #{_lambda_.76} parent=27 // pred_check
              _
            $region34: #{_lambda_.76} parent=27 // pred_check_branch
              %187 = sbr.rel target = $region36
            $region35: #{_lambda_.76} parent=27 // pred_region
              loop: start=0, step=1, limit=1
              $region37: #{_lambda_.76} parent=35 // loop_pre_header
                _
              $region38: #{_lambda_.76} parent=35 // loop_header
                %s190 = sphi 0, %s194
                %p191 = scmp.ge.s32.totalorder %s190, 1
                %s195 = sphi %s181, %s181
                %s196 = sphi %s175, %s175
              $region39: #{_lambda_.76} parent=35 // loop_header_branch
                %193 = sbr.rel (%p191) target = $region43
              $region40: #{_lambda_.76} parent=35 // loop_body
                %v197 = vld [vmem:[%s195] sm:$0xff]
                %198 = vst [vmem:[%s196] sm:$0xff] %v197
                %v199 = vld [vmem:[%s195 + $0x18] sm:$0xff]
                %200 = vst [vmem:[%s196 + $0x8] sm:$0xff] %v199
                %v201 = vld [vmem:[%s195 + $0x30] sm:$0xff]
                %202 = vst [vmem:[%s196 + $0x10] sm:$0xff] %v201
                %v203 = vld [vmem:[%s195 + $0x48] sm:$0xff]
                %204 = vst [vmem:[%s196 + $0x18] sm:$0xff] %v203
                %v205 = vld [vmem:[%s195 + $0x60] sm:$0xff]
                %206 = vst [vmem:[%s196 + $0x20] sm:$0xff] %v205
                %v207 = vld [vmem:[%s195 + $0x78] sm:$0xff]
                %208 = vst [vmem:[%s196 + $0x28] sm:$0xff] %v207
              $region41: #{_lambda_.76} parent=35 // loop_footer
                %s194 = sadd.s32 1, %s190
              $region42: #{_lambda_.76} parent=35 // loop_footer_branch
                %189 = sbr.rel target = $region38
              $region43: #{_lambda_.76} parent=35 // loop_exit
                _
            $region36: #{_lambda_.76} parent=27 // pred_fallthru
              _
          $region28: #{_lambda_.76} parent=23 // pred_fallthru
            _
          %233 = vnop
        $region24: #{_lambda_.76} parent=19 // pred_fallthru
          _
        // Predicated region
        $region59: #{_lambda_.76} parent=19 // pred_check
          %p234 = pneg %p104
        $region60: #{_lambda_.76} parent=19 // pred_check_branch
          %236 = sbr.rel (%p234) target = $region62
        $region61: #{_lambda_.76} parent=19 // pred_region
          %s237 = smul.u32 2, %s17
          %p238 = scmp.lt.s32.totalorder %s237, 5
          %s239 = scalar_select %p238, %s237, 5
          %s240 = scalar_lea.vmem %s2, %s239
          %s241 = smul.u32 2, %s17
        $region62: #{_lambda_.76} parent=19 // pred_fallthru
          _
      $region20: #{_lambda_.76} parent=5 // pred_fallthru
        _
      %p242 = scmp.le.s32.totalorder 1, %s9
      %p243 = scmp.lt.s32.totalorder %s9, 4
      %p244 = pnand %p242, %p243
      %p245 = pneg %p244
      // Predicated region
      $region63: #{_lambda_.76} parent=5 // pred_check
        _
      $region64: #{_lambda_.76} parent=5 // pred_check_branch
        %247 = sbr.rel (%p244) target = $region66
      $region65: #{_lambda_.76} parent=5 // pred_region
        %s248 = ssub.s32 %s9, 1
        %s249 = sand.u32 %s71, 1
        %s250 = sand.u32 %s71, 1
        %s251 = smul.addr %s250, 48
        %s252 = scalar_lea.vmem [#allocation3], %s251
        // Predicated region
        $region67: #{_lambda_.76} parent=65 // pred_check
          %p253 = pneg %p84
        $region68: #{_lambda_.76} parent=65 // pred_check_branch
          %255 = sbr.rel (%p253) target = $region70
        $region69: #{_lambda_.76} parent=65 // pred_region
          _
        $region70: #{_lambda_.76} parent=65 // pred_fallthru
          _
        %s256 = smul.u32 2, %s19
        %p257 = scmp.lt.s32.totalorder %s256, 1
        %s258 = scalar_select %p257, %s256, 1
        %p259 = scmp.lt.s32.totalorder %s21, 0
        %s260 = scalar_select %p259, %s21, 0
        %s261 = sadd.s32 %s260, %s258
        %s262 = smul.addr %s261, 4
        %s263 = scalar_lea.vmem %s0, %s262
        %p264 = pneg %p56
        %p265 = pneg %p53
        %s266 = sand.u32 %s71, 1
        %s267 = sand.u32 %s71, 1
        %s268 = smul.addr %s267, 48
        %s269 = scalar_lea.vmem [#allocation3], %s268
        %p270 = pneg %p84
        %p271 = pneg %p81
        %s272 = smul.u32 2, %s20
        %p273 = scmp.lt.s32.totalorder %s272, 5
        %s274 = scalar_select %p273, %s272, 5
        %s275 = scalar_lea.vmem %s2, %s274
        %p276 = pneg %p110
        %p277 = pneg %p107
        %p278 = pneg %p138
        %p279 = pneg %p135
        %s280 = sand.u32 %s125, 1
        %s281 = sand.u32 %s125, 1
        %s282 = smul.addr %s281, 32
        %s283 = scalar_lea.vmem [#allocation4], %s282
        %s284 = smul.u32 2, %s19
        %p285 = scmp.lt.s32.totalorder %s284, 1
        %s286 = scalar_select %p285, %s284, 1
        %p287 = scmp.lt.s32.totalorder %s21, 0
        %s288 = scalar_select %p287, %s21, 0
        %s289 = sadd.s32 %s288, %s286
        %s290 = smul.addr %s289, 4
        %s291 = scalar_lea.vmem %s0, %s290
        %s292 = smul.u32 2, %s19
        %s293 = smul.u32 6, %s21
        %s294 = smul.u32 2, %s20
        %s295 = smul.u32 2, %s20
        %p296 = scmp.lt.s32.totalorder %s295, 5
        %s297 = scalar_select %p296, %s295, 5
        %s298 = scalar_lea.vmem %s2, %s297
        %s299 = smul.u32 2, %s20
        %s300 = smul.u32 2, %s19
        %s301 = smul.u32 2, %s20
        %p303 = scmp.eq.s32.totalorder %s21, 0
        // Predicated region
        $region71: #{_lambda_.76} parent=65 // pred_check
          %p304 = pneg %p303
        $region72: #{_lambda_.76} parent=65 // pred_check_branch
          %306 = sbr.rel (%p304) target = $region74
        $region73: #{_lambda_.76} parent=65 // pred_region
          %307 = vst [vmem:[#allocation2] sm:$0xff] 0.0
          %308 = vst [vmem:[#allocation2 + $0x8] sm:$0xff] 0.0
          %309 = vst [vmem:[#allocation2 + $0x10] sm:$0xff] 0.0
          %310 = vst [vmem:[#allocation2 + $0x18] sm:$0xff] 0.0
        $region74: #{_lambda_.76} parent=65 // pred_fallthru
          _
        %v311 = vld [vmem:[%s291] sm:$0xf]
        %v312 = vld [vmem:[%s291 + $0x4] sm:$0xf]
        %v313 = vld [vmem:[#allocation2] sm:$0xff]
        %v314 = vld [vmem:[#allocation2 + $0x8] sm:$0xff]
        %v315 = vld [vmem:[#allocation2 + $0x10] sm:$0xff]
        %v316 = vld [vmem:[#allocation2 + $0x18] sm:$0xff]
        %v317 = vld [vmem:[%s252] sm:$0xff]
        %v318 = vld [vmem:[%s252 + $0x8] sm:$0xff]
        %v319 = vld [vmem:[%s252 + $0x10] sm:$0xff]
        %v320 = vld [vmem:[%s252 + $0x18] sm:$0xff]
        %v321 = vld [vmem:[%s252 + $0x20] sm:$0xff]
        %v322 = vld [vmem:[%s252 + $0x28] sm:$0xff]
        %v325 = vunpack.c.l.b16 %v311
        %v326 = vunpack.c.l.b16 %v312
        %v327 = vpack.c.b16 %v326, %v325
        %v334 = vunpack.c.l.b16 %v317
        %v335 = vunpack.c.h.b16 %v317
        %v336 = vunpack.c.l.b16 %v318
        %v337 = vunpack.c.h.b16 %v318
        %v338 = vunpack.c.l.b16 %v319
        %v339 = vunpack.c.h.b16 %v319
        %v340 = vunpack.c.l.b16 %v320
        %v341 = vunpack.c.h.b16 %v320
        %v342 = vunpack.c.l.b16 %v321
        %v343 = vunpack.c.h.b16 %v321
        %v344 = vunpack.c.l.b16 %v322
        %v345 = vunpack.c.h.b16 %v322
        %v346 = vpack.c.b16 %v336, %v334
        %v347 = vpack.c.b16 %v337, %v335
        %v348 = vpack.c.b16 %v340, %v338
        %v349 = vpack.c.b16 %v341, %v339
        %v350 = vpack.c.b16 %v344, %v342
        %v351 = vpack.c.b16 %v345, %v343
        %vm358 = vcmask 392192
        %v360 = vsel %vm358, %v327, 0
        %362 = vmatprep.subr.bf16.mxu0 %v347
        %363 = vmatpush1.bf16.msra.mxu0 %v346
        %364 = vmatprep.subr.bf16.mxu0 %v349
        %365 = vmatpush1.bf16.msra.mxu0 %v348
        %366 = vmatprep.subr.bf16.mxu0 %v351
        %367 = vmatpush1.bf16.msra.mxu0 %v350
        %368 = vmatprep.subr.bf16.mxu0 0
        %369 = vmatpush1.bf16.msra.mxu0 0
        %370 = vmatprep.subr.bf16.mxu0 0
        %371 = vmatpush1.bf16.msra.mxu0 0
        %372 = vmatprep.subr.bf16.mxu0 0
        %373 = vmatpush1.bf16.msra.mxu0 0
        %374 = vmatprep.subr.bf16.mxu0 0
        %375 = vmatpush1.bf16.msra.mxu0 0
        %376 = vmatprep.subr.bf16.mxu0 0
        %377 = vmatpush1.bf16.msra.mxu0 0
        %378 = vmatprep.subr.bf16.mxu0 0
        %379 = vmatpush1.bf16.msra.mxu0 0
        %380 = vmatprep.subr.bf16.mxu0 0
        %381 = vmatpush1.bf16.msra.mxu0 0
        %382 = vmatprep.subr.bf16.mxu0 0
        %383 = vmatpush1.bf16.msra.mxu0 0
        %384 = vmatprep.subr.bf16.mxu0 0
        %385 = vmatpush1.bf16.msra.mxu0 0
        %386 = vmatprep.subr.bf16.mxu0 0
        %387 = vmatpush1.bf16.msra.mxu0 0
        %388 = vmatprep.subr.bf16.mxu0 0
        %389 = vmatpush1.bf16.msra.mxu0 0
        %390 = vmatprep.subr.bf16.mxu0 0
        %391 = vmatpush1.bf16.msra.mxu0 0
        %392 = vmatprep.subr.bf16.mxu0 0
        %393 = vmatpush1.bf16.msra.mxu0 0
        %394 = vmatprep.mubr.bf16.mxu0 0
        %395 = vmatmul.mubr.bf16.gmra.mrb[0].mxu0 %v360
        %v396 = vpop.f32.mrb[0].mxu0
        %v397 = vadd.f32 0.0, %v396
        %v398 = vpop.f32.mrb[0].mxu0
        %v399 = vadd.f32 0.0, %v398
        %v400 = vpop.f32.mrb[0].mxu0
        %v401 = vadd.f32 0.0, %v400
        %v402 = vpop.f32.mrb[0].mxu0
        %v403 = vadd.f32 0.0, %v402
        %404 = vdwg.mxu0
        %v405 = vadd.f32 %v313, %v397
        %v406 = vadd.f32 %v314, %v399
        %v407 = vadd.f32 %v315, %v401
        %v408 = vadd.f32 %v316, %v403
        %409 = vst [vmem:[#allocation2] sm:$0xff] %v405
        %410 = vst [vmem:[#allocation2 + $0x8] sm:$0xff] %v406
        %411 = vst [vmem:[#allocation2 + $0x10] sm:$0xff] %v407
        %412 = vst [vmem:[#allocation2 + $0x18] sm:$0xff] %v408
        // Predicated region
        $region75: #{_lambda_.76} parent=65 // pred_check
          %p413 = pneg %p303
        $region76: #{_lambda_.76} parent=65 // pred_check_branch
          %415 = sbr.rel (%p413) target = $region78
        $region77: #{_lambda_.76} parent=65 // pred_region
          %v416 = vld [vmem:[#allocation2] sm:$0xff]
          %v417 = vld [vmem:[#allocation2 + $0x8] sm:$0xff]
          %v418 = vld [vmem:[#allocation2 + $0x10] sm:$0xff]
          %v419 = vld [vmem:[#allocation2 + $0x18] sm:$0xff]
          %v420 = vld [vmem:[%s298] sm:$0x3]
          %v422 = vlaneseq
          %v423 = vshrl.u32 %v422, 7
          %v424 = vsub.s32 0, %v423
          %v425 = vrot.slane %v420, %v424
          %v426 = vlaneseq
          %v427 = vshrl.u32 %v426, 7
          %v428 = vsub.s32 1, %v427
          %v429 = vrot.slane %v420, %v428
          %v432 = vadd.f32 %v416, %v425
          %v433 = vadd.f32 %v417, %v429
          %v434 = vadd.f32 %v418, %v425
          %v435 = vadd.f32 %v419, %v429
          %436 = vst [vmem:[%s283] sm:$0xff] %v432
          %437 = vst [vmem:[%s283 + $0x8] sm:$0xff] %v433
          %438 = vst [vmem:[%s283 + $0x10] sm:$0xff] %v434
          %439 = vst [vmem:[%s283 + $0x18] sm:$0xff] %v435
        $region78: #{_lambda_.76} parent=65 // pred_fallthru
          _
        %s440 = sand.u32 %s125, 1
        %s441 = sand.u32 %s125, 1
        %s442 = smul.addr %s441, 32
        %s443 = scalar_lea.vmem [#allocation4], %s442
        // Predicated region
        $region79: #{_lambda_.76} parent=65 // pred_check
          %p444 = pneg %p135
        $region80: #{_lambda_.76} parent=65 // pred_check_branch
          %446 = sbr.rel (%p444) target = $region82
        $region81: #{_lambda_.76} parent=65 // pred_region
          %s447 = smul.u32 2, %s19
          %s448 = smul.u32 2, %s20
          %s449 = smul.addr %s447, 6
          %s450 = sadd.s32 %s448, %s449
          %s451 = smul.addr %s450, 8
          %s452 = scalar_lea.vmem %s3, %s451
          // Predicated region
          $region83: #{_lambda_.76} parent=81 // pred_check
            _
          $region84: #{_lambda_.76} parent=81 // pred_check_branch
            %454 = sbr.rel (0) target = $region86
          $region85: #{_lambda_.76} parent=81 // pred_region
            // Predicated region
            $region87: #{_lambda_.76} parent=85 // pred_check
              _
            $region88: #{_lambda_.76} parent=85 // pred_check_branch
              %456 = sbr.rel (0) target = $region90
            $region89: #{_lambda_.76} parent=85 // pred_region
              loop: start=0, step=1, limit=1
              $region91: #{_lambda_.76} parent=89 // loop_pre_header
                _
              $region92: #{_lambda_.76} parent=89 // loop_header
                %s458 = sphi 0, %s462
                %p459 = scmp.ge.s32.totalorder %s458, 1
                %s463 = sphi %s443, %s443
                %s464 = sphi %s452, %s452
              $region93: #{_lambda_.76} parent=89 // loop_header_branch
                %461 = sbr.rel (%p459) target = $region97
              $region94: #{_lambda_.76} parent=89 // loop_body
                %v465 = vld [vmem:[%s463] sm:$0xff]
                %466 = vst [vmem:[%s464] sm:$0xff] %v465
                %v467 = vld [vmem:[%s463 + $0x8] sm:$0xff]
                %468 = vst [vmem:[%s464 + $0x8] sm:$0xff] %v467
                %v469 = vld [vmem:[%s463 + $0x10] sm:$0xff]
                %470 = vst [vmem:[%s464 + $0x30] sm:$0xff] %v469
                %v471 = vld [vmem:[%s463 + $0x18] sm:$0xff]
                %472 = vst [vmem:[%s464 + $0x38] sm:$0xff] %v471
              $region95: #{_lambda_.76} parent=89 // loop_footer
                %s462 = sadd.s32 1, %s458
              $region96: #{_lambda_.76} parent=89 // loop_footer_branch
                %457 = sbr.rel target = $region92
              $region97: #{_lambda_.76} parent=89 // loop_exit
                _
            $region90: #{_lambda_.76} parent=85 // pred_fallthru
              _
            // Predicated region
            $region98: #{_lambda_.76} parent=85 // pred_check
              _
            $region99: #{_lambda_.76} parent=85 // pred_check_branch
              %474 = sbr.rel target = $region101
            $region100: #{_lambda_.76} parent=85 // pred_region
              _
            $region101: #{_lambda_.76} parent=85 // pred_fallthru
              _
          $region86: #{_lambda_.76} parent=81 // pred_fallthru
            _
          %475 = vnop
        $region82: #{_lambda_.76} parent=65 // pred_fallthru
          _
      $region66: #{_lambda_.76} parent=5 // pred_fallthru
        _
      %p476 = scmp.le.s32.totalorder 2, %s9
      // Predicated region
      $region102: #{_lambda_.76} parent=5 // pred_check
        %p477 = pneg %p476
      $region103: #{_lambda_.76} parent=5 // pred_check_branch
        %479 = sbr.rel (%p477) target = $region105
      $region104: #{_lambda_.76} parent=5 // pred_region
        %s480 = ssub.s32 %s9, 2
        // Predicated region
        $region106: #{_lambda_.76} parent=104 // pred_check
          %p481 = pneg %p141
        $region107: #{_lambda_.76} parent=104 // pred_check_branch
          %483 = sbr.rel (%p481) target = $region109
        $region108: #{_lambda_.76} parent=104 // pred_region
          %s484 = sand.u32 %s126, 1
          %s485 = sand.u32 %s126, 1
          %s486 = smul.addr %s485, 32
          %s487 = scalar_lea.vmem [#allocation4], %s486
        $region109: #{_lambda_.76} parent=104 // pred_fallthru
          _
      $region105: #{_lambda_.76} parent=5 // pred_fallthru
        _
    $region6: #{_lambda_.76} parent=1 // loop_footer
      %s13 = sadd.s32 1, %s9
    $region7: #{_lambda_.76} parent=1 // loop_footer_branch
      %8 = sbr.rel target = $region3
    $region8: #{_lambda_.76} parent=1 // loop_exit
      _

// kernel: _lambda_.77
$region0: #{_lambda_.77}
  #allocation0 [shape = 'u32[]', space=smem, size = 0x4, offset = 0x4, fixed_abs, tag = 'smem constant byte address 0x4 - core index']
  #allocation1 [shape = 'u32[144,128]{1,0:T(1,128)}', space=vmem, size = 0x12000, scoped, tag = 'internal scratch']
  #allocation2 [shape = 'f32[16,128]{1,0:T(8,128)}', space=vmem, size = 0x2000, scoped, tag = 'scratch operand']
  %s0 = inlined_call_operand.vmem [shape: bf16[16,48], index: 0, kind: input, shape index: {}]
  %s1 = inlined_call_operand.vmem [shape: bf16[48,128], index: 1, kind: input, shape index: {}]
  %s2 = inlined_call_operand.vmem [shape: f32[1,128], index: 2, kind: input, shape index: {}]
  %s3 = inlined_call_operand.vmem [shape: f32[16,128], index: 3, kind: output, shape index: {}]
  %s4 = sld [smem:[#allocation0]]
  $region30: #{_lambda_.77} parent=0
    _
  %s6 = ssub.s32 1, %s4
  %s7 = scalar_select 0, %s6, %s4
  // Predicated region
  $region2: #{_lambda_.77} parent=0 // pred_check
    _
  $region3: #{_lambda_.77} parent=0 // pred_check_branch
    %9 = sbr.rel (0) target = $region5
  $region4: #{_lambda_.77} parent=0 // pred_region
    _
  $region5: #{_lambda_.77} parent=0 // pred_fallthru
    _
  // Predicated region
  $region6: #{_lambda_.77} parent=0 // pred_check
    _
  $region7: #{_lambda_.77} parent=0 // pred_check_branch
    %11 = sbr.rel (0) target = $region9
  $region8: #{_lambda_.77} parent=0 // pred_region
    _
  $region9: #{_lambda_.77} parent=0 // pred_fallthru
    _
  // Predicated region
  $region10: #{_lambda_.77} parent=0 // pred_check
    _
  $region11: #{_lambda_.77} parent=0 // pred_check_branch
    %13 = sbr.rel (0) target = $region13
  $region12: #{_lambda_.77} parent=0 // pred_region
    _
  $region13: #{_lambda_.77} parent=0 // pred_fallthru
    _
  %p15 = scmp.eq.s32.totalorder 0, 0
  // Predicated region
  $region14: #{_lambda_.77} parent=0 // pred_check
    %p16 = pneg %p15
  $region15: #{_lambda_.77} parent=0 // pred_check_branch
    %18 = sbr.rel (%p16) target = $region17
  $region16: #{_lambda_.77} parent=0 // pred_region
    %19 = vst [vmem:[#allocation2] sm:$0xff] 0.0
    %20 = vst [vmem:[#allocation2 + $0x8] sm:$0xff] 0.0
  $region17: #{_lambda_.77} parent=0 // pred_fallthru
    _
  %v21 = vld [vmem:[%s0] sm:$0xf]
  %v22 = vld [vmem:[%s0 + $0x4] sm:$0xf]
  %v23 = vld [vmem:[#allocation2] sm:$0xff]
  %v24 = vld [vmem:[#allocation2 + $0x8] sm:$0xff]
  %v25 = vld [vmem:[%s1] sm:$0xf]
  %v26 = vld [vmem:[%s1 + $0x4] sm:$0xf]
  %v27 = vld [vmem:[%s1 + $0x8] sm:$0xf]
  %v28 = vld [vmem:[%s1 + $0xc] sm:$0xf]
  %v29 = vld [vmem:[%s1 + $0x10] sm:$0xf]
  %v30 = vld [vmem:[%s1 + $0x14] sm:$0xf]
  %v33 = vunpack.c.l.b16 %v21
  %v34 = vunpack.c.l.b16 %v22
  %v35 = vpack.c.b16 %v34, %v33
  %v42 = vunpack.c.l.b16 %v25
  %v43 = vunpack.c.l.b16 %v26
  %v44 = vunpack.c.l.b16 %v27
  %v45 = vunpack.c.l.b16 %v28
  %v46 = vunpack.c.l.b16 %v29
  %v47 = vunpack.c.l.b16 %v30
  %v48 = vpack.c.b16 %v43, %v42
  %v49 = vpack.c.b16 %v45, %v44
  %v50 = vpack.c.b16 %v47, %v46
  %vm54 = vcmask 392192
  %v56 = vsel %vm54, %v35, 0
  %58 = vmatprep.subr.bf16.mxu0 0
  %59 = vmatpush1.bf16.msra.mxu0 %v48
  %60 = vmatprep.subr.bf16.mxu0 0
  %61 = vmatpush1.bf16.msra.mxu0 %v49
  %62 = vmatprep.subr.bf16.mxu0 0
  %63 = vmatpush1.bf16.msra.mxu0 %v50
  %64 = vmatprep.subr.bf16.mxu0 0
  %65 = vmatpush1.bf16.msra.mxu0 0
  %66 = vmatprep.subr.bf16.mxu0 0
  %67 = vmatpush1.bf16.msra.mxu0 0
  %68 = vmatprep.subr.bf16.mxu0 0
  %69 = vmatpush1.bf16.msra.mxu0 0
  %70 = vmatprep.subr.bf16.mxu0 0
  %71 = vmatpush1.bf16.msra.mxu0 0
  %72 = vmatprep.subr.bf16.mxu0 0
  %73 = vmatpush1.bf16.msra.mxu0 0
  %74 = vmatprep.subr.bf16.mxu0 0
  %75 = vmatpush1.bf16.msra.mxu0 0
  %76 = vmatprep.subr.bf16.mxu0 0
  %77 = vmatpush1.bf16.msra.mxu0 0
  %78 = vmatprep.subr.bf16.mxu0 0
  %79 = vmatpush1.bf16.msra.mxu0 0
  %80 = vmatprep.subr.bf16.mxu0 0
  %81 = vmatpush1.bf16.msra.mxu0 0
  %82 = vmatprep.subr.bf16.mxu0 0
  %83 = vmatpush1.bf16.msra.mxu0 0
  %84 = vmatprep.subr.bf16.mxu0 0
  %85 = vmatpush1.bf16.msra.mxu0 0
  %86 = vmatprep.subr.bf16.mxu0 0
  %87 = vmatpush1.bf16.msra.mxu0 0
  %88 = vmatprep.subr.bf16.mxu0 0
  %89 = vmatpush1.bf16.msra.mxu0 0
  %90 = vmatprep.mubr.bf16.mxu0 0
  %91 = vmatmul.mubr.bf16.gmra.mrb[0].mxu0 %v56
  %v92 = vpop.f32.mrb[0].mxu0
  %v93 = vadd.f32 0.0, %v92
  %v94 = vpop.f32.mrb[0].mxu0
  %v95 = vpop.f32.mrb[0].mxu0
  %v96 = vadd.f32 0.0, %v95
  %v97 = vpop.f32.mrb[0].mxu0
  %98 = vdwg.mxu0
  %v99 = vadd.f32 %v23, %v93
  %v100 = vadd.f32 %v24, %v96
  %101 = vst [vmem:[#allocation2] sm:$0xff] %v99
  %102 = vst [vmem:[#allocation2 + $0x8] sm:$0xff] %v100
  // Predicated region
  $region18: #{_lambda_.77} parent=0 // pred_check
    %p103 = pneg %p15
  $region19: #{_lambda_.77} parent=0 // pred_check_branch
    %105 = sbr.rel (%p103) target = $region21
  $region20: #{_lambda_.77} parent=0 // pred_region
    %v106 = vld [vmem:[#allocation2] sm:$0xff]
    %v107 = vld [vmem:[#allocation2 + $0x8] sm:$0xff]
    %v108 = vld [vmem:[%s2] sm:$0x1]
    %v110 = vlaneseq
    %v111 = vshrl.u32 %v110, 7
    %v112 = vsub.s32 0, %v111
    %v113 = vrot.slane %v108, %v112
    %v115 = vadd.f32 %v106, %v113
    %v116 = vadd.f32 %v107, %v113
    %117 = vst [vmem:[%s3] sm:$0xff] %v115
    %118 = vst [vmem:[%s3 + $0x8] sm:$0xff] %v116
  $region21: #{_lambda_.77} parent=0 // pred_fallthru
    _
  // Predicated region
  $region22: #{_lambda_.77} parent=0 // pred_check
    _
  $region23: #{_lambda_.77} parent=0 // pred_check_branch
    %120 = sbr.rel (0) target = $region25
  $region24: #{_lambda_.77} parent=0 // pred_region
    _
  $region25: #{_lambda_.77} parent=0 // pred_fallthru
    _
  // Predicated region
  $region26: #{_lambda_.77} parent=0 // pred_check
    _
  $region27: #{_lambda_.77} parent=0 // pred_check_branch
    %122 = sbr.rel (0) target = $region29
  $region28: #{_lambda_.77} parent=0 // pred_region
    _
  $region29: #{_lambda_.77} parent=0 // pred_fallthru
    _

// kernel: _lambda_.80
$region0: #{_lambda_.80}
  #allocation0 [shape = 'u32[]', space=smem, size = 0x4, offset = 0x4, fixed_abs, tag = 'smem constant byte address 0x4 - core index']
  #allocation1 [shape = 'u32[144,128]{1,0:T(1,128)}', space=vmem, size = 0x12000, scoped, tag = 'internal scratch']
  %s0 = inlined_call_operand.vmem [shape: bf16[16,2,24], index: 0, kind: input, shape index: {}]
  %s1 = inlined_call_operand.vmem [shape: bf16[16,24,256], index: 1, kind: input, shape index: {}]
  %s2 = inlined_call_operand.vmem [shape: f32[16,1,256], index: 2, kind: input, shape index: {}]
  %s3 = inlined_call_operand.vmem [shape: f32[16,2,128], index: 3, kind: output, shape index: {}]
  %s4 = sld [smem:[#allocation0]]
  $region45: #{_lambda_.80} parent=0
    _
  %s6 = ssub.s32 1, %s4
  %s7 = scalar_select 0, %s6, %s4
  loop: start=0, step=1, limit=4
  $region2: #{_lambda_.80} parent=0 // loop_pre_header
    _
  $region3: #{_lambda_.80} parent=0 // loop_header
    %s9 = sphi 0, %s13
    %p10 = scmp.ge.s32.totalorder %s9, 4
    %s19 = sphi 0, %s21
    %s22 = sphi 0, %s19
    %s23 = sphi 0, %s22
    %s39 = sphi 0, %s23
    %s45 = sphi 0, %s47
    %s48 = sphi 0, %s45
    %s49 = sphi 0, %s48
    %s65 = sphi 0, %s49
    %s71 = sphi 0, %s73
    %s74 = sphi 0, %s71
    %s75 = sphi 0, %s74
    %s91 = sphi 0, %s75
    %s97 = sphi 0, %s99
    %s100 = sphi 0, %s97
    %s101 = sphi 0, %s100
    %s117 = sphi 0, %s101
  $region4: #{_lambda_.80} parent=0 // loop_header_branch
    %12 = sbr.rel (%p10) target = $region8
  $region5: #{_lambda_.80} parent=0 // loop_body
    %s14 = ssub.s32 %s9, 1
    %s15 = ssub.s32 %s9, 2
    %s16 = sadd.s32 %s9, 1
    %s17 = ssub.s32 %s9, %s16
    %p18 = scmp.eq.s32.totalorder %s17, 0
    %s20 = sadd.s32 %s19, 1
    %s21 = scalar_select %p18, %s19, %s20
    %p24 = pneg %p18
    %p25 = scmp.eq.s32.totalorder %s9, 1
    %p26 = por %p24, %p25
    %p27 = scmp.ne.s32.totalorder %s19, %s22
    %p28 = scmp.eq.s32.totalorder %s9, 0
    %p29 = por %p27, %p28
    %p30 = scmp.ne.s32.totalorder %s19, %s22
    %p31 = scmp.eq.s32.totalorder %s14, 1
    %p32 = por %p30, %p31
    %p33 = scmp.ne.s32.totalorder %s22, %s23
    %p34 = scmp.eq.s32.totalorder %s14, 0
    %p35 = por %p33, %p34
    %p36 = scmp.ne.s32.totalorder %s22, %s23
    %p37 = scmp.eq.s32.totalorder %s15, 1
    %p38 = por %p36, %p37
    %p40 = scmp.ne.s32.totalorder %s23, %s39
    %p41 = scmp.eq.s32.totalorder %s15, 0
    %p42 = por %p40, %p41
    %s43 = ssub.s32 %s9, %s16
    %p44 = scmp.eq.s32.totalorder %s43, 0
    %s46 = sadd.s32 %s45, 1
    %s47 = scalar_select %p44, %s45, %s46
    %p50 = pneg %p44
    %p51 = scmp.eq.s32.totalorder %s9, 1
    %p52 = por %p50, %p51
    %p53 = scmp.ne.s32.totalorder %s45, %s48
    %p54 = scmp.eq.s32.totalorder %s9, 0
    %p55 = por %p53, %p54
    %p56 = scmp.ne.s32.totalorder %s45, %s48
    %p57 = scmp.eq.s32.totalorder %s14, 1
    %p58 = por %p56, %p57
    %p59 = scmp.ne.s32.totalorder %s48, %s49
    %p60 = scmp.eq.s32.totalorder %s14, 0
    %p61 = por %p59, %p60
    %p62 = scmp.ne.s32.totalorder %s48, %s49
    %p63 = scmp.eq.s32.totalorder %s15, 1
    %p64 = por %p62, %p63
    %p66 = scmp.ne.s32.totalorder %s49, %s65
    %p67 = scmp.eq.s32.totalorder %s15, 0
    %p68 = por %p66, %p67
    %s69 = ssub.s32 %s9, %s16
    %p70 = scmp.eq.s32.totalorder %s69, 0
    %s72 = sadd.s32 %s71, 1
    %s73 = scalar_select %p70, %s71, %s72
    %p76 = pneg %p70
    %p77 = scmp.eq.s32.totalorder %s9, 1
    %p78 = por %p76, %p77
    %p79 = scmp.ne.s32.totalorder %s71, %s74
    %p80 = scmp.eq.s32.totalorder %s9, 0
    %p81 = por %p79, %p80
    %p82 = scmp.ne.s32.totalorder %s71, %s74
    %p83 = scmp.eq.s32.totalorder %s14, 1
    %p84 = por %p82, %p83
    %p85 = scmp.ne.s32.totalorder %s74, %s75
    %p86 = scmp.eq.s32.totalorder %s14, 0
    %p87 = por %p85, %p86
    %p88 = scmp.ne.s32.totalorder %s74, %s75
    %p89 = scmp.eq.s32.totalorder %s15, 1
    %p90 = por %p88, %p89
    %p92 = scmp.ne.s32.totalorder %s75, %s91
    %p93 = scmp.eq.s32.totalorder %s15, 0
    %p94 = por %p92, %p93
    %s95 = ssub.s32 %s9, %s16
    %p96 = scmp.eq.s32.totalorder %s95, 0
    %s98 = sadd.s32 %s97, 1
    %s99 = scalar_select %p96, %s97, %s98
    %p102 = pneg %p96
    %p103 = scmp.eq.s32.totalorder %s9, 1
    %p104 = por %p102, %p103
    %p105 = scmp.ne.s32.totalorder %s97, %s100
    %p106 = scmp.eq.s32.totalorder %s9, 0
    %p107 = por %p105, %p106
    %p108 = scmp.ne.s32.totalorder %s97, %s100
    %p109 = scmp.eq.s32.totalorder %s14, 1
    %p110 = por %p108, %p109
    %p111 = scmp.ne.s32.totalorder %s100, %s101
    %p112 = scmp.eq.s32.totalorder %s14, 0
    %p113 = por %p111, %p112
    %p114 = scmp.ne.s32.totalorder %s100, %s101
    %p115 = scmp.eq.s32.totalorder %s15, 1
    %p116 = por %p114, %p115
    %p118 = scmp.ne.s32.totalorder %s101, %s117
    %p119 = scmp.eq.s32.totalorder %s15, 0
    %p120 = por %p118, %p119
    %p121 = scmp.le.s32.totalorder 1, %s9
    %p122 = scmp.lt.s32.totalorder %s9, 3
    %p123 = pnand %p121, %p122
    %p124 = pneg %p123
    // Predicated region
    $region9: #{_lambda_.80} parent=5 // pred_check
      _
    $region10: #{_lambda_.80} parent=5 // pred_check_branch
      %126 = sbr.rel (%p123) target = $region12
    $region11: #{_lambda_.80} parent=5 // pred_region
      %s127 = ssub.s32 %s9, 1
    $region12: #{_lambda_.80} parent=5 // pred_fallthru
      _
    %p128 = scmp.lt.s32.totalorder %s9, 2
    // Predicated region
    $region13: #{_lambda_.80} parent=5 // pred_check
      %p129 = pneg %p128
    $region14: #{_lambda_.80} parent=5 // pred_check_branch
      %131 = sbr.rel (%p129) target = $region16
    $region15: #{_lambda_.80} parent=5 // pred_region
      // Predicated region
      $region17: #{_lambda_.80} parent=15 // pred_check
        %p132 = pneg %p29
      $region18: #{_lambda_.80} parent=15 // pred_check_branch
        %134 = sbr.rel (%p132) target = $region20
      $region19: #{_lambda_.80} parent=15 // pred_region
        %s135 = smul.u32 8, %s9
        %p136 = scmp.lt.s32.totalorder %s135, 15
        %s137 = scalar_select %p136, %s135, 15
        %s138 = scalar_lea.vmem %s0, %s137
        %s139 = smul.u32 8, %s9
      $region20: #{_lambda_.80} parent=15 // pred_fallthru
        _
      // Predicated region
      $region21: #{_lambda_.80} parent=15 // pred_check
        %p140 = pneg %p55
      $region22: #{_lambda_.80} parent=15 // pred_check_branch
        %142 = sbr.rel (%p140) target = $region24
      $region23: #{_lambda_.80} parent=15 // pred_region
        %s143 = smul.u32 8, %s9
        %p144 = scmp.lt.s32.totalorder %s143, 15
        %s145 = scalar_select %p144, %s143, 15
        %s146 = smul.addr %s145, 6
        %s147 = smul.addr %s146, 4
        %s148 = scalar_lea.vmem %s1, %s147
        %s149 = smul.u32 8, %s9
      $region24: #{_lambda_.80} parent=15 // pred_fallthru
        _
      // Predicated region
      $region25: #{_lambda_.80} parent=15 // pred_check
        %p150 = pneg %p81
      $region26: #{_lambda_.80} parent=15 // pred_check_branch
        %152 = sbr.rel (%p150) target = $region28
      $region27: #{_lambda_.80} parent=15 // pred_region
        %s153 = smul.u32 8, %s9
        %p154 = scmp.lt.s32.totalorder %s153, 15
        %s155 = scalar_select %p154, %s153, 15
        %s156 = smul.addr %s155, 2
        %s157 = scalar_lea.vmem %s2, %s156
        %s158 = smul.u32 8, %s9
      $region28: #{_lambda_.80} parent=15 // pred_fallthru
        _
    $region16: #{_lambda_.80} parent=5 // pred_fallthru
      _
    %p159 = scmp.le.s32.totalorder 1, %s9
    %p160 = scmp.lt.s32.totalorder %s9, 3
    %p161 = pnand %p159, %p160
    %p162 = pneg %p161
    // Predicated region
    $region29: #{_lambda_.80} parent=5 // pred_check
      _
    $region30: #{_lambda_.80} parent=5 // pred_check_branch
      %164 = sbr.rel (%p161) target = $region32
    $region31: #{_lambda_.80} parent=5 // pred_region
      %s165 = ssub.s32 %s9, 1
      %s166 = smul.u32 8, %s14
      %p167 = scmp.lt.s32.totalorder %s166, 15
      %s168 = scalar_select %p167, %s166, 15
      %s169 = scalar_lea.vmem %s0, %s168
      %p170 = pneg %p35
      %p171 = pneg %p32
      %s172 = smul.u32 8, %s14
      %p173 = scmp.lt.s32.totalorder %s172, 15
      %s174 = scalar_select %p173, %s172, 15
      %s175 = smul.addr %s174, 6
      %s176 = smul.addr %s175, 4
      %s177 = scalar_lea.vmem %s1, %s176
      %p178 = pneg %p61
      %p179 = pneg %p58
      %s180 = smul.u32 8, %s14
      %p181 = scmp.lt.s32.totalorder %s180, 15
      %s182 = scalar_select %p181, %s180, 15
      %s183 = smul.addr %s182, 2
      %s184 = scalar_lea.vmem %s2, %s183
      %p185 = pneg %p87
      %p186 = pneg %p84
      %p187 = pneg %p113
      %p188 = pneg %p110
      %s189 = smul.u32 8, %s14
      %p190 = scmp.lt.s32.totalorder %s189, 15
      %s191 = scalar_select %p190, %s189, 15
      %s192 = smul.addr %s191, 2
      %s193 = scalar_lea.vmem %s3, %s192
      %s194 = smul.u32 8, %s14
      %p195 = scmp.lt.s32.totalorder %s194, 15
      %s196 = scalar_select %p195, %s194, 15
      %s197 = scalar_lea.vmem %s0, %s196
      %s198 = smul.u32 8, %s14
      %s199 = smul.u32 8, %s14
      %p200 = scmp.lt.s32.totalorder %s199, 15
      %s201 = scalar_select %p200, %s199, 15
      %s202 = smul.addr %s201, 6
      %s203 = smul.addr %s202, 4
      %s204 = scalar_lea.vmem %s1, %s203
      %s205 = smul.u32 8, %s14
      %s206 = smul.u32 8, %s14
      %p207 = scmp.lt.s32.totalorder %s206, 15
      %s208 = scalar_select %p207, %s206, 15
      %s209 = smul.addr %s208, 2
      %s210 = scalar_lea.vmem %s2, %s209
      %s211 = smul.u32 8, %s14
      %s212 = smul.u32 8, %s14
      %p213 = scmp.lt.s32.totalorder %s212, 15
      %s214 = scalar_select %p213, %s212, 15
      %s215 = smul.addr %s214, 2
      %s216 = scalar_lea.vmem %s3, %s215
      %s217 = smul.u32 8, %s14
      %v219 = vld [vmem:[%s197] sm:$0x1]
      %v220 = vld [vmem:[%s197 + $0x1] sm:$0x1]
      %v221 = vld [vmem:[%s197 + $0x2] sm:$0x1]
      %v222 = vld [vmem:[%s197 + $0x3] sm:$0x1]
      %v223 = vld [vmem:[%s197 + $0x4] sm:$0x1]
      %v224 = vld [vmem:[%s197 + $0x5] sm:$0x1]
      %v225 = vld [vmem:[%s197 + $0x6] sm:$0x1]
      %v226 = vld [vmem:[%s197 + $0x7] sm:$0x1]
      %v227 = vld [vmem:[%s204] sm:$0xff]
      %v228 = vld [vmem:[%s204 + $0x8] sm:$0xff]
      %v229 = vld [vmem:[%s204 + $0x10] sm:$0xff]
      %v230 = vld [vmem:[%s204 + $0x18] sm:$0xff]
      %v231 = vld [vmem:[%s204 + $0x20] sm:$0xff]
      %v232 = vld [vmem:[%s204 + $0x28] sm:$0xff]
      %v233 = vld [vmem:[%s204 + $0x30] sm:$0xff]
      %v234 = vld [vmem:[%s204 + $0x38] sm:$0xff]
      %v235 = vld [vmem:[%s204 + $0x40] sm:$0xff]
      %v236 = vld [vmem:[%s204 + $0x48] sm:$0xff]
      %v237 = vld [vmem:[%s204 + $0x50] sm:$0xff]
      %v238 = vld [vmem:[%s204 + $0x58] sm:$0xff]
      %v239 = vld [vmem:[%s204 + $0x60] sm:$0xff]
      %v240 = vld [vmem:[%s204 + $0x68] sm:$0xff]
      %v241 = vld [vmem:[%s204 + $0x70] sm:$0xff]
      %v242 = vld [vmem:[%s204 + $0x78] sm:$0xff]
      %v243 = vld [vmem:[%s204 + $0x80] sm:$0xff]
      %v244 = vld [vmem:[%s204 + $0x88] sm:$0xff]
      %v245 = vld [vmem:[%s204 + $0x90] sm:$0xff]
      %v246 = vld [vmem:[%s204 + $0x98] sm:$0xff]
      %v247 = vld [vmem:[%s204 + $0xa0] sm:$0xff]
      %v248 = vld [vmem:[%s204 + $0xa8] sm:$0xff]
      %v249 = vld [vmem:[%s204 + $0xb0] sm:$0xff]
      %v250 = vld [vmem:[%s204 + $0xb8] sm:$0xff]
      %v251 = vld [vmem:[%s210] sm:$0x3]
      %v252 = vld [vmem:[%s210 + $0x2] sm:$0x3]
      %v253 = vld [vmem:[%s210 + $0x4] sm:$0x3]
      %v254 = vld [vmem:[%s210 + $0x6] sm:$0x3]
      %v255 = vld [vmem:[%s210 + $0x8] sm:$0x3]
      %v256 = vld [vmem:[%s210 + $0xa] sm:$0x3]
      %v257 = vld [vmem:[%s210 + $0xc] sm:$0x3]
      %v258 = vld [vmem:[%s210 + $0xe] sm:$0x3]
      %v267 = vlaneseq
      %v268 = vshrl.u32 %v267, 7
      %v269 = vsub.s32 0, %v268
      %v270 = vrot.slane %v251, %v269
      %v271 = vlaneseq
      %v272 = vshrl.u32 %v271, 7
      %v273 = vsub.s32 1, %v272
      %v274 = vrot.slane %v251, %v273
      %v275 = vlaneseq
      %v276 = vshrl.u32 %v275, 7
      %v277 = vsub.s32 0, %v276
      %v278 = vrot.slane %v252, %v277
      %v279 = vlaneseq
      %v280 = vshrl.u32 %v279, 7
      %v281 = vsub.s32 1, %v280
      %v282 = vrot.slane %v252, %v281
      %v283 = vlaneseq
      %v284 = vshrl.u32 %v283, 7
      %v285 = vsub.s32 0, %v284
      %v286 = vrot.slane %v253, %v285
      %v287 = vlaneseq
      %v288 = vshrl.u32 %v287, 7
      %v289 = vsub.s32 1, %v288
      %v290 = vrot.slane %v253, %v289
      %v291 = vlaneseq
      %v292 = vshrl.u32 %v291, 7
      %v293 = vsub.s32 0, %v292
      %v294 = vrot.slane %v254, %v293
      %v295 = vlaneseq
      %v296 = vshrl.u32 %v295, 7
      %v297 = vsub.s32 1, %v296
      %v298 = vrot.slane %v254, %v297
      %v299 = vlaneseq
      %v300 = vshrl.u32 %v299, 7
      %v301 = vsub.s32 0, %v300
      %v302 = vrot.slane %v255, %v301
      %v303 = vlaneseq
      %v304 = vshrl.u32 %v303, 7
      %v305 = vsub.s32 1, %v304
      %v306 = vrot.slane %v255, %v305
      %v307 = vlaneseq
      %v308 = vshrl.u32 %v307, 7
      %v309 = vsub.s32 0, %v308
      %v310 = vrot.slane %v256, %v309
      %v311 = vlaneseq
      %v312 = vshrl.u32 %v311, 7
      %v313 = vsub.s32 1, %v312
      %v314 = vrot.slane %v256, %v313
      %v315 = vlaneseq
      %v316 = vshrl.u32 %v315, 7
      %v317 = vsub.s32 0, %v316
      %v318 = vrot.slane %v257, %v317
      %v319 = vlaneseq
      %v320 = vshrl.u32 %v319, 7
      %v321 = vsub.s32 1, %v320
      %v322 = vrot.slane %v257, %v321
      %v323 = vlaneseq
      %v324 = vshrl.u32 %v323, 7
      %v325 = vsub.s32 0, %v324
      %v326 = vrot.slane %v258, %v325
      %v327 = vlaneseq
      %v328 = vshrl.u32 %v327, 7
      %v329 = vsub.s32 1, %v328
      %v330 = vrot.slane %v258, %v329
      %v350 = vunpack.c.l.b16 %v227
      %v351 = vunpack.c.h.b16 %v227
      %v352 = vunpack.c.l.b16 %v228
      %v353 = vunpack.c.h.b16 %v228
      %v354 = vunpack.c.l.b16 %v229
      %v355 = vunpack.c.h.b16 %v229
      %v356 = vpack.c.b16 %v352, %v350
      %v357 = vpack.c.b16 %v353, %v351
      %v358 = vpack.c.b16 %v354, %v354
      %v359 = vpack.c.b16 %v355, %v355
      %vm362 = vcmask 195584
      %v364 = vsel %vm362, %v219, 0
      %vm366 = vcmask 1043456
      %v368 = vsel %vm366, %v358, 0
      %v371 = vsel %vm366, %v359, 0
      %373 = vmatprep.subr.bf16.mxu0 %v357
      %374 = vmatpush1.bf16.msra.mxu0 %v356
      %375 = vmatprep.subr.bf16.mxu0 %v371
      %376 = vmatpush1.bf16.msra.mxu0 %v368
      %377 = vmatprep.subr.bf16.mxu0 0
      %378 = vmatpush1.bf16.msra.mxu0 0
      %379 = vmatprep.subr.bf16.mxu0 0
      %380 = vmatpush1.bf16.msra.mxu0 0
      %381 = vmatprep.subr.bf16.mxu0 0
      %382 = vmatpush1.bf16.msra.mxu0 0
      %383 = vmatprep.subr.bf16.mxu0 0
      %384 = vmatpush1.bf16.msra.mxu0 0
      %385 = vmatprep.subr.bf16.mxu0 0
      %386 = vmatpush1.bf16.msra.mxu0 0
      %387 = vmatprep.subr.bf16.mxu0 0
      %388 = vmatpush1.bf16.msra.mxu0 0
      %389 = vmatprep.subr.bf16.mxu0 0
      %390 = vmatpush1.bf16.msra.mxu0 0
      %391 = vmatprep.subr.bf16.mxu0 0
      %392 = vmatpush1.bf16.msra.mxu0 0
      %393 = vmatprep.subr.bf16.mxu0 0
      %394 = vmatpush1.bf16.msra.mxu0 0
      %395 = vmatprep.subr.bf16.mxu0 0
      %396 = vmatpush1.bf16.msra.mxu0 0
      %397 = vmatprep.subr.bf16.mxu0 0
      %398 = vmatpush1.bf16.msra.mxu0 0
      %399 = vmatprep.subr.bf16.mxu0 0
      %400 = vmatpush1.bf16.msra.mxu0 0
      %401 = vmatprep.subr.bf16.mxu0 0
      %402 = vmatpush1.bf16.msra.mxu0 0
      %403 = vmatprep.subr.bf16.mxu0 0
      %404 = vmatpush1.bf16.msra.mxu0 0
      %405 = vmatprep.mubr.bf16.mxu0 0
      %406 = vmatmul.mubr.bf16.gmra.mrb[0].mxu0 %v364
      %v407 = vpop.f32.mrb[0].mxu0
      %v408 = vadd.f32 %v270, %v407
      %v409 = vpop.f32.mrb[0].mxu0
      %v410 = vadd.f32 %v274, %v409
      %v411 = vpop.f32.mrb[0].mxu0
      %v412 = vpop.f32.mrb[0].mxu0
      %413 = vdwg.mxu0
      %v417 = vunpack.c.l.b16 %v230
      %v418 = vunpack.c.h.b16 %v230
      %v419 = vunpack.c.l.b16 %v231
      %v420 = vunpack.c.h.b16 %v231
      %v421 = vunpack.c.l.b16 %v232
      %v422 = vunpack.c.h.b16 %v232
      %v423 = vpack.c.b16 %v419, %v417
      %v424 = vpack.c.b16 %v420, %v418
      %v425 = vpack.c.b16 %v421, %v421
      %v426 = vpack.c.b16 %v422, %v422
      %v430 = vsel %vm362, %v220, 0
      %v433 = vsel %vm366, %v425, 0
      %v436 = vsel %vm366, %v426, 0
      %438 = vmatprep.subr.bf16.mxu0 %v424
      %439 = vmatpush1.bf16.msra.mxu0 %v423
      %440 = vmatprep.subr.bf16.mxu0 %v436
      %441 = vmatpush1.bf16.msra.mxu0 %v433
      %442 = vmatprep.subr.bf16.mxu0 0
      %443 = vmatpush1.bf16.msra.mxu0 0
      %444 = vmatprep.subr.bf16.mxu0 0
      %445 = vmatpush1.bf16.msra.mxu0 0
      %446 = vmatprep.subr.bf16.mxu0 0
      %447 = vmatpush1.bf16.msra.mxu0 0
      %448 = vmatprep.subr.bf16.mxu0 0
      %449 = vmatpush1.bf16.msra.mxu0 0
      %450 = vmatprep.subr.bf16.mxu0 0
      %451 = vmatpush1.bf16.msra.mxu0 0
      %452 = vmatprep.subr.bf16.mxu0 0
      %453 = vmatpush1.bf16.msra.mxu0 0
      %454 = vmatprep.subr.bf16.mxu0 0
      %455 = vmatpush1.bf16.msra.mxu0 0
      %456 = vmatprep.subr.bf16.mxu0 0
      %457 = vmatpush1.bf16.msra.mxu0 0
      %458 = vmatprep.subr.bf16.mxu0 0
      %459 = vmatpush1.bf16.msra.mxu0 0
      %460 = vmatprep.subr.bf16.mxu0 0
      %461 = vmatpush1.bf16.msra.mxu0 0
      %462 = vmatprep.subr.bf16.mxu0 0
      %463 = vmatpush1.bf16.msra.mxu0 0
      %464 = vmatprep.subr.bf16.mxu0 0
      %465 = vmatpush1.bf16.msra.mxu0 0
      %466 = vmatprep.subr.bf16.mxu0 0
      %467 = vmatpush1.bf16.msra.mxu0 0
      %468 = vmatprep.subr.bf16.mxu0 0
      %469 = vmatpush1.bf16.msra.mxu0 0
      %470 = vmatprep.mubr.bf16.mxu0 0
      %471 = vmatmul.mubr.bf16.gmra.mrb[0].mxu0 %v430
      %v472 = vpop.f32.mrb[0].mxu0
      %v473 = vadd.f32 %v278, %v472
      %v474 = vpop.f32.mrb[0].mxu0
      %v475 = vadd.f32 %v282, %v474
      %v476 = vpop.f32.mrb[0].mxu0
      %v477 = vpop.f32.mrb[0].mxu0
      %478 = vdwg.mxu0
      %v482 = vunpack.c.l.b16 %v233
      %v483 = vunpack.c.h.b16 %v233
      %v484 = vunpack.c.l.b16 %v234
      %v485 = vunpack.c.h.b16 %v234
      %v486 = vunpack.c.l.b16 %v235
      %v487 = vunpack.c.h.b16 %v235
      %v488 = vpack.c.b16 %v484, %v482
      %v489 = vpack.c.b16 %v485, %v483
      %v490 = vpack.c.b16 %v486, %v486
      %v491 = vpack.c.b16 %v487, %v487
      %v495 = vsel %vm362, %v221, 0
      %v498 = vsel %vm366, %v490, 0
      %v501 = vsel %vm366, %v491, 0
      %503 = vmatprep.subr.bf16.mxu0 %v489
      %504 = vmatpush1.bf16.msra.mxu0 %v488
      %505 = vmatprep.subr.bf16.mxu0 %v501
      %506 = vmatpush1.bf16.msra.mxu0 %v498
      %507 = vmatprep.subr.bf16.mxu0 0
      %508 = vmatpush1.bf16.msra.mxu0 0
      %509 = vmatprep.subr.bf16.mxu0 0
      %510 = vmatpush1.bf16.msra.mxu0 0
      %511 = vmatprep.subr.bf16.mxu0 0
      %512 = vmatpush1.bf16.msra.mxu0 0
      %513 = vmatprep.subr.bf16.mxu0 0
      %514 = vmatpush1.bf16.msra.mxu0 0
      %515 = vmatprep.subr.bf16.mxu0 0
      %516 = vmatpush1.bf16.msra.mxu0 0
      %517 = vmatprep.subr.bf16.mxu0 0
      %518 = vmatpush1.bf16.msra.mxu0 0
      %519 = vmatprep.subr.bf16.mxu0 0
      %520 = vmatpush1.bf16.msra.mxu0 0
      %521 = vmatprep.subr.bf16.mxu0 0
      %522 = vmatpush1.bf16.msra.mxu0 0
      %523 = vmatprep.subr.bf16.mxu0 0
      %524 = vmatpush1.bf16.msra.mxu0 0
      %525 = vmatprep.subr.bf16.mxu0 0
      %526 = vmatpush1.bf16.msra.mxu0 0
      %527 = vmatprep.subr.bf16.mxu0 0
      %528 = vmatpush1.bf16.msra.mxu0 0
      %529 = vmatprep.subr.bf16.mxu0 0
      %530 = vmatpush1.bf16.msra.mxu0 0
      %531 = vmatprep.subr.bf16.mxu0 0
      %532 = vmatpush1.bf16.msra.mxu0 0
      %533 = vmatprep.subr.bf16.mxu0 0
      %534 = vmatpush1.bf16.msra.mxu0 0
      %535 = vmatprep.mubr.bf16.mxu0 0
      %536 = vmatmul.mubr.bf16.gmra.mrb[0].mxu0 %v495
      %v537 = vpop.f32.mrb[0].mxu0
      %v538 = vadd.f32 %v286, %v537
      %v539 = vpop.f32.mrb[0].mxu0
      %v540 = vadd.f32 %v290, %v539
      %v541 = vpop.f32.mrb[0].mxu0
      %v542 = vpop.f32.mrb[0].mxu0
      %543 = vdwg.mxu0
      %v547 = vunpack.c.l.b16 %v236
      %v548 = vunpack.c.h.b16 %v236
      %v549 = vunpack.c.l.b16 %v237
      %v550 = vunpack.c.h.b16 %v237
      %v551 = vunpack.c.l.b16 %v238
      %v552 = vunpack.c.h.b16 %v238
      %v553 = vpack.c.b16 %v549, %v547
      %v554 = vpack.c.b16 %v550, %v548
      %v555 = vpack.c.b16 %v551, %v551
      %v556 = vpack.c.b16 %v552, %v552
      %v560 = vsel %vm362, %v222, 0
      %v563 = vsel %vm366, %v555, 0
      %v566 = vsel %vm366, %v556, 0
      %568 = vmatprep.subr.bf16.mxu0 %v554
      %569 = vmatpush1.bf16.msra.mxu0 %v553
      %570 = vmatprep.subr.bf16.mxu0 %v566
      %571 = vmatpush1.bf16.msra.mxu0 %v563
      %572 = vmatprep.subr.bf16.mxu0 0
      %573 = vmatpush1.bf16.msra.mxu0 0
      %574 = vmatprep.subr.bf16.mxu0 0
      %575 = vmatpush1.bf16.msra.mxu0 0
      %576 = vmatprep.subr.bf16.mxu0 0
      %577 = vmatpush1.bf16.msra.mxu0 0
      %578 = vmatprep.subr.bf16.mxu0 0
      %579 = vmatpush1.bf16.msra.mxu0 0
      %580 = vmatprep.subr.bf16.mxu0 0
      %581 = vmatpush1.bf16.msra.mxu0 0
      %582 = vmatprep.subr.bf16.mxu0 0
      %583 = vmatpush1.bf16.msra.mxu0 0
      %584 = vmatprep.subr.bf16.mxu0 0
      %585 = vmatpush1.bf16.msra.mxu0 0
      %586 = vmatprep.subr.bf16.mxu0 0
      %587 = vmatpush1.bf16.msra.mxu0 0
      %588 = vmatprep.subr.bf16.mxu0 0
      %589 = vmatpush1.bf16.msra.mxu0 0
      %590 = vmatprep.subr.bf16.mxu0 0
      %591 = vmatpush1.bf16.msra.mxu0 0
      %592 = vmatprep.subr.bf16.mxu0 0
      %593 = vmatpush1.bf16.msra.mxu0 0
      %594 = vmatprep.subr.bf16.mxu0 0
      %595 = vmatpush1.bf16.msra.mxu0 0
      %596 = vmatprep.subr.bf16.mxu0 0
      %597 = vmatpush1.bf16.msra.mxu0 0
      %598 = vmatprep.subr.bf16.mxu0 0
      %599 = vmatpush1.bf16.msra.mxu0 0
      %600 = vmatprep.mubr.bf16.mxu0 0
      %601 = vmatmul.mubr.bf16.gmra.mrb[0].mxu0 %v560
      %v602 = vpop.f32.mrb[0].mxu0
      %v603 = vadd.f32 %v294, %v602
      %v604 = vpop.f32.mrb[0].mxu0
      %v605 = vadd.f32 %v298, %v604
      %v606 = vpop.f32.mrb[0].mxu0
      %v607 = vpop.f32.mrb[0].mxu0
      %608 = vdwg.mxu0
      %v612 = vunpack.c.l.b16 %v239
      %v613 = vunpack.c.h.b16 %v239
      %v614 = vunpack.c.l.b16 %v240
      %v615 = vunpack.c.h.b16 %v240
      %v616 = vunpack.c.l.b16 %v241
      %v617 = vunpack.c.h.b16 %v241
      %v618 = vpack.c.b16 %v614, %v612
      %v619 = vpack.c.b16 %v615, %v613
      %v620 = vpack.c.b16 %v616, %v616
      %v621 = vpack.c.b16 %v617, %v617
      %v625 = vsel %vm362, %v223, 0
      %v628 = vsel %vm366, %v620, 0
      %v631 = vsel %vm366, %v621, 0
      %633 = vmatprep.subr.bf16.mxu0 %v619
      %634 = vmatpush1.bf16.msra.mxu0 %v618
      %635 = vmatprep.subr.bf16.mxu0 %v631
      %636 = vmatpush1.bf16.msra.mxu0 %v628
      %637 = vmatprep.subr.bf16.mxu0 0
      %638 = vmatpush1.bf16.msra.mxu0 0
      %639 = vmatprep.subr.bf16.mxu0 0
      %640 = vmatpush1.bf16.msra.mxu0 0
      %641 = vmatprep.subr.bf16.mxu0 0
      %642 = vmatpush1.bf16.msra.mxu0 0
      %643 = vmatprep.subr.bf16.mxu0 0
      %644 = vmatpush1.bf16.msra.mxu0 0
      %645 = vmatprep.subr.bf16.mxu0 0
      %646 = vmatpush1.bf16.msra.mxu0 0
      %647 = vmatprep.subr.bf16.mxu0 0
      %648 = vmatpush1.bf16.msra.mxu0 0
      %649 = vmatprep.subr.bf16.mxu0 0
      %650 = vmatpush1.bf16.msra.mxu0 0
      %651 = vmatprep.subr.bf16.mxu0 0
      %652 = vmatpush1.bf16.msra.mxu0 0
      %653 = vmatprep.subr.bf16.mxu0 0
      %654 = vmatpush1.bf16.msra.mxu0 0
      %655 = vmatprep.subr.bf16.mxu0 0
      %656 = vmatpush1.bf16.msra.mxu0 0
      %657 = vmatprep.subr.bf16.mxu0 0
      %658 = vmatpush1.bf16.msra.mxu0 0
      %659 = vmatprep.subr.bf16.mxu0 0
      %660 = vmatpush1.bf16.msra.mxu0 0
      %661 = vmatprep.subr.bf16.mxu0 0
      %662 = vmatpush1.bf16.msra.mxu0 0
      %663 = vmatprep.subr.bf16.mxu0 0
      %664 = vmatpush1.bf16.msra.mxu0 0
      %665 = vmatprep.mubr.bf16.mxu0 0
      %666 = vmatmul.mubr.bf16.gmra.mrb[0].mxu0 %v625
      %v667 = vpop.f32.mrb[0].mxu0
      %v668 = vadd.f32 %v302, %v667
      %v669 = vpop.f32.mrb[0].mxu0
      %v670 = vadd.f32 %v306, %v669
      %v671 = vpop.f32.mrb[0].mxu0
      %v672 = vpop.f32.mrb[0].mxu0
      %673 = vdwg.mxu0
      %v677 = vunpack.c.l.b16 %v242
      %v678 = vunpack.c.h.b16 %v242
      %v679 = vunpack.c.l.b16 %v243
      %v680 = vunpack.c.h.b16 %v243
      %v681 = vunpack.c.l.b16 %v244
      %v682 = vunpack.c.h.b16 %v244
      %v683 = vpack.c.b16 %v679, %v677
      %v684 = vpack.c.b16 %v680, %v678
      %v685 = vpack.c.b16 %v681, %v681
      %v686 = vpack.c.b16 %v682, %v682
      %v690 = vsel %vm362, %v224, 0
      %v693 = vsel %vm366, %v685, 0
      %v696 = vsel %vm366, %v686, 0
      %698 = vmatprep.subr.bf16.mxu0 %v684
      %699 = vmatpush1.bf16.msra.mxu0 %v683
      %700 = vmatprep.subr.bf16.mxu0 %v696
      %701 = vmatpush1.bf16.msra.mxu0 %v693
      %702 = vmatprep.subr.bf16.mxu0 0
      %703 = vmatpush1.bf16.msra.mxu0 0
      %704 = vmatprep.subr.bf16.mxu0 0
      %705 = vmatpush1.bf16.msra.mxu0 0
      %706 = vmatprep.subr.bf16.mxu0 0
      %707 = vmatpush1.bf16.msra.mxu0 0
      %708 = vmatprep.subr.bf16.mxu0 0
      %709 = vmatpush1.bf16.msra.mxu0 0
      %710 = vmatprep.subr.bf16.mxu0 0
      %711 = vmatpush1.bf16.msra.mxu0 0
      %712 = vmatprep.subr.bf16.mxu0 0
      %713 = vmatpush1.bf16.msra.mxu0 0
      %714 = vmatprep.subr.bf16.mxu0 0
      %715 = vmatpush1.bf16.msra.mxu0 0
      %716 = vmatprep.subr.bf16.mxu0 0
      %717 = vmatpush1.bf16.msra.mxu0 0
      %718 = vmatprep.subr.bf16.mxu0 0
      %719 = vmatpush1.bf16.msra.mxu0 0
      %720 = vmatprep.subr.bf16.mxu0 0
      %721 = vmatpush1.bf16.msra.mxu0 0
      %722 = vmatprep.subr.bf16.mxu0 0
      %723 = vmatpush1.bf16.msra.mxu0 0
      %724 = vmatprep.subr.bf16.mxu0 0
      %725 = vmatpush1.bf16.msra.mxu0 0
      %726 = vmatprep.subr.bf16.mxu0 0
      %727 = vmatpush1.bf16.msra.mxu0 0
      %728 = vmatprep.subr.bf16.mxu0 0
      %729 = vmatpush1.bf16.msra.mxu0 0
      %730 = vmatprep.mubr.bf16.mxu0 0
      %731 = vmatmul.mubr.bf16.gmra.mrb[0].mxu0 %v690
      %v732 = vpop.f32.mrb[0].mxu0
      %v733 = vadd.f32 %v310, %v732
      %v734 = vpop.f32.mrb[0].mxu0
      %v735 = vadd.f32 %v314, %v734
      %v736 = vpop.f32.mrb[0].mxu0
      %v737 = vpop.f32.mrb[0].mxu0
      %738 = vdwg.mxu0
      %v742 = vunpack.c.l.b16 %v245
      %v743 = vunpack.c.h.b16 %v245
      %v744 = vunpack.c.l.b16 %v246
      %v745 = vunpack.c.h.b16 %v246
      %v746 = vunpack.c.l.b16 %v247
      %v747 = vunpack.c.h.b16 %v247
      %v748 = vpack.c.b16 %v744, %v742
      %v749 = vpack.c.b16 %v745, %v743
      %v750 = vpack.c.b16 %v746, %v746
      %v751 = vpack.c.b16 %v747, %v747
      %v755 = vsel %vm362, %v225, 0
      %v758 = vsel %vm366, %v750, 0
      %v761 = vsel %vm366, %v751, 0
      %763 = vmatprep.subr.bf16.mxu0 %v749
      %764 = vmatpush1.bf16.msra.mxu0 %v748
      %765 = vmatprep.subr.bf16.mxu0 %v761
      %766 = vmatpush1.bf16.msra.mxu0 %v758
      %767 = vmatprep.subr.bf16.mxu0 0
      %768 = vmatpush1.bf16.msra.mxu0 0
      %769 = vmatprep.subr.bf16.mxu0 0
      %770 = vmatpush1.bf16.msra.mxu0 0
      %771 = vmatprep.subr.bf16.mxu0 0
      %772 = vmatpush1.bf16.msra.mxu0 0
      %773 = vmatprep.subr.bf16.mxu0 0
      %774 = vmatpush1.bf16.msra.mxu0 0
      %775 = vmatprep.subr.bf16.mxu0 0
      %776 = vmatpush1.bf16.msra.mxu0 0
      %777 = vmatprep.subr.bf16.mxu0 0
      %778 = vmatpush1.bf16.msra.mxu0 0
      %779 = vmatprep.subr.bf16.mxu0 0
      %780 = vmatpush1.bf16.msra.mxu0 0
      %781 = vmatprep.subr.bf16.mxu0 0
      %782 = vmatpush1.bf16.msra.mxu0 0
      %783 = vmatprep.subr.bf16.mxu0 0
      %784 = vmatpush1.bf16.msra.mxu0 0
      %785 = vmatprep.subr.bf16.mxu0 0
      %786 = vmatpush1.bf16.msra.mxu0 0
      %787 = vmatprep.subr.bf16.mxu0 0
      %788 = vmatpush1.bf16.msra.mxu0 0
      %789 = vmatprep.subr.bf16.mxu0 0
      %790 = vmatpush1.bf16.msra.mxu0 0
      %791 = vmatprep.subr.bf16.mxu0 0
      %792 = vmatpush1.bf16.msra.mxu0 0
      %793 = vmatprep.subr.bf16.mxu0 0
      %794 = vmatpush1.bf16.msra.mxu0 0
      %795 = vmatprep.mubr.bf16.mxu0 0
      %796 = vmatmul.mubr.bf16.gmra.mrb[0].mxu0 %v755
      %v797 = vpop.f32.mrb[0].mxu0
      %v798 = vadd.f32 %v318, %v797
      %v799 = vpop.f32.mrb[0].mxu0
      %v800 = vadd.f32 %v322, %v799
      %v801 = vpop.f32.mrb[0].mxu0
      %v802 = vpop.f32.mrb[0].mxu0
      %803 = vdwg.mxu0
      %v807 = vunpack.c.l.b16 %v248
      %v808 = vunpack.c.h.b16 %v248
      %v809 = vunpack.c.l.b16 %v249
      %v810 = vunpack.c.h.b16 %v249
      %v811 = vunpack.c.l.b16 %v250
      %v812 = vunpack.c.h.b16 %v250
      %v813 = vpack.c.b16 %v809, %v807
      %v814 = vpack.c.b16 %v810, %v808
      %v815 = vpack.c.b16 %v811, %v811
      %v816 = vpack.c.b16 %v812, %v812
      %v820 = vsel %vm362, %v226, 0
      %v823 = vsel %vm366, %v815, 0
      %v826 = vsel %vm366, %v816, 0
      %828 = vmatprep.subr.bf16.mxu0 %v814
      %829 = vmatpush1.bf16.msra.mxu0 %v813
      %830 = vmatprep.subr.bf16.mxu0 %v826
      %831 = vmatpush1.bf16.msra.mxu0 %v823
      %832 = vmatprep.subr.bf16.mxu0 0
      %833 = vmatpush1.bf16.msra.mxu0 0
      %834 = vmatprep.subr.bf16.mxu0 0
      %835 = vmatpush1.bf16.msra.mxu0 0
      %836 = vmatprep.subr.bf16.mxu0 0
      %837 = vmatpush1.bf16.msra.mxu0 0
      %838 = vmatprep.subr.bf16.mxu0 0
      %839 = vmatpush1.bf16.msra.mxu0 0
      %840 = vmatprep.subr.bf16.mxu0 0
      %841 = vmatpush1.bf16.msra.mxu0 0
      %842 = vmatprep.subr.bf16.mxu0 0
      %843 = vmatpush1.bf16.msra.mxu0 0
      %844 = vmatprep.subr.bf16.mxu0 0
      %845 = vmatpush1.bf16.msra.mxu0 0
      %846 = vmatprep.subr.bf16.mxu0 0
      %847 = vmatpush1.bf16.msra.mxu0 0
      %848 = vmatprep.subr.bf16.mxu0 0
      %849 = vmatpush1.bf16.msra.mxu0 0
      %850 = vmatprep.subr.bf16.mxu0 0
      %851 = vmatpush1.bf16.msra.mxu0 0
      %852 = vmatprep.subr.bf16.mxu0 0
      %853 = vmatpush1.bf16.msra.mxu0 0
      %854 = vmatprep.subr.bf16.mxu0 0
      %855 = vmatpush1.bf16.msra.mxu0 0
      %856 = vmatprep.subr.bf16.mxu0 0
      %857 = vmatpush1.bf16.msra.mxu0 0
      %858 = vmatprep.subr.bf16.mxu0 0
      %859 = vmatpush1.bf16.msra.mxu0 0
      %860 = vmatprep.mubr.bf16.mxu0 0
      %861 = vmatmul.mubr.bf16.gmra.mrb[0].mxu0 %v820
      %v862 = vpop.f32.mrb[0].mxu0
      %v863 = vadd.f32 %v326, %v862
      %v864 = vpop.f32.mrb[0].mxu0
      %v865 = vadd.f32 %v330, %v864
      %v866 = vpop.f32.mrb[0].mxu0
      %v867 = vpop.f32.mrb[0].mxu0
      %868 = vdwg.mxu0
      %v869 = vxor.u32 %v408, 2147483648
      %v870 = vxor.u32 %v473, 2147483648
      %v871 = vxor.u32 %v538, 2147483648
      %v872 = vxor.u32 %v603, 2147483648
      %v873 = vxor.u32 %v668, 2147483648
      %v874 = vxor.u32 %v733, 2147483648
      %v875 = vxor.u32 %v798, 2147483648
      %v876 = vxor.u32 %v863, 2147483648
      %v877 = vmul.f32 %v869, 1.442695
      %v878 = vpow.pop %v877
      %v879 = vmul.f32 %v870, 1.442695
      %v880 = vpow.pop %v879
      %v881 = vmul.f32 %v871, 1.442695
      %v882 = vpow.pop %v881
      %v883 = vmul.f32 %v872, 1.442695
      %v884 = vpow.pop %v883
      %v885 = vmul.f32 %v873, 1.442695
      %v886 = vpow.pop %v885
      %v887 = vmul.f32 %v874, 1.442695
      %v888 = vpow.pop %v887
      %v889 = vmul.f32 %v875, 1.442695
      %v890 = vpow.pop %v889
      %v891 = vmul.f32 %v876, 1.442695
      %v892 = vpow.pop %v891
      %v893 = vadd.f32 %v878, 1.0
      %v894 = vadd.f32 %v880, 1.0
      %v895 = vadd.f32 %v882, 1.0
      %v896 = vadd.f32 %v884, 1.0
      %v897 = vadd.f32 %v886, 1.0
      %v898 = vadd.f32 %v888, 1.0
      %v899 = vadd.f32 %v890, 1.0
      %v900 = vadd.f32 %v892, 1.0
      %v901 = vrcp.pop %v893
      %v902 = vmul.f32 1.0, %v901
      %v903 = vrcp.pop %v894
      %v904 = vmul.f32 1.0, %v903
      %v905 = vrcp.pop %v895
      %v906 = vmul.f32 1.0, %v905
      %v907 = vrcp.pop %v896
      %v908 = vmul.f32 1.0, %v907
      %v909 = vrcp.pop %v897
      %v910 = vmul.f32 1.0, %v909
      %v911 = vrcp.pop %v898
      %v912 = vmul.f32 1.0, %v911
      %v913 = vrcp.pop %v899
      %v914 = vmul.f32 1.0, %v913
      %v915 = vrcp.pop %v900
      %v916 = vmul.f32 1.0, %v915
      %v917 = vtanh.pop %v410
      %v918 = vtanh.pop %v475
      %v919 = vtanh.pop %v540
      %v920 = vtanh.pop %v605
      %v921 = vtanh.pop %v670
      %v922 = vtanh.pop %v735
      %v923 = vtanh.pop %v800
      %v924 = vtanh.pop %v865
      %v925 = vmul.f32 %v902, %v917
      %v926 = vmul.f32 %v904, %v918
      %v927 = vmul.f32 %v906, %v919
      %v928 = vmul.f32 %v908, %v920
      %v929 = vmul.f32 %v910, %v921
      %v930 = vmul.f32 %v912, %v922
      %v931 = vmul.f32 %v914, %v923
      %v932 = vmul.f32 %v916, %v924
      %933 = vst [vmem:[%s216] sm:$0x3] %v925
      %934 = vst [vmem:[%s216 + $0x2] sm:$0x3] %v926
      %935 = vst [vmem:[%s216 + $0x4] sm:$0x3] %v927
      %936 = vst [vmem:[%s216 + $0x6] sm:$0x3] %v928
      %937 = vst [vmem:[%s216 + $0x8] sm:$0x3] %v929
      %938 = vst [vmem:[%s216 + $0xa] sm:$0x3] %v930
      %939 = vst [vmem:[%s216 + $0xc] sm:$0x3] %v931
      %940 = vst [vmem:[%s216 + $0xe] sm:$0x3] %v932
      %s941 = smul.u32 8, %s14
      %p942 = scmp.lt.s32.totalorder %s941, 15
      %s943 = scalar_select %p942, %s941, 15
      %s944 = smul.addr %s943, 2
      %s945 = scalar_lea.vmem %s3, %s944
      // Predicated region
      $region33: #{_lambda_.80} parent=31 // pred_check
        %p946 = pneg %p110
      $region34: #{_lambda_.80} parent=31 // pred_check_branch
        %948 = sbr.rel (%p946) target = $region36
      $region35: #{_lambda_.80} parent=31 // pred_region
        %s949 = smul.u32 8, %s14
      $region36: #{_lambda_.80} parent=31 // pred_fallthru
        _
    $region32: #{_lambda_.80} parent=5 // pred_fallthru
      _
    %p950 = scmp.le.s32.totalorder 2, %s9
    // Predicated region
    $region37: #{_lambda_.80} parent=5 // pred_check
      %p951 = pneg %p950
    $region38: #{_lambda_.80} parent=5 // pred_check_branch
      %953 = sbr.rel (%p951) target = $region40
    $region39: #{_lambda_.80} parent=5 // pred_region
      %s954 = ssub.s32 %s9, 2
      // Predicated region
      $region41: #{_lambda_.80} parent=39 // pred_check
        %p955 = pneg %p116
      $region42: #{_lambda_.80} parent=39 // pred_check_branch
        %957 = sbr.rel (%p955) target = $region44
      $region43: #{_lambda_.80} parent=39 // pred_region
        %s958 = smul.u32 8, %s15
        %p959 = scmp.lt.s32.totalorder %s958, 15
        %s960 = scalar_select %p959, %s958, 15
        %s961 = smul.addr %s960, 2
        %s962 = scalar_lea.vmem %s3, %s961
      $region44: #{_lambda_.80} parent=39 // pred_fallthru
        _
    $region40: #{_lambda_.80} parent=5 // pred_fallthru
      _
  $region6: #{_lambda_.80} parent=0 // loop_footer
    %s13 = sadd.s32 1, %s9
  $region7: #{_lambda_.80} parent=0 // loop_footer_branch
    %8 = sbr.rel target = $region3
  $region8: #{_lambda_.80} parent=0 // loop_exit
    _

// kernel: _lambda_.92
$region0: #{_lambda_.92}
  #allocation0 [shape = 'u32[]', space=smem, size = 0x4, offset = 0x4, fixed_abs, tag = 'smem constant byte address 0x4 - core index']
  #allocation1 [shape = 'u32[144,128]{1,0:T(1,128)}', space=vmem, size = 0x12000, scoped, tag = 'internal scratch']
  #allocation2 [shape = 'f32[64,128]{1,0:T(8,128)}', space=vmem, size = 0x8000, scoped, tag = 'scratch operand']
  %s0 = inlined_call_operand.vmem [shape: bf16[64,32], index: 0, kind: input, shape index: {}]
  %s1 = inlined_call_operand.vmem [shape: bf16[32,128], index: 1, kind: input, shape index: {}]
  %s2 = inlined_call_operand.vmem [shape: f32[1,128], index: 2, kind: input, shape index: {}]
  %s3 = inlined_call_operand.vmem [shape: f32[64,128], index: 3, kind: output, shape index: {}]
  %s4 = sld [smem:[#allocation0]]
  $region30: #{_lambda_.92} parent=0
    _
  %s6 = ssub.s32 1, %s4
  %s7 = scalar_select 0, %s6, %s4
  // Predicated region
  $region2: #{_lambda_.92} parent=0 // pred_check
    _
  $region3: #{_lambda_.92} parent=0 // pred_check_branch
    %9 = sbr.rel (0) target = $region5
  $region4: #{_lambda_.92} parent=0 // pred_region
    _
  $region5: #{_lambda_.92} parent=0 // pred_fallthru
    _
  // Predicated region
  $region6: #{_lambda_.92} parent=0 // pred_check
    _
  $region7: #{_lambda_.92} parent=0 // pred_check_branch
    %11 = sbr.rel (0) target = $region9
  $region8: #{_lambda_.92} parent=0 // pred_region
    _
  $region9: #{_lambda_.92} parent=0 // pred_fallthru
    _
  // Predicated region
  $region10: #{_lambda_.92} parent=0 // pred_check
    _
  $region11: #{_lambda_.92} parent=0 // pred_check_branch
    %13 = sbr.rel (0) target = $region13
  $region12: #{_lambda_.92} parent=0 // pred_region
    _
  $region13: #{_lambda_.92} parent=0 // pred_fallthru
    _
  %p16 = scmp.eq.s32.totalorder 0, 0
  // Predicated region
  $region14: #{_lambda_.92} parent=0 // pred_check
    %p17 = pneg %p16
  $region15: #{_lambda_.92} parent=0 // pred_check_branch
    %19 = sbr.rel (%p17) target = $region17
  $region16: #{_lambda_.92} parent=0 // pred_region
    %20 = vst [vmem:[#allocation2] sm:$0xff] 0.0
    %21 = vst [vmem:[#allocation2 + $0x8] sm:$0xff] 0.0
    %22 = vst [vmem:[#allocation2 + $0x10] sm:$0xff] 0.0
    %23 = vst [vmem:[#allocation2 + $0x18] sm:$0xff] 0.0
    %24 = vst [vmem:[#allocation2 + $0x20] sm:$0xff] 0.0
    %25 = vst [vmem:[#allocation2 + $0x28] sm:$0xff] 0.0
    %26 = vst [vmem:[#allocation2 + $0x30] sm:$0xff] 0.0
    %27 = vst [vmem:[#allocation2 + $0x38] sm:$0xff] 0.0
  $region17: #{_lambda_.92} parent=0 // pred_fallthru
    _
  %v28 = vld [vmem:[%s0] sm:$0xf]
  %v29 = vld [vmem:[%s0 + $0x4] sm:$0xf]
  %v30 = vld [vmem:[%s0 + $0x8] sm:$0xf]
  %v31 = vld [vmem:[%s0 + $0xc] sm:$0xf]
  %v32 = vld [vmem:[%s0 + $0x10] sm:$0xf]
  %v33 = vld [vmem:[%s0 + $0x14] sm:$0xf]
  %v34 = vld [vmem:[%s0 + $0x18] sm:$0xf]
  %v35 = vld [vmem:[%s0 + $0x1c] sm:$0xf]
  %vm36 = vcmp.ge.bf16.partialorder %v28, 0
  %vm37 = vcmp.ge.bf16.partialorder %v29, 0
  %vm38 = vcmp.ge.bf16.partialorder %v30, 0
  %vm39 = vcmp.ge.bf16.partialorder %v31, 0
  %vm40 = vcmp.ge.bf16.partialorder %v32, 0
  %vm41 = vcmp.ge.bf16.partialorder %v33, 0
  %vm42 = vcmp.ge.bf16.partialorder %v34, 0
  %vm43 = vcmp.ge.bf16.partialorder %v35, 0
  %v44 = vmul.bf16 %v28, 1045249613
  %v45 = vmul.bf16 %v29, 1045249613
  %v46 = vmul.bf16 %v30, 1045249613
  %v47 = vmul.bf16 %v31, 1045249613
  %v48 = vmul.bf16 %v32, 1045249613
  %v49 = vmul.bf16 %v33, 1045249613
  %v50 = vmul.bf16 %v34, 1045249613
  %v51 = vmul.bf16 %v35, 1045249613
  %v52 = vsel %vm36, %v28, %v44
  %v53 = vsel %vm37, %v29, %v45
  %v54 = vsel %vm38, %v30, %v46
  %v55 = vsel %vm39, %v31, %v47
  %v56 = vsel %vm40, %v32, %v48
  %v57 = vsel %vm41, %v33, %v49
  %v58 = vsel %vm42, %v34, %v50
  %v59 = vsel %vm43, %v35, %v51
  %v60 = vld [vmem:[#allocation2] sm:$0xff]
  %v61 = vld [vmem:[#allocation2 + $0x8] sm:$0xff]
  %v62 = vld [vmem:[#allocation2 + $0x10] sm:$0xff]
  %v63 = vld [vmem:[#allocation2 + $0x18] sm:$0xff]
  %v64 = vld [vmem:[#allocation2 + $0x20] sm:$0xff]
  %v65 = vld [vmem:[#allocation2 + $0x28] sm:$0xff]
  %v66 = vld [vmem:[#allocation2 + $0x30] sm:$0xff]
  %v67 = vld [vmem:[#allocation2 + $0x38] sm:$0xff]
  %v68 = vld [vmem:[%s1] sm:$0xf]
  %v69 = vld [vmem:[%s1 + $0x4] sm:$0xf]
  %v70 = vld [vmem:[%s1 + $0x8] sm:$0xf]
  %v71 = vld [vmem:[%s1 + $0xc] sm:$0xf]
  %v80 = vunpack.c.l.b16 %v52
  %v81 = vunpack.c.l.b16 %v53
  %v82 = vunpack.c.l.b16 %v54
  %v83 = vunpack.c.l.b16 %v55
  %v84 = vunpack.c.l.b16 %v56
  %v85 = vunpack.c.l.b16 %v57
  %v86 = vunpack.c.l.b16 %v58
  %v87 = vunpack.c.l.b16 %v59
  %v88 = vpack.c.b16 %v81, %v80
  %v89 = vpack.c.b16 %v83, %v82
  %v90 = vpack.c.b16 %v85, %v84
  %v91 = vpack.c.b16 %v87, %v86
  %v96 = vunpack.c.l.b16 %v68
  %v97 = vunpack.c.l.b16 %v69
  %v98 = vunpack.c.l.b16 %v70
  %v99 = vunpack.c.l.b16 %v71
  %v100 = vpack.c.b16 %v97, %v96
  %v101 = vpack.c.b16 %v99, %v98
  %vm104 = vcmask 261120
  %v106 = vsel %vm104, %v88, 0
  %v109 = vsel %vm104, %v89, 0
  %v112 = vsel %vm104, %v90, 0
  %v115 = vsel %vm104, %v91, 0
  %117 = vmatprep.subr.bf16.mxu0 0
  %118 = vmatpush1.bf16.msra.mxu0 %v100
  %119 = vmatprep.subr.bf16.mxu0 0
  %120 = vmatpush1.bf16.msra.mxu0 %v101
  %121 = vmatprep.subr.bf16.mxu0 0
  %122 = vmatpush1.bf16.msra.mxu0 0
  %123 = vmatprep.subr.bf16.mxu0 0
  %124 = vmatpush1.bf16.msra.mxu0 0
  %125 = vmatprep.subr.bf16.mxu0 0
  %126 = vmatpush1.bf16.msra.mxu0 0
  %127 = vmatprep.subr.bf16.mxu0 0
  %128 = vmatpush1.bf16.msra.mxu0 0
  %129 = vmatprep.subr.bf16.mxu0 0
  %130 = vmatpush1.bf16.msra.mxu0 0
  %131 = vmatprep.subr.bf16.mxu0 0
  %132 = vmatpush1.bf16.msra.mxu0 0
  %133 = vmatprep.subr.bf16.mxu0 0
  %134 = vmatpush1.bf16.msra.mxu0 0
  %135 = vmatprep.subr.bf16.mxu0 0
  %136 = vmatpush1.bf16.msra.mxu0 0
  %137 = vmatprep.subr.bf16.mxu0 0
  %138 = vmatpush1.bf16.msra.mxu0 0
  %139 = vmatprep.subr.bf16.mxu0 0
  %140 = vmatpush1.bf16.msra.mxu0 0
  %141 = vmatprep.subr.bf16.mxu0 0
  %142 = vmatpush1.bf16.msra.mxu0 0
  %143 = vmatprep.subr.bf16.mxu0 0
  %144 = vmatpush1.bf16.msra.mxu0 0
  %145 = vmatprep.subr.bf16.mxu0 0
  %146 = vmatpush1.bf16.msra.mxu0 0
  %147 = vmatprep.subr.bf16.mxu0 0
  %148 = vmatpush1.bf16.msra.mxu0 0
  %149 = vmatprep.mubr.bf16.mxu0 0
  %150 = vmatmul.mubr.bf16.gmra.mrb[0].mxu0 %v106
  %v151 = vpop.f32.mrb[0].mxu0
  %v152 = vadd.f32 0.0, %v151
  %v153 = vpop.f32.mrb[0].mxu0
  %v154 = vpop.f32.mrb[0].mxu0
  %v155 = vadd.f32 0.0, %v154
  %v156 = vpop.f32.mrb[0].mxu0
  %157 = vmatprep.mubr.bf16.mxu0 0
  %158 = vmatmul.mubr.bf16.gmra.mrb[0].mxu0 %v109
  %v159 = vpop.f32.mrb[0].mxu0
  %v160 = vadd.f32 0.0, %v159
  %v161 = vpop.f32.mrb[0].mxu0
  %v162 = vpop.f32.mrb[0].mxu0
  %v163 = vadd.f32 0.0, %v162
  %v164 = vpop.f32.mrb[0].mxu0
  %165 = vmatprep.mubr.bf16.mxu0 0
  %166 = vmatmul.mubr.bf16.gmra.mrb[0].mxu0 %v112
  %v167 = vpop.f32.mrb[0].mxu0
  %v168 = vadd.f32 0.0, %v167
  %v169 = vpop.f32.mrb[0].mxu0
  %v170 = vpop.f32.mrb[0].mxu0
  %v171 = vadd.f32 0.0, %v170
  %v172 = vpop.f32.mrb[0].mxu0
  %173 = vmatprep.mubr.bf16.mxu0 0
  %174 = vmatmul.mubr.bf16.gmra.mrb[0].mxu0 %v115
  %v175 = vpop.f32.mrb[0].mxu0
  %v176 = vadd.f32 0.0, %v175
  %v177 = vpop.f32.mrb[0].mxu0
  %v178 = vpop.f32.mrb[0].mxu0
  %v179 = vadd.f32 0.0, %v178
  %v180 = vpop.f32.mrb[0].mxu0
  %181 = vdwg.mxu0
  %v182 = vadd.f32 %v60, %v152
  %v183 = vadd.f32 %v61, %v155
  %v184 = vadd.f32 %v62, %v160
  %v185 = vadd.f32 %v63, %v163
  %v186 = vadd.f32 %v64, %v168
  %v187 = vadd.f32 %v65, %v171
  %v188 = vadd.f32 %v66, %v176
  %v189 = vadd.f32 %v67, %v179
  %190 = vst [vmem:[#allocation2] sm:$0xff] %v182
  %191 = vst [vmem:[#allocation2 + $0x8] sm:$0xff] %v183
  %192 = vst [vmem:[#allocation2 + $0x10] sm:$0xff] %v184
  %193 = vst [vmem:[#allocation2 + $0x18] sm:$0xff] %v185
  %194 = vst [vmem:[#allocation2 + $0x20] sm:$0xff] %v186
  %195 = vst [vmem:[#allocation2 + $0x28] sm:$0xff] %v187
  %196 = vst [vmem:[#allocation2 + $0x30] sm:$0xff] %v188
  %197 = vst [vmem:[#allocation2 + $0x38] sm:$0xff] %v189
  // Predicated region
  $region18: #{_lambda_.92} parent=0 // pred_check
    %p198 = pneg %p16
  $region19: #{_lambda_.92} parent=0 // pred_check_branch
    %200 = sbr.rel (%p198) target = $region21
  $region20: #{_lambda_.92} parent=0 // pred_region
    %v201 = vld [vmem:[#allocation2] sm:$0xff]
    %v202 = vld [vmem:[#allocation2 + $0x8] sm:$0xff]
    %v203 = vld [vmem:[#allocation2 + $0x10] sm:$0xff]
    %v204 = vld [vmem:[#allocation2 + $0x18] sm:$0xff]
    %v205 = vld [vmem:[#allocation2 + $0x20] sm:$0xff]
    %v206 = vld [vmem:[#allocation2 + $0x28] sm:$0xff]
    %v207 = vld [vmem:[#allocation2 + $0x30] sm:$0xff]
    %v208 = vld [vmem:[#allocation2 + $0x38] sm:$0xff]
    %v209 = vld [vmem:[%s2] sm:$0x1]
    %v211 = vlaneseq
    %v212 = vshrl.u32 %v211, 7
    %v213 = vsub.s32 0, %v212
    %v214 = vrot.slane %v209, %v213
    %v216 = vadd.f32 %v201, %v214
    %v217 = vadd.f32 %v202, %v214
    %v218 = vadd.f32 %v203, %v214
    %v219 = vadd.f32 %v204, %v214
    %v220 = vadd.f32 %v205, %v214
    %v221 = vadd.f32 %v206, %v214
    %v222 = vadd.f32 %v207, %v214
    %v223 = vadd.f32 %v208, %v214
    %224 = vst [vmem:[%s3] sm:$0xff] %v216
    %225 = vst [vmem:[%s3 + $0x8] sm:$0xff] %v217
    %226 = vst [vmem:[%s3 + $0x10] sm:$0xff] %v218
    %227 = vst [vmem:[%s3 + $0x18] sm:$0xff] %v219
    %228 = vst [vmem:[%s3 + $0x20] sm:$0xff] %v220
    %229 = vst [vmem:[%s3 + $0x28] sm:$0xff] %v221
    %230 = vst [vmem:[%s3 + $0x30] sm:$0xff] %v222
    %231 = vst [vmem:[%s3 + $0x38] sm:$0xff] %v223
  $region21: #{_lambda_.92} parent=0 // pred_fallthru
    _
  // Predicated region
  $region22: #{_lambda_.92} parent=0 // pred_check
    _
  $region23: #{_lambda_.92} parent=0 // pred_check_branch
    %233 = sbr.rel (0) target = $region25
  $region24: #{_lambda_.92} parent=0 // pred_region
    _
  $region25: #{_lambda_.92} parent=0 // pred_fallthru
    _
  // Predicated region
  $region26: #{_lambda_.92} parent=0 // pred_check
    _
  $region27: #{_lambda_.92} parent=0 // pred_check_branch
    %235 = sbr.rel (0) target = $region29
  $region28: #{_lambda_.92} parent=0 // pred_region
    _
  $region29: #{_lambda_.92} parent=0 // pred_fallthru
    _

// kernel: _lambda_.93
$region0: #{_lambda_.93}
  #allocation0 [shape = 'u32[]', space=smem, size = 0x4, offset = 0x4, fixed_abs, tag = 'smem constant byte address 0x4 - core index']
  #allocation1 [shape = 'u32[144,128]{1,0:T(1,128)}', space=vmem, size = 0x12000, scoped, tag = 'internal scratch']
  #allocation2 [shape = 'f32[64,128]{1,0:T(8,128)}', space=vmem, size = 0x8000, scoped, tag = 'scratch operand']
  %s0 = inlined_call_operand.vmem [shape: bf16[64,24], index: 0, kind: input, shape index: {}]
  %s1 = inlined_call_operand.vmem [shape: bf16[24,128], index: 1, kind: input, shape index: {}]
  %s2 = inlined_call_operand.vmem [shape: f32[1,128], index: 2, kind: input, shape index: {}]
  %s3 = inlined_call_operand.vmem [shape: f32[64,128], index: 3, kind: output, shape index: {}]
  %s4 = sld [smem:[#allocation0]]
  $region30: #{_lambda_.93} parent=0
    _
  %s6 = ssub.s32 1, %s4
  %s7 = scalar_select 0, %s6, %s4
  // Predicated region
  $region2: #{_lambda_.93} parent=0 // pred_check
    _
  $region3: #{_lambda_.93} parent=0 // pred_check_branch
    %9 = sbr.rel (0) target = $region5
  $region4: #{_lambda_.93} parent=0 // pred_region
    _
  $region5: #{_lambda_.93} parent=0 // pred_fallthru
    _
  // Predicated region
  $region6: #{_lambda_.93} parent=0 // pred_check
    _
  $region7: #{_lambda_.93} parent=0 // pred_check_branch
    %11 = sbr.rel (0) target = $region9
  $region8: #{_lambda_.93} parent=0 // pred_region
    _
  $region9: #{_lambda_.93} parent=0 // pred_fallthru
    _
  // Predicated region
  $region10: #{_lambda_.93} parent=0 // pred_check
    _
  $region11: #{_lambda_.93} parent=0 // pred_check_branch
    %13 = sbr.rel (0) target = $region13
  $region12: #{_lambda_.93} parent=0 // pred_region
    _
  $region13: #{_lambda_.93} parent=0 // pred_fallthru
    _
  %p16 = scmp.eq.s32.totalorder 0, 0
  // Predicated region
  $region14: #{_lambda_.93} parent=0 // pred_check
    %p17 = pneg %p16
  $region15: #{_lambda_.93} parent=0 // pred_check_branch
    %19 = sbr.rel (%p17) target = $region17
  $region16: #{_lambda_.93} parent=0 // pred_region
    %20 = vst [vmem:[#allocation2] sm:$0xff] 0.0
    %21 = vst [vmem:[#allocation2 + $0x8] sm:$0xff] 0.0
    %22 = vst [vmem:[#allocation2 + $0x10] sm:$0xff] 0.0
    %23 = vst [vmem:[#allocation2 + $0x18] sm:$0xff] 0.0
    %24 = vst [vmem:[#allocation2 + $0x20] sm:$0xff] 0.0
    %25 = vst [vmem:[#allocation2 + $0x28] sm:$0xff] 0.0
    %26 = vst [vmem:[#allocation2 + $0x30] sm:$0xff] 0.0
    %27 = vst [vmem:[#allocation2 + $0x38] sm:$0xff] 0.0
  $region17: #{_lambda_.93} parent=0 // pred_fallthru
    _
  %v28 = vld [vmem:[%s0] sm:$0xf]
  %v29 = vld [vmem:[%s0 + $0x4] sm:$0xf]
  %v30 = vld [vmem:[%s0 + $0x8] sm:$0xf]
  %v31 = vld [vmem:[%s0 + $0xc] sm:$0xf]
  %v32 = vld [vmem:[%s0 + $0x10] sm:$0xf]
  %v33 = vld [vmem:[%s0 + $0x14] sm:$0xf]
  %v34 = vld [vmem:[%s0 + $0x18] sm:$0xf]
  %v35 = vld [vmem:[%s0 + $0x1c] sm:$0xf]
  %vm36 = vcmp.ge.bf16.partialorder %v28, 0
  %vm37 = vcmp.ge.bf16.partialorder %v29, 0
  %vm38 = vcmp.ge.bf16.partialorder %v30, 0
  %vm39 = vcmp.ge.bf16.partialorder %v31, 0
  %vm40 = vcmp.ge.bf16.partialorder %v32, 0
  %vm41 = vcmp.ge.bf16.partialorder %v33, 0
  %vm42 = vcmp.ge.bf16.partialorder %v34, 0
  %vm43 = vcmp.ge.bf16.partialorder %v35, 0
  %v44 = vmul.bf16 %v28, 1045249613
  %v45 = vmul.bf16 %v29, 1045249613
  %v46 = vmul.bf16 %v30, 1045249613
  %v47 = vmul.bf16 %v31, 1045249613
  %v48 = vmul.bf16 %v32, 1045249613
  %v49 = vmul.bf16 %v33, 1045249613
  %v50 = vmul.bf16 %v34, 1045249613
  %v51 = vmul.bf16 %v35, 1045249613
  %v52 = vsel %vm36, %v28, %v44
  %v53 = vsel %vm37, %v29, %v45
  %v54 = vsel %vm38, %v30, %v46
  %v55 = vsel %vm39, %v31, %v47
  %v56 = vsel %vm40, %v32, %v48
  %v57 = vsel %vm41, %v33, %v49
  %v58 = vsel %vm42, %v34, %v50
  %v59 = vsel %vm43, %v35, %v51
  %v60 = vld [vmem:[#allocation2] sm:$0xff]
  %v61 = vld [vmem:[#allocation2 + $0x8] sm:$0xff]
  %v62 = vld [vmem:[#allocation2 + $0x10] sm:$0xff]
  %v63 = vld [vmem:[#allocation2 + $0x18] sm:$0xff]
  %v64 = vld [vmem:[#allocation2 + $0x20] sm:$0xff]
  %v65 = vld [vmem:[#allocation2 + $0x28] sm:$0xff]
  %v66 = vld [vmem:[#allocation2 + $0x30] sm:$0xff]
  %v67 = vld [vmem:[#allocation2 + $0x38] sm:$0xff]
  %v68 = vld [vmem:[%s1] sm:$0xf]
  %v69 = vld [vmem:[%s1 + $0x4] sm:$0xf]
  %v70 = vld [vmem:[%s1 + $0x8] sm:$0xf]
  %v79 = vunpack.c.l.b16 %v52
  %v80 = vunpack.c.l.b16 %v53
  %v81 = vunpack.c.l.b16 %v54
  %v82 = vunpack.c.l.b16 %v55
  %v83 = vunpack.c.l.b16 %v56
  %v84 = vunpack.c.l.b16 %v57
  %v85 = vunpack.c.l.b16 %v58
  %v86 = vunpack.c.l.b16 %v59
  %v87 = vpack.c.b16 %v80, %v79
  %v88 = vpack.c.b16 %v82, %v81
  %v89 = vpack.c.b16 %v84, %v83
  %v90 = vpack.c.b16 %v86, %v85
  %v94 = vunpack.c.l.b16 %v68
  %v95 = vunpack.c.l.b16 %v69
  %v96 = vunpack.c.l.b16 %v70
  %v97 = vpack.c.b16 %v95, %v94
  %v98 = vpack.c.b16 %v96, %v96
  %vm100 = vcmask 195584
  %v102 = vsel %vm100, %v87, 0
  %v105 = vsel %vm100, %v88, 0
  %v108 = vsel %vm100, %v89, 0
  %v111 = vsel %vm100, %v90, 0
  %vm113 = vcmask 1043456
  %v115 = vsel %vm113, %v98, 0
  %117 = vmatprep.subr.bf16.mxu0 0
  %118 = vmatpush1.bf16.msra.mxu0 %v97
  %119 = vmatprep.subr.bf16.mxu0 0
  %120 = vmatpush1.bf16.msra.mxu0 %v115
  %121 = vmatprep.subr.bf16.mxu0 0
  %122 = vmatpush1.bf16.msra.mxu0 0
  %123 = vmatprep.subr.bf16.mxu0 0
  %124 = vmatpush1.bf16.msra.mxu0 0
  %125 = vmatprep.subr.bf16.mxu0 0
  %126 = vmatpush1.bf16.msra.mxu0 0
  %127 = vmatprep.subr.bf16.mxu0 0
  %128 = vmatpush1.bf16.msra.mxu0 0
  %129 = vmatprep.subr.bf16.mxu0 0
  %130 = vmatpush1.bf16.msra.mxu0 0
  %131 = vmatprep.subr.bf16.mxu0 0
  %132 = vmatpush1.bf16.msra.mxu0 0
  %133 = vmatprep.subr.bf16.mxu0 0
  %134 = vmatpush1.bf16.msra.mxu0 0
  %135 = vmatprep.subr.bf16.mxu0 0
  %136 = vmatpush1.bf16.msra.mxu0 0
  %137 = vmatprep.subr.bf16.mxu0 0
  %138 = vmatpush1.bf16.msra.mxu0 0
  %139 = vmatprep.subr.bf16.mxu0 0
  %140 = vmatpush1.bf16.msra.mxu0 0
  %141 = vmatprep.subr.bf16.mxu0 0
  %142 = vmatpush1.bf16.msra.mxu0 0
  %143 = vmatprep.subr.bf16.mxu0 0
  %144 = vmatpush1.bf16.msra.mxu0 0
  %145 = vmatprep.subr.bf16.mxu0 0
  %146 = vmatpush1.bf16.msra.mxu0 0
  %147 = vmatprep.subr.bf16.mxu0 0
  %148 = vmatpush1.bf16.msra.mxu0 0
  %149 = vmatprep.mubr.bf16.mxu0 0
  %150 = vmatmul.mubr.bf16.gmra.mrb[0].mxu0 %v102
  %v151 = vpop.f32.mrb[0].mxu0
  %v152 = vadd.f32 0.0, %v151
  %v153 = vpop.f32.mrb[0].mxu0
  %v154 = vpop.f32.mrb[0].mxu0
  %v155 = vadd.f32 0.0, %v154
  %v156 = vpop.f32.mrb[0].mxu0
  %157 = vmatprep.mubr.bf16.mxu0 0
  %158 = vmatmul.mubr.bf16.gmra.mrb[0].mxu0 %v105
  %v159 = vpop.f32.mrb[0].mxu0
  %v160 = vadd.f32 0.0, %v159
  %v161 = vpop.f32.mrb[0].mxu0
  %v162 = vpop.f32.mrb[0].mxu0
  %v163 = vadd.f32 0.0, %v162
  %v164 = vpop.f32.mrb[0].mxu0
  %165 = vmatprep.mubr.bf16.mxu0 0
  %166 = vmatmul.mubr.bf16.gmra.mrb[0].mxu0 %v108
  %v167 = vpop.f32.mrb[0].mxu0
  %v168 = vadd.f32 0.0, %v167
  %v169 = vpop.f32.mrb[0].mxu0
  %v170 = vpop.f32.mrb[0].mxu0
  %v171 = vadd.f32 0.0, %v170
  %v172 = vpop.f32.mrb[0].mxu0
  %173 = vmatprep.mubr.bf16.mxu0 0
  %174 = vmatmul.mubr.bf16.gmra.mrb[0].mxu0 %v111
  %v175 = vpop.f32.mrb[0].mxu0
  %v176 = vadd.f32 0.0, %v175
  %v177 = vpop.f32.mrb[0].mxu0
  %v178 = vpop.f32.mrb[0].mxu0
  %v179 = vadd.f32 0.0, %v178
  %v180 = vpop.f32.mrb[0].mxu0
  %181 = vdwg.mxu0
  %v182 = vadd.f32 %v60, %v152
  %v183 = vadd.f32 %v61, %v155
  %v184 = vadd.f32 %v62, %v160
  %v185 = vadd.f32 %v63, %v163
  %v186 = vadd.f32 %v64, %v168
  %v187 = vadd.f32 %v65, %v171
  %v188 = vadd.f32 %v66, %v176
  %v189 = vadd.f32 %v67, %v179
  %190 = vst [vmem:[#allocation2] sm:$0xff] %v182
  %191 = vst [vmem:[#allocation2 + $0x8] sm:$0xff] %v183
  %192 = vst [vmem:[#allocation2 + $0x10] sm:$0xff] %v184
  %193 = vst [vmem:[#allocation2 + $0x18] sm:$0xff] %v185
  %194 = vst [vmem:[#allocation2 + $0x20] sm:$0xff] %v186
  %195 = vst [vmem:[#allocation2 + $0x28] sm:$0xff] %v187
  %196 = vst [vmem:[#allocation2 + $0x30] sm:$0xff] %v188
  %197 = vst [vmem:[#allocation2 + $0x38] sm:$0xff] %v189
  // Predicated region
  $region18: #{_lambda_.93} parent=0 // pred_check
    %p198 = pneg %p16
  $region19: #{_lambda_.93} parent=0 // pred_check_branch
    %200 = sbr.rel (%p198) target = $region21
  $region20: #{_lambda_.93} parent=0 // pred_region
    %v201 = vld [vmem:[#allocation2] sm:$0xff]
    %v202 = vld [vmem:[#allocation2 + $0x8] sm:$0xff]
    %v203 = vld [vmem:[#allocation2 + $0x10] sm:$0xff]
    %v204 = vld [vmem:[#allocation2 + $0x18] sm:$0xff]
    %v205 = vld [vmem:[#allocation2 + $0x20] sm:$0xff]
    %v206 = vld [vmem:[#allocation2 + $0x28] sm:$0xff]
    %v207 = vld [vmem:[#allocation2 + $0x30] sm:$0xff]
    %v208 = vld [vmem:[#allocation2 + $0x38] sm:$0xff]
    %v209 = vld [vmem:[%s2] sm:$0x1]
    %v211 = vlaneseq
    %v212 = vshrl.u32 %v211, 7
    %v213 = vsub.s32 0, %v212
    %v214 = vrot.slane %v209, %v213
    %v216 = vadd.f32 %v201, %v214
    %v217 = vadd.f32 %v202, %v214
    %v218 = vadd.f32 %v203, %v214
    %v219 = vadd.f32 %v204, %v214
    %v220 = vadd.f32 %v205, %v214
    %v221 = vadd.f32 %v206, %v214
    %v222 = vadd.f32 %v207, %v214
    %v223 = vadd.f32 %v208, %v214
    %vm224 = vcmp.ge.f32.partialorder %v216, 0.0
    %vm225 = vcmp.ge.f32.partialorder %v217, 0.0
    %vm226 = vcmp.ge.f32.partialorder %v218, 0.0
    %vm227 = vcmp.ge.f32.partialorder %v219, 0.0
    %vm228 = vcmp.ge.f32.partialorder %v220, 0.0
    %vm229 = vcmp.ge.f32.partialorder %v221, 0.0
    %vm230 = vcmp.ge.f32.partialorder %v222, 0.0
    %vm231 = vcmp.ge.f32.partialorder %v223, 0.0
    %v232 = vmul.f32 %v216, 0.2
    %v233 = vmul.f32 %v217, 0.2
    %v234 = vmul.f32 %v218, 0.2
    %v235 = vmul.f32 %v219, 0.2
    %v236 = vmul.f32 %v220, 0.2
    %v237 = vmul.f32 %v221, 0.2
    %v238 = vmul.f32 %v222, 0.2
    %v239 = vmul.f32 %v223, 0.2
    %v240 = vsel %vm224, %v216, %v232
    %v241 = vsel %vm225, %v217, %v233
    %v242 = vsel %vm226, %v218, %v234
    %v243 = vsel %vm227, %v219, %v235
    %v244 = vsel %vm228, %v220, %v236
    %v245 = vsel %vm229, %v221, %v237
    %v246 = vsel %vm230, %v222, %v238
    %v247 = vsel %vm231, %v223, %v239
    %248 = vst [vmem:[%s3] sm:$0xff] %v240
    %249 = vst [vmem:[%s3 + $0x8] sm:$0xff] %v241
    %250 = vst [vmem:[%s3 + $0x10] sm:$0xff] %v242
    %251 = vst [vmem:[%s3 + $0x18] sm:$0xff] %v243
    %252 = vst [vmem:[%s3 + $0x20] sm:$0xff] %v244
    %253 = vst [vmem:[%s3 + $0x28] sm:$0xff] %v245
    %254 = vst [vmem:[%s3 + $0x30] sm:$0xff] %v246
    %255 = vst [vmem:[%s3 + $0x38] sm:$0xff] %v247
  $region21: #{_lambda_.93} parent=0 // pred_fallthru
    _
  // Predicated region
  $region22: #{_lambda_.93} parent=0 // pred_check
    _
  $region23: #{_lambda_.93} parent=0 // pred_check_branch
    %257 = sbr.rel (0) target = $region25
  $region24: #{_lambda_.93} parent=0 // pred_region
    _
  $region25: #{_lambda_.93} parent=0 // pred_fallthru
    _
  // Predicated region
  $region26: #{_lambda_.93} parent=0 // pred_check
    _
  $region27: #{_lambda_.93} parent=0 // pred_check_branch
    %259 = sbr.rel (0) target = $region29
  $region28: #{_lambda_.93} parent=0 // pred_region
    _
  $region29: #{_lambda_.93} parent=0 // pred_fallthru
    _

// kernel: _lambda_.94
$region0: #{_lambda_.94}
  #allocation0 [shape = 'u32[]', space=smem, size = 0x4, offset = 0x4, fixed_abs, tag = 'smem constant byte address 0x4 - core index']
  #allocation1 [shape = 'u32[144,128]{1,0:T(1,128)}', space=vmem, size = 0x12000, scoped, tag = 'internal scratch']
  %s0 = inlined_call_operand.vmem [shape: bf16[16,4,24], index: 0, kind: input, shape index: {}]
  %s1 = inlined_call_operand.vmem [shape: bf16[16,24,256], index: 1, kind: input, shape index: {}]
  %s2 = inlined_call_operand.vmem [shape: f32[16,1,256], index: 2, kind: input, shape index: {}]
  %s3 = inlined_call_operand.vmem [shape: f32[16,4,128], index: 3, kind: output, shape index: {}]
  %s4 = sld [smem:[#allocation0]]
  $region45: #{_lambda_.94} parent=0
    _
  %s6 = ssub.s32 1, %s4
  %s7 = scalar_select 0, %s6, %s4
  loop: start=0, step=1, limit=4
  $region2: #{_lambda_.94} parent=0 // loop_pre_header
    _
  $region3: #{_lambda_.94} parent=0 // loop_header
    %s9 = sphi 0, %s13
    %p10 = scmp.ge.s32.totalorder %s9, 4
    %s19 = sphi 0, %s21
    %s22 = sphi 0, %s19
    %s23 = sphi 0, %s22
    %s39 = sphi 0, %s23
    %s45 = sphi 0, %s47
    %s48 = sphi 0, %s45
    %s49 = sphi 0, %s48
    %s65 = sphi 0, %s49
    %s71 = sphi 0, %s73
    %s74 = sphi 0, %s71
    %s75 = sphi 0, %s74
    %s91 = sphi 0, %s75
    %s97 = sphi 0, %s99
    %s100 = sphi 0, %s97
    %s101 = sphi 0, %s100
    %s117 = sphi 0, %s101
  $region4: #{_lambda_.94} parent=0 // loop_header_branch
    %12 = sbr.rel (%p10) target = $region8
  $region5: #{_lambda_.94} parent=0 // loop_body
    %s14 = ssub.s32 %s9, 1
    %s15 = ssub.s32 %s9, 2
    %s16 = sadd.s32 %s9, 1
    %s17 = ssub.s32 %s9, %s16
    %p18 = scmp.eq.s32.totalorder %s17, 0
    %s20 = sadd.s32 %s19, 1
    %s21 = scalar_select %p18, %s19, %s20
    %p24 = pneg %p18
    %p25 = scmp.eq.s32.totalorder %s9, 1
    %p26 = por %p24, %p25
    %p27 = scmp.ne.s32.totalorder %s19, %s22
    %p28 = scmp.eq.s32.totalorder %s9, 0
    %p29 = por %p27, %p28
    %p30 = scmp.ne.s32.totalorder %s19, %s22
    %p31 = scmp.eq.s32.totalorder %s14, 1
    %p32 = por %p30, %p31
    %p33 = scmp.ne.s32.totalorder %s22, %s23
    %p34 = scmp.eq.s32.totalorder %s14, 0
    %p35 = por %p33, %p34
    %p36 = scmp.ne.s32.totalorder %s22, %s23
    %p37 = scmp.eq.s32.totalorder %s15, 1
    %p38 = por %p36, %p37
    %p40 = scmp.ne.s32.totalorder %s23, %s39
    %p41 = scmp.eq.s32.totalorder %s15, 0
    %p42 = por %p40, %p41
    %s43 = ssub.s32 %s9, %s16
    %p44 = scmp.eq.s32.totalorder %s43, 0
    %s46 = sadd.s32 %s45, 1
    %s47 = scalar_select %p44, %s45, %s46
    %p50 = pneg %p44
    %p51 = scmp.eq.s32.totalorder %s9, 1
    %p52 = por %p50, %p51
    %p53 = scmp.ne.s32.totalorder %s45, %s48
    %p54 = scmp.eq.s32.totalorder %s9, 0
    %p55 = por %p53, %p54
    %p56 = scmp.ne.s32.totalorder %s45, %s48
    %p57 = scmp.eq.s32.totalorder %s14, 1
    %p58 = por %p56, %p57
    %p59 = scmp.ne.s32.totalorder %s48, %s49
    %p60 = scmp.eq.s32.totalorder %s14, 0
    %p61 = por %p59, %p60
    %p62 = scmp.ne.s32.totalorder %s48, %s49
    %p63 = scmp.eq.s32.totalorder %s15, 1
    %p64 = por %p62, %p63
    %p66 = scmp.ne.s32.totalorder %s49, %s65
    %p67 = scmp.eq.s32.totalorder %s15, 0
    %p68 = por %p66, %p67
    %s69 = ssub.s32 %s9, %s16
    %p70 = scmp.eq.s32.totalorder %s69, 0
    %s72 = sadd.s32 %s71, 1
    %s73 = scalar_select %p70, %s71, %s72
    %p76 = pneg %p70
    %p77 = scmp.eq.s32.totalorder %s9, 1
    %p78 = por %p76, %p77
    %p79 = scmp.ne.s32.totalorder %s71, %s74
    %p80 = scmp.eq.s32.totalorder %s9, 0
    %p81 = por %p79, %p80
    %p82 = scmp.ne.s32.totalorder %s71, %s74
    %p83 = scmp.eq.s32.totalorder %s14, 1
    %p84 = por %p82, %p83
    %p85 = scmp.ne.s32.totalorder %s74, %s75
    %p86 = scmp.eq.s32.totalorder %s14, 0
    %p87 = por %p85, %p86
    %p88 = scmp.ne.s32.totalorder %s74, %s75
    %p89 = scmp.eq.s32.totalorder %s15, 1
    %p90 = por %p88, %p89
    %p92 = scmp.ne.s32.totalorder %s75, %s91
    %p93 = scmp.eq.s32.totalorder %s15, 0
    %p94 = por %p92, %p93
    %s95 = ssub.s32 %s9, %s16
    %p96 = scmp.eq.s32.totalorder %s95, 0
    %s98 = sadd.s32 %s97, 1
    %s99 = scalar_select %p96, %s97, %s98
    %p102 = pneg %p96
    %p103 = scmp.eq.s32.totalorder %s9, 1
    %p104 = por %p102, %p103
    %p105 = scmp.ne.s32.totalorder %s97, %s100
    %p106 = scmp.eq.s32.totalorder %s9, 0
    %p107 = por %p105, %p106
    %p108 = scmp.ne.s32.totalorder %s97, %s100
    %p109 = scmp.eq.s32.totalorder %s14, 1
    %p110 = por %p108, %p109
    %p111 = scmp.ne.s32.totalorder %s100, %s101
    %p112 = scmp.eq.s32.totalorder %s14, 0
    %p113 = por %p111, %p112
    %p114 = scmp.ne.s32.totalorder %s100, %s101
    %p115 = scmp.eq.s32.totalorder %s15, 1
    %p116 = por %p114, %p115
    %p118 = scmp.ne.s32.totalorder %s101, %s117
    %p119 = scmp.eq.s32.totalorder %s15, 0
    %p120 = por %p118, %p119
    %p121 = scmp.le.s32.totalorder 1, %s9
    %p122 = scmp.lt.s32.totalorder %s9, 3
    %p123 = pnand %p121, %p122
    %p124 = pneg %p123
    // Predicated region
    $region9: #{_lambda_.94} parent=5 // pred_check
      _
    $region10: #{_lambda_.94} parent=5 // pred_check_branch
      %126 = sbr.rel (%p123) target = $region12
    $region11: #{_lambda_.94} parent=5 // pred_region
      %s127 = ssub.s32 %s9, 1
    $region12: #{_lambda_.94} parent=5 // pred_fallthru
      _
    %p128 = scmp.lt.s32.totalorder %s9, 2
    // Predicated region
    $region13: #{_lambda_.94} parent=5 // pred_check
      %p129 = pneg %p128
    $region14: #{_lambda_.94} parent=5 // pred_check_branch
      %131 = sbr.rel (%p129) target = $region16
    $region15: #{_lambda_.94} parent=5 // pred_region
      // Predicated region
      $region17: #{_lambda_.94} parent=15 // pred_check
        %p132 = pneg %p29
      $region18: #{_lambda_.94} parent=15 // pred_check_branch
        %134 = sbr.rel (%p132) target = $region20
      $region19: #{_lambda_.94} parent=15 // pred_region
        %s135 = smul.u32 8, %s9
        %p136 = scmp.lt.s32.totalorder %s135, 15
        %s137 = scalar_select %p136, %s135, 15
        %s138 = smul.addr %s137, 2
        %s139 = scalar_lea.vmem %s0, %s138
        %s140 = smul.u32 8, %s9
      $region20: #{_lambda_.94} parent=15 // pred_fallthru
        _
      // Predicated region
      $region21: #{_lambda_.94} parent=15 // pred_check
        %p141 = pneg %p55
      $region22: #{_lambda_.94} parent=15 // pred_check_branch
        %143 = sbr.rel (%p141) target = $region24
      $region23: #{_lambda_.94} parent=15 // pred_region
        %s144 = smul.u32 8, %s9
        %p145 = scmp.lt.s32.totalorder %s144, 15
        %s146 = scalar_select %p145, %s144, 15
        %s147 = smul.addr %s146, 6
        %s148 = smul.addr %s147, 4
        %s149 = scalar_lea.vmem %s1, %s148
        %s150 = smul.u32 8, %s9
      $region24: #{_lambda_.94} parent=15 // pred_fallthru
        _
      // Predicated region
      $region25: #{_lambda_.94} parent=15 // pred_check
        %p151 = pneg %p81
      $region26: #{_lambda_.94} parent=15 // pred_check_branch
        %153 = sbr.rel (%p151) target = $region28
      $region27: #{_lambda_.94} parent=15 // pred_region
        %s154 = smul.u32 8, %s9
        %p155 = scmp.lt.s32.totalorder %s154, 15
        %s156 = scalar_select %p155, %s154, 15
        %s157 = smul.addr %s156, 2
        %s158 = scalar_lea.vmem %s2, %s157
        %s159 = smul.u32 8, %s9
      $region28: #{_lambda_.94} parent=15 // pred_fallthru
        _
    $region16: #{_lambda_.94} parent=5 // pred_fallthru
      _
    %p160 = scmp.le.s32.totalorder 1, %s9
    %p161 = scmp.lt.s32.totalorder %s9, 3
    %p162 = pnand %p160, %p161
    %p163 = pneg %p162
    // Predicated region
    $region29: #{_lambda_.94} parent=5 // pred_check
      _
    $region30: #{_lambda_.94} parent=5 // pred_check_branch
      %165 = sbr.rel (%p162) target = $region32
    $region31: #{_lambda_.94} parent=5 // pred_region
      %s166 = ssub.s32 %s9, 1
      %s167 = smul.u32 8, %s14
      %p168 = scmp.lt.s32.totalorder %s167, 15
      %s169 = scalar_select %p168, %s167, 15
      %s170 = smul.addr %s169, 2
      %s171 = scalar_lea.vmem %s0, %s170
      %p172 = pneg %p35
      %p173 = pneg %p32
      %s174 = smul.u32 8, %s14
      %p175 = scmp.lt.s32.totalorder %s174, 15
      %s176 = scalar_select %p175, %s174, 15
      %s177 = smul.addr %s176, 6
      %s178 = smul.addr %s177, 4
      %s179 = scalar_lea.vmem %s1, %s178
      %p180 = pneg %p61
      %p181 = pneg %p58
      %s182 = smul.u32 8, %s14
      %p183 = scmp.lt.s32.totalorder %s182, 15
      %s184 = scalar_select %p183, %s182, 15
      %s185 = smul.addr %s184, 2
      %s186 = scalar_lea.vmem %s2, %s185
      %p187 = pneg %p87
      %p188 = pneg %p84
      %p189 = pneg %p113
      %p190 = pneg %p110
      %s191 = smul.u32 8, %s14
      %p192 = scmp.lt.s32.totalorder %s191, 15
      %s193 = scalar_select %p192, %s191, 15
      %s194 = smul.addr %s193, 4
      %s195 = scalar_lea.vmem %s3, %s194
      %s196 = smul.u32 8, %s14
      %p197 = scmp.lt.s32.totalorder %s196, 15
      %s198 = scalar_select %p197, %s196, 15
      %s199 = smul.addr %s198, 2
      %s200 = scalar_lea.vmem %s0, %s199
      %s201 = smul.u32 8, %s14
      %s202 = smul.u32 8, %s14
      %p203 = scmp.lt.s32.totalorder %s202, 15
      %s204 = scalar_select %p203, %s202, 15
      %s205 = smul.addr %s204, 6
      %s206 = smul.addr %s205, 4
      %s207 = scalar_lea.vmem %s1, %s206
      %s208 = smul.u32 8, %s14
      %s209 = smul.u32 8, %s14
      %p210 = scmp.lt.s32.totalorder %s209, 15
      %s211 = scalar_select %p210, %s209, 15
      %s212 = smul.addr %s211, 2
      %s213 = scalar_lea.vmem %s2, %s212
      %s214 = smul.u32 8, %s14
      %s215 = smul.u32 8, %s14
      %p216 = scmp.lt.s32.totalorder %s215, 15
      %s217 = scalar_select %p216, %s215, 15
      %s218 = smul.addr %s217, 4
      %s219 = scalar_lea.vmem %s3, %s218
      %s220 = smul.u32 8, %s14
      %v222 = vld [vmem:[%s200] sm:$0x3]
      %v223 = vld [vmem:[%s200 + $0x2] sm:$0x3]
      %v224 = vld [vmem:[%s200 + $0x4] sm:$0x3]
      %v225 = vld [vmem:[%s200 + $0x6] sm:$0x3]
      %v226 = vld [vmem:[%s200 + $0x8] sm:$0x3]
      %v227 = vld [vmem:[%s200 + $0xa] sm:$0x3]
      %v228 = vld [vmem:[%s200 + $0xc] sm:$0x3]
      %v229 = vld [vmem:[%s200 + $0xe] sm:$0x3]
      %v230 = vld [vmem:[%s207] sm:$0xff]
      %v231 = vld [vmem:[%s207 + $0x8] sm:$0xff]
      %v232 = vld [vmem:[%s207 + $0x10] sm:$0xff]
      %v233 = vld [vmem:[%s207 + $0x18] sm:$0xff]
      %v234 = vld [vmem:[%s207 + $0x20] sm:$0xff]
      %v235 = vld [vmem:[%s207 + $0x28] sm:$0xff]
      %v236 = vld [vmem:[%s207 + $0x30] sm:$0xff]
      %v237 = vld [vmem:[%s207 + $0x38] sm:$0xff]
      %v238 = vld [vmem:[%s207 + $0x40] sm:$0xff]
      %v239 = vld [vmem:[%s207 + $0x48] sm:$0xff]
      %v240 = vld [vmem:[%s207 + $0x50] sm:$0xff]
      %v241 = vld [vmem:[%s207 + $0x58] sm:$0xff]
      %v242 = vld [vmem:[%s207 + $0x60] sm:$0xff]
      %v243 = vld [vmem:[%s207 + $0x68] sm:$0xff]
      %v244 = vld [vmem:[%s207 + $0x70] sm:$0xff]
      %v245 = vld [vmem:[%s207 + $0x78] sm:$0xff]
      %v246 = vld [vmem:[%s207 + $0x80] sm:$0xff]
      %v247 = vld [vmem:[%s207 + $0x88] sm:$0xff]
      %v248 = vld [vmem:[%s207 + $0x90] sm:$0xff]
      %v249 = vld [vmem:[%s207 + $0x98] sm:$0xff]
      %v250 = vld [vmem:[%s207 + $0xa0] sm:$0xff]
      %v251 = vld [vmem:[%s207 + $0xa8] sm:$0xff]
      %v252 = vld [vmem:[%s207 + $0xb0] sm:$0xff]
      %v253 = vld [vmem:[%s207 + $0xb8] sm:$0xff]
      %v254 = vld [vmem:[%s213] sm:$0x3]
      %v255 = vld [vmem:[%s213 + $0x2] sm:$0x3]
      %v256 = vld [vmem:[%s213 + $0x4] sm:$0x3]
      %v257 = vld [vmem:[%s213 + $0x6] sm:$0x3]
      %v258 = vld [vmem:[%s213 + $0x8] sm:$0x3]
      %v259 = vld [vmem:[%s213 + $0xa] sm:$0x3]
      %v260 = vld [vmem:[%s213 + $0xc] sm:$0x3]
      %v261 = vld [vmem:[%s213 + $0xe] sm:$0x3]
      %v270 = vlaneseq
      %v271 = vshrl.u32 %v270, 7
      %v272 = vsub.s32 0, %v271
      %v273 = vrot.slane %v254, %v272
      %v274 = vlaneseq
      %v275 = vshrl.u32 %v274, 7
      %v276 = vsub.s32 1, %v275
      %v277 = vrot.slane %v254, %v276
      %v278 = vlaneseq
      %v279 = vshrl.u32 %v278, 7
      %v280 = vsub.s32 0, %v279
      %v281 = vrot.slane %v255, %v280
      %v282 = vlaneseq
      %v283 = vshrl.u32 %v282, 7
      %v284 = vsub.s32 1, %v283
      %v285 = vrot.slane %v255, %v284
      %v286 = vlaneseq
      %v287 = vshrl.u32 %v286, 7
      %v288 = vsub.s32 0, %v287
      %v289 = vrot.slane %v256, %v288
      %v290 = vlaneseq
      %v291 = vshrl.u32 %v290, 7
      %v292 = vsub.s32 1, %v291
      %v293 = vrot.slane %v256, %v292
      %v294 = vlaneseq
      %v295 = vshrl.u32 %v294, 7
      %v296 = vsub.s32 0, %v295
      %v297 = vrot.slane %v257, %v296
      %v298 = vlaneseq
      %v299 = vshrl.u32 %v298, 7
      %v300 = vsub.s32 1, %v299
      %v301 = vrot.slane %v257, %v300
      %v302 = vlaneseq
      %v303 = vshrl.u32 %v302, 7
      %v304 = vsub.s32 0, %v303
      %v305 = vrot.slane %v258, %v304
      %v306 = vlaneseq
      %v307 = vshrl.u32 %v306, 7
      %v308 = vsub.s32 1, %v307
      %v309 = vrot.slane %v258, %v308
      %v310 = vlaneseq
      %v311 = vshrl.u32 %v310, 7
      %v312 = vsub.s32 0, %v311
      %v313 = vrot.slane %v259, %v312
      %v314 = vlaneseq
      %v315 = vshrl.u32 %v314, 7
      %v316 = vsub.s32 1, %v315
      %v317 = vrot.slane %v259, %v316
      %v318 = vlaneseq
      %v319 = vshrl.u32 %v318, 7
      %v320 = vsub.s32 0, %v319
      %v321 = vrot.slane %v260, %v320
      %v322 = vlaneseq
      %v323 = vshrl.u32 %v322, 7
      %v324 = vsub.s32 1, %v323
      %v325 = vrot.slane %v260, %v324
      %v326 = vlaneseq
      %v327 = vshrl.u32 %v326, 7
      %v328 = vsub.s32 0, %v327
      %v329 = vrot.slane %v261, %v328
      %v330 = vlaneseq
      %v331 = vshrl.u32 %v330, 7
      %v332 = vsub.s32 1, %v331
      %v333 = vrot.slane %v261, %v332
      %v353 = vunpack.c.l.b16 %v230
      %v354 = vunpack.c.h.b16 %v230
      %v355 = vunpack.c.l.b16 %v231
      %v356 = vunpack.c.h.b16 %v231
      %v357 = vunpack.c.l.b16 %v232
      %v358 = vunpack.c.h.b16 %v232
      %v359 = vpack.c.b16 %v355, %v353
      %v360 = vpack.c.b16 %v356, %v354
      %v361 = vpack.c.b16 %v357, %v357
      %v362 = vpack.c.b16 %v358, %v358
      %vm365 = vcmask 195584
      %v367 = vsel %vm365, %v222, 0
      %vm369 = vcmask 1043456
      %v371 = vsel %vm369, %v361, 0
      %v374 = vsel %vm369, %v362, 0
      %376 = vmatprep.subr.bf16.mxu0 %v360
      %377 = vmatpush1.bf16.msra.mxu0 %v359
      %378 = vmatprep.subr.bf16.mxu0 %v374
      %379 = vmatpush1.bf16.msra.mxu0 %v371
      %380 = vmatprep.subr.bf16.mxu0 0
      %381 = vmatpush1.bf16.msra.mxu0 0
      %382 = vmatprep.subr.bf16.mxu0 0
      %383 = vmatpush1.bf16.msra.mxu0 0
      %384 = vmatprep.subr.bf16.mxu0 0
      %385 = vmatpush1.bf16.msra.mxu0 0
      %386 = vmatprep.subr.bf16.mxu0 0
      %387 = vmatpush1.bf16.msra.mxu0 0
      %388 = vmatprep.subr.bf16.mxu0 0
      %389 = vmatpush1.bf16.msra.mxu0 0
      %390 = vmatprep.subr.bf16.mxu0 0
      %391 = vmatpush1.bf16.msra.mxu0 0
      %392 = vmatprep.subr.bf16.mxu0 0
      %393 = vmatpush1.bf16.msra.mxu0 0
      %394 = vmatprep.subr.bf16.mxu0 0
      %395 = vmatpush1.bf16.msra.mxu0 0
      %396 = vmatprep.subr.bf16.mxu0 0
      %397 = vmatpush1.bf16.msra.mxu0 0
      %398 = vmatprep.subr.bf16.mxu0 0
      %399 = vmatpush1.bf16.msra.mxu0 0
      %400 = vmatprep.subr.bf16.mxu0 0
      %401 = vmatpush1.bf16.msra.mxu0 0
      %402 = vmatprep.subr.bf16.mxu0 0
      %403 = vmatpush1.bf16.msra.mxu0 0
      %404 = vmatprep.subr.bf16.mxu0 0
      %405 = vmatpush1.bf16.msra.mxu0 0
      %406 = vmatprep.subr.bf16.mxu0 0
      %407 = vmatpush1.bf16.msra.mxu0 0
      %408 = vmatprep.mubr.bf16.mxu0 0
      %409 = vmatmul.mubr.bf16.gmra.mrb[0].mxu0 %v367
      %v410 = vpop.f32.mrb[0].mxu0
      %v411 = vadd.f32 %v273, %v410
      %v412 = vpop.f32.mrb[0].mxu0
      %v413 = vadd.f32 %v277, %v412
      %v414 = vpop.f32.mrb[0].mxu0
      %v415 = vpop.f32.mrb[0].mxu0
      %416 = vdwg.mxu0
      %v420 = vunpack.c.l.b16 %v233
      %v421 = vunpack.c.h.b16 %v233
      %v422 = vunpack.c.l.b16 %v234
      %v423 = vunpack.c.h.b16 %v234
      %v424 = vunpack.c.l.b16 %v235
      %v425 = vunpack.c.h.b16 %v235
      %v426 = vpack.c.b16 %v422, %v420
      %v427 = vpack.c.b16 %v423, %v421
      %v428 = vpack.c.b16 %v424, %v424
      %v429 = vpack.c.b16 %v425, %v425
      %v433 = vsel %vm365, %v223, 0
      %v436 = vsel %vm369, %v428, 0
      %v439 = vsel %vm369, %v429, 0
      %441 = vmatprep.subr.bf16.mxu0 %v427
      %442 = vmatpush1.bf16.msra.mxu0 %v426
      %443 = vmatprep.subr.bf16.mxu0 %v439
      %444 = vmatpush1.bf16.msra.mxu0 %v436
      %445 = vmatprep.subr.bf16.mxu0 0
      %446 = vmatpush1.bf16.msra.mxu0 0
      %447 = vmatprep.subr.bf16.mxu0 0
      %448 = vmatpush1.bf16.msra.mxu0 0
      %449 = vmatprep.subr.bf16.mxu0 0
      %450 = vmatpush1.bf16.msra.mxu0 0
      %451 = vmatprep.subr.bf16.mxu0 0
      %452 = vmatpush1.bf16.msra.mxu0 0
      %453 = vmatprep.subr.bf16.mxu0 0
      %454 = vmatpush1.bf16.msra.mxu0 0
      %455 = vmatprep.subr.bf16.mxu0 0
      %456 = vmatpush1.bf16.msra.mxu0 0
      %457 = vmatprep.subr.bf16.mxu0 0
      %458 = vmatpush1.bf16.msra.mxu0 0
      %459 = vmatprep.subr.bf16.mxu0 0
      %460 = vmatpush1.bf16.msra.mxu0 0
      %461 = vmatprep.subr.bf16.mxu0 0
      %462 = vmatpush1.bf16.msra.mxu0 0
      %463 = vmatprep.subr.bf16.mxu0 0
      %464 = vmatpush1.bf16.msra.mxu0 0
      %465 = vmatprep.subr.bf16.mxu0 0
      %466 = vmatpush1.bf16.msra.mxu0 0
      %467 = vmatprep.subr.bf16.mxu0 0
      %468 = vmatpush1.bf16.msra.mxu0 0
      %469 = vmatprep.subr.bf16.mxu0 0
      %470 = vmatpush1.bf16.msra.mxu0 0
      %471 = vmatprep.subr.bf16.mxu0 0
      %472 = vmatpush1.bf16.msra.mxu0 0
      %473 = vmatprep.mubr.bf16.mxu0 0
      %474 = vmatmul.mubr.bf16.gmra.mrb[0].mxu0 %v433
      %v475 = vpop.f32.mrb[0].mxu0
      %v476 = vadd.f32 %v281, %v475
      %v477 = vpop.f32.mrb[0].mxu0
      %v478 = vadd.f32 %v285, %v477
      %v479 = vpop.f32.mrb[0].mxu0
      %v480 = vpop.f32.mrb[0].mxu0
      %481 = vdwg.mxu0
      %v485 = vunpack.c.l.b16 %v236
      %v486 = vunpack.c.h.b16 %v236
      %v487 = vunpack.c.l.b16 %v237
      %v488 = vunpack.c.h.b16 %v237
      %v489 = vunpack.c.l.b16 %v238
      %v490 = vunpack.c.h.b16 %v238
      %v491 = vpack.c.b16 %v487, %v485
      %v492 = vpack.c.b16 %v488, %v486
      %v493 = vpack.c.b16 %v489, %v489
      %v494 = vpack.c.b16 %v490, %v490
      %v498 = vsel %vm365, %v224, 0
      %v501 = vsel %vm369, %v493, 0
      %v504 = vsel %vm369, %v494, 0
      %506 = vmatprep.subr.bf16.mxu0 %v492
      %507 = vmatpush1.bf16.msra.mxu0 %v491
      %508 = vmatprep.subr.bf16.mxu0 %v504
      %509 = vmatpush1.bf16.msra.mxu0 %v501
      %510 = vmatprep.subr.bf16.mxu0 0
      %511 = vmatpush1.bf16.msra.mxu0 0
      %512 = vmatprep.subr.bf16.mxu0 0
      %513 = vmatpush1.bf16.msra.mxu0 0
      %514 = vmatprep.subr.bf16.mxu0 0
      %515 = vmatpush1.bf16.msra.mxu0 0
      %516 = vmatprep.subr.bf16.mxu0 0
      %517 = vmatpush1.bf16.msra.mxu0 0
      %518 = vmatprep.subr.bf16.mxu0 0
      %519 = vmatpush1.bf16.msra.mxu0 0
      %520 = vmatprep.subr.bf16.mxu0 0
      %521 = vmatpush1.bf16.msra.mxu0 0
      %522 = vmatprep.subr.bf16.mxu0 0
      %523 = vmatpush1.bf16.msra.mxu0 0
      %524 = vmatprep.subr.bf16.mxu0 0
      %525 = vmatpush1.bf16.msra.mxu0 0
      %526 = vmatprep.subr.bf16.mxu0 0
      %527 = vmatpush1.bf16.msra.mxu0 0
      %528 = vmatprep.subr.bf16.mxu0 0
      %529 = vmatpush1.bf16.msra.mxu0 0
      %530 = vmatprep.subr.bf16.mxu0 0
      %531 = vmatpush1.bf16.msra.mxu0 0
      %532 = vmatprep.subr.bf16.mxu0 0
      %533 = vmatpush1.bf16.msra.mxu0 0
      %534 = vmatprep.subr.bf16.mxu0 0
      %535 = vmatpush1.bf16.msra.mxu0 0
      %536 = vmatprep.subr.bf16.mxu0 0
      %537 = vmatpush1.bf16.msra.mxu0 0
      %538 = vmatprep.mubr.bf16.mxu0 0
      %539 = vmatmul.mubr.bf16.gmra.mrb[0].mxu0 %v498
      %v540 = vpop.f32.mrb[0].mxu0
      %v541 = vadd.f32 %v289, %v540
      %v542 = vpop.f32.mrb[0].mxu0
      %v543 = vadd.f32 %v293, %v542
      %v544 = vpop.f32.mrb[0].mxu0
      %v545 = vpop.f32.mrb[0].mxu0
      %546 = vdwg.mxu0
      %v550 = vunpack.c.l.b16 %v239
      %v551 = vunpack.c.h.b16 %v239
      %v552 = vunpack.c.l.b16 %v240
      %v553 = vunpack.c.h.b16 %v240
      %v554 = vunpack.c.l.b16 %v241
      %v555 = vunpack.c.h.b16 %v241
      %v556 = vpack.c.b16 %v552, %v550
      %v557 = vpack.c.b16 %v553, %v551
      %v558 = vpack.c.b16 %v554, %v554
      %v559 = vpack.c.b16 %v555, %v555
      %v563 = vsel %vm365, %v225, 0
      %v566 = vsel %vm369, %v558, 0
      %v569 = vsel %vm369, %v559, 0
      %571 = vmatprep.subr.bf16.mxu0 %v557
      %572 = vmatpush1.bf16.msra.mxu0 %v556
      %573 = vmatprep.subr.bf16.mxu0 %v569
      %574 = vmatpush1.bf16.msra.mxu0 %v566
      %575 = vmatprep.subr.bf16.mxu0 0
      %576 = vmatpush1.bf16.msra.mxu0 0
      %577 = vmatprep.subr.bf16.mxu0 0
      %578 = vmatpush1.bf16.msra.mxu0 0
      %579 = vmatprep.subr.bf16.mxu0 0
      %580 = vmatpush1.bf16.msra.mxu0 0
      %581 = vmatprep.subr.bf16.mxu0 0
      %582 = vmatpush1.bf16.msra.mxu0 0
      %583 = vmatprep.subr.bf16.mxu0 0
      %584 = vmatpush1.bf16.msra.mxu0 0
      %585 = vmatprep.subr.bf16.mxu0 0
      %586 = vmatpush1.bf16.msra.mxu0 0
      %587 = vmatprep.subr.bf16.mxu0 0
      %588 = vmatpush1.bf16.msra.mxu0 0
      %589 = vmatprep.subr.bf16.mxu0 0
      %590 = vmatpush1.bf16.msra.mxu0 0
      %591 = vmatprep.subr.bf16.mxu0 0
      %592 = vmatpush1.bf16.msra.mxu0 0
      %593 = vmatprep.subr.bf16.mxu0 0
      %594 = vmatpush1.bf16.msra.mxu0 0
      %595 = vmatprep.subr.bf16.mxu0 0
      %596 = vmatpush1.bf16.msra.mxu0 0
      %597 = vmatprep.subr.bf16.mxu0 0
      %598 = vmatpush1.bf16.msra.mxu0 0
      %599 = vmatprep.subr.bf16.mxu0 0
      %600 = vmatpush1.bf16.msra.mxu0 0
      %601 = vmatprep.subr.bf16.mxu0 0
      %602 = vmatpush1.bf16.msra.mxu0 0
      %603 = vmatprep.mubr.bf16.mxu0 0
      %604 = vmatmul.mubr.bf16.gmra.mrb[0].mxu0 %v563
      %v605 = vpop.f32.mrb[0].mxu0
      %v606 = vadd.f32 %v297, %v605
      %v607 = vpop.f32.mrb[0].mxu0
      %v608 = vadd.f32 %v301, %v607
      %v609 = vpop.f32.mrb[0].mxu0
      %v610 = vpop.f32.mrb[0].mxu0
      %611 = vdwg.mxu0
      %v615 = vunpack.c.l.b16 %v242
      %v616 = vunpack.c.h.b16 %v242
      %v617 = vunpack.c.l.b16 %v243
      %v618 = vunpack.c.h.b16 %v243
      %v619 = vunpack.c.l.b16 %v244
      %v620 = vunpack.c.h.b16 %v244
      %v621 = vpack.c.b16 %v617, %v615
      %v622 = vpack.c.b16 %v618, %v616
      %v623 = vpack.c.b16 %v619, %v619
      %v624 = vpack.c.b16 %v620, %v620
      %v628 = vsel %vm365, %v226, 0
      %v631 = vsel %vm369, %v623, 0
      %v634 = vsel %vm369, %v624, 0
      %636 = vmatprep.subr.bf16.mxu0 %v622
      %637 = vmatpush1.bf16.msra.mxu0 %v621
      %638 = vmatprep.subr.bf16.mxu0 %v634
      %639 = vmatpush1.bf16.msra.mxu0 %v631
      %640 = vmatprep.subr.bf16.mxu0 0
      %641 = vmatpush1.bf16.msra.mxu0 0
      %642 = vmatprep.subr.bf16.mxu0 0
      %643 = vmatpush1.bf16.msra.mxu0 0
      %644 = vmatprep.subr.bf16.mxu0 0
      %645 = vmatpush1.bf16.msra.mxu0 0
      %646 = vmatprep.subr.bf16.mxu0 0
      %647 = vmatpush1.bf16.msra.mxu0 0
      %648 = vmatprep.subr.bf16.mxu0 0
      %649 = vmatpush1.bf16.msra.mxu0 0
      %650 = vmatprep.subr.bf16.mxu0 0
      %651 = vmatpush1.bf16.msra.mxu0 0
      %652 = vmatprep.subr.bf16.mxu0 0
      %653 = vmatpush1.bf16.msra.mxu0 0
      %654 = vmatprep.subr.bf16.mxu0 0
      %655 = vmatpush1.bf16.msra.mxu0 0
      %656 = vmatprep.subr.bf16.mxu0 0
      %657 = vmatpush1.bf16.msra.mxu0 0
      %658 = vmatprep.subr.bf16.mxu0 0
      %659 = vmatpush1.bf16.msra.mxu0 0
      %660 = vmatprep.subr.bf16.mxu0 0
      %661 = vmatpush1.bf16.msra.mxu0 0
      %662 = vmatprep.subr.bf16.mxu0 0
      %663 = vmatpush1.bf16.msra.mxu0 0
      %664 = vmatprep.subr.bf16.mxu0 0
      %665 = vmatpush1.bf16.msra.mxu0 0
      %666 = vmatprep.subr.bf16.mxu0 0
      %667 = vmatpush1.bf16.msra.mxu0 0
      %668 = vmatprep.mubr.bf16.mxu0 0
      %669 = vmatmul.mubr.bf16.gmra.mrb[0].mxu0 %v628
      %v670 = vpop.f32.mrb[0].mxu0
      %v671 = vadd.f32 %v305, %v670
      %v672 = vpop.f32.mrb[0].mxu0
      %v673 = vadd.f32 %v309, %v672
      %v674 = vpop.f32.mrb[0].mxu0
      %v675 = vpop.f32.mrb[0].mxu0
      %676 = vdwg.mxu0
      %v680 = vunpack.c.l.b16 %v245
      %v681 = vunpack.c.h.b16 %v245
      %v682 = vunpack.c.l.b16 %v246
      %v683 = vunpack.c.h.b16 %v246
      %v684 = vunpack.c.l.b16 %v247
      %v685 = vunpack.c.h.b16 %v247
      %v686 = vpack.c.b16 %v682, %v680
      %v687 = vpack.c.b16 %v683, %v681
      %v688 = vpack.c.b16 %v684, %v684
      %v689 = vpack.c.b16 %v685, %v685
      %v693 = vsel %vm365, %v227, 0
      %v696 = vsel %vm369, %v688, 0
      %v699 = vsel %vm369, %v689, 0
      %701 = vmatprep.subr.bf16.mxu0 %v687
      %702 = vmatpush1.bf16.msra.mxu0 %v686
      %703 = vmatprep.subr.bf16.mxu0 %v699
      %704 = vmatpush1.bf16.msra.mxu0 %v696
      %705 = vmatprep.subr.bf16.mxu0 0
      %706 = vmatpush1.bf16.msra.mxu0 0
      %707 = vmatprep.subr.bf16.mxu0 0
      %708 = vmatpush1.bf16.msra.mxu0 0
      %709 = vmatprep.subr.bf16.mxu0 0
      %710 = vmatpush1.bf16.msra.mxu0 0
      %711 = vmatprep.subr.bf16.mxu0 0
      %712 = vmatpush1.bf16.msra.mxu0 0
      %713 = vmatprep.subr.bf16.mxu0 0
      %714 = vmatpush1.bf16.msra.mxu0 0
      %715 = vmatprep.subr.bf16.mxu0 0
      %716 = vmatpush1.bf16.msra.mxu0 0
      %717 = vmatprep.subr.bf16.mxu0 0
      %718 = vmatpush1.bf16.msra.mxu0 0
      %719 = vmatprep.subr.bf16.mxu0 0
      %720 = vmatpush1.bf16.msra.mxu0 0
      %721 = vmatprep.subr.bf16.mxu0 0
      %722 = vmatpush1.bf16.msra.mxu0 0
      %723 = vmatprep.subr.bf16.mxu0 0
      %724 = vmatpush1.bf16.msra.mxu0 0
      %725 = vmatprep.subr.bf16.mxu0 0
      %726 = vmatpush1.bf16.msra.mxu0 0
      %727 = vmatprep.subr.bf16.mxu0 0
      %728 = vmatpush1.bf16.msra.mxu0 0
      %729 = vmatprep.subr.bf16.mxu0 0
      %730 = vmatpush1.bf16.msra.mxu0 0
      %731 = vmatprep.subr.bf16.mxu0 0
      %732 = vmatpush1.bf16.msra.mxu0 0
      %733 = vmatprep.mubr.bf16.mxu0 0
      %734 = vmatmul.mubr.bf16.gmra.mrb[0].mxu0 %v693
      %v735 = vpop.f32.mrb[0].mxu0
      %v736 = vadd.f32 %v313, %v735
      %v737 = vpop.f32.mrb[0].mxu0
      %v738 = vadd.f32 %v317, %v737
      %v739 = vpop.f32.mrb[0].mxu0
      %v740 = vpop.f32.mrb[0].mxu0
      %741 = vdwg.mxu0
      %v745 = vunpack.c.l.b16 %v248
      %v746 = vunpack.c.h.b16 %v248
      %v747 = vunpack.c.l.b16 %v249
      %v748 = vunpack.c.h.b16 %v249
      %v749 = vunpack.c.l.b16 %v250
      %v750 = vunpack.c.h.b16 %v250
      %v751 = vpack.c.b16 %v747, %v745
      %v752 = vpack.c.b16 %v748, %v746
      %v753 = vpack.c.b16 %v749, %v749
      %v754 = vpack.c.b16 %v750, %v750
      %v758 = vsel %vm365, %v228, 0
      %v761 = vsel %vm369, %v753, 0
      %v764 = vsel %vm369, %v754, 0
      %766 = vmatprep.subr.bf16.mxu0 %v752
      %767 = vmatpush1.bf16.msra.mxu0 %v751
      %768 = vmatprep.subr.bf16.mxu0 %v764
      %769 = vmatpush1.bf16.msra.mxu0 %v761
      %770 = vmatprep.subr.bf16.mxu0 0
      %771 = vmatpush1.bf16.msra.mxu0 0
      %772 = vmatprep.subr.bf16.mxu0 0
      %773 = vmatpush1.bf16.msra.mxu0 0
      %774 = vmatprep.subr.bf16.mxu0 0
      %775 = vmatpush1.bf16.msra.mxu0 0
      %776 = vmatprep.subr.bf16.mxu0 0
      %777 = vmatpush1.bf16.msra.mxu0 0
      %778 = vmatprep.subr.bf16.mxu0 0
      %779 = vmatpush1.bf16.msra.mxu0 0
      %780 = vmatprep.subr.bf16.mxu0 0
      %781 = vmatpush1.bf16.msra.mxu0 0
      %782 = vmatprep.subr.bf16.mxu0 0
      %783 = vmatpush1.bf16.msra.mxu0 0
      %784 = vmatprep.subr.bf16.mxu0 0
      %785 = vmatpush1.bf16.msra.mxu0 0
      %786 = vmatprep.subr.bf16.mxu0 0
      %787 = vmatpush1.bf16.msra.mxu0 0
      %788 = vmatprep.subr.bf16.mxu0 0
      %789 = vmatpush1.bf16.msra.mxu0 0
      %790 = vmatprep.subr.bf16.mxu0 0
      %791 = vmatpush1.bf16.msra.mxu0 0
      %792 = vmatprep.subr.bf16.mxu0 0
      %793 = vmatpush1.bf16.msra.mxu0 0
      %794 = vmatprep.subr.bf16.mxu0 0
      %795 = vmatpush1.bf16.msra.mxu0 0
      %796 = vmatprep.subr.bf16.mxu0 0
      %797 = vmatpush1.bf16.msra.mxu0 0
      %798 = vmatprep.mubr.bf16.mxu0 0
      %799 = vmatmul.mubr.bf16.gmra.mrb[0].mxu0 %v758
      %v800 = vpop.f32.mrb[0].mxu0
      %v801 = vadd.f32 %v321, %v800
      %v802 = vpop.f32.mrb[0].mxu0
      %v803 = vadd.f32 %v325, %v802
      %v804 = vpop.f32.mrb[0].mxu0
      %v805 = vpop.f32.mrb[0].mxu0
      %806 = vdwg.mxu0
      %v810 = vunpack.c.l.b16 %v251
      %v811 = vunpack.c.h.b16 %v251
      %v812 = vunpack.c.l.b16 %v252
      %v813 = vunpack.c.h.b16 %v252
      %v814 = vunpack.c.l.b16 %v253
      %v815 = vunpack.c.h.b16 %v253
      %v816 = vpack.c.b16 %v812, %v810
      %v817 = vpack.c.b16 %v813, %v811
      %v818 = vpack.c.b16 %v814, %v814
      %v819 = vpack.c.b16 %v815, %v815
      %v823 = vsel %vm365, %v229, 0
      %v826 = vsel %vm369, %v818, 0
      %v829 = vsel %vm369, %v819, 0
      %831 = vmatprep.subr.bf16.mxu0 %v817
      %832 = vmatpush1.bf16.msra.mxu0 %v816
      %833 = vmatprep.subr.bf16.mxu0 %v829
      %834 = vmatpush1.bf16.msra.mxu0 %v826
      %835 = vmatprep.subr.bf16.mxu0 0
      %836 = vmatpush1.bf16.msra.mxu0 0
      %837 = vmatprep.subr.bf16.mxu0 0
      %838 = vmatpush1.bf16.msra.mxu0 0
      %839 = vmatprep.subr.bf16.mxu0 0
      %840 = vmatpush1.bf16.msra.mxu0 0
      %841 = vmatprep.subr.bf16.mxu0 0
      %842 = vmatpush1.bf16.msra.mxu0 0
      %843 = vmatprep.subr.bf16.mxu0 0
      %844 = vmatpush1.bf16.msra.mxu0 0
      %845 = vmatprep.subr.bf16.mxu0 0
      %846 = vmatpush1.bf16.msra.mxu0 0
      %847 = vmatprep.subr.bf16.mxu0 0
      %848 = vmatpush1.bf16.msra.mxu0 0
      %849 = vmatprep.subr.bf16.mxu0 0
      %850 = vmatpush1.bf16.msra.mxu0 0
      %851 = vmatprep.subr.bf16.mxu0 0
      %852 = vmatpush1.bf16.msra.mxu0 0
      %853 = vmatprep.subr.bf16.mxu0 0
      %854 = vmatpush1.bf16.msra.mxu0 0
      %855 = vmatprep.subr.bf16.mxu0 0
      %856 = vmatpush1.bf16.msra.mxu0 0
      %857 = vmatprep.subr.bf16.mxu0 0
      %858 = vmatpush1.bf16.msra.mxu0 0
      %859 = vmatprep.subr.bf16.mxu0 0
      %860 = vmatpush1.bf16.msra.mxu0 0
      %861 = vmatprep.subr.bf16.mxu0 0
      %862 = vmatpush1.bf16.msra.mxu0 0
      %863 = vmatprep.mubr.bf16.mxu0 0
      %864 = vmatmul.mubr.bf16.gmra.mrb[0].mxu0 %v823
      %v865 = vpop.f32.mrb[0].mxu0
      %v866 = vadd.f32 %v329, %v865
      %v867 = vpop.f32.mrb[0].mxu0
      %v868 = vadd.f32 %v333, %v867
      %v869 = vpop.f32.mrb[0].mxu0
      %v870 = vpop.f32.mrb[0].mxu0
      %871 = vdwg.mxu0
      %v872 = vxor.u32 %v411, 2147483648
      %v873 = vxor.u32 %v476, 2147483648
      %v874 = vxor.u32 %v541, 2147483648
      %v875 = vxor.u32 %v606, 2147483648
      %v876 = vxor.u32 %v671, 2147483648
      %v877 = vxor.u32 %v736, 2147483648
      %v878 = vxor.u32 %v801, 2147483648
      %v879 = vxor.u32 %v866, 2147483648
      %v880 = vmul.f32 %v872, 1.442695
      %v881 = vpow.pop %v880
      %v882 = vmul.f32 %v873, 1.442695
      %v883 = vpow.pop %v882
      %v884 = vmul.f32 %v874, 1.442695
      %v885 = vpow.pop %v884
      %v886 = vmul.f32 %v875, 1.442695
      %v887 = vpow.pop %v886
      %v888 = vmul.f32 %v876, 1.442695
      %v889 = vpow.pop %v888
      %v890 = vmul.f32 %v877, 1.442695
      %v891 = vpow.pop %v890
      %v892 = vmul.f32 %v878, 1.442695
      %v893 = vpow.pop %v892
      %v894 = vmul.f32 %v879, 1.442695
      %v895 = vpow.pop %v894
      %v896 = vadd.f32 %v881, 1.0
      %v897 = vadd.f32 %v883, 1.0
      %v898 = vadd.f32 %v885, 1.0
      %v899 = vadd.f32 %v887, 1.0
      %v900 = vadd.f32 %v889, 1.0
      %v901 = vadd.f32 %v891, 1.0
      %v902 = vadd.f32 %v893, 1.0
      %v903 = vadd.f32 %v895, 1.0
      %v904 = vrcp.pop %v896
      %v905 = vmul.f32 1.0, %v904
      %v906 = vrcp.pop %v897
      %v907 = vmul.f32 1.0, %v906
      %v908 = vrcp.pop %v898
      %v909 = vmul.f32 1.0, %v908
      %v910 = vrcp.pop %v899
      %v911 = vmul.f32 1.0, %v910
      %v912 = vrcp.pop %v900
      %v913 = vmul.f32 1.0, %v912
      %v914 = vrcp.pop %v901
      %v915 = vmul.f32 1.0, %v914
      %v916 = vrcp.pop %v902
      %v917 = vmul.f32 1.0, %v916
      %v918 = vrcp.pop %v903
      %v919 = vmul.f32 1.0, %v918
      %v920 = vtanh.pop %v413
      %v921 = vtanh.pop %v478
      %v922 = vtanh.pop %v543
      %v923 = vtanh.pop %v608
      %v924 = vtanh.pop %v673
      %v925 = vtanh.pop %v738
      %v926 = vtanh.pop %v803
      %v927 = vtanh.pop %v868
      %v928 = vmul.f32 %v905, %v920
      %v929 = vmul.f32 %v907, %v921
      %v930 = vmul.f32 %v909, %v922
      %v931 = vmul.f32 %v911, %v923
      %v932 = vmul.f32 %v913, %v924
      %v933 = vmul.f32 %v915, %v925
      %v934 = vmul.f32 %v917, %v926
      %v935 = vmul.f32 %v919, %v927
      %936 = vst [vmem:[%s219] sm:$0xf] %v928
      %937 = vst [vmem:[%s219 + $0x4] sm:$0xf] %v929
      %938 = vst [vmem:[%s219 + $0x8] sm:$0xf] %v930
      %939 = vst [vmem:[%s219 + $0xc] sm:$0xf] %v931
      %940 = vst [vmem:[%s219 + $0x10] sm:$0xf] %v932
      %941 = vst [vmem:[%s219 + $0x14] sm:$0xf] %v933
      %942 = vst [vmem:[%s219 + $0x18] sm:$0xf] %v934
      %943 = vst [vmem:[%s219 + $0x1c] sm:$0xf] %v935
      %s944 = smul.u32 8, %s14
      %p945 = scmp.lt.s32.totalorder %s944, 15
      %s946 = scalar_select %p945, %s944, 15
      %s947 = smul.addr %s946, 4
      %s948 = scalar_lea.vmem %s3, %s947
      // Predicated region
      $region33: #{_lambda_.94} parent=31 // pred_check
        %p949 = pneg %p110
      $region34: #{_lambda_.94} parent=31 // pred_check_branch
        %951 = sbr.rel (%p949) target = $region36
      $region35: #{_lambda_.94} parent=31 // pred_region
        %s952 = smul.u32 8, %s14
      $region36: #{_lambda_.94} parent=31 // pred_fallthru
        _
    $region32: #{_lambda_.94} parent=5 // pred_fallthru
      _
    %p953 = scmp.le.s32.totalorder 2, %s9
    // Predicated region
    $region37: #{_lambda_.94} parent=5 // pred_check
      %p954 = pneg %p953
    $region38: #{_lambda_.94} parent=5 // pred_check_branch
      %956 = sbr.rel (%p954) target = $region40
    $region39: #{_lambda_.94} parent=5 // pred_region
      %s957 = ssub.s32 %s9, 2
      // Predicated region
      $region41: #{_lambda_.94} parent=39 // pred_check
        %p958 = pneg %p116
      $region42: #{_lambda_.94} parent=39 // pred_check_branch
        %960 = sbr.rel (%p958) target = $region44
      $region43: #{_lambda_.94} parent=39 // pred_region
        %s961 = smul.u32 8, %s15
        %p962 = scmp.lt.s32.totalorder %s961, 15
        %s963 = scalar_select %p962, %s961, 15
        %s964 = smul.addr %s963, 4
        %s965 = scalar_lea.vmem %s3, %s964
      $region44: #{_lambda_.94} parent=39 // pred_fallthru
        _
    $region40: #{_lambda_.94} parent=5 // pred_fallthru
      _
  $region6: #{_lambda_.94} parent=0 // loop_footer
    %s13 = sadd.s32 1, %s9
  $region7: #{_lambda_.94} parent=0 // loop_footer_branch
    %8 = sbr.rel target = $region3
  $region8: #{_lambda_.94} parent=0 // loop_exit
    _

// kernel: _lambda_.106
$region0: #{_lambda_.106}
  #allocation0 [shape = 'u32[]', space=smem, size = 0x4, offset = 0x4, fixed_abs, tag = 'smem constant byte address 0x4 - core index']
  #allocation1 [shape = 'u32[144,128]{1,0:T(1,128)}', space=vmem, size = 0x12000, scoped, tag = 'internal scratch']
  #allocation2 [shape = 'f32[128,128]{1,0:T(8,128)}', space=vmem, size = 0x10000, scoped, tag = 'scratch operand']
  %s0 = inlined_call_operand.vmem [shape: bf16[128,32], index: 0, kind: input, shape index: {}]
  %s1 = inlined_call_operand.vmem [shape: bf16[32,128], index: 1, kind: input, shape index: {}]
  %s2 = inlined_call_operand.vmem [shape: f32[1,128], index: 2, kind: input, shape index: {}]
  %s3 = inlined_call_operand.vmem [shape: f32[128,128], index: 3, kind: output, shape index: {}]
  %s4 = sld [smem:[#allocation0]]
  $region30: #{_lambda_.106} parent=0
    _
  %s6 = ssub.s32 1, %s4
  %s7 = scalar_select 0, %s6, %s4
  // Predicated region
  $region2: #{_lambda_.106} parent=0 // pred_check
    _
  $region3: #{_lambda_.106} parent=0 // pred_check_branch
    %9 = sbr.rel (0) target = $region5
  $region4: #{_lambda_.106} parent=0 // pred_region
    _
  $region5: #{_lambda_.106} parent=0 // pred_fallthru
    _
  // Predicated region
  $region6: #{_lambda_.106} parent=0 // pred_check
    _
  $region7: #{_lambda_.106} parent=0 // pred_check_branch
    %11 = sbr.rel (0) target = $region9
  $region8: #{_lambda_.106} parent=0 // pred_region
    _
  $region9: #{_lambda_.106} parent=0 // pred_fallthru
    _
  // Predicated region
  $region10: #{_lambda_.106} parent=0 // pred_check
    _
  $region11: #{_lambda_.106} parent=0 // pred_check_branch
    %13 = sbr.rel (0) target = $region13
  $region12: #{_lambda_.106} parent=0 // pred_region
    _
  $region13: #{_lambda_.106} parent=0 // pred_fallthru
    _
  %p16 = scmp.eq.s32.totalorder 0, 0
  // Predicated region
  $region14: #{_lambda_.106} parent=0 // pred_check
    %p17 = pneg %p16
  $region15: #{_lambda_.106} parent=0 // pred_check_branch
    %19 = sbr.rel (%p17) target = $region17
  $region16: #{_lambda_.106} parent=0 // pred_region
    %20 = vst [vmem:[#allocation2] sm:$0xff] 0.0
    %21 = vst [vmem:[#allocation2 + $0x8] sm:$0xff] 0.0
    %22 = vst [vmem:[#allocation2 + $0x10] sm:$0xff] 0.0
    %23 = vst [vmem:[#allocation2 + $0x18] sm:$0xff] 0.0
    %24 = vst [vmem:[#allocation2 + $0x20] sm:$0xff] 0.0
    %25 = vst [vmem:[#allocation2 + $0x28] sm:$0xff] 0.0
    %26 = vst [vmem:[#allocation2 + $0x30] sm:$0xff] 0.0
    %27 = vst [vmem:[#allocation2 + $0x38] sm:$0xff] 0.0
    %28 = vst [vmem:[#allocation2 + $0x40] sm:$0xff] 0.0
    %29 = vst [vmem:[#allocation2 + $0x48] sm:$0xff] 0.0
    %30 = vst [vmem:[#allocation2 + $0x50] sm:$0xff] 0.0
    %31 = vst [vmem:[#allocation2 + $0x58] sm:$0xff] 0.0
    %32 = vst [vmem:[#allocation2 + $0x60] sm:$0xff] 0.0
    %33 = vst [vmem:[#allocation2 + $0x68] sm:$0xff] 0.0
    %34 = vst [vmem:[#allocation2 + $0x70] sm:$0xff] 0.0
    %35 = vst [vmem:[#allocation2 + $0x78] sm:$0xff] 0.0
  $region17: #{_lambda_.106} parent=0 // pred_fallthru
    _
  %v36 = vld [vmem:[%s0] sm:$0xf]
  %v37 = vld [vmem:[%s0 + $0x4] sm:$0xf]
  %v38 = vld [vmem:[%s0 + $0x8] sm:$0xf]
  %v39 = vld [vmem:[%s0 + $0xc] sm:$0xf]
  %v40 = vld [vmem:[%s0 + $0x10] sm:$0xf]
  %v41 = vld [vmem:[%s0 + $0x14] sm:$0xf]
  %v42 = vld [vmem:[%s0 + $0x18] sm:$0xf]
  %v43 = vld [vmem:[%s0 + $0x1c] sm:$0xf]
  %v44 = vld [vmem:[%s0 + $0x20] sm:$0xf]
  %v45 = vld [vmem:[%s0 + $0x24] sm:$0xf]
  %v46 = vld [vmem:[%s0 + $0x28] sm:$0xf]
  %v47 = vld [vmem:[%s0 + $0x2c] sm:$0xf]
  %v48 = vld [vmem:[%s0 + $0x30] sm:$0xf]
  %v49 = vld [vmem:[%s0 + $0x34] sm:$0xf]
  %v50 = vld [vmem:[%s0 + $0x38] sm:$0xf]
  %v51 = vld [vmem:[%s0 + $0x3c] sm:$0xf]
  %vm52 = vcmp.ge.bf16.partialorder %v36, 0
  %vm53 = vcmp.ge.bf16.partialorder %v37, 0
  %vm54 = vcmp.ge.bf16.partialorder %v38, 0
  %vm55 = vcmp.ge.bf16.partialorder %v39, 0
  %vm56 = vcmp.ge.bf16.partialorder %v40, 0
  %vm57 = vcmp.ge.bf16.partialorder %v41, 0
  %vm58 = vcmp.ge.bf16.partialorder %v42, 0
  %vm59 = vcmp.ge.bf16.partialorder %v43, 0
  %vm60 = vcmp.ge.bf16.partialorder %v44, 0
  %vm61 = vcmp.ge.bf16.partialorder %v45, 0
  %vm62 = vcmp.ge.bf16.partialorder %v46, 0
  %vm63 = vcmp.ge.bf16.partialorder %v47, 0
  %vm64 = vcmp.ge.bf16.partialorder %v48, 0
  %vm65 = vcmp.ge.bf16.partialorder %v49, 0
  %vm66 = vcmp.ge.bf16.partialorder %v50, 0
  %vm67 = vcmp.ge.bf16.partialorder %v51, 0
  %v68 = vmul.bf16 %v36, 1045249613
  %v69 = vmul.bf16 %v37, 1045249613
  %v70 = vmul.bf16 %v38, 1045249613
  %v71 = vmul.bf16 %v39, 1045249613
  %v72 = vmul.bf16 %v40, 1045249613
  %v73 = vmul.bf16 %v41, 1045249613
  %v74 = vmul.bf16 %v42, 1045249613
  %v75 = vmul.bf16 %v43, 1045249613
  %v76 = vmul.bf16 %v44, 1045249613
  %v77 = vmul.bf16 %v45, 1045249613
  %v78 = vmul.bf16 %v46, 1045249613
  %v79 = vmul.bf16 %v47, 1045249613
  %v80 = vmul.bf16 %v48, 1045249613
  %v81 = vmul.bf16 %v49, 1045249613
  %v82 = vmul.bf16 %v50, 1045249613
  %v83 = vmul.bf16 %v51, 1045249613
  %v84 = vsel %vm52, %v36, %v68
  %v85 = vsel %vm53, %v37, %v69
  %v86 = vsel %vm54, %v38, %v70
  %v87 = vsel %vm55, %v39, %v71
  %v88 = vsel %vm56, %v40, %v72
  %v89 = vsel %vm57, %v41, %v73
  %v90 = vsel %vm58, %v42, %v74
  %v91 = vsel %vm59, %v43, %v75
  %v92 = vsel %vm60, %v44, %v76
  %v93 = vsel %vm61, %v45, %v77
  %v94 = vsel %vm62, %v46, %v78
  %v95 = vsel %vm63, %v47, %v79
  %v96 = vsel %vm64, %v48, %v80
  %v97 = vsel %vm65, %v49, %v81
  %v98 = vsel %vm66, %v50, %v82
  %v99 = vsel %vm67, %v51, %v83
  %v100 = vld [vmem:[#allocation2] sm:$0xff]
  %v101 = vld [vmem:[#allocation2 + $0x8] sm:$0xff]
  %v102 = vld [vmem:[#allocation2 + $0x10] sm:$0xff]
  %v103 = vld [vmem:[#allocation2 + $0x18] sm:$0xff]
  %v104 = vld [vmem:[#allocation2 + $0x20] sm:$0xff]
  %v105 = vld [vmem:[#allocation2 + $0x28] sm:$0xff]
  %v106 = vld [vmem:[#allocation2 + $0x30] sm:$0xff]
  %v107 = vld [vmem:[#allocation2 + $0x38] sm:$0xff]
  %v108 = vld [vmem:[#allocation2 + $0x40] sm:$0xff]
  %v109 = vld [vmem:[#allocation2 + $0x48] sm:$0xff]
  %v110 = vld [vmem:[#allocation2 + $0x50] sm:$0xff]
  %v111 = vld [vmem:[#allocation2 + $0x58] sm:$0xff]
  %v112 = vld [vmem:[#allocation2 + $0x60] sm:$0xff]
  %v113 = vld [vmem:[#allocation2 + $0x68] sm:$0xff]
  %v114 = vld [vmem:[#allocation2 + $0x70] sm:$0xff]
  %v115 = vld [vmem:[#allocation2 + $0x78] sm:$0xff]
  %v116 = vld [vmem:[%s1] sm:$0xf]
  %v117 = vld [vmem:[%s1 + $0x4] sm:$0xf]
  %v118 = vld [vmem:[%s1 + $0x8] sm:$0xf]
  %v119 = vld [vmem:[%s1 + $0xc] sm:$0xf]
  %v136 = vunpack.c.l.b16 %v84
  %v137 = vunpack.c.l.b16 %v85
  %v138 = vunpack.c.l.b16 %v86
  %v139 = vunpack.c.l.b16 %v87
  %v140 = vunpack.c.l.b16 %v88
  %v141 = vunpack.c.l.b16 %v89
  %v142 = vunpack.c.l.b16 %v90
  %v143 = vunpack.c.l.b16 %v91
  %v144 = vunpack.c.l.b16 %v92
  %v145 = vunpack.c.l.b16 %v93
  %v146 = vunpack.c.l.b16 %v94
  %v147 = vunpack.c.l.b16 %v95
  %v148 = vunpack.c.l.b16 %v96
  %v149 = vunpack.c.l.b16 %v97
  %v150 = vunpack.c.l.b16 %v98
  %v151 = vunpack.c.l.b16 %v99
  %v152 = vpack.c.b16 %v137, %v136
  %v153 = vpack.c.b16 %v139, %v138
  %v154 = vpack.c.b16 %v141, %v140
  %v155 = vpack.c.b16 %v143, %v142
  %v156 = vpack.c.b16 %v145, %v144
  %v157 = vpack.c.b16 %v147, %v146
  %v158 = vpack.c.b16 %v149, %v148
  %v159 = vpack.c.b16 %v151, %v150
  %v164 = vunpack.c.l.b16 %v116
  %v165 = vunpack.c.l.b16 %v117
  %v166 = vunpack.c.l.b16 %v118
  %v167 = vunpack.c.l.b16 %v119
  %v168 = vpack.c.b16 %v165, %v164
  %v169 = vpack.c.b16 %v167, %v166
  %vm172 = vcmask 261120
  %v174 = vsel %vm172, %v152, 0
  %v177 = vsel %vm172, %v153, 0
  %v180 = vsel %vm172, %v154, 0
  %v183 = vsel %vm172, %v155, 0
  %v186 = vsel %vm172, %v156, 0
  %v189 = vsel %vm172, %v157, 0
  %v192 = vsel %vm172, %v158, 0
  %v195 = vsel %vm172, %v159, 0
  %197 = vmatprep.subr.bf16.mxu0 0
  %198 = vmatpush1.bf16.msra.mxu0 %v168
  %199 = vmatprep.subr.bf16.mxu0 0
  %200 = vmatpush1.bf16.msra.mxu0 %v169
  %201 = vmatprep.subr.bf16.mxu0 0
  %202 = vmatpush1.bf16.msra.mxu0 0
  %203 = vmatprep.subr.bf16.mxu0 0
  %204 = vmatpush1.bf16.msra.mxu0 0
  %205 = vmatprep.subr.bf16.mxu0 0
  %206 = vmatpush1.bf16.msra.mxu0 0
  %207 = vmatprep.subr.bf16.mxu0 0
  %208 = vmatpush1.bf16.msra.mxu0 0
  %209 = vmatprep.subr.bf16.mxu0 0
  %210 = vmatpush1.bf16.msra.mxu0 0
  %211 = vmatprep.subr.bf16.mxu0 0
  %212 = vmatpush1.bf16.msra.mxu0 0
  %213 = vmatprep.subr.bf16.mxu0 0
  %214 = vmatpush1.bf16.msra.mxu0 0
  %215 = vmatprep.subr.bf16.mxu0 0
  %216 = vmatpush1.bf16.msra.mxu0 0
  %217 = vmatprep.subr.bf16.mxu0 0
  %218 = vmatpush1.bf16.msra.mxu0 0
  %219 = vmatprep.subr.bf16.mxu0 0
  %220 = vmatpush1.bf16.msra.mxu0 0
  %221 = vmatprep.subr.bf16.mxu0 0
  %222 = vmatpush1.bf16.msra.mxu0 0
  %223 = vmatprep.subr.bf16.mxu0 0
  %224 = vmatpush1.bf16.msra.mxu0 0
  %225 = vmatprep.subr.bf16.mxu0 0
  %226 = vmatpush1.bf16.msra.mxu0 0
  %227 = vmatprep.subr.bf16.mxu0 0
  %228 = vmatpush1.bf16.msra.mxu0 0
  %229 = vmatprep.mubr.bf16.mxu0 0
  %230 = vmatmul.mubr.bf16.gmra.mrb[0].mxu0 %v174
  %v231 = vpop.f32.mrb[0].mxu0
  %v232 = vadd.f32 0.0, %v231
  %v233 = vpop.f32.mrb[0].mxu0
  %v234 = vpop.f32.mrb[0].mxu0
  %v235 = vadd.f32 0.0, %v234
  %v236 = vpop.f32.mrb[0].mxu0
  %237 = vmatprep.mubr.bf16.mxu0 0
  %238 = vmatmul.mubr.bf16.gmra.mrb[0].mxu0 %v177
  %v239 = vpop.f32.mrb[0].mxu0
  %v240 = vadd.f32 0.0, %v239
  %v241 = vpop.f32.mrb[0].mxu0
  %v242 = vpop.f32.mrb[0].mxu0
  %v243 = vadd.f32 0.0, %v242
  %v244 = vpop.f32.mrb[0].mxu0
  %245 = vmatprep.mubr.bf16.mxu0 0
  %246 = vmatmul.mubr.bf16.gmra.mrb[0].mxu0 %v180
  %v247 = vpop.f32.mrb[0].mxu0
  %v248 = vadd.f32 0.0, %v247
  %v249 = vpop.f32.mrb[0].mxu0
  %v250 = vpop.f32.mrb[0].mxu0
  %v251 = vadd.f32 0.0, %v250
  %v252 = vpop.f32.mrb[0].mxu0
  %253 = vmatprep.mubr.bf16.mxu0 0
  %254 = vmatmul.mubr.bf16.gmra.mrb[0].mxu0 %v183
  %v255 = vpop.f32.mrb[0].mxu0
  %v256 = vadd.f32 0.0, %v255
  %v257 = vpop.f32.mrb[0].mxu0
  %v258 = vpop.f32.mrb[0].mxu0
  %v259 = vadd.f32 0.0, %v258
  %v260 = vpop.f32.mrb[0].mxu0
  %261 = vmatprep.mubr.bf16.mxu0 0
  %262 = vmatmul.mubr.bf16.gmra.mrb[0].mxu0 %v186
  %v263 = vpop.f32.mrb[0].mxu0
  %v264 = vadd.f32 0.0, %v263
  %v265 = vpop.f32.mrb[0].mxu0
  %v266 = vpop.f32.mrb[0].mxu0
  %v267 = vadd.f32 0.0, %v266
  %v268 = vpop.f32.mrb[0].mxu0
  %269 = vmatprep.mubr.bf16.mxu0 0
  %270 = vmatmul.mubr.bf16.gmra.mrb[0].mxu0 %v189
  %v271 = vpop.f32.mrb[0].mxu0
  %v272 = vadd.f32 0.0, %v271
  %v273 = vpop.f32.mrb[0].mxu0
  %v274 = vpop.f32.mrb[0].mxu0
  %v275 = vadd.f32 0.0, %v274
  %v276 = vpop.f32.mrb[0].mxu0
  %277 = vmatprep.mubr.bf16.mxu0 0
  %278 = vmatmul.mubr.bf16.gmra.mrb[0].mxu0 %v192
  %v279 = vpop.f32.mrb[0].mxu0
  %v280 = vadd.f32 0.0, %v279
  %v281 = vpop.f32.mrb[0].mxu0
  %v282 = vpop.f32.mrb[0].mxu0
  %v283 = vadd.f32 0.0, %v282
  %v284 = vpop.f32.mrb[0].mxu0
  %285 = vmatprep.mubr.bf16.mxu0 0
  %286 = vmatmul.mubr.bf16.gmra.mrb[0].mxu0 %v195
  %v287 = vpop.f32.mrb[0].mxu0
  %v288 = vadd.f32 0.0, %v287
  %v289 = vpop.f32.mrb[0].mxu0
  %v290 = vpop.f32.mrb[0].mxu0
  %v291 = vadd.f32 0.0, %v290
  %v292 = vpop.f32.mrb[0].mxu0
  %293 = vdwg.mxu0
  %v294 = vadd.f32 %v100, %v232
  %v295 = vadd.f32 %v101, %v235
  %v296 = vadd.f32 %v102, %v240
  %v297 = vadd.f32 %v103, %v243
  %v298 = vadd.f32 %v104, %v248
  %v299 = vadd.f32 %v105, %v251
  %v300 = vadd.f32 %v106, %v256
  %v301 = vadd.f32 %v107, %v259
  %v302 = vadd.f32 %v108, %v264
  %v303 = vadd.f32 %v109, %v267
  %v304 = vadd.f32 %v110, %v272
  %v305 = vadd.f32 %v111, %v275
  %v306 = vadd.f32 %v112, %v280
  %v307 = vadd.f32 %v113, %v283
  %v308 = vadd.f32 %v114, %v288
  %v309 = vadd.f32 %v115, %v291
  %310 = vst [vmem:[#allocation2] sm:$0xff] %v294
  %311 = vst [vmem:[#allocation2 + $0x8] sm:$0xff] %v295
  %312 = vst [vmem:[#allocation2 + $0x10] sm:$0xff] %v296
  %313 = vst [vmem:[#allocation2 + $0x18] sm:$0xff] %v297
  %314 = vst [vmem:[#allocation2 + $0x20] sm:$0xff] %v298
  %315 = vst [vmem:[#allocation2 + $0x28] sm:$0xff] %v299
  %316 = vst [vmem:[#allocation2 + $0x30] sm:$0xff] %v300
  %317 = vst [vmem:[#allocation2 + $0x38] sm:$0xff] %v301
  %318 = vst [vmem:[#allocation2 + $0x40] sm:$0xff] %v302
  %319 = vst [vmem:[#allocation2 + $0x48] sm:$0xff] %v303
  %320 = vst [vmem:[#allocation2 + $0x50] sm:$0xff] %v304
  %321 = vst [vmem:[#allocation2 + $0x58] sm:$0xff] %v305
  %322 = vst [vmem:[#allocation2 + $0x60] sm:$0xff] %v306
  %323 = vst [vmem:[#allocation2 + $0x68] sm:$0xff] %v307
  %324 = vst [vmem:[#allocation2 + $0x70] sm:$0xff] %v308
  %325 = vst [vmem:[#allocation2 + $0x78] sm:$0xff] %v309
  // Predicated region
  $region18: #{_lambda_.106} parent=0 // pred_check
    %p326 = pneg %p16
  $region19: #{_lambda_.106} parent=0 // pred_check_branch
    %328 = sbr.rel (%p326) target = $region21
  $region20: #{_lambda_.106} parent=0 // pred_region
    %v329 = vld [vmem:[#allocation2] sm:$0xff]
    %v330 = vld [vmem:[#allocation2 + $0x8] sm:$0xff]
    %v331 = vld [vmem:[#allocation2 + $0x10] sm:$0xff]
    %v332 = vld [vmem:[#allocation2 + $0x18] sm:$0xff]
    %v333 = vld [vmem:[#allocation2 + $0x20] sm:$0xff]
    %v334 = vld [vmem:[#allocation2 + $0x28] sm:$0xff]
    %v335 = vld [vmem:[#allocation2 + $0x30] sm:$0xff]
    %v336 = vld [vmem:[#allocation2 + $0x38] sm:$0xff]
    %v337 = vld [vmem:[#allocation2 + $0x40] sm:$0xff]
    %v338 = vld [vmem:[#allocation2 + $0x48] sm:$0xff]
    %v339 = vld [vmem:[#allocation2 + $0x50] sm:$0xff]
    %v340 = vld [vmem:[#allocation2 + $0x58] sm:$0xff]
    %v341 = vld [vmem:[#allocation2 + $0x60] sm:$0xff]
    %v342 = vld [vmem:[#allocation2 + $0x68] sm:$0xff]
    %v343 = vld [vmem:[#allocation2 + $0x70] sm:$0xff]
    %v344 = vld [vmem:[#allocation2 + $0x78] sm:$0xff]
    %v345 = vld [vmem:[%s2] sm:$0x1]
    %v347 = vlaneseq
    %v348 = vshrl.u32 %v347, 7
    %v349 = vsub.s32 0, %v348
    %v350 = vrot.slane %v345, %v349
    %v352 = vadd.f32 %v329, %v350
    %v353 = vadd.f32 %v330, %v350
    %v354 = vadd.f32 %v331, %v350
    %v355 = vadd.f32 %v332, %v350
    %v356 = vadd.f32 %v333, %v350
    %v357 = vadd.f32 %v334, %v350
    %v358 = vadd.f32 %v335, %v350
    %v359 = vadd.f32 %v336, %v350
    %v360 = vadd.f32 %v337, %v350
    %v361 = vadd.f32 %v338, %v350
    %v362 = vadd.f32 %v339, %v350
    %v363 = vadd.f32 %v340, %v350
    %v364 = vadd.f32 %v341, %v350
    %v365 = vadd.f32 %v342, %v350
    %v366 = vadd.f32 %v343, %v350
    %v367 = vadd.f32 %v344, %v350
    %368 = vst [vmem:[%s3] sm:$0xff] %v352
    %369 = vst [vmem:[%s3 + $0x8] sm:$0xff] %v353
    %370 = vst [vmem:[%s3 + $0x10] sm:$0xff] %v354
    %371 = vst [vmem:[%s3 + $0x18] sm:$0xff] %v355
    %372 = vst [vmem:[%s3 + $0x20] sm:$0xff] %v356
    %373 = vst [vmem:[%s3 + $0x28] sm:$0xff] %v357
    %374 = vst [vmem:[%s3 + $0x30] sm:$0xff] %v358
    %375 = vst [vmem:[%s3 + $0x38] sm:$0xff] %v359
    %376 = vst [vmem:[%s3 + $0x40] sm:$0xff] %v360
    %377 = vst [vmem:[%s3 + $0x48] sm:$0xff] %v361
    %378 = vst [vmem:[%s3 + $0x50] sm:$0xff] %v362
    %379 = vst [vmem:[%s3 + $0x58] sm:$0xff] %v363
    %380 = vst [vmem:[%s3 + $0x60] sm:$0xff] %v364
    %381 = vst [vmem:[%s3 + $0x68] sm:$0xff] %v365
    %382 = vst [vmem:[%s3 + $0x70] sm:$0xff] %v366
    %383 = vst [vmem:[%s3 + $0x78] sm:$0xff] %v367
  $region21: #{_lambda_.106} parent=0 // pred_fallthru
    _
  // Predicated region
  $region22: #{_lambda_.106} parent=0 // pred_check
    _
  $region23: #{_lambda_.106} parent=0 // pred_check_branch
    %385 = sbr.rel (0) target = $region25
  $region24: #{_lambda_.106} parent=0 // pred_region
    _
  $region25: #{_lambda_.106} parent=0 // pred_fallthru
    _
  // Predicated region
  $region26: #{_lambda_.106} parent=0 // pred_check
    _
  $region27: #{_lambda_.106} parent=0 // pred_check_branch
    %387 = sbr.rel (0) target = $region29
  $region28: #{_lambda_.106} parent=0 // pred_region
    _
  $region29: #{_lambda_.106} parent=0 // pred_fallthru
    _

// kernel: _lambda_.107
$region0: #{_lambda_.107}
  #allocation0 [shape = 'u32[]', space=smem, size = 0x4, offset = 0x4, fixed_abs, tag = 'smem constant byte address 0x4 - core index']
  #allocation1 [shape = 'u32[144,128]{1,0:T(1,128)}', space=vmem, size = 0x12000, scoped, tag = 'internal scratch']
  #allocation2 [shape = 'f32[128,128]{1,0:T(8,128)}', space=vmem, size = 0x10000, scoped, tag = 'scratch operand']
  %s0 = inlined_call_operand.vmem [shape: bf16[128,24], index: 0, kind: input, shape index: {}]
  %s1 = inlined_call_operand.vmem [shape: bf16[24,128], index: 1, kind: input, shape index: {}]
  %s2 = inlined_call_operand.vmem [shape: f32[1,128], index: 2, kind: input, shape index: {}]
  %s3 = inlined_call_operand.vmem [shape: f32[128,128], index: 3, kind: output, shape index: {}]
  %s4 = sld [smem:[#allocation0]]
  $region30: #{_lambda_.107} parent=0
    _
  %s6 = ssub.s32 1, %s4
  %s7 = scalar_select 0, %s6, %s4
  // Predicated region
  $region2: #{_lambda_.107} parent=0 // pred_check
    _
  $region3: #{_lambda_.107} parent=0 // pred_check_branch
    %9 = sbr.rel (0) target = $region5
  $region4: #{_lambda_.107} parent=0 // pred_region
    _
  $region5: #{_lambda_.107} parent=0 // pred_fallthru
    _
  // Predicated region
  $region6: #{_lambda_.107} parent=0 // pred_check
    _
  $region7: #{_lambda_.107} parent=0 // pred_check_branch
    %11 = sbr.rel (0) target = $region9
  $region8: #{_lambda_.107} parent=0 // pred_region
    _
  $region9: #{_lambda_.107} parent=0 // pred_fallthru
    _
  // Predicated region
  $region10: #{_lambda_.107} parent=0 // pred_check
    _
  $region11: #{_lambda_.107} parent=0 // pred_check_branch
    %13 = sbr.rel (0) target = $region13
  $region12: #{_lambda_.107} parent=0 // pred_region
    _
  $region13: #{_lambda_.107} parent=0 // pred_fallthru
    _
  %p16 = scmp.eq.s32.totalorder 0, 0
  // Predicated region
  $region14: #{_lambda_.107} parent=0 // pred_check
    %p17 = pneg %p16
  $region15: #{_lambda_.107} parent=0 // pred_check_branch
    %19 = sbr.rel (%p17) target = $region17
  $region16: #{_lambda_.107} parent=0 // pred_region
    %20 = vst [vmem:[#allocation2] sm:$0xff] 0.0
    %21 = vst [vmem:[#allocation2 + $0x8] sm:$0xff] 0.0
    %22 = vst [vmem:[#allocation2 + $0x10] sm:$0xff] 0.0
    %23 = vst [vmem:[#allocation2 + $0x18] sm:$0xff] 0.0
    %24 = vst [vmem:[#allocation2 + $0x20] sm:$0xff] 0.0
    %25 = vst [vmem:[#allocation2 + $0x28] sm:$0xff] 0.0
    %26 = vst [vmem:[#allocation2 + $0x30] sm:$0xff] 0.0
    %27 = vst [vmem:[#allocation2 + $0x38] sm:$0xff] 0.0
    %28 = vst [vmem:[#allocation2 + $0x40] sm:$0xff] 0.0
    %29 = vst [vmem:[#allocation2 + $0x48] sm:$0xff] 0.0
    %30 = vst [vmem:[#allocation2 + $0x50] sm:$0xff] 0.0
    %31 = vst [vmem:[#allocation2 + $0x58] sm:$0xff] 0.0
    %32 = vst [vmem:[#allocation2 + $0x60] sm:$0xff] 0.0
    %33 = vst [vmem:[#allocation2 + $0x68] sm:$0xff] 0.0
    %34 = vst [vmem:[#allocation2 + $0x70] sm:$0xff] 0.0
    %35 = vst [vmem:[#allocation2 + $0x78] sm:$0xff] 0.0
  $region17: #{_lambda_.107} parent=0 // pred_fallthru
    _
  %v36 = vld [vmem:[%s0] sm:$0xf]
  %v37 = vld [vmem:[%s0 + $0x4] sm:$0xf]
  %v38 = vld [vmem:[%s0 + $0x8] sm:$0xf]
  %v39 = vld [vmem:[%s0 + $0xc] sm:$0xf]
  %v40 = vld [vmem:[%s0 + $0x10] sm:$0xf]
  %v41 = vld [vmem:[%s0 + $0x14] sm:$0xf]
  %v42 = vld [vmem:[%s0 + $0x18] sm:$0xf]
  %v43 = vld [vmem:[%s0 + $0x1c] sm:$0xf]
  %v44 = vld [vmem:[%s0 + $0x20] sm:$0xf]
  %v45 = vld [vmem:[%s0 + $0x24] sm:$0xf]
  %v46 = vld [vmem:[%s0 + $0x28] sm:$0xf]
  %v47 = vld [vmem:[%s0 + $0x2c] sm:$0xf]
  %v48 = vld [vmem:[%s0 + $0x30] sm:$0xf]
  %v49 = vld [vmem:[%s0 + $0x34] sm:$0xf]
  %v50 = vld [vmem:[%s0 + $0x38] sm:$0xf]
  %v51 = vld [vmem:[%s0 + $0x3c] sm:$0xf]
  %vm52 = vcmp.ge.bf16.partialorder %v36, 0
  %vm53 = vcmp.ge.bf16.partialorder %v37, 0
  %vm54 = vcmp.ge.bf16.partialorder %v38, 0
  %vm55 = vcmp.ge.bf16.partialorder %v39, 0
  %vm56 = vcmp.ge.bf16.partialorder %v40, 0
  %vm57 = vcmp.ge.bf16.partialorder %v41, 0
  %vm58 = vcmp.ge.bf16.partialorder %v42, 0
  %vm59 = vcmp.ge.bf16.partialorder %v43, 0
  %vm60 = vcmp.ge.bf16.partialorder %v44, 0
  %vm61 = vcmp.ge.bf16.partialorder %v45, 0
  %vm62 = vcmp.ge.bf16.partialorder %v46, 0
  %vm63 = vcmp.ge.bf16.partialorder %v47, 0
  %vm64 = vcmp.ge.bf16.partialorder %v48, 0
  %vm65 = vcmp.ge.bf16.partialorder %v49, 0
  %vm66 = vcmp.ge.bf16.partialorder %v50, 0
  %vm67 = vcmp.ge.bf16.partialorder %v51, 0
  %v68 = vmul.bf16 %v36, 1045249613
  %v69 = vmul.bf16 %v37, 1045249613
  %v70 = vmul.bf16 %v38, 1045249613
  %v71 = vmul.bf16 %v39, 1045249613
  %v72 = vmul.bf16 %v40, 1045249613
  %v73 = vmul.bf16 %v41, 1045249613
  %v74 = vmul.bf16 %v42, 1045249613
  %v75 = vmul.bf16 %v43, 1045249613
  %v76 = vmul.bf16 %v44, 1045249613
  %v77 = vmul.bf16 %v45, 1045249613
  %v78 = vmul.bf16 %v46, 1045249613
  %v79 = vmul.bf16 %v47, 1045249613
  %v80 = vmul.bf16 %v48, 1045249613
  %v81 = vmul.bf16 %v49, 1045249613
  %v82 = vmul.bf16 %v50, 1045249613
  %v83 = vmul.bf16 %v51, 1045249613
  %v84 = vsel %vm52, %v36, %v68
  %v85 = vsel %vm53, %v37, %v69
  %v86 = vsel %vm54, %v38, %v70
  %v87 = vsel %vm55, %v39, %v71
  %v88 = vsel %vm56, %v40, %v72
  %v89 = vsel %vm57, %v41, %v73
  %v90 = vsel %vm58, %v42, %v74
  %v91 = vsel %vm59, %v43, %v75
  %v92 = vsel %vm60, %v44, %v76
  %v93 = vsel %vm61, %v45, %v77
  %v94 = vsel %vm62, %v46, %v78
  %v95 = vsel %vm63, %v47, %v79
  %v96 = vsel %vm64, %v48, %v80
  %v97 = vsel %vm65, %v49, %v81
  %v98 = vsel %vm66, %v50, %v82
  %v99 = vsel %vm67, %v51, %v83
  %v100 = vld [vmem:[#allocation2] sm:$0xff]
  %v101 = vld [vmem:[#allocation2 + $0x8] sm:$0xff]
  %v102 = vld [vmem:[#allocation2 + $0x10] sm:$0xff]
  %v103 = vld [vmem:[#allocation2 + $0x18] sm:$0xff]
  %v104 = vld [vmem:[#allocation2 + $0x20] sm:$0xff]
  %v105 = vld [vmem:[#allocation2 + $0x28] sm:$0xff]
  %v106 = vld [vmem:[#allocation2 + $0x30] sm:$0xff]
  %v107 = vld [vmem:[#allocation2 + $0x38] sm:$0xff]
  %v108 = vld [vmem:[#allocation2 + $0x40] sm:$0xff]
  %v109 = vld [vmem:[#allocation2 + $0x48] sm:$0xff]
  %v110 = vld [vmem:[#allocation2 + $0x50] sm:$0xff]
  %v111 = vld [vmem:[#allocation2 + $0x58] sm:$0xff]
  %v112 = vld [vmem:[#allocation2 + $0x60] sm:$0xff]
  %v113 = vld [vmem:[#allocation2 + $0x68] sm:$0xff]
  %v114 = vld [vmem:[#allocation2 + $0x70] sm:$0xff]
  %v115 = vld [vmem:[#allocation2 + $0x78] sm:$0xff]
  %v116 = vld [vmem:[%s1] sm:$0xf]
  %v117 = vld [vmem:[%s1 + $0x4] sm:$0xf]
  %v118 = vld [vmem:[%s1 + $0x8] sm:$0xf]
  %v135 = vunpack.c.l.b16 %v84
  %v136 = vunpack.c.l.b16 %v85
  %v137 = vunpack.c.l.b16 %v86
  %v138 = vunpack.c.l.b16 %v87
  %v139 = vunpack.c.l.b16 %v88
  %v140 = vunpack.c.l.b16 %v89
  %v141 = vunpack.c.l.b16 %v90
  %v142 = vunpack.c.l.b16 %v91
  %v143 = vunpack.c.l.b16 %v92
  %v144 = vunpack.c.l.b16 %v93
  %v145 = vunpack.c.l.b16 %v94
  %v146 = vunpack.c.l.b16 %v95
  %v147 = vunpack.c.l.b16 %v96
  %v148 = vunpack.c.l.b16 %v97
  %v149 = vunpack.c.l.b16 %v98
  %v150 = vunpack.c.l.b16 %v99
  %v151 = vpack.c.b16 %v136, %v135
  %v152 = vpack.c.b16 %v138, %v137
  %v153 = vpack.c.b16 %v140, %v139
  %v154 = vpack.c.b16 %v142, %v141
  %v155 = vpack.c.b16 %v144, %v143
  %v156 = vpack.c.b16 %v146, %v145
  %v157 = vpack.c.b16 %v148, %v147
  %v158 = vpack.c.b16 %v150, %v149
  %v162 = vunpack.c.l.b16 %v116
  %v163 = vunpack.c.l.b16 %v117
  %v164 = vunpack.c.l.b16 %v118
  %v165 = vpack.c.b16 %v163, %v162
  %v166 = vpack.c.b16 %v164, %v164
  %vm168 = vcmask 195584
  %v170 = vsel %vm168, %v151, 0
  %v173 = vsel %vm168, %v152, 0
  %v176 = vsel %vm168, %v153, 0
  %v179 = vsel %vm168, %v154, 0
  %v182 = vsel %vm168, %v155, 0
  %v185 = vsel %vm168, %v156, 0
  %v188 = vsel %vm168, %v157, 0
  %v191 = vsel %vm168, %v158, 0
  %vm193 = vcmask 1043456
  %v195 = vsel %vm193, %v166, 0
  %197 = vmatprep.subr.bf16.mxu0 0
  %198 = vmatpush1.bf16.msra.mxu0 %v165
  %199 = vmatprep.subr.bf16.mxu0 0
  %200 = vmatpush1.bf16.msra.mxu0 %v195
  %201 = vmatprep.subr.bf16.mxu0 0
  %202 = vmatpush1.bf16.msra.mxu0 0
  %203 = vmatprep.subr.bf16.mxu0 0
  %204 = vmatpush1.bf16.msra.mxu0 0
  %205 = vmatprep.subr.bf16.mxu0 0
  %206 = vmatpush1.bf16.msra.mxu0 0
  %207 = vmatprep.subr.bf16.mxu0 0
  %208 = vmatpush1.bf16.msra.mxu0 0
  %209 = vmatprep.subr.bf16.mxu0 0
  %210 = vmatpush1.bf16.msra.mxu0 0
  %211 = vmatprep.subr.bf16.mxu0 0
  %212 = vmatpush1.bf16.msra.mxu0 0
  %213 = vmatprep.subr.bf16.mxu0 0
  %214 = vmatpush1.bf16.msra.mxu0 0
  %215 = vmatprep.subr.bf16.mxu0 0
  %216 = vmatpush1.bf16.msra.mxu0 0
  %217 = vmatprep.subr.bf16.mxu0 0
  %218 = vmatpush1.bf16.msra.mxu0 0
  %219 = vmatprep.subr.bf16.mxu0 0
  %220 = vmatpush1.bf16.msra.mxu0 0
  %221 = vmatprep.subr.bf16.mxu0 0
  %222 = vmatpush1.bf16.msra.mxu0 0
  %223 = vmatprep.subr.bf16.mxu0 0
  %224 = vmatpush1.bf16.msra.mxu0 0
  %225 = vmatprep.subr.bf16.mxu0 0
  %226 = vmatpush1.bf16.msra.mxu0 0
  %227 = vmatprep.subr.bf16.mxu0 0
  %228 = vmatpush1.bf16.msra.mxu0 0
  %229 = vmatprep.mubr.bf16.mxu0 0
  %230 = vmatmul.mubr.bf16.gmra.mrb[0].mxu0 %v170
  %v231 = vpop.f32.mrb[0].mxu0
  %v232 = vadd.f32 0.0, %v231
  %v233 = vpop.f32.mrb[0].mxu0
  %v234 = vpop.f32.mrb[0].mxu0
  %v235 = vadd.f32 0.0, %v234
  %v236 = vpop.f32.mrb[0].mxu0
  %237 = vmatprep.mubr.bf16.mxu0 0
  %238 = vmatmul.mubr.bf16.gmra.mrb[0].mxu0 %v173
  %v239 = vpop.f32.mrb[0].mxu0
  %v240 = vadd.f32 0.0, %v239
  %v241 = vpop.f32.mrb[0].mxu0
  %v242 = vpop.f32.mrb[0].mxu0
  %v243 = vadd.f32 0.0, %v242
  %v244 = vpop.f32.mrb[0].mxu0
  %245 = vmatprep.mubr.bf16.mxu0 0
  %246 = vmatmul.mubr.bf16.gmra.mrb[0].mxu0 %v176
  %v247 = vpop.f32.mrb[0].mxu0
  %v248 = vadd.f32 0.0, %v247
  %v249 = vpop.f32.mrb[0].mxu0
  %v250 = vpop.f32.mrb[0].mxu0
  %v251 = vadd.f32 0.0, %v250
  %v252 = vpop.f32.mrb[0].mxu0
  %253 = vmatprep.mubr.bf16.mxu0 0
  %254 = vmatmul.mubr.bf16.gmra.mrb[0].mxu0 %v179
  %v255 = vpop.f32.mrb[0].mxu0
  %v256 = vadd.f32 0.0, %v255
  %v257 = vpop.f32.mrb[0].mxu0
  %v258 = vpop.f32.mrb[0].mxu0
  %v259 = vadd.f32 0.0, %v258
  %v260 = vpop.f32.mrb[0].mxu0
  %261 = vmatprep.mubr.bf16.mxu0 0
  %262 = vmatmul.mubr.bf16.gmra.mrb[0].mxu0 %v182
  %v263 = vpop.f32.mrb[0].mxu0
  %v264 = vadd.f32 0.0, %v263
  %v265 = vpop.f32.mrb[0].mxu0
  %v266 = vpop.f32.mrb[0].mxu0
  %v267 = vadd.f32 0.0, %v266
  %v268 = vpop.f32.mrb[0].mxu0
  %269 = vmatprep.mubr.bf16.mxu0 0
  %270 = vmatmul.mubr.bf16.gmra.mrb[0].mxu0 %v185
  %v271 = vpop.f32.mrb[0].mxu0
  %v272 = vadd.f32 0.0, %v271
  %v273 = vpop.f32.mrb[0].mxu0
  %v274 = vpop.f32.mrb[0].mxu0
  %v275 = vadd.f32 0.0, %v274
  %v276 = vpop.f32.mrb[0].mxu0
  %277 = vmatprep.mubr.bf16.mxu0 0
  %278 = vmatmul.mubr.bf16.gmra.mrb[0].mxu0 %v188
  %v279 = vpop.f32.mrb[0].mxu0
  %v280 = vadd.f32 0.0, %v279
  %v281 = vpop.f32.mrb[0].mxu0
  %v282 = vpop.f32.mrb[0].mxu0
  %v283 = vadd.f32 0.0, %v282
  %v284 = vpop.f32.mrb[0].mxu0
  %285 = vmatprep.mubr.bf16.mxu0 0
  %286 = vmatmul.mubr.bf16.gmra.mrb[0].mxu0 %v191
  %v287 = vpop.f32.mrb[0].mxu0
  %v288 = vadd.f32 0.0, %v287
  %v289 = vpop.f32.mrb[0].mxu0
  %v290 = vpop.f32.mrb[0].mxu0
  %v291 = vadd.f32 0.0, %v290
  %v292 = vpop.f32.mrb[0].mxu0
  %293 = vdwg.mxu0
  %v294 = vadd.f32 %v100, %v232
  %v295 = vadd.f32 %v101, %v235
  %v296 = vadd.f32 %v102, %v240
  %v297 = vadd.f32 %v103, %v243
  %v298 = vadd.f32 %v104, %v248
  %v299 = vadd.f32 %v105, %v251
  %v300 = vadd.f32 %v106, %v256
  %v301 = vadd.f32 %v107, %v259
  %v302 = vadd.f32 %v108, %v264
  %v303 = vadd.f32 %v109, %v267
  %v304 = vadd.f32 %v110, %v272
  %v305 = vadd.f32 %v111, %v275
  %v306 = vadd.f32 %v112, %v280
  %v307 = vadd.f32 %v113, %v283
  %v308 = vadd.f32 %v114, %v288
  %v309 = vadd.f32 %v115, %v291
  %310 = vst [vmem:[#allocation2] sm:$0xff] %v294
  %311 = vst [vmem:[#allocation2 + $0x8] sm:$0xff] %v295
  %312 = vst [vmem:[#allocation2 + $0x10] sm:$0xff] %v296
  %313 = vst [vmem:[#allocation2 + $0x18] sm:$0xff] %v297
  %314 = vst [vmem:[#allocation2 + $0x20] sm:$0xff] %v298
  %315 = vst [vmem:[#allocation2 + $0x28] sm:$0xff] %v299
  %316 = vst [vmem:[#allocation2 + $0x30] sm:$0xff] %v300
  %317 = vst [vmem:[#allocation2 + $0x38] sm:$0xff] %v301
  %318 = vst [vmem:[#allocation2 + $0x40] sm:$0xff] %v302
  %319 = vst [vmem:[#allocation2 + $0x48] sm:$0xff] %v303
  %320 = vst [vmem:[#allocation2 + $0x50] sm:$0xff] %v304
  %321 = vst [vmem:[#allocation2 + $0x58] sm:$0xff] %v305
  %322 = vst [vmem:[#allocation2 + $0x60] sm:$0xff] %v306
  %323 = vst [vmem:[#allocation2 + $0x68] sm:$0xff] %v307
  %324 = vst [vmem:[#allocation2 + $0x70] sm:$0xff] %v308
  %325 = vst [vmem:[#allocation2 + $0x78] sm:$0xff] %v309
  // Predicated region
  $region18: #{_lambda_.107} parent=0 // pred_check
    %p326 = pneg %p16
  $region19: #{_lambda_.107} parent=0 // pred_check_branch
    %328 = sbr.rel (%p326) target = $region21
  $region20: #{_lambda_.107} parent=0 // pred_region
    %v329 = vld [vmem:[#allocation2] sm:$0xff]
    %v330 = vld [vmem:[#allocation2 + $0x8] sm:$0xff]
    %v331 = vld [vmem:[#allocation2 + $0x10] sm:$0xff]
    %v332 = vld [vmem:[#allocation2 + $0x18] sm:$0xff]
    %v333 = vld [vmem:[#allocation2 + $0x20] sm:$0xff]
    %v334 = vld [vmem:[#allocation2 + $0x28] sm:$0xff]
    %v335 = vld [vmem:[#allocation2 + $0x30] sm:$0xff]
    %v336 = vld [vmem:[#allocation2 + $0x38] sm:$0xff]
    %v337 = vld [vmem:[#allocation2 + $0x40] sm:$0xff]
    %v338 = vld [vmem:[#allocation2 + $0x48] sm:$0xff]
    %v339 = vld [vmem:[#allocation2 + $0x50] sm:$0xff]
    %v340 = vld [vmem:[#allocation2 + $0x58] sm:$0xff]
    %v341 = vld [vmem:[#allocation2 + $0x60] sm:$0xff]
    %v342 = vld [vmem:[#allocation2 + $0x68] sm:$0xff]
    %v343 = vld [vmem:[#allocation2 + $0x70] sm:$0xff]
    %v344 = vld [vmem:[#allocation2 + $0x78] sm:$0xff]
    %v345 = vld [vmem:[%s2] sm:$0x1]
    %v347 = vlaneseq
    %v348 = vshrl.u32 %v347, 7
    %v349 = vsub.s32 0, %v348
    %v350 = vrot.slane %v345, %v349
    %v352 = vadd.f32 %v329, %v350
    %v353 = vadd.f32 %v330, %v350
    %v354 = vadd.f32 %v331, %v350
    %v355 = vadd.f32 %v332, %v350
    %v356 = vadd.f32 %v333, %v350
    %v357 = vadd.f32 %v334, %v350
    %v358 = vadd.f32 %v335, %v350
    %v359 = vadd.f32 %v336, %v350
    %v360 = vadd.f32 %v337, %v350
    %v361 = vadd.f32 %v338, %v350
    %v362 = vadd.f32 %v339, %v350
    %v363 = vadd.f32 %v340, %v350
    %v364 = vadd.f32 %v341, %v350
    %v365 = vadd.f32 %v342, %v350
    %v366 = vadd.f32 %v343, %v350
    %v367 = vadd.f32 %v344, %v350
    %vm368 = vcmp.ge.f32.partialorder %v352, 0.0
    %vm369 = vcmp.ge.f32.partialorder %v353, 0.0
    %vm370 = vcmp.ge.f32.partialorder %v354, 0.0
    %vm371 = vcmp.ge.f32.partialorder %v355, 0.0
    %vm372 = vcmp.ge.f32.partialorder %v356, 0.0
    %vm373 = vcmp.ge.f32.partialorder %v357, 0.0
    %vm374 = vcmp.ge.f32.partialorder %v358, 0.0
    %vm375 = vcmp.ge.f32.partialorder %v359, 0.0
    %vm376 = vcmp.ge.f32.partialorder %v360, 0.0
    %vm377 = vcmp.ge.f32.partialorder %v361, 0.0
    %vm378 = vcmp.ge.f32.partialorder %v362, 0.0
    %vm379 = vcmp.ge.f32.partialorder %v363, 0.0
    %vm380 = vcmp.ge.f32.partialorder %v364, 0.0
    %vm381 = vcmp.ge.f32.partialorder %v365, 0.0
    %vm382 = vcmp.ge.f32.partialorder %v366, 0.0
    %vm383 = vcmp.ge.f32.partialorder %v367, 0.0
    %v384 = vmul.f32 %v352, 0.2
    %v385 = vmul.f32 %v353, 0.2
    %v386 = vmul.f32 %v354, 0.2
    %v387 = vmul.f32 %v355, 0.2
    %v388 = vmul.f32 %v356, 0.2
    %v389 = vmul.f32 %v357, 0.2
    %v390 = vmul.f32 %v358, 0.2
    %v391 = vmul.f32 %v359, 0.2
    %v392 = vmul.f32 %v360, 0.2
    %v393 = vmul.f32 %v361, 0.2
    %v394 = vmul.f32 %v362, 0.2
    %v395 = vmul.f32 %v363, 0.2
    %v396 = vmul.f32 %v364, 0.2
    %v397 = vmul.f32 %v365, 0.2
    %v398 = vmul.f32 %v366, 0.2
    %v399 = vmul.f32 %v367, 0.2
    %v400 = vsel %vm368, %v352, %v384
    %v401 = vsel %vm369, %v353, %v385
    %v402 = vsel %vm370, %v354, %v386
    %v403 = vsel %vm371, %v355, %v387
    %v404 = vsel %vm372, %v356, %v388
    %v405 = vsel %vm373, %v357, %v389
    %v406 = vsel %vm374, %v358, %v390
    %v407 = vsel %vm375, %v359, %v391
    %v408 = vsel %vm376, %v360, %v392
    %v409 = vsel %vm377, %v361, %v393
    %v410 = vsel %vm378, %v362, %v394
    %v411 = vsel %vm379, %v363, %v395
    %v412 = vsel %vm380, %v364, %v396
    %v413 = vsel %vm381, %v365, %v397
    %v414 = vsel %vm382, %v366, %v398
    %v415 = vsel %vm383, %v367, %v399
    %416 = vst [vmem:[%s3] sm:$0xff] %v400
    %417 = vst [vmem:[%s3 + $0x8] sm:$0xff] %v401
    %418 = vst [vmem:[%s3 + $0x10] sm:$0xff] %v402
    %419 = vst [vmem:[%s3 + $0x18] sm:$0xff] %v403
    %420 = vst [vmem:[%s3 + $0x20] sm:$0xff] %v404
    %421 = vst [vmem:[%s3 + $0x28] sm:$0xff] %v405
    %422 = vst [vmem:[%s3 + $0x30] sm:$0xff] %v406
    %423 = vst [vmem:[%s3 + $0x38] sm:$0xff] %v407
    %424 = vst [vmem:[%s3 + $0x40] sm:$0xff] %v408
    %425 = vst [vmem:[%s3 + $0x48] sm:$0xff] %v409
    %426 = vst [vmem:[%s3 + $0x50] sm:$0xff] %v410
    %427 = vst [vmem:[%s3 + $0x58] sm:$0xff] %v411
    %428 = vst [vmem:[%s3 + $0x60] sm:$0xff] %v412
    %429 = vst [vmem:[%s3 + $0x68] sm:$0xff] %v413
    %430 = vst [vmem:[%s3 + $0x70] sm:$0xff] %v414
    %431 = vst [vmem:[%s3 + $0x78] sm:$0xff] %v415
  $region21: #{_lambda_.107} parent=0 // pred_fallthru
    _
  // Predicated region
  $region22: #{_lambda_.107} parent=0 // pred_check
    _
  $region23: #{_lambda_.107} parent=0 // pred_check_branch
    %433 = sbr.rel (0) target = $region25
  $region24: #{_lambda_.107} parent=0 // pred_region
    _
  $region25: #{_lambda_.107} parent=0 // pred_fallthru
    _
  // Predicated region
  $region26: #{_lambda_.107} parent=0 // pred_check
    _
  $region27: #{_lambda_.107} parent=0 // pred_check_branch
    %435 = sbr.rel (0) target = $region29
  $region28: #{_lambda_.107} parent=0 // pred_region
    _
  $region29: #{_lambda_.107} parent=0 // pred_fallthru
    _

// kernel: _lambda_.108
$region0: #{_lambda_.108}
  #allocation0 [shape = 'u32[]', space=smem, size = 0x4, offset = 0x4, fixed_abs, tag = 'smem constant byte address 0x4 - core index']
  #allocation1 [shape = 'u32[144,128]{1,0:T(1,128)}', space=vmem, size = 0x12000, scoped, tag = 'internal scratch']
  %s0 = inlined_call_operand.vmem [shape: bf16[16,8,24], index: 0, kind: input, shape index: {}]
  %s1 = inlined_call_operand.vmem [shape: bf16[16,24,256], index: 1, kind: input, shape index: {}]
  %s2 = inlined_call_operand.vmem [shape: f32[16,1,256], index: 2, kind: input, shape index: {}]
  %s3 = inlined_call_operand.vmem [shape: f32[16,8,128], index: 3, kind: output, shape index: {}]
  %s4 = sld [smem:[#allocation0]]
  $region45: #{_lambda_.108} parent=0
    _
  %s6 = ssub.s32 1, %s4
  %s7 = scalar_select 0, %s6, %s4
  loop: start=0, step=1, limit=4
  $region2: #{_lambda_.108} parent=0 // loop_pre_header
    _
  $region3: #{_lambda_.108} parent=0 // loop_header
    %s9 = sphi 0, %s13
    %p10 = scmp.ge.s32.totalorder %s9, 4
    %s19 = sphi 0, %s21
    %s22 = sphi 0, %s19
    %s23 = sphi 0, %s22
    %s39 = sphi 0, %s23
    %s45 = sphi 0, %s47
    %s48 = sphi 0, %s45
    %s49 = sphi 0, %s48
    %s65 = sphi 0, %s49
    %s71 = sphi 0, %s73
    %s74 = sphi 0, %s71
    %s75 = sphi 0, %s74
    %s91 = sphi 0, %s75
    %s97 = sphi 0, %s99
    %s100 = sphi 0, %s97
    %s101 = sphi 0, %s100
    %s117 = sphi 0, %s101
  $region4: #{_lambda_.108} parent=0 // loop_header_branch
    %12 = sbr.rel (%p10) target = $region8
  $region5: #{_lambda_.108} parent=0 // loop_body
    %s14 = ssub.s32 %s9, 1
    %s15 = ssub.s32 %s9, 2
    %s16 = sadd.s32 %s9, 1
    %s17 = ssub.s32 %s9, %s16
    %p18 = scmp.eq.s32.totalorder %s17, 0
    %s20 = sadd.s32 %s19, 1
    %s21 = scalar_select %p18, %s19, %s20
    %p24 = pneg %p18
    %p25 = scmp.eq.s32.totalorder %s9, 1
    %p26 = por %p24, %p25
    %p27 = scmp.ne.s32.totalorder %s19, %s22
    %p28 = scmp.eq.s32.totalorder %s9, 0
    %p29 = por %p27, %p28
    %p30 = scmp.ne.s32.totalorder %s19, %s22
    %p31 = scmp.eq.s32.totalorder %s14, 1
    %p32 = por %p30, %p31
    %p33 = scmp.ne.s32.totalorder %s22, %s23
    %p34 = scmp.eq.s32.totalorder %s14, 0
    %p35 = por %p33, %p34
    %p36 = scmp.ne.s32.totalorder %s22, %s23
    %p37 = scmp.eq.s32.totalorder %s15, 1
    %p38 = por %p36, %p37
    %p40 = scmp.ne.s32.totalorder %s23, %s39
    %p41 = scmp.eq.s32.totalorder %s15, 0
    %p42 = por %p40, %p41
    %s43 = ssub.s32 %s9, %s16
    %p44 = scmp.eq.s32.totalorder %s43, 0
    %s46 = sadd.s32 %s45, 1
    %s47 = scalar_select %p44, %s45, %s46
    %p50 = pneg %p44
    %p51 = scmp.eq.s32.totalorder %s9, 1
    %p52 = por %p50, %p51
    %p53 = scmp.ne.s32.totalorder %s45, %s48
    %p54 = scmp.eq.s32.totalorder %s9, 0
    %p55 = por %p53, %p54
    %p56 = scmp.ne.s32.totalorder %s45, %s48
    %p57 = scmp.eq.s32.totalorder %s14, 1
    %p58 = por %p56, %p57
    %p59 = scmp.ne.s32.totalorder %s48, %s49
    %p60 = scmp.eq.s32.totalorder %s14, 0
    %p61 = por %p59, %p60
    %p62 = scmp.ne.s32.totalorder %s48, %s49
    %p63 = scmp.eq.s32.totalorder %s15, 1
    %p64 = por %p62, %p63
    %p66 = scmp.ne.s32.totalorder %s49, %s65
    %p67 = scmp.eq.s32.totalorder %s15, 0
    %p68 = por %p66, %p67
    %s69 = ssub.s32 %s9, %s16
    %p70 = scmp.eq.s32.totalorder %s69, 0
    %s72 = sadd.s32 %s71, 1
    %s73 = scalar_select %p70, %s71, %s72
    %p76 = pneg %p70
    %p77 = scmp.eq.s32.totalorder %s9, 1
    %p78 = por %p76, %p77
    %p79 = scmp.ne.s32.totalorder %s71, %s74
    %p80 = scmp.eq.s32.totalorder %s9, 0
    %p81 = por %p79, %p80
    %p82 = scmp.ne.s32.totalorder %s71, %s74
    %p83 = scmp.eq.s32.totalorder %s14, 1
    %p84 = por %p82, %p83
    %p85 = scmp.ne.s32.totalorder %s74, %s75
    %p86 = scmp.eq.s32.totalorder %s14, 0
    %p87 = por %p85, %p86
    %p88 = scmp.ne.s32.totalorder %s74, %s75
    %p89 = scmp.eq.s32.totalorder %s15, 1
    %p90 = por %p88, %p89
    %p92 = scmp.ne.s32.totalorder %s75, %s91
    %p93 = scmp.eq.s32.totalorder %s15, 0
    %p94 = por %p92, %p93
    %s95 = ssub.s32 %s9, %s16
    %p96 = scmp.eq.s32.totalorder %s95, 0
    %s98 = sadd.s32 %s97, 1
    %s99 = scalar_select %p96, %s97, %s98
    %p102 = pneg %p96
    %p103 = scmp.eq.s32.totalorder %s9, 1
    %p104 = por %p102, %p103
    %p105 = scmp.ne.s32.totalorder %s97, %s100
    %p106 = scmp.eq.s32.totalorder %s9, 0
    %p107 = por %p105, %p106
    %p108 = scmp.ne.s32.totalorder %s97, %s100
    %p109 = scmp.eq.s32.totalorder %s14, 1
    %p110 = por %p108, %p109
    %p111 = scmp.ne.s32.totalorder %s100, %s101
    %p112 = scmp.eq.s32.totalorder %s14, 0
    %p113 = por %p111, %p112
    %p114 = scmp.ne.s32.totalorder %s100, %s101
    %p115 = scmp.eq.s32.totalorder %s15, 1
    %p116 = por %p114, %p115
    %p118 = scmp.ne.s32.totalorder %s101, %s117
    %p119 = scmp.eq.s32.totalorder %s15, 0
    %p120 = por %p118, %p119
    %p121 = scmp.le.s32.totalorder 1, %s9
    %p122 = scmp.lt.s32.totalorder %s9, 3
    %p123 = pnand %p121, %p122
    %p124 = pneg %p123
    // Predicated region
    $region9: #{_lambda_.108} parent=5 // pred_check
      _
    $region10: #{_lambda_.108} parent=5 // pred_check_branch
      %126 = sbr.rel (%p123) target = $region12
    $region11: #{_lambda_.108} parent=5 // pred_region
      %s127 = ssub.s32 %s9, 1
    $region12: #{_lambda_.108} parent=5 // pred_fallthru
      _
    %p128 = scmp.lt.s32.totalorder %s9, 2
    // Predicated region
    $region13: #{_lambda_.108} parent=5 // pred_check
      %p129 = pneg %p128
    $region14: #{_lambda_.108} parent=5 // pred_check_branch
      %131 = sbr.rel (%p129) target = $region16
    $region15: #{_lambda_.108} parent=5 // pred_region
      // Predicated region
      $region17: #{_lambda_.108} parent=15 // pred_check
        %p132 = pneg %p29
      $region18: #{_lambda_.108} parent=15 // pred_check_branch
        %134 = sbr.rel (%p132) target = $region20
      $region19: #{_lambda_.108} parent=15 // pred_region
        %s135 = smul.u32 8, %s9
        %p136 = scmp.lt.s32.totalorder %s135, 15
        %s137 = scalar_select %p136, %s135, 15
        %s138 = smul.addr %s137, 4
        %s139 = scalar_lea.vmem %s0, %s138
        %s140 = smul.u32 8, %s9
      $region20: #{_lambda_.108} parent=15 // pred_fallthru
        _
      // Predicated region
      $region21: #{_lambda_.108} parent=15 // pred_check
        %p141 = pneg %p55
      $region22: #{_lambda_.108} parent=15 // pred_check_branch
        %143 = sbr.rel (%p141) target = $region24
      $region23: #{_lambda_.108} parent=15 // pred_region
        %s144 = smul.u32 8, %s9
        %p145 = scmp.lt.s32.totalorder %s144, 15
        %s146 = scalar_select %p145, %s144, 15
        %s147 = smul.addr %s146, 6
        %s148 = smul.addr %s147, 4
        %s149 = scalar_lea.vmem %s1, %s148
        %s150 = smul.u32 8, %s9
      $region24: #{_lambda_.108} parent=15 // pred_fallthru
        _
      // Predicated region
      $region25: #{_lambda_.108} parent=15 // pred_check
        %p151 = pneg %p81
      $region26: #{_lambda_.108} parent=15 // pred_check_branch
        %153 = sbr.rel (%p151) target = $region28
      $region27: #{_lambda_.108} parent=15 // pred_region
        %s154 = smul.u32 8, %s9
        %p155 = scmp.lt.s32.totalorder %s154, 15
        %s156 = scalar_select %p155, %s154, 15
        %s157 = smul.addr %s156, 2
        %s158 = scalar_lea.vmem %s2, %s157
        %s159 = smul.u32 8, %s9
      $region28: #{_lambda_.108} parent=15 // pred_fallthru
        _
    $region16: #{_lambda_.108} parent=5 // pred_fallthru
      _
    %p160 = scmp.le.s32.totalorder 1, %s9
    %p161 = scmp.lt.s32.totalorder %s9, 3
    %p162 = pnand %p160, %p161
    %p163 = pneg %p162
    // Predicated region
    $region29: #{_lambda_.108} parent=5 // pred_check
      _
    $region30: #{_lambda_.108} parent=5 // pred_check_branch
      %165 = sbr.rel (%p162) target = $region32
    $region31: #{_lambda_.108} parent=5 // pred_region
      %s166 = ssub.s32 %s9, 1
      %s167 = smul.u32 8, %s14
      %p168 = scmp.lt.s32.totalorder %s167, 15
      %s169 = scalar_select %p168, %s167, 15
      %s170 = smul.addr %s169, 4
      %s171 = scalar_lea.vmem %s0, %s170
      %p172 = pneg %p35
      %p173 = pneg %p32
      %s174 = smul.u32 8, %s14
      %p175 = scmp.lt.s32.totalorder %s174, 15
      %s176 = scalar_select %p175, %s174, 15
      %s177 = smul.addr %s176, 6
      %s178 = smul.addr %s177, 4
      %s179 = scalar_lea.vmem %s1, %s178
      %p180 = pneg %p61
      %p181 = pneg %p58
      %s182 = smul.u32 8, %s14
      %p183 = scmp.lt.s32.totalorder %s182, 15
      %s184 = scalar_select %p183, %s182, 15
      %s185 = smul.addr %s184, 2
      %s186 = scalar_lea.vmem %s2, %s185
      %p187 = pneg %p87
      %p188 = pneg %p84
      %p189 = pneg %p113
      %p190 = pneg %p110
      %s191 = smul.u32 8, %s14
      %p192 = scmp.lt.s32.totalorder %s191, 15
      %s193 = scalar_select %p192, %s191, 15
      %s194 = smul.addr %s193, 8
      %s195 = scalar_lea.vmem %s3, %s194
      %s196 = smul.u32 8, %s14
      %p197 = scmp.lt.s32.totalorder %s196, 15
      %s198 = scalar_select %p197, %s196, 15
      %s199 = smul.addr %s198, 4
      %s200 = scalar_lea.vmem %s0, %s199
      %s201 = smul.u32 8, %s14
      %s202 = smul.u32 8, %s14
      %p203 = scmp.lt.s32.totalorder %s202, 15
      %s204 = scalar_select %p203, %s202, 15
      %s205 = smul.addr %s204, 6
      %s206 = smul.addr %s205, 4
      %s207 = scalar_lea.vmem %s1, %s206
      %s208 = smul.u32 8, %s14
      %s209 = smul.u32 8, %s14
      %p210 = scmp.lt.s32.totalorder %s209, 15
      %s211 = scalar_select %p210, %s209, 15
      %s212 = smul.addr %s211, 2
      %s213 = scalar_lea.vmem %s2, %s212
      %s214 = smul.u32 8, %s14
      %s215 = smul.u32 8, %s14
      %p216 = scmp.lt.s32.totalorder %s215, 15
      %s217 = scalar_select %p216, %s215, 15
      %s218 = smul.addr %s217, 8
      %s219 = scalar_lea.vmem %s3, %s218
      %s220 = smul.u32 8, %s14
      %v222 = vld [vmem:[%s200] sm:$0xf]
      %v223 = vld [vmem:[%s200 + $0x4] sm:$0xf]
      %v224 = vld [vmem:[%s200 + $0x8] sm:$0xf]
      %v225 = vld [vmem:[%s200 + $0xc] sm:$0xf]
      %v226 = vld [vmem:[%s200 + $0x10] sm:$0xf]
      %v227 = vld [vmem:[%s200 + $0x14] sm:$0xf]
      %v228 = vld [vmem:[%s200 + $0x18] sm:$0xf]
      %v229 = vld [vmem:[%s200 + $0x1c] sm:$0xf]
      %v230 = vld [vmem:[%s207] sm:$0xff]
      %v231 = vld [vmem:[%s207 + $0x8] sm:$0xff]
      %v232 = vld [vmem:[%s207 + $0x10] sm:$0xff]
      %v233 = vld [vmem:[%s207 + $0x18] sm:$0xff]
      %v234 = vld [vmem:[%s207 + $0x20] sm:$0xff]
      %v235 = vld [vmem:[%s207 + $0x28] sm:$0xff]
      %v236 = vld [vmem:[%s207 + $0x30] sm:$0xff]
      %v237 = vld [vmem:[%s207 + $0x38] sm:$0xff]
      %v238 = vld [vmem:[%s207 + $0x40] sm:$0xff]
      %v239 = vld [vmem:[%s207 + $0x48] sm:$0xff]
      %v240 = vld [vmem:[%s207 + $0x50] sm:$0xff]
      %v241 = vld [vmem:[%s207 + $0x58] sm:$0xff]
      %v242 = vld [vmem:[%s207 + $0x60] sm:$0xff]
      %v243 = vld [vmem:[%s207 + $0x68] sm:$0xff]
      %v244 = vld [vmem:[%s207 + $0x70] sm:$0xff]
      %v245 = vld [vmem:[%s207 + $0x78] sm:$0xff]
      %v246 = vld [vmem:[%s207 + $0x80] sm:$0xff]
      %v247 = vld [vmem:[%s207 + $0x88] sm:$0xff]
      %v248 = vld [vmem:[%s207 + $0x90] sm:$0xff]
      %v249 = vld [vmem:[%s207 + $0x98] sm:$0xff]
      %v250 = vld [vmem:[%s207 + $0xa0] sm:$0xff]
      %v251 = vld [vmem:[%s207 + $0xa8] sm:$0xff]
      %v252 = vld [vmem:[%s207 + $0xb0] sm:$0xff]
      %v253 = vld [vmem:[%s207 + $0xb8] sm:$0xff]
      %v254 = vld [vmem:[%s213] sm:$0x3]
      %v255 = vld [vmem:[%s213 + $0x2] sm:$0x3]
      %v256 = vld [vmem:[%s213 + $0x4] sm:$0x3]
      %v257 = vld [vmem:[%s213 + $0x6] sm:$0x3]
      %v258 = vld [vmem:[%s213 + $0x8] sm:$0x3]
      %v259 = vld [vmem:[%s213 + $0xa] sm:$0x3]
      %v260 = vld [vmem:[%s213 + $0xc] sm:$0x3]
      %v261 = vld [vmem:[%s213 + $0xe] sm:$0x3]
      %v270 = vlaneseq
      %v271 = vshrl.u32 %v270, 7
      %v272 = vsub.s32 0, %v271
      %v273 = vrot.slane %v254, %v272
      %v274 = vlaneseq
      %v275 = vshrl.u32 %v274, 7
      %v276 = vsub.s32 1, %v275
      %v277 = vrot.slane %v254, %v276
      %v278 = vlaneseq
      %v279 = vshrl.u32 %v278, 7
      %v280 = vsub.s32 0, %v279
      %v281 = vrot.slane %v255, %v280
      %v282 = vlaneseq
      %v283 = vshrl.u32 %v282, 7
      %v284 = vsub.s32 1, %v283
      %v285 = vrot.slane %v255, %v284
      %v286 = vlaneseq
      %v287 = vshrl.u32 %v286, 7
      %v288 = vsub.s32 0, %v287
      %v289 = vrot.slane %v256, %v288
      %v290 = vlaneseq
      %v291 = vshrl.u32 %v290, 7
      %v292 = vsub.s32 1, %v291
      %v293 = vrot.slane %v256, %v292
      %v294 = vlaneseq
      %v295 = vshrl.u32 %v294, 7
      %v296 = vsub.s32 0, %v295
      %v297 = vrot.slane %v257, %v296
      %v298 = vlaneseq
      %v299 = vshrl.u32 %v298, 7
      %v300 = vsub.s32 1, %v299
      %v301 = vrot.slane %v257, %v300
      %v302 = vlaneseq
      %v303 = vshrl.u32 %v302, 7
      %v304 = vsub.s32 0, %v303
      %v305 = vrot.slane %v258, %v304
      %v306 = vlaneseq
      %v307 = vshrl.u32 %v306, 7
      %v308 = vsub.s32 1, %v307
      %v309 = vrot.slane %v258, %v308
      %v310 = vlaneseq
      %v311 = vshrl.u32 %v310, 7
      %v312 = vsub.s32 0, %v311
      %v313 = vrot.slane %v259, %v312
      %v314 = vlaneseq
      %v315 = vshrl.u32 %v314, 7
      %v316 = vsub.s32 1, %v315
      %v317 = vrot.slane %v259, %v316
      %v318 = vlaneseq
      %v319 = vshrl.u32 %v318, 7
      %v320 = vsub.s32 0, %v319
      %v321 = vrot.slane %v260, %v320
      %v322 = vlaneseq
      %v323 = vshrl.u32 %v322, 7
      %v324 = vsub.s32 1, %v323
      %v325 = vrot.slane %v260, %v324
      %v326 = vlaneseq
      %v327 = vshrl.u32 %v326, 7
      %v328 = vsub.s32 0, %v327
      %v329 = vrot.slane %v261, %v328
      %v330 = vlaneseq
      %v331 = vshrl.u32 %v330, 7
      %v332 = vsub.s32 1, %v331
      %v333 = vrot.slane %v261, %v332
      %v353 = vunpack.c.l.b16 %v230
      %v354 = vunpack.c.h.b16 %v230
      %v355 = vunpack.c.l.b16 %v231
      %v356 = vunpack.c.h.b16 %v231
      %v357 = vunpack.c.l.b16 %v232
      %v358 = vunpack.c.h.b16 %v232
      %v359 = vpack.c.b16 %v355, %v353
      %v360 = vpack.c.b16 %v356, %v354
      %v361 = vpack.c.b16 %v357, %v357
      %v362 = vpack.c.b16 %v358, %v358
      %vm365 = vcmask 195584
      %v367 = vsel %vm365, %v222, 0
      %vm369 = vcmask 1043456
      %v371 = vsel %vm369, %v361, 0
      %v374 = vsel %vm369, %v362, 0
      %376 = vmatprep.subr.bf16.mxu0 %v360
      %377 = vmatpush1.bf16.msra.mxu0 %v359
      %378 = vmatprep.subr.bf16.mxu0 %v374
      %379 = vmatpush1.bf16.msra.mxu0 %v371
      %380 = vmatprep.subr.bf16.mxu0 0
      %381 = vmatpush1.bf16.msra.mxu0 0
      %382 = vmatprep.subr.bf16.mxu0 0
      %383 = vmatpush1.bf16.msra.mxu0 0
      %384 = vmatprep.subr.bf16.mxu0 0
      %385 = vmatpush1.bf16.msra.mxu0 0
      %386 = vmatprep.subr.bf16.mxu0 0
      %387 = vmatpush1.bf16.msra.mxu0 0
      %388 = vmatprep.subr.bf16.mxu0 0
      %389 = vmatpush1.bf16.msra.mxu0 0
      %390 = vmatprep.subr.bf16.mxu0 0
      %391 = vmatpush1.bf16.msra.mxu0 0
      %392 = vmatprep.subr.bf16.mxu0 0
      %393 = vmatpush1.bf16.msra.mxu0 0
      %394 = vmatprep.subr.bf16.mxu0 0
      %395 = vmatpush1.bf16.msra.mxu0 0
      %396 = vmatprep.subr.bf16.mxu0 0
      %397 = vmatpush1.bf16.msra.mxu0 0
      %398 = vmatprep.subr.bf16.mxu0 0
      %399 = vmatpush1.bf16.msra.mxu0 0
      %400 = vmatprep.subr.bf16.mxu0 0
      %401 = vmatpush1.bf16.msra.mxu0 0
      %402 = vmatprep.subr.bf16.mxu0 0
      %403 = vmatpush1.bf16.msra.mxu0 0
      %404 = vmatprep.subr.bf16.mxu0 0
      %405 = vmatpush1.bf16.msra.mxu0 0
      %406 = vmatprep.subr.bf16.mxu0 0
      %407 = vmatpush1.bf16.msra.mxu0 0
      %408 = vmatprep.mubr.bf16.mxu0 0
      %409 = vmatmul.mubr.bf16.gmra.mrb[0].mxu0 %v367
      %v410 = vpop.f32.mrb[0].mxu0
      %v411 = vadd.f32 %v273, %v410
      %v412 = vpop.f32.mrb[0].mxu0
      %v413 = vadd.f32 %v277, %v412
      %v414 = vpop.f32.mrb[0].mxu0
      %v415 = vpop.f32.mrb[0].mxu0
      %416 = vdwg.mxu0
      %v420 = vunpack.c.l.b16 %v233
      %v421 = vunpack.c.h.b16 %v233
      %v422 = vunpack.c.l.b16 %v234
      %v423 = vunpack.c.h.b16 %v234
      %v424 = vunpack.c.l.b16 %v235
      %v425 = vunpack.c.h.b16 %v235
      %v426 = vpack.c.b16 %v422, %v420
      %v427 = vpack.c.b16 %v423, %v421
      %v428 = vpack.c.b16 %v424, %v424
      %v429 = vpack.c.b16 %v425, %v425
      %v433 = vsel %vm365, %v223, 0
      %v436 = vsel %vm369, %v428, 0
      %v439 = vsel %vm369, %v429, 0
      %441 = vmatprep.subr.bf16.mxu0 %v427
      %442 = vmatpush1.bf16.msra.mxu0 %v426
      %443 = vmatprep.subr.bf16.mxu0 %v439
      %444 = vmatpush1.bf16.msra.mxu0 %v436
      %445 = vmatprep.subr.bf16.mxu0 0
      %446 = vmatpush1.bf16.msra.mxu0 0
      %447 = vmatprep.subr.bf16.mxu0 0
      %448 = vmatpush1.bf16.msra.mxu0 0
      %449 = vmatprep.subr.bf16.mxu0 0
      %450 = vmatpush1.bf16.msra.mxu0 0
      %451 = vmatprep.subr.bf16.mxu0 0
      %452 = vmatpush1.bf16.msra.mxu0 0
      %453 = vmatprep.subr.bf16.mxu0 0
      %454 = vmatpush1.bf16.msra.mxu0 0
      %455 = vmatprep.subr.bf16.mxu0 0
      %456 = vmatpush1.bf16.msra.mxu0 0
      %457 = vmatprep.subr.bf16.mxu0 0
      %458 = vmatpush1.bf16.msra.mxu0 0
      %459 = vmatprep.subr.bf16.mxu0 0
      %460 = vmatpush1.bf16.msra.mxu0 0
      %461 = vmatprep.subr.bf16.mxu0 0
      %462 = vmatpush1.bf16.msra.mxu0 0
      %463 = vmatprep.subr.bf16.mxu0 0
      %464 = vmatpush1.bf16.msra.mxu0 0
      %465 = vmatprep.subr.bf16.mxu0 0
      %466 = vmatpush1.bf16.msra.mxu0 0
      %467 = vmatprep.subr.bf16.mxu0 0
      %468 = vmatpush1.bf16.msra.mxu0 0
      %469 = vmatprep.subr.bf16.mxu0 0
      %470 = vmatpush1.bf16.msra.mxu0 0
      %471 = vmatprep.subr.bf16.mxu0 0
      %472 = vmatpush1.bf16.msra.mxu0 0
      %473 = vmatprep.mubr.bf16.mxu0 0
      %474 = vmatmul.mubr.bf16.gmra.mrb[0].mxu0 %v433
      %v475 = vpop.f32.mrb[0].mxu0
      %v476 = vadd.f32 %v281, %v475
      %v477 = vpop.f32.mrb[0].mxu0
      %v478 = vadd.f32 %v285, %v477
      %v479 = vpop.f32.mrb[0].mxu0
      %v480 = vpop.f32.mrb[0].mxu0
      %481 = vdwg.mxu0
      %v485 = vunpack.c.l.b16 %v236
      %v486 = vunpack.c.h.b16 %v236
      %v487 = vunpack.c.l.b16 %v237
      %v488 = vunpack.c.h.b16 %v237
      %v489 = vunpack.c.l.b16 %v238
      %v490 = vunpack.c.h.b16 %v238
      %v491 = vpack.c.b16 %v487, %v485
      %v492 = vpack.c.b16 %v488, %v486
      %v493 = vpack.c.b16 %v489, %v489
      %v494 = vpack.c.b16 %v490, %v490
      %v498 = vsel %vm365, %v224, 0
      %v501 = vsel %vm369, %v493, 0
      %v504 = vsel %vm369, %v494, 0
      %506 = vmatprep.subr.bf16.mxu0 %v492
      %507 = vmatpush1.bf16.msra.mxu0 %v491
      %508 = vmatprep.subr.bf16.mxu0 %v504
      %509 = vmatpush1.bf16.msra.mxu0 %v501
      %510 = vmatprep.subr.bf16.mxu0 0
      %511 = vmatpush1.bf16.msra.mxu0 0
      %512 = vmatprep.subr.bf16.mxu0 0
      %513 = vmatpush1.bf16.msra.mxu0 0
      %514 = vmatprep.subr.bf16.mxu0 0
      %515 = vmatpush1.bf16.msra.mxu0 0
      %516 = vmatprep.subr.bf16.mxu0 0
      %517 = vmatpush1.bf16.msra.mxu0 0
      %518 = vmatprep.subr.bf16.mxu0 0
      %519 = vmatpush1.bf16.msra.mxu0 0
      %520 = vmatprep.subr.bf16.mxu0 0
      %521 = vmatpush1.bf16.msra.mxu0 0
      %522 = vmatprep.subr.bf16.mxu0 0
      %523 = vmatpush1.bf16.msra.mxu0 0
      %524 = vmatprep.subr.bf16.mxu0 0
      %525 = vmatpush1.bf16.msra.mxu0 0
      %526 = vmatprep.subr.bf16.mxu0 0
      %527 = vmatpush1.bf16.msra.mxu0 0
      %528 = vmatprep.subr.bf16.mxu0 0
      %529 = vmatpush1.bf16.msra.mxu0 0
      %530 = vmatprep.subr.bf16.mxu0 0
      %531 = vmatpush1.bf16.msra.mxu0 0
      %532 = vmatprep.subr.bf16.mxu0 0
      %533 = vmatpush1.bf16.msra.mxu0 0
      %534 = vmatprep.subr.bf16.mxu0 0
      %535 = vmatpush1.bf16.msra.mxu0 0
      %536 = vmatprep.subr.bf16.mxu0 0
      %537 = vmatpush1.bf16.msra.mxu0 0
      %538 = vmatprep.mubr.bf16.mxu0 0
      %539 = vmatmul.mubr.bf16.gmra.mrb[0].mxu0 %v498
      %v540 = vpop.f32.mrb[0].mxu0
      %v541 = vadd.f32 %v289, %v540
      %v542 = vpop.f32.mrb[0].mxu0
      %v543 = vadd.f32 %v293, %v542
      %v544 = vpop.f32.mrb[0].mxu0
      %v545 = vpop.f32.mrb[0].mxu0
      %546 = vdwg.mxu0
      %v550 = vunpack.c.l.b16 %v239
      %v551 = vunpack.c.h.b16 %v239
      %v552 = vunpack.c.l.b16 %v240
      %v553 = vunpack.c.h.b16 %v240
      %v554 = vunpack.c.l.b16 %v241
      %v555 = vunpack.c.h.b16 %v241
      %v556 = vpack.c.b16 %v552, %v550
      %v557 = vpack.c.b16 %v553, %v551
      %v558 = vpack.c.b16 %v554, %v554
      %v559 = vpack.c.b16 %v555, %v555
      %v563 = vsel %vm365, %v225, 0
      %v566 = vsel %vm369, %v558, 0
      %v569 = vsel %vm369, %v559, 0
      %571 = vmatprep.subr.bf16.mxu0 %v557
      %572 = vmatpush1.bf16.msra.mxu0 %v556
      %573 = vmatprep.subr.bf16.mxu0 %v569
      %574 = vmatpush1.bf16.msra.mxu0 %v566
      %575 = vmatprep.subr.bf16.mxu0 0
      %576 = vmatpush1.bf16.msra.mxu0 0
      %577 = vmatprep.subr.bf16.mxu0 0
      %578 = vmatpush1.bf16.msra.mxu0 0
      %579 = vmatprep.subr.bf16.mxu0 0
      %580 = vmatpush1.bf16.msra.mxu0 0
      %581 = vmatprep.subr.bf16.mxu0 0
      %582 = vmatpush1.bf16.msra.mxu0 0
      %583 = vmatprep.subr.bf16.mxu0 0
      %584 = vmatpush1.bf16.msra.mxu0 0
      %585 = vmatprep.subr.bf16.mxu0 0
      %586 = vmatpush1.bf16.msra.mxu0 0
      %587 = vmatprep.subr.bf16.mxu0 0
      %588 = vmatpush1.bf16.msra.mxu0 0
      %589 = vmatprep.subr.bf16.mxu0 0
      %590 = vmatpush1.bf16.msra.mxu0 0
      %591 = vmatprep.subr.bf16.mxu0 0
      %592 = vmatpush1.bf16.msra.mxu0 0
      %593 = vmatprep.subr.bf16.mxu0 0
      %594 = vmatpush1.bf16.msra.mxu0 0
      %595 = vmatprep.subr.bf16.mxu0 0
      %596 = vmatpush1.bf16.msra.mxu0 0
      %597 = vmatprep.subr.bf16.mxu0 0
      %598 = vmatpush1.bf16.msra.mxu0 0
      %599 = vmatprep.subr.bf16.mxu0 0
      %600 = vmatpush1.bf16.msra.mxu0 0
      %601 = vmatprep.subr.bf16.mxu0 0
      %602 = vmatpush1.bf16.msra.mxu0 0
      %603 = vmatprep.mubr.bf16.mxu0 0
      %604 = vmatmul.mubr.bf16.gmra.mrb[0].mxu0 %v563
      %v605 = vpop.f32.mrb[0].mxu0
      %v606 = vadd.f32 %v297, %v605
      %v607 = vpop.f32.mrb[0].mxu0
      %v608 = vadd.f32 %v301, %v607
      %v609 = vpop.f32.mrb[0].mxu0
      %v610 = vpop.f32.mrb[0].mxu0
      %611 = vdwg.mxu0
      %v615 = vunpack.c.l.b16 %v242
      %v616 = vunpack.c.h.b16 %v242
      %v617 = vunpack.c.l.b16 %v243
      %v618 = vunpack.c.h.b16 %v243
      %v619 = vunpack.c.l.b16 %v244
      %v620 = vunpack.c.h.b16 %v244
      %v621 = vpack.c.b16 %v617, %v615
      %v622 = vpack.c.b16 %v618, %v616
      %v623 = vpack.c.b16 %v619, %v619
      %v624 = vpack.c.b16 %v620, %v620
      %v628 = vsel %vm365, %v226, 0
      %v631 = vsel %vm369, %v623, 0
      %v634 = vsel %vm369, %v624, 0
      %636 = vmatprep.subr.bf16.mxu0 %v622
      %637 = vmatpush1.bf16.msra.mxu0 %v621
      %638 = vmatprep.subr.bf16.mxu0 %v634
      %639 = vmatpush1.bf16.msra.mxu0 %v631
      %640 = vmatprep.subr.bf16.mxu0 0
      %641 = vmatpush1.bf16.msra.mxu0 0
      %642 = vmatprep.subr.bf16.mxu0 0
      %643 = vmatpush1.bf16.msra.mxu0 0
      %644 = vmatprep.subr.bf16.mxu0 0
      %645 = vmatpush1.bf16.msra.mxu0 0
      %646 = vmatprep.subr.bf16.mxu0 0
      %647 = vmatpush1.bf16.msra.mxu0 0
      %648 = vmatprep.subr.bf16.mxu0 0
      %649 = vmatpush1.bf16.msra.mxu0 0
      %650 = vmatprep.subr.bf16.mxu0 0
      %651 = vmatpush1.bf16.msra.mxu0 0
      %652 = vmatprep.subr.bf16.mxu0 0
      %653 = vmatpush1.bf16.msra.mxu0 0
      %654 = vmatprep.subr.bf16.mxu0 0
      %655 = vmatpush1.bf16.msra.mxu0 0
      %656 = vmatprep.subr.bf16.mxu0 0
      %657 = vmatpush1.bf16.msra.mxu0 0
      %658 = vmatprep.subr.bf16.mxu0 0
      %659 = vmatpush1.bf16.msra.mxu0 0
      %660 = vmatprep.subr.bf16.mxu0 0
      %661 = vmatpush1.bf16.msra.mxu0 0
      %662 = vmatprep.subr.bf16.mxu0 0
      %663 = vmatpush1.bf16.msra.mxu0 0
      %664 = vmatprep.subr.bf16.mxu0 0
      %665 = vmatpush1.bf16.msra.mxu0 0
      %666 = vmatprep.subr.bf16.mxu0 0
      %667 = vmatpush1.bf16.msra.mxu0 0
      %668 = vmatprep.mubr.bf16.mxu0 0
      %669 = vmatmul.mubr.bf16.gmra.mrb[0].mxu0 %v628
      %v670 = vpop.f32.mrb[0].mxu0
      %v671 = vadd.f32 %v305, %v670
      %v672 = vpop.f32.mrb[0].mxu0
      %v673 = vadd.f32 %v309, %v672
      %v674 = vpop.f32.mrb[0].mxu0
      %v675 = vpop.f32.mrb[0].mxu0
      %676 = vdwg.mxu0
      %v680 = vunpack.c.l.b16 %v245
      %v681 = vunpack.c.h.b16 %v245
      %v682 = vunpack.c.l.b16 %v246
      %v683 = vunpack.c.h.b16 %v246
      %v684 = vunpack.c.l.b16 %v247
      %v685 = vunpack.c.h.b16 %v247
      %v686 = vpack.c.b16 %v682, %v680
      %v687 = vpack.c.b16 %v683, %v681
      %v688 = vpack.c.b16 %v684, %v684
      %v689 = vpack.c.b16 %v685, %v685
      %v693 = vsel %vm365, %v227, 0
      %v696 = vsel %vm369, %v688, 0
      %v699 = vsel %vm369, %v689, 0
      %701 = vmatprep.subr.bf16.mxu0 %v687
      %702 = vmatpush1.bf16.msra.mxu0 %v686
      %703 = vmatprep.subr.bf16.mxu0 %v699
      %704 = vmatpush1.bf16.msra.mxu0 %v696
      %705 = vmatprep.subr.bf16.mxu0 0
      %706 = vmatpush1.bf16.msra.mxu0 0
      %707 = vmatprep.subr.bf16.mxu0 0
      %708 = vmatpush1.bf16.msra.mxu0 0
      %709 = vmatprep.subr.bf16.mxu0 0
      %710 = vmatpush1.bf16.msra.mxu0 0
      %711 = vmatprep.subr.bf16.mxu0 0
      %712 = vmatpush1.bf16.msra.mxu0 0
      %713 = vmatprep.subr.bf16.mxu0 0
      %714 = vmatpush1.bf16.msra.mxu0 0
      %715 = vmatprep.subr.bf16.mxu0 0
      %716 = vmatpush1.bf16.msra.mxu0 0
      %717 = vmatprep.subr.bf16.mxu0 0
      %718 = vmatpush1.bf16.msra.mxu0 0
      %719 = vmatprep.subr.bf16.mxu0 0
      %720 = vmatpush1.bf16.msra.mxu0 0
      %721 = vmatprep.subr.bf16.mxu0 0
      %722 = vmatpush1.bf16.msra.mxu0 0
      %723 = vmatprep.subr.bf16.mxu0 0
      %724 = vmatpush1.bf16.msra.mxu0 0
      %725 = vmatprep.subr.bf16.mxu0 0
      %726 = vmatpush1.bf16.msra.mxu0 0
      %727 = vmatprep.subr.bf16.mxu0 0
      %728 = vmatpush1.bf16.msra.mxu0 0
      %729 = vmatprep.subr.bf16.mxu0 0
      %730 = vmatpush1.bf16.msra.mxu0 0
      %731 = vmatprep.subr.bf16.mxu0 0
      %732 = vmatpush1.bf16.msra.mxu0 0
      %733 = vmatprep.mubr.bf16.mxu0 0
      %734 = vmatmul.mubr.bf16.gmra.mrb[0].mxu0 %v693
      %v735 = vpop.f32.mrb[0].mxu0
      %v736 = vadd.f32 %v313, %v735
      %v737 = vpop.f32.mrb[0].mxu0
      %v738 = vadd.f32 %v317, %v737
      %v739 = vpop.f32.mrb[0].mxu0
      %v740 = vpop.f32.mrb[0].mxu0
      %741 = vdwg.mxu0
      %v745 = vunpack.c.l.b16 %v248
      %v746 = vunpack.c.h.b16 %v248
      %v747 = vunpack.c.l.b16 %v249
      %v748 = vunpack.c.h.b16 %v249
      %v749 = vunpack.c.l.b16 %v250
      %v750 = vunpack.c.h.b16 %v250
      %v751 = vpack.c.b16 %v747, %v745
      %v752 = vpack.c.b16 %v748, %v746
      %v753 = vpack.c.b16 %v749, %v749
      %v754 = vpack.c.b16 %v750, %v750
      %v758 = vsel %vm365, %v228, 0
      %v761 = vsel %vm369, %v753, 0
      %v764 = vsel %vm369, %v754, 0
      %766 = vmatprep.subr.bf16.mxu0 %v752
      %767 = vmatpush1.bf16.msra.mxu0 %v751
      %768 = vmatprep.subr.bf16.mxu0 %v764
      %769 = vmatpush1.bf16.msra.mxu0 %v761
      %770 = vmatprep.subr.bf16.mxu0 0
      %771 = vmatpush1.bf16.msra.mxu0 0
      %772 = vmatprep.subr.bf16.mxu0 0
      %773 = vmatpush1.bf16.msra.mxu0 0
      %774 = vmatprep.subr.bf16.mxu0 0
      %775 = vmatpush1.bf16.msra.mxu0 0
      %776 = vmatprep.subr.bf16.mxu0 0
      %777 = vmatpush1.bf16.msra.mxu0 0
      %778 = vmatprep.subr.bf16.mxu0 0
      %779 = vmatpush1.bf16.msra.mxu0 0
      %780 = vmatprep.subr.bf16.mxu0 0
      %781 = vmatpush1.bf16.msra.mxu0 0
      %782 = vmatprep.subr.bf16.mxu0 0
      %783 = vmatpush1.bf16.msra.mxu0 0
      %784 = vmatprep.subr.bf16.mxu0 0
      %785 = vmatpush1.bf16.msra.mxu0 0
      %786 = vmatprep.subr.bf16.mxu0 0
      %787 = vmatpush1.bf16.msra.mxu0 0
      %788 = vmatprep.subr.bf16.mxu0 0
      %789 = vmatpush1.bf16.msra.mxu0 0
      %790 = vmatprep.subr.bf16.mxu0 0
      %791 = vmatpush1.bf16.msra.mxu0 0
      %792 = vmatprep.subr.bf16.mxu0 0
      %793 = vmatpush1.bf16.msra.mxu0 0
      %794 = vmatprep.subr.bf16.mxu0 0
      %795 = vmatpush1.bf16.msra.mxu0 0
      %796 = vmatprep.subr.bf16.mxu0 0
      %797 = vmatpush1.bf16.msra.mxu0 0
      %798 = vmatprep.mubr.bf16.mxu0 0
      %799 = vmatmul.mubr.bf16.gmra.mrb[0].mxu0 %v758
      %v800 = vpop.f32.mrb[0].mxu0
      %v801 = vadd.f32 %v321, %v800
      %v802 = vpop.f32.mrb[0].mxu0
      %v803 = vadd.f32 %v325, %v802
      %v804 = vpop.f32.mrb[0].mxu0
      %v805 = vpop.f32.mrb[0].mxu0
      %806 = vdwg.mxu0
      %v810 = vunpack.c.l.b16 %v251
      %v811 = vunpack.c.h.b16 %v251
      %v812 = vunpack.c.l.b16 %v252
      %v813 = vunpack.c.h.b16 %v252
      %v814 = vunpack.c.l.b16 %v253
      %v815 = vunpack.c.h.b16 %v253
      %v816 = vpack.c.b16 %v812, %v810
      %v817 = vpack.c.b16 %v813, %v811
      %v818 = vpack.c.b16 %v814, %v814
      %v819 = vpack.c.b16 %v815, %v815
      %v823 = vsel %vm365, %v229, 0
      %v826 = vsel %vm369, %v818, 0
      %v829 = vsel %vm369, %v819, 0
      %831 = vmatprep.subr.bf16.mxu0 %v817
      %832 = vmatpush1.bf16.msra.mxu0 %v816
      %833 = vmatprep.subr.bf16.mxu0 %v829
      %834 = vmatpush1.bf16.msra.mxu0 %v826
      %835 = vmatprep.subr.bf16.mxu0 0
      %836 = vmatpush1.bf16.msra.mxu0 0
      %837 = vmatprep.subr.bf16.mxu0 0
      %838 = vmatpush1.bf16.msra.mxu0 0
      %839 = vmatprep.subr.bf16.mxu0 0
      %840 = vmatpush1.bf16.msra.mxu0 0
      %841 = vmatprep.subr.bf16.mxu0 0
      %842 = vmatpush1.bf16.msra.mxu0 0
      %843 = vmatprep.subr.bf16.mxu0 0
      %844 = vmatpush1.bf16.msra.mxu0 0
      %845 = vmatprep.subr.bf16.mxu0 0
      %846 = vmatpush1.bf16.msra.mxu0 0
      %847 = vmatprep.subr.bf16.mxu0 0
      %848 = vmatpush1.bf16.msra.mxu0 0
      %849 = vmatprep.subr.bf16.mxu0 0
      %850 = vmatpush1.bf16.msra.mxu0 0
      %851 = vmatprep.subr.bf16.mxu0 0
      %852 = vmatpush1.bf16.msra.mxu0 0
      %853 = vmatprep.subr.bf16.mxu0 0
      %854 = vmatpush1.bf16.msra.mxu0 0
      %855 = vmatprep.subr.bf16.mxu0 0
      %856 = vmatpush1.bf16.msra.mxu0 0
      %857 = vmatprep.subr.bf16.mxu0 0
      %858 = vmatpush1.bf16.msra.mxu0 0
      %859 = vmatprep.subr.bf16.mxu0 0
      %860 = vmatpush1.bf16.msra.mxu0 0
      %861 = vmatprep.subr.bf16.mxu0 0
      %862 = vmatpush1.bf16.msra.mxu0 0
      %863 = vmatprep.mubr.bf16.mxu0 0
      %864 = vmatmul.mubr.bf16.gmra.mrb[0].mxu0 %v823
      %v865 = vpop.f32.mrb[0].mxu0
      %v866 = vadd.f32 %v329, %v865
      %v867 = vpop.f32.mrb[0].mxu0
      %v868 = vadd.f32 %v333, %v867
      %v869 = vpop.f32.mrb[0].mxu0
      %v870 = vpop.f32.mrb[0].mxu0
      %871 = vdwg.mxu0
      %v872 = vxor.u32 %v411, 2147483648
      %v873 = vxor.u32 %v476, 2147483648
      %v874 = vxor.u32 %v541, 2147483648
      %v875 = vxor.u32 %v606, 2147483648
      %v876 = vxor.u32 %v671, 2147483648
      %v877 = vxor.u32 %v736, 2147483648
      %v878 = vxor.u32 %v801, 2147483648
      %v879 = vxor.u32 %v866, 2147483648
      %v880 = vmul.f32 %v872, 1.442695
      %v881 = vpow.pop %v880
      %v882 = vmul.f32 %v873, 1.442695
      %v883 = vpow.pop %v882
      %v884 = vmul.f32 %v874, 1.442695
      %v885 = vpow.pop %v884
      %v886 = vmul.f32 %v875, 1.442695
      %v887 = vpow.pop %v886
      %v888 = vmul.f32 %v876, 1.442695
      %v889 = vpow.pop %v888
      %v890 = vmul.f32 %v877, 1.442695
      %v891 = vpow.pop %v890
      %v892 = vmul.f32 %v878, 1.442695
      %v893 = vpow.pop %v892
      %v894 = vmul.f32 %v879, 1.442695
      %v895 = vpow.pop %v894
      %v896 = vadd.f32 %v881, 1.0
      %v897 = vadd.f32 %v883, 1.0
      %v898 = vadd.f32 %v885, 1.0
      %v899 = vadd.f32 %v887, 1.0
      %v900 = vadd.f32 %v889, 1.0
      %v901 = vadd.f32 %v891, 1.0
      %v902 = vadd.f32 %v893, 1.0
      %v903 = vadd.f32 %v895, 1.0
      %v904 = vrcp.pop %v896
      %v905 = vmul.f32 1.0, %v904
      %v906 = vrcp.pop %v897
      %v907 = vmul.f32 1.0, %v906
      %v908 = vrcp.pop %v898
      %v909 = vmul.f32 1.0, %v908
      %v910 = vrcp.pop %v899
      %v911 = vmul.f32 1.0, %v910
      %v912 = vrcp.pop %v900
      %v913 = vmul.f32 1.0, %v912
      %v914 = vrcp.pop %v901
      %v915 = vmul.f32 1.0, %v914
      %v916 = vrcp.pop %v902
      %v917 = vmul.f32 1.0, %v916
      %v918 = vrcp.pop %v903
      %v919 = vmul.f32 1.0, %v918
      %v920 = vtanh.pop %v413
      %v921 = vtanh.pop %v478
      %v922 = vtanh.pop %v543
      %v923 = vtanh.pop %v608
      %v924 = vtanh.pop %v673
      %v925 = vtanh.pop %v738
      %v926 = vtanh.pop %v803
      %v927 = vtanh.pop %v868
      %v928 = vmul.f32 %v905, %v920
      %v929 = vmul.f32 %v907, %v921
      %v930 = vmul.f32 %v909, %v922
      %v931 = vmul.f32 %v911, %v923
      %v932 = vmul.f32 %v913, %v924
      %v933 = vmul.f32 %v915, %v925
      %v934 = vmul.f32 %v917, %v926
      %v935 = vmul.f32 %v919, %v927
      %936 = vst [vmem:[%s219] sm:$0xff] %v928
      %937 = vst [vmem:[%s219 + $0x8] sm:$0xff] %v929
      %938 = vst [vmem:[%s219 + $0x10] sm:$0xff] %v930
      %939 = vst [vmem:[%s219 + $0x18] sm:$0xff] %v931
      %940 = vst [vmem:[%s219 + $0x20] sm:$0xff] %v932
      %941 = vst [vmem:[%s219 + $0x28] sm:$0xff] %v933
      %942 = vst [vmem:[%s219 + $0x30] sm:$0xff] %v934
      %943 = vst [vmem:[%s219 + $0x38] sm:$0xff] %v935
      %s944 = smul.u32 8, %s14
      %p945 = scmp.lt.s32.totalorder %s944, 15
      %s946 = scalar_select %p945, %s944, 15
      %s947 = smul.addr %s946, 8
      %s948 = scalar_lea.vmem %s3, %s947
      // Predicated region
      $region33: #{_lambda_.108} parent=31 // pred_check
        %p949 = pneg %p110
      $region34: #{_lambda_.108} parent=31 // pred_check_branch
        %951 = sbr.rel (%p949) target = $region36
      $region35: #{_lambda_.108} parent=31 // pred_region
        %s952 = smul.u32 8, %s14
      $region36: #{_lambda_.108} parent=31 // pred_fallthru
        _
    $region32: #{_lambda_.108} parent=5 // pred_fallthru
      _
    %p953 = scmp.le.s32.totalorder 2, %s9
    // Predicated region
    $region37: #{_lambda_.108} parent=5 // pred_check
      %p954 = pneg %p953
    $region38: #{_lambda_.108} parent=5 // pred_check_branch
      %956 = sbr.rel (%p954) target = $region40
    $region39: #{_lambda_.108} parent=5 // pred_region
      %s957 = ssub.s32 %s9, 2
      // Predicated region
      $region41: #{_lambda_.108} parent=39 // pred_check
        %p958 = pneg %p116
      $region42: #{_lambda_.108} parent=39 // pred_check_branch
        %960 = sbr.rel (%p958) target = $region44
      $region43: #{_lambda_.108} parent=39 // pred_region
        %s961 = smul.u32 8, %s15
        %p962 = scmp.lt.s32.totalorder %s961, 15
        %s963 = scalar_select %p962, %s961, 15
        %s964 = smul.addr %s963, 8
        %s965 = scalar_lea.vmem %s3, %s964
      $region44: #{_lambda_.108} parent=39 // pred_fallthru
        _
    $region40: #{_lambda_.108} parent=5 // pred_fallthru
      _
  $region6: #{_lambda_.108} parent=0 // loop_footer
    %s13 = sadd.s32 1, %s9
  $region7: #{_lambda_.108} parent=0 // loop_footer_branch
    %8 = sbr.rel target = $region3
  $region8: #{_lambda_.108} parent=0 // loop_exit
    _

// kernel: _lambda_.111
$region0: #{_lambda_.111}
  #allocation0 [shape = 'u32[]', space=smem, size = 0x4, offset = 0x4, fixed_abs, tag = 'smem constant byte address 0x4 - core index']
  #allocation1 [shape = 'u32[144,128]{1,0:T(1,128)}', space=vmem, size = 0x12000, scoped, tag = 'internal scratch']
  #allocation2 [shape = 'f32[128,128]{1,0:T(8,128)}', space=vmem, size = 0x10000, scoped, tag = 'scratch operand']
  %s0 = inlined_call_operand.vmem [shape: bf16[128,56], index: 0, kind: input, shape index: {}]
  %s1 = inlined_call_operand.vmem [shape: bf16[56,128], index: 1, kind: input, shape index: {}]
  %s2 = inlined_call_operand.vmem [shape: f32[1,128], index: 2, kind: input, shape index: {}]
  %s3 = inlined_call_operand.vmem [shape: f32[128,128], index: 3, kind: output, shape index: {}]
  %s4 = sld [smem:[#allocation0]]
  $region30: #{_lambda_.111} parent=0
    _
  %s6 = ssub.s32 1, %s4
  %s7 = scalar_select 0, %s6, %s4
  // Predicated region
  $region2: #{_lambda_.111} parent=0 // pred_check
    _
  $region3: #{_lambda_.111} parent=0 // pred_check_branch
    %9 = sbr.rel (0) target = $region5
  $region4: #{_lambda_.111} parent=0 // pred_region
    _
  $region5: #{_lambda_.111} parent=0 // pred_fallthru
    _
  // Predicated region
  $region6: #{_lambda_.111} parent=0 // pred_check
    _
  $region7: #{_lambda_.111} parent=0 // pred_check_branch
    %11 = sbr.rel (0) target = $region9
  $region8: #{_lambda_.111} parent=0 // pred_region
    _
  $region9: #{_lambda_.111} parent=0 // pred_fallthru
    _
  // Predicated region
  $region10: #{_lambda_.111} parent=0 // pred_check
    _
  $region11: #{_lambda_.111} parent=0 // pred_check_branch
    %13 = sbr.rel (0) target = $region13
  $region12: #{_lambda_.111} parent=0 // pred_region
    _
  $region13: #{_lambda_.111} parent=0 // pred_fallthru
    _
  %p15 = scmp.eq.s32.totalorder 0, 0
  // Predicated region
  $region14: #{_lambda_.111} parent=0 // pred_check
    %p16 = pneg %p15
  $region15: #{_lambda_.111} parent=0 // pred_check_branch
    %18 = sbr.rel (%p16) target = $region17
  $region16: #{_lambda_.111} parent=0 // pred_region
    %19 = vst [vmem:[#allocation2] sm:$0xff] 0.0
    %20 = vst [vmem:[#allocation2 + $0x8] sm:$0xff] 0.0
    %21 = vst [vmem:[#allocation2 + $0x10] sm:$0xff] 0.0
    %22 = vst [vmem:[#allocation2 + $0x18] sm:$0xff] 0.0
    %23 = vst [vmem:[#allocation2 + $0x20] sm:$0xff] 0.0
    %24 = vst [vmem:[#allocation2 + $0x28] sm:$0xff] 0.0
    %25 = vst [vmem:[#allocation2 + $0x30] sm:$0xff] 0.0
    %26 = vst [vmem:[#allocation2 + $0x38] sm:$0xff] 0.0
    %27 = vst [vmem:[#allocation2 + $0x40] sm:$0xff] 0.0
    %28 = vst [vmem:[#allocation2 + $0x48] sm:$0xff] 0.0
    %29 = vst [vmem:[#allocation2 + $0x50] sm:$0xff] 0.0
    %30 = vst [vmem:[#allocation2 + $0x58] sm:$0xff] 0.0
    %31 = vst [vmem:[#allocation2 + $0x60] sm:$0xff] 0.0
    %32 = vst [vmem:[#allocation2 + $0x68] sm:$0xff] 0.0
    %33 = vst [vmem:[#allocation2 + $0x70] sm:$0xff] 0.0
    %34 = vst [vmem:[#allocation2 + $0x78] sm:$0xff] 0.0
  $region17: #{_lambda_.111} parent=0 // pred_fallthru
    _
  %v35 = vld [vmem:[%s0] sm:$0xf]
  %v36 = vld [vmem:[%s0 + $0x4] sm:$0xf]
  %v37 = vld [vmem:[%s0 + $0x8] sm:$0xf]
  %v38 = vld [vmem:[%s0 + $0xc] sm:$0xf]
  %v39 = vld [vmem:[%s0 + $0x10] sm:$0xf]
  %v40 = vld [vmem:[%s0 + $0x14] sm:$0xf]
  %v41 = vld [vmem:[%s0 + $0x18] sm:$0xf]
  %v42 = vld [vmem:[%s0 + $0x1c] sm:$0xf]
  %v43 = vld [vmem:[%s0 + $0x20] sm:$0xf]
  %v44 = vld [vmem:[%s0 + $0x24] sm:$0xf]
  %v45 = vld [vmem:[%s0 + $0x28] sm:$0xf]
  %v46 = vld [vmem:[%s0 + $0x2c] sm:$0xf]
  %v47 = vld [vmem:[%s0 + $0x30] sm:$0xf]
  %v48 = vld [vmem:[%s0 + $0x34] sm:$0xf]
  %v49 = vld [vmem:[%s0 + $0x38] sm:$0xf]
  %v50 = vld [vmem:[%s0 + $0x3c] sm:$0xf]
  %v51 = vld [vmem:[#allocation2] sm:$0xff]
  %v52 = vld [vmem:[#allocation2 + $0x8] sm:$0xff]
  %v53 = vld [vmem:[#allocation2 + $0x10] sm:$0xff]
  %v54 = vld [vmem:[#allocation2 + $0x18] sm:$0xff]
  %v55 = vld [vmem:[#allocation2 + $0x20] sm:$0xff]
  %v56 = vld [vmem:[#allocation2 + $0x28] sm:$0xff]
  %v57 = vld [vmem:[#allocation2 + $0x30] sm:$0xff]
  %v58 = vld [vmem:[#allocation2 + $0x38] sm:$0xff]
  %v59 = vld [vmem:[#allocation2 + $0x40] sm:$0xff]
  %v60 = vld [vmem:[#allocation2 + $0x48] sm:$0xff]
  %v61 = vld [vmem:[#allocation2 + $0x50] sm:$0xff]
  %v62 = vld [vmem:[#allocation2 + $0x58] sm:$0xff]
  %v63 = vld [vmem:[#allocation2 + $0x60] sm:$0xff]
  %v64 = vld [vmem:[#allocation2 + $0x68] sm:$0xff]
  %v65 = vld [vmem:[#allocation2 + $0x70] sm:$0xff]
  %v66 = vld [vmem:[#allocation2 + $0x78] sm:$0xff]
  %v67 = vld [vmem:[%s1] sm:$0xf]
  %v68 = vld [vmem:[%s1 + $0x4] sm:$0xf]
  %v69 = vld [vmem:[%s1 + $0x8] sm:$0xf]
  %v70 = vld [vmem:[%s1 + $0xc] sm:$0xf]
  %v71 = vld [vmem:[%s1 + $0x10] sm:$0xf]
  %v72 = vld [vmem:[%s1 + $0x14] sm:$0xf]
  %v73 = vld [vmem:[%s1 + $0x18] sm:$0xf]
  %v90 = vunpack.c.l.b16 %v35
  %v91 = vunpack.c.l.b16 %v36
  %v92 = vunpack.c.l.b16 %v37
  %v93 = vunpack.c.l.b16 %v38
  %v94 = vunpack.c.l.b16 %v39
  %v95 = vunpack.c.l.b16 %v40
  %v96 = vunpack.c.l.b16 %v41
  %v97 = vunpack.c.l.b16 %v42
  %v98 = vunpack.c.l.b16 %v43
  %v99 = vunpack.c.l.b16 %v44
  %v100 = vunpack.c.l.b16 %v45
  %v101 = vunpack.c.l.b16 %v46
  %v102 = vunpack.c.l.b16 %v47
  %v103 = vunpack.c.l.b16 %v48
  %v104 = vunpack.c.l.b16 %v49
  %v105 = vunpack.c.l.b16 %v50
  %v106 = vpack.c.b16 %v91, %v90
  %v107 = vpack.c.b16 %v93, %v92
  %v108 = vpack.c.b16 %v95, %v94
  %v109 = vpack.c.b16 %v97, %v96
  %v110 = vpack.c.b16 %v99, %v98
  %v111 = vpack.c.b16 %v101, %v100
  %v112 = vpack.c.b16 %v103, %v102
  %v113 = vpack.c.b16 %v105, %v104
  %v121 = vunpack.c.l.b16 %v67
  %v122 = vunpack.c.l.b16 %v68
  %v123 = vunpack.c.l.b16 %v69
  %v124 = vunpack.c.l.b16 %v70
  %v125 = vunpack.c.l.b16 %v71
  %v126 = vunpack.c.l.b16 %v72
  %v127 = vunpack.c.l.b16 %v73
  %v128 = vpack.c.b16 %v122, %v121
  %v129 = vpack.c.b16 %v124, %v123
  %v130 = vpack.c.b16 %v126, %v125
  %v131 = vpack.c.b16 %v127, %v127
  %vm135 = vcmask 457728
  %v137 = vsel %vm135, %v106, 0
  %v140 = vsel %vm135, %v107, 0
  %v143 = vsel %vm135, %v108, 0
  %v146 = vsel %vm135, %v109, 0
  %v149 = vsel %vm135, %v110, 0
  %v152 = vsel %vm135, %v111, 0
  %v155 = vsel %vm135, %v112, 0
  %v158 = vsel %vm135, %v113, 0
  %vm160 = vcmask 1043456
  %v162 = vsel %vm160, %v131, 0
  %164 = vmatprep.subr.bf16.mxu0 0
  %165 = vmatpush1.bf16.msra.mxu0 %v128
  %166 = vmatprep.subr.bf16.mxu0 0
  %167 = vmatpush1.bf16.msra.mxu0 %v129
  %168 = vmatprep.subr.bf16.mxu0 0
  %169 = vmatpush1.bf16.msra.mxu0 %v130
  %170 = vmatprep.subr.bf16.mxu0 0
  %171 = vmatpush1.bf16.msra.mxu0 %v162
  %172 = vmatprep.subr.bf16.mxu0 0
  %173 = vmatpush1.bf16.msra.mxu0 0
  %174 = vmatprep.subr.bf16.mxu0 0
  %175 = vmatpush1.bf16.msra.mxu0 0
  %176 = vmatprep.subr.bf16.mxu0 0
  %177 = vmatpush1.bf16.msra.mxu0 0
  %178 = vmatprep.subr.bf16.mxu0 0
  %179 = vmatpush1.bf16.msra.mxu0 0
  %180 = vmatprep.subr.bf16.mxu0 0
  %181 = vmatpush1.bf16.msra.mxu0 0
  %182 = vmatprep.subr.bf16.mxu0 0
  %183 = vmatpush1.bf16.msra.mxu0 0
  %184 = vmatprep.subr.bf16.mxu0 0
  %185 = vmatpush1.bf16.msra.mxu0 0
  %186 = vmatprep.subr.bf16.mxu0 0
  %187 = vmatpush1.bf16.msra.mxu0 0
  %188 = vmatprep.subr.bf16.mxu0 0
  %189 = vmatpush1.bf16.msra.mxu0 0
  %190 = vmatprep.subr.bf16.mxu0 0
  %191 = vmatpush1.bf16.msra.mxu0 0
  %192 = vmatprep.subr.bf16.mxu0 0
  %193 = vmatpush1.bf16.msra.mxu0 0
  %194 = vmatprep.subr.bf16.mxu0 0
  %195 = vmatpush1.bf16.msra.mxu0 0
  %196 = vmatprep.mubr.bf16.mxu0 0
  %197 = vmatmul.mubr.bf16.gmra.mrb[0].mxu0 %v137
  %v198 = vpop.f32.mrb[0].mxu0
  %v199 = vadd.f32 0.0, %v198
  %v200 = vpop.f32.mrb[0].mxu0
  %v201 = vpop.f32.mrb[0].mxu0
  %v202 = vadd.f32 0.0, %v201
  %v203 = vpop.f32.mrb[0].mxu0
  %204 = vmatprep.mubr.bf16.mxu0 0
  %205 = vmatmul.mubr.bf16.gmra.mrb[0].mxu0 %v140
  %v206 = vpop.f32.mrb[0].mxu0
  %v207 = vadd.f32 0.0, %v206
  %v208 = vpop.f32.mrb[0].mxu0
  %v209 = vpop.f32.mrb[0].mxu0
  %v210 = vadd.f32 0.0, %v209
  %v211 = vpop.f32.mrb[0].mxu0
  %212 = vmatprep.mubr.bf16.mxu0 0
  %213 = vmatmul.mubr.bf16.gmra.mrb[0].mxu0 %v143
  %v214 = vpop.f32.mrb[0].mxu0
  %v215 = vadd.f32 0.0, %v214
  %v216 = vpop.f32.mrb[0].mxu0
  %v217 = vpop.f32.mrb[0].mxu0
  %v218 = vadd.f32 0.0, %v217
  %v219 = vpop.f32.mrb[0].mxu0
  %220 = vmatprep.mubr.bf16.mxu0 0
  %221 = vmatmul.mubr.bf16.gmra.mrb[0].mxu0 %v146
  %v222 = vpop.f32.mrb[0].mxu0
  %v223 = vadd.f32 0.0, %v222
  %v224 = vpop.f32.mrb[0].mxu0
  %v225 = vpop.f32.mrb[0].mxu0
  %v226 = vadd.f32 0.0, %v225
  %v227 = vpop.f32.mrb[0].mxu0
  %228 = vmatprep.mubr.bf16.mxu0 0
  %229 = vmatmul.mubr.bf16.gmra.mrb[0].mxu0 %v149
  %v230 = vpop.f32.mrb[0].mxu0
  %v231 = vadd.f32 0.0, %v230
  %v232 = vpop.f32.mrb[0].mxu0
  %v233 = vpop.f32.mrb[0].mxu0
  %v234 = vadd.f32 0.0, %v233
  %v235 = vpop.f32.mrb[0].mxu0
  %236 = vmatprep.mubr.bf16.mxu0 0
  %237 = vmatmul.mubr.bf16.gmra.mrb[0].mxu0 %v152
  %v238 = vpop.f32.mrb[0].mxu0
  %v239 = vadd.f32 0.0, %v238
  %v240 = vpop.f32.mrb[0].mxu0
  %v241 = vpop.f32.mrb[0].mxu0
  %v242 = vadd.f32 0.0, %v241
  %v243 = vpop.f32.mrb[0].mxu0
  %244 = vmatprep.mubr.bf16.mxu0 0
  %245 = vmatmul.mubr.bf16.gmra.mrb[0].mxu0 %v155
  %v246 = vpop.f32.mrb[0].mxu0
  %v247 = vadd.f32 0.0, %v246
  %v248 = vpop.f32.mrb[0].mxu0
  %v249 = vpop.f32.mrb[0].mxu0
  %v250 = vadd.f32 0.0, %v249
  %v251 = vpop.f32.mrb[0].mxu0
  %252 = vmatprep.mubr.bf16.mxu0 0
  %253 = vmatmul.mubr.bf16.gmra.mrb[0].mxu0 %v158
  %v254 = vpop.f32.mrb[0].mxu0
  %v255 = vadd.f32 0.0, %v254
  %v256 = vpop.f32.mrb[0].mxu0
  %v257 = vpop.f32.mrb[0].mxu0
  %v258 = vadd.f32 0.0, %v257
  %v259 = vpop.f32.mrb[0].mxu0
  %260 = vdwg.mxu0
  %v261 = vadd.f32 %v51, %v199
  %v262 = vadd.f32 %v52, %v202
  %v263 = vadd.f32 %v53, %v207
  %v264 = vadd.f32 %v54, %v210
  %v265 = vadd.f32 %v55, %v215
  %v266 = vadd.f32 %v56, %v218
  %v267 = vadd.f32 %v57, %v223
  %v268 = vadd.f32 %v58, %v226
  %v269 = vadd.f32 %v59, %v231
  %v270 = vadd.f32 %v60, %v234
  %v271 = vadd.f32 %v61, %v239
  %v272 = vadd.f32 %v62, %v242
  %v273 = vadd.f32 %v63, %v247
  %v274 = vadd.f32 %v64, %v250
  %v275 = vadd.f32 %v65, %v255
  %v276 = vadd.f32 %v66, %v258
  %277 = vst [vmem:[#allocation2] sm:$0xff] %v261
  %278 = vst [vmem:[#allocation2 + $0x8] sm:$0xff] %v262
  %279 = vst [vmem:[#allocation2 + $0x10] sm:$0xff] %v263
  %280 = vst [vmem:[#allocation2 + $0x18] sm:$0xff] %v264
  %281 = vst [vmem:[#allocation2 + $0x20] sm:$0xff] %v265
  %282 = vst [vmem:[#allocation2 + $0x28] sm:$0xff] %v266
  %283 = vst [vmem:[#allocation2 + $0x30] sm:$0xff] %v267
  %284 = vst [vmem:[#allocation2 + $0x38] sm:$0xff] %v268
  %285 = vst [vmem:[#allocation2 + $0x40] sm:$0xff] %v269
  %286 = vst [vmem:[#allocation2 + $0x48] sm:$0xff] %v270
  %287 = vst [vmem:[#allocation2 + $0x50] sm:$0xff] %v271
  %288 = vst [vmem:[#allocation2 + $0x58] sm:$0xff] %v272
  %289 = vst [vmem:[#allocation2 + $0x60] sm:$0xff] %v273
  %290 = vst [vmem:[#allocation2 + $0x68] sm:$0xff] %v274
  %291 = vst [vmem:[#allocation2 + $0x70] sm:$0xff] %v275
  %292 = vst [vmem:[#allocation2 + $0x78] sm:$0xff] %v276
  // Predicated region
  $region18: #{_lambda_.111} parent=0 // pred_check
    %p293 = pneg %p15
  $region19: #{_lambda_.111} parent=0 // pred_check_branch
    %295 = sbr.rel (%p293) target = $region21
  $region20: #{_lambda_.111} parent=0 // pred_region
    %v296 = vld [vmem:[#allocation2] sm:$0xff]
    %v297 = vld [vmem:[#allocation2 + $0x8] sm:$0xff]
    %v298 = vld [vmem:[#allocation2 + $0x10] sm:$0xff]
    %v299 = vld [vmem:[#allocation2 + $0x18] sm:$0xff]
    %v300 = vld [vmem:[#allocation2 + $0x20] sm:$0xff]
    %v301 = vld [vmem:[#allocation2 + $0x28] sm:$0xff]
    %v302 = vld [vmem:[#allocation2 + $0x30] sm:$0xff]
    %v303 = vld [vmem:[#allocation2 + $0x38] sm:$0xff]
    %v304 = vld [vmem:[#allocation2 + $0x40] sm:$0xff]
    %v305 = vld [vmem:[#allocation2 + $0x48] sm:$0xff]
    %v306 = vld [vmem:[#allocation2 + $0x50] sm:$0xff]
    %v307 = vld [vmem:[#allocation2 + $0x58] sm:$0xff]
    %v308 = vld [vmem:[#allocation2 + $0x60] sm:$0xff]
    %v309 = vld [vmem:[#allocation2 + $0x68] sm:$0xff]
    %v310 = vld [vmem:[#allocation2 + $0x70] sm:$0xff]
    %v311 = vld [vmem:[#allocation2 + $0x78] sm:$0xff]
    %v312 = vld [vmem:[%s2] sm:$0x1]
    %v314 = vlaneseq
    %v315 = vshrl.u32 %v314, 7
    %v316 = vsub.s32 0, %v315
    %v317 = vrot.slane %v312, %v316
    %v319 = vadd.f32 %v296, %v317
    %v320 = vadd.f32 %v297, %v317
    %v321 = vadd.f32 %v298, %v317
    %v322 = vadd.f32 %v299, %v317
    %v323 = vadd.f32 %v300, %v317
    %v324 = vadd.f32 %v301, %v317
    %v325 = vadd.f32 %v302, %v317
    %v326 = vadd.f32 %v303, %v317
    %v327 = vadd.f32 %v304, %v317
    %v328 = vadd.f32 %v305, %v317
    %v329 = vadd.f32 %v306, %v317
    %v330 = vadd.f32 %v307, %v317
    %v331 = vadd.f32 %v308, %v317
    %v332 = vadd.f32 %v309, %v317
    %v333 = vadd.f32 %v310, %v317
    %v334 = vadd.f32 %v311, %v317
    %335 = vst [vmem:[%s3] sm:$0xff] %v319
    %336 = vst [vmem:[%s3 + $0x8] sm:$0xff] %v320
    %337 = vst [vmem:[%s3 + $0x10] sm:$0xff] %v321
    %338 = vst [vmem:[%s3 + $0x18] sm:$0xff] %v322
    %339 = vst [vmem:[%s3 + $0x20] sm:$0xff] %v323
    %340 = vst [vmem:[%s3 + $0x28] sm:$0xff] %v324
    %341 = vst [vmem:[%s3 + $0x30] sm:$0xff] %v325
    %342 = vst [vmem:[%s3 + $0x38] sm:$0xff] %v326
    %343 = vst [vmem:[%s3 + $0x40] sm:$0xff] %v327
    %344 = vst [vmem:[%s3 + $0x48] sm:$0xff] %v328
    %345 = vst [vmem:[%s3 + $0x50] sm:$0xff] %v329
    %346 = vst [vmem:[%s3 + $0x58] sm:$0xff] %v330
    %347 = vst [vmem:[%s3 + $0x60] sm:$0xff] %v331
    %348 = vst [vmem:[%s3 + $0x68] sm:$0xff] %v332
    %349 = vst [vmem:[%s3 + $0x70] sm:$0xff] %v333
    %350 = vst [vmem:[%s3 + $0x78] sm:$0xff] %v334
  $region21: #{_lambda_.111} parent=0 // pred_fallthru
    _
  // Predicated region
  $region22: #{_lambda_.111} parent=0 // pred_check
    _
  $region23: #{_lambda_.111} parent=0 // pred_check_branch
    %352 = sbr.rel (0) target = $region25
  $region24: #{_lambda_.111} parent=0 // pred_region
    _
  $region25: #{_lambda_.111} parent=0 // pred_fallthru
    _
  // Predicated region
  $region26: #{_lambda_.111} parent=0 // pred_check
    _
  $region27: #{_lambda_.111} parent=0 // pred_check_branch
    %354 = sbr.rel (0) target = $region29
  $region28: #{_lambda_.111} parent=0 // pred_region
    _
  $region29: #{_lambda_.111} parent=0 // pred_fallthru
    _

</llo_original>
